<compile_context>
chip_gen: v7x
topology: tpu7x:2x2x1
jax: 0.10.0
libtpu: 0.0.40
codegen_flags: <defaults>
</compile_context>

<pallas_src>
import functools
import math

import numpy as np

import jax
import jax.numpy as jnp
from jax.experimental import pallas as pl
from jax.experimental.pallas import tpu as pltpu  # noqa: F401  (TPU-specific tuning hooks)

# ---------------- small-config (consistent with the module's forward) --------
B = 2                 # batch
C = 3                 # input_image_channels
IMG = 16              # image_size
PATCH = 4             # patch_size
NUM_PATCHES = (IMG // PATCH) ** 2          # 16
PATCH_DIM = C * PATCH * PATCH              # 48
DIM = 32              # hidden_features
HEADS = 4             # attn_heads
DIM_HEAD = 8          # dim_head
INNER = HEADS * DIM_HEAD                   # 32
N_TOK = NUM_PATCHES + 1                    # +1 cls token
MLP_HIDDEN = [32, 32]                      # mlp_hidden_list
N_MLP = len(MLP_HIDDEN)
GENE_DIM = 16                              # gene_dim
DEPTH = 4                                  # 4 (attn + ff) pre-norm blocks


# ---------------- math helpers (usable both in-kernel and in reference) ------
def _erf(x):
    # Abramowitz & Stegun 7.1.26 (|err| < 1.5e-7); exp goes to the EUP slot.
    p = 0.3275911
    a1, a2, a3, a4, a5 = 0.254829592, -0.284496736, 1.421413741, -1.453152027, 1.061405429
    s = jnp.where(x >= 0.0, 1.0, -1.0)
    ax = jnp.abs(x)
    t = 1.0 / (1.0 + p * ax)
    poly = ((((a5 * t + a4) * t + a3) * t + a2) * t + a1) * t
    return s * (1.0 - poly * jnp.exp(-ax * ax))


def _gelu(x):
    # exact (erf-based) GELU, matching torch.nn.GELU() default
    return 0.5 * x * (1.0 + _erf(x / math.sqrt(2.0)))


def _layernorm(x, g, b, eps=1e-5):
    mu = jnp.mean(x, axis=-1, keepdims=True)
    var = jnp.mean((x - mu) ** 2, axis=-1, keepdims=True)
    return (x - mu) * jax.lax.rsqrt(var + eps) * g + b


# ---------------- host-side parameter slab packer -----------------------------
class _SlabPacker:
    """Packs 2-D f32 tensors into one (R, 128) slab; each tensor starts at a
    row offset that is a multiple of 8, lane offset 0 (fully aligned loads)."""
    LANES = 128

    def __init__(self):
        self._blocks = []
        self._nrows = 0
        self.offsets = {}          # name -> (row_offset, (rows, cols))

    def add(self, name, arr):
        a = np.asarray(arr, dtype=np.float32)
        assert a.ndim == 2 and a.shape[1] <= self.LANES, (name, a.shape)
        h = -(-a.shape[0] // 8) * 8
        blk = np.zeros((h, self.LANES), np.float32)
        blk[: a.shape[0], : a.shape[1]] = a
        self.offsets[name] = (self._nrows, a.shape)
        self._blocks.append(blk)
        self._nrows += h

    def finish(self):
        return jnp.asarray(np.concatenate(self._blocks, axis=0)), dict(self.offsets)


# ---------------- the single fused kernel -------------------------------------
def _vit_fused_kernel(patch_ref, slab_ref, o_ref, *, batch, offs):
    bn = batch * N_TOK

    def g(name):                              # static slab slice -> VMEM load
        r, (h, w) = offs[name]
        return slab_ref[r:r + h, :w]

    # ---- patch embedding + cls-row insertion + positional embedding ----------
    # scatter places each patch-embedding row at its token row (cls rows = 0);
    # tok_add already carries cls_token+pos[0] / patch_bias+pos[t].
    emb = jnp.dot(patch_ref[...], g("w_patch"), preferred_element_type=jnp.float32)
    x = jnp.dot(g("scatter"), emb, preferred_element_type=jnp.float32) + g("tok_add")

    mask_bias = g("maskbias")                 # (bn, bn) additive 0 / -1e30

    for l in range(DEPTH):                    # static unroll over depth
        biases = g(f"bias{l}")                # (7, DIM): ln1_g ln1_b b_o ln2_g ln2_b b_ff1 b_ff2
        ln1_g, ln1_b = biases[0:1], biases[1:2]
        b_o = biases[2:3]
        ln2_g, ln2_b = biases[3:4], biases[4:5]
        b_ff1, b_ff2 = biases[5:6], biases[6:7]

        # ---- PreNorm(Attention) + residual ----
        xn = _layernorm(x, ln1_g, ln1_b)
        # Q columns of w_qkv were pre-scaled by DIM_HEAD**-0.5 at pack time.
        qkv = jnp.dot(xn, g(f"w_qkv{l}"), preferred_element_type=jnp.float32)  # (bn, 3*INNER)
        wo_l = g(f"w_o{l}")                                                    # (INNER, DIM)
        attn_out = jnp.zeros((bn, DIM), jnp.float32)
        for h in range(HEADS):                # static per-head loop (lane slices)
            lo = h * DIM_HEAD
            qh = qkv[:, 0 * INNER + lo: 0 * INNER + lo + DIM_HEAD]
            kh = qkv[:, 1 * INNER + lo: 1 * INNER + lo + DIM_HEAD]
            vh = qkv[:, 2 * INNER + lo: 2 * INNER + lo + DIM_HEAD]
            dots = jax.lax.dot_general(qh, kh, (((1,), (1,)), ((), ())),
                                       preferred_element_type=jnp.float32) + mask_bias
            dots = dots - jnp.max(dots, axis=-1, keepdims=True)
            e = jnp.exp(dots)
            p = e * pl.reciprocal(jnp.sum(e, axis=-1, keepdims=True), approx=True)
            oh = jnp.dot(p, vh, preferred_element_type=jnp.float32)           # (bn, DIM_HEAD)
            attn_out = attn_out + jnp.dot(oh, wo_l[lo:lo + DIM_HEAD, :],
                                          preferred_element_type=jnp.float32)
        x = x + attn_out + b_o

        # ---- PreNorm(FeedForward) + residual ----
        xn = _layernorm(x, ln2_g, ln2_b)
        hid = jnp.dot(xn, g(f"w_ff1{l}"), preferred_element_type=jnp.float32) + b_ff1
        hid = _gelu(hid)
        x = x + jnp.dot(hid, g(f"w_ff2{l}"), preferred_element_type=jnp.float32) + b_ff2

    # ---- mean pooling over tokens per image (precomputed pooling matrix) -----
    y = jnp.dot(g("pool"), x, preferred_element_type=jnp.float32)             # (batch, DIM)

    # ---- MLP blocks: Linear -> ReLU -> Dropout(0.5, eval: identity) -> Linear
    for m in range(N_MLP):
        mb = g(f"mlp_b{m}")                                                    # (2, hidden)
        hid = jnp.dot(y, g(f"mlp_wa{m}"), preferred_element_type=jnp.float32) + mb[0:1]
        hid = jnp.maximum(hid, 0.0)
        y = jnp.dot(hid, g(f"mlp_wb{m}"), preferred_element_type=jnp.float32) + mb[1:2]

    # ---- head ----
    o_ref[...] = jnp.dot(y, g("head_w"), preferred_element_type=jnp.float32) + g("head_b")


# ---------------- JAX glue -----------------------------------------------------
def patchify(img):
    # 'b c (h p1) (w p2) -> b (h w) (p1 p2 c)'
    b, c, H, W = img.shape
    h, w = H // PATCH, W // PATCH
    x = img.reshape(b, c, h, PATCH, w, PATCH)
    x = jnp.transpose(x, (0, 2, 4, 3, 5, 1))         # b h w p1 p2 c
    return x.reshape(b, h * w, PATCH * PATCH * c)


def pack_params(params, batch):
    """Host-side, once: pre-transpose every Linear weight to (in, out), fold
    the attention scale into Q, precompute all batch-static tensors (tiled
    additive term, block-diagonal mask bias, cls scatter matrix, pool matrix)
    and pack everything into ONE aligned f32 slab."""
    bn = batch * N_TOK
    pk = _SlabPacker()

    # patch-embed weight (in, out)
    pk.add("w_patch", np.asarray(params["patch_w"]).T)                        # (48, 32)

    # additive term per token row: cls_token+pos[0] on cls rows, patch_b+pos[t] on patches
    pos = np.asarray(params["pos_emb"][0])                                    # (N_TOK, DIM)
    cls_add = np.asarray(params["cls_token"]).reshape(1, DIM) + pos[0:1]
    patch_add = np.asarray(params["patch_b"]).reshape(1, DIM) + pos[1:]
    tok_add_one = np.concatenate([cls_add, patch_add], axis=0)                # (17, 32)
    pk.add("tok_add", np.tile(tok_add_one, (batch, 1)))                       # (bn, 32)

    # scatter: token row <- patch row (cls rows are all-zero)
    rows = np.arange(bn)
    tok = rows % N_TOK
    img_id = rows // N_TOK
    src = img_id * NUM_PATCHES + (tok - 1)
    cols = np.arange(batch * NUM_PATCHES)
    scatter = ((tok[:, None] >= 1) & (src[:, None] == cols[None, :])).astype(np.float32)
    pk.add("scatter", scatter)                                                # (bn, B*NP)

    # block-diagonal additive attention mask (0 within image, -1e30 across)
    maskbias = np.where(img_id[:, None] == img_id[None, :], 0.0, -1e30).astype(np.float32)
    pk.add("maskbias", maskbias)                                              # (bn, bn)

    # per-image mean-pool matrix
    pool = np.where(np.arange(batch)[:, None] == img_id[None, :],
                    1.0 / N_TOK, 0.0).astype(np.float32)
    pk.add("pool", pool)                                                      # (batch, bn)

    scale = DIM_HEAD ** -0.5
    for l, blk in enumerate(params["blocks"]):
        w_qkv_t = np.asarray(blk["w_qkv"]).T.copy()                           # (DIM, 3*INNER)
        w_qkv_t[:, :INNER] *= scale                                           # fold attn scale into Q
        pk.add(f"w_qkv{l}", w_qkv_t)
        pk.add(f"w_o{l}", np.asarray(blk["w_o"]).T)                           # (INNER, DIM)
        pk.add(f"w_ff1{l}", np.asarray(blk["w_ff1"]).T)
        pk.add(f"w_ff2{l}", np.asarray(blk["w_ff2"]).T)
        pk.add(f"bias{l}", np.concatenate([np.asarray(blk["ln1_g"]), np.asarray(blk["ln1_b"]),
                                           np.asarray(blk["b_o"]),
                                           np.asarray(blk["ln2_g"]), np.asarray(blk["ln2_b"]),
                                           np.asarray(blk["b_ff1"]), np.asarray(blk["b_ff2"])],
                                          axis=0))                            # (7, DIM)

    for m, mp in enumerate(params["mlp"]):
        pk.add(f"mlp_wa{m}", np.asarray(mp["w_a"]).T)
        pk.add(f"mlp_wb{m}", np.asarray(mp["w_b"]).T)
        pk.add(f"mlp_b{m}", np.stack([np.asarray(mp["b_a"]), np.asarray(mp["b_b"])], axis=0))

    pk.add("head_w", np.asarray(params["head_w"]).T)                          # (in, GENE_DIM)
    pk.add("head_b", np.asarray(params["head_b"]).reshape(1, GENE_DIM))

    return pk.finish()                                                        # (slab, offsets)


def make_forward(offs, batch):
    kernel = functools.partial(_vit_fused_kernel, batch=batch, offs=offs)

    def fwd(img, slab):
        patches = patchify(img).reshape(batch * NUM_PATCHES, PATCH_DIM)       # (B*NP, PATCH_DIM)
        return pl.pallas_call(
            kernel,
            out_shape=jax.ShapeDtypeStruct((batch, GENE_DIM), jnp.float32),
        )(patches, slab)

    return jax.jit(fwd)


# ---------------- deterministic parameter init ---------------------------------
def init_params(key):
    keys = iter(jax.random.split(key, 64))

    def rnd(shape, scale=0.02):
        return (scale * jax.random.normal(next(keys), shape)).astype(jnp.float32)

    params = {
        "patch_w": rnd((DIM, PATCH_DIM)),
        "patch_b": rnd((DIM,)),
        "pos_emb": rnd((1, N_TOK, DIM), scale=1.0),
        "cls_token": rnd((1, 1, DIM), scale=1.0),
        "blocks": [],
        "mlp": [],
    }
    for _ in range(DEPTH):
        params["blocks"].append({
            "ln1_g": jnp.ones((1, DIM), jnp.float32),
            "ln1_b": jnp.zeros((1, DIM), jnp.float32),
            "w_qkv": rnd((3 * INNER, DIM)),          # to_qkv: Linear(dim, 3*inner, bias=False)
            "w_o":   rnd((DIM, INNER)),              # to_out: Linear(inner, dim)
            "b_o":   rnd((1, DIM)),
            "ln2_g": jnp.ones((1, DIM), jnp.float32),
            "ln2_b": jnp.zeros((1, DIM), jnp.float32),
            "w_ff1": rnd((DIM, DIM)),                # FeedForward(dim, dim)
            "b_ff1": rnd((1, DIM)),
            "w_ff2": rnd((DIM, DIM)),
            "b_ff2": rnd((1, DIM)),
        })
    in_f = DIM
    for hdim in MLP_HIDDEN:
        params["mlp"].append({
            "w_a": rnd((hdim, in_f)), "b_a": rnd((hdim,)),
            "w_b": rnd((hdim, hdim)), "b_b": rnd((hdim,)),
        })
        in_f = hdim
    params["head_w"] = rnd((GENE_DIM, in_f))
    params["head_b"] = rnd((GENE_DIM,))
    return params


# ---------------- pure-JAX reference (for correctness check) -------------------
def reference_forward(img, params):
    b = img.shape[0]
    x = patchify(img) @ params["patch_w"].T + params["patch_b"]
    cls = jnp.broadcast_to(params["cls_token"], (b, 1, DIM))
    x = jnp.concatenate([cls, x], axis=1) + params["pos_emb"][:, :N_TOK]
    for bp in params["blocks"]:
        xn = _layernorm(x, bp["ln1_g"][0], bp["ln1_b"][0])
        qkv = xn @ bp["w_qkv"].T
        q, k, v = jnp.split(qkv, 3, axis=-1)
        to_h = lambda t: t.reshape(b, N_TOK, HEADS, DIM_HEAD).transpose(0, 2, 1, 3)
        q, k, v = to_h(q), to_h(k), to_h(v)
        dots = jnp.einsum("bhnd,bhmd->bhnm", q, k) * (DIM_HEAD ** -0.5)
        attn = jax.nn.softmax(dots, axis=-1)
        out = jnp.einsum("bhnm,bhmd->bhnd", attn, v)
        out = out.transpose(0, 2, 1, 3).reshape(b, N_TOK, INNER)
        x = x + (out @ bp["w_o"].T + bp["b_o"][0])
        xn = _layernorm(x, bp["ln2_g"][0], bp["ln2_b"][0])
        h = _gelu(xn @ bp["w_ff1"].T + bp["b_ff1"][0])
        x = x + (h @ bp["w_ff2"].T + bp["b_ff2"][0])
    x = x.mean(axis=1)
    for blk in params["mlp"]:
        h = jnp.maximum(x @ blk["w_a"].T + blk["b_a"], 0.0)
        x = h @ blk["w_b"].T + blk["b_b"]
    return x @ params["head_w"].T + params["head_b"]


# ---------------- main ----------------------------------------------------------
if __name__ == "__main__":
    key = jax.random.PRNGKey(0)
    pkey, xkey = jax.random.split(key)
    params = init_params(pkey)
    slab, offs = pack_params(params, batch=B)     # host-side: transpose + fold + pack once
    img = jax.random.normal(xkey, (B, C, IMG, IMG), dtype=jnp.float32)

    fwd = make_forward(offs, B)
    out = jax.block_until_ready(fwd(img, slab))
    ref = jax.block_until_ready(reference_forward(img, params))

    assert out.shape == (B, GENE_DIM), out.shape
    max_err = float(jnp.max(jnp.abs(out - ref)))
    assert jnp.allclose(out, ref, rtol=2e-4, atol=2e-4), max_err
    print("KERNEL_OK")
</pallas_src>

<mosaic_0001>
module attributes {stable_mosaic.version = 11 : i64} {
  func.func @_vit_fused_kernel(%arg0: memref<32x48xf32, #tpu.memory_space<vmem>>, %arg1: memref<904x128xf32, #tpu.memory_space<vmem>>, %arg2: memref<2x16xf32, #tpu.memory_space<vmem>>) attributes {dimension_semantics = [], scalar_prefetch = 0 : i64, scratch_operands = 0 : i64, tpu.core_type = #tpu.core_type<tc>} {
    %c0 = arith.constant 0 : index
    %c0_0 = arith.constant 0 : index
    %0 = vector.load %arg0[%c0, %c0_0] : memref<32x48xf32, #tpu.memory_space<vmem>>, vector<32x48xf32>
    %c0_1 = arith.constant 0 : index
    %c0_2 = arith.constant 0 : index
    %1 = vector.load %arg1[%c0_1, %c0_2] : memref<904x128xf32, #tpu.memory_space<vmem>>, vector<48x32xf32>
    %cst = arith.constant dense<0.000000e+00> : vector<32x32xf32>
    %2 = tpu.matmul %0, %1, %cst {dimension_numbers = #tpu.dot_dimension_numbers<[1], [0], [0], [1], [0, 0, 1, 1], [], []>} : vector<32x48xf32>, vector<48x32xf32>, vector<32x32xf32> -> vector<32x32xf32>
    %c88 = arith.constant 88 : index
    %c0_3 = arith.constant 0 : index
    %3 = vector.load %arg1[%c88, %c0_3] : memref<904x128xf32, #tpu.memory_space<vmem>>, vector<34x32xf32>
    %cst_4 = arith.constant dense<0.000000e+00> : vector<34x32xf32>
    %4 = tpu.matmul %3, %2, %cst_4 {dimension_numbers = #tpu.dot_dimension_numbers<[1], [0], [0], [1], [0, 0, 1, 1], [], []>} : vector<34x32xf32>, vector<32x32xf32>, vector<34x32xf32> -> vector<34x32xf32>
    %c48 = arith.constant 48 : index
    %c0_5 = arith.constant 0 : index
    %5 = vector.load %arg1[%c48, %c0_5] : memref<904x128xf32, #tpu.memory_space<vmem>>, vector<34x32xf32>
    %6 = arith.addf %4, %5 : vector<34x32xf32>
    %c128 = arith.constant 128 : index
    %c0_6 = arith.constant 0 : index
    %7 = vector.load %arg1[%c128, %c0_6] : memref<904x128xf32, #tpu.memory_space<vmem>>, vector<34x34xf32>
    %c304 = arith.constant 304 : index
    %c0_7 = arith.constant 0 : index
    %8 = vector.load %arg1[%c304, %c0_7] : memref<904x128xf32, #tpu.memory_space<vmem>>, vector<7x32xf32>
    %9 = vector.extract_strided_slice %8 {offsets = [0, 0], sizes = [1, 32], strides = [1, 1]} : vector<7x32xf32> to vector<1x32xf32>
    %10 = vector.extract_strided_slice %8 {offsets = [1, 0], sizes = [1, 32], strides = [1, 1]} : vector<7x32xf32> to vector<1x32xf32>
    %11 = vector.extract_strided_slice %8 {offsets = [2, 0], sizes = [1, 32], strides = [1, 1]} : vector<7x32xf32> to vector<1x32xf32>
    %12 = vector.extract_strided_slice %8 {offsets = [3, 0], sizes = [1, 32], strides = [1, 1]} : vector<7x32xf32> to vector<1x32xf32>
    %13 = vector.extract_strided_slice %8 {offsets = [4, 0], sizes = [1, 32], strides = [1, 1]} : vector<7x32xf32> to vector<1x32xf32>
    %14 = vector.extract_strided_slice %8 {offsets = [5, 0], sizes = [1, 32], strides = [1, 1]} : vector<7x32xf32> to vector<1x32xf32>
    %15 = vector.extract_strided_slice %8 {offsets = [6, 0], sizes = [1, 32], strides = [1, 1]} : vector<7x32xf32> to vector<1x32xf32>
    %cst_8 = arith.constant dense<0.000000e+00> : vector<34xf32>
    %16 = vector.multi_reduction <add>, %6, %cst_8 [1] : vector<34x32xf32> to vector<34xf32>
    %17 = vector.shape_cast %16 : vector<34xf32> to vector<34x1xf32>
    %cst_9 = arith.constant 3.200000e+01 : f32
    %18 = vector.broadcast %cst_9 : f32 to vector<34x1xf32>
    %19 = arith.divf %17, %18 : vector<34x1xf32>
    %20 = vector.broadcast %19 : vector<34x1xf32> to vector<34x32xf32>
    %21 = arith.subf %6, %20 : vector<34x32xf32>
    %22 = arith.mulf %21, %21 : vector<34x32xf32>
    %cst_10 = arith.constant dense<0.000000e+00> : vector<34xf32>
    %23 = vector.multi_reduction <add>, %22, %cst_10 [1] : vector<34x32xf32> to vector<34xf32>
    %24 = vector.shape_cast %23 : vector<34xf32> to vector<34x1xf32>
    %cst_11 = arith.constant 3.200000e+01 : f32
    %25 = vector.broadcast %cst_11 : f32 to vector<34x1xf32>
    %26 = arith.divf %24, %25 : vector<34x1xf32>
    %27 = vector.broadcast %19 : vector<34x1xf32> to vector<34x32xf32>
    %28 = arith.subf %6, %27 : vector<34x32xf32>
    %cst_12 = arith.constant 9.99999974E-6 : f32
    %29 = vector.broadcast %cst_12 : f32 to vector<34x1xf32>
    %30 = arith.addf %26, %29 : vector<34x1xf32>
    %31 = math.rsqrt %30 : vector<34x1xf32>
    %32 = vector.broadcast %31 : vector<34x1xf32> to vector<34x32xf32>
    %33 = arith.mulf %28, %32 : vector<34x32xf32>
    %34 = vector.broadcast %9 : vector<1x32xf32> to vector<34x32xf32>
    %35 = arith.mulf %33, %34 : vector<34x32xf32>
    %36 = vector.broadcast %10 : vector<1x32xf32> to vector<34x32xf32>
    %37 = arith.addf %35, %36 : vector<34x32xf32>
    %c176 = arith.constant 176 : index
    %c0_13 = arith.constant 0 : index
    %38 = vector.load %arg1[%c176, %c0_13] : memref<904x128xf32, #tpu.memory_space<vmem>>, vector<32x96xf32>
    %cst_14 = arith.constant dense<0.000000e+00> : vector<34x96xf32>
    %39 = tpu.matmul %37, %38, %cst_14 {dimension_numbers = #tpu.dot_dimension_numbers<[1], [0], [0], [1], [0, 0, 1, 1], [], []>} : vector<34x32xf32>, vector<32x96xf32>, vector<34x96xf32> -> vector<34x96xf32>
    %c208 = arith.constant 208 : index
    %c0_15 = arith.constant 0 : index
    %40 = vector.load %arg1[%c208, %c0_15] : memref<904x128xf32, #tpu.memory_space<vmem>>, vector<32x32xf32>
    %cst_16 = arith.constant 0.000000e+00 : f32
    %41 = vector.broadcast %cst_16 : f32 to vector<34x32xf32>
    %42 = vector.extract_strided_slice %39 {offsets = [0, 0], sizes = [34, 8], strides = [1, 1]} : vector<34x96xf32> to vector<34x8xf32>
    %43 = vector.extract_strided_slice %39 {offsets = [0, 32], sizes = [34, 8], strides = [1, 1]} : vector<34x96xf32> to vector<34x8xf32>
    %44 = vector.extract_strided_slice %39 {offsets = [0, 64], sizes = [34, 8], strides = [1, 1]} : vector<34x96xf32> to vector<34x8xf32>
    %cst_17 = arith.constant dense<0.000000e+00> : vector<34x34xf32>
    %45 = tpu.matmul %42, %43, %cst_17 {dimension_numbers = #tpu.dot_dimension_numbers<[1], [1], [0], [0], [0, 0, 1, 0], [], []>} : vector<34x8xf32>, vector<34x8xf32>, vector<34x34xf32> -> vector<34x34xf32>
    %46 = arith.addf %45, %7 : vector<34x34xf32>
    %cst_18 = arith.constant dense<0xFF800000> : vector<34xf32>
    %47 = vector.multi_reduction <maximumf>, %46, %cst_18 [1] : vector<34x34xf32> to vector<34xf32>
    %48 = vector.shape_cast %47 : vector<34xf32> to vector<34x1xf32>
    %49 = vector.broadcast %48 : vector<34x1xf32> to vector<34x34xf32>
    %50 = arith.subf %46, %49 : vector<34x34xf32>
    %51 = math.exp %50 : vector<34x34xf32>
    %cst_19 = arith.constant dense<0.000000e+00> : vector<34xf32>
    %52 = vector.multi_reduction <add>, %51, %cst_19 [1] : vector<34x34xf32> to vector<34xf32>
    %53 = vector.shape_cast %52 : vector<34xf32> to vector<34x1xf32>
    %54 = tpu.reciprocal %53 {approx = true} : vector<34x1xf32> -> vector<34x1xf32>
    %55 = vector.broadcast %54 : vector<34x1xf32> to vector<34x34xf32>
    %56 = arith.mulf %51, %55 : vector<34x34xf32>
    %cst_20 = arith.constant dense<0.000000e+00> : vector<34x8xf32>
    %57 = tpu.matmul %56, %44, %cst_20 {dimension_numbers = #tpu.dot_dimension_numbers<[1], [0], [0], [1], [0, 0, 1, 1], [], []>} : vector<34x34xf32>, vector<34x8xf32>, vector<34x8xf32> -> vector<34x8xf32>
    %58 = vector.extract_strided_slice %40 {offsets = [0, 0], sizes = [8, 32], strides = [1, 1]} : vector<32x32xf32> to vector<8x32xf32>
    %cst_21 = arith.constant dense<0.000000e+00> : vector<34x32xf32>
    %59 = tpu.matmul %57, %58, %cst_21 {dimension_numbers = #tpu.dot_dimension_numbers<[1], [0], [0], [1], [0, 0, 1, 1], [], []>} : vector<34x8xf32>, vector<8x32xf32>, vector<34x32xf32> -> vector<34x32xf32>
    %60 = arith.addf %41, %59 : vector<34x32xf32>
    %61 = vector.extract_strided_slice %39 {offsets = [0, 8], sizes = [34, 8], strides = [1, 1]} : vector<34x96xf32> to vector<34x8xf32>
    %62 = vector.extract_strided_slice %39 {offsets = [0, 40], sizes = [34, 8], strides = [1, 1]} : vector<34x96xf32> to vector<34x8xf32>
    %63 = vector.extract_strided_slice %39 {offsets = [0, 72], sizes = [34, 8], strides = [1, 1]} : vector<34x96xf32> to vector<34x8xf32>
    %cst_22 = arith.constant dense<0.000000e+00> : vector<34x34xf32>
    %64 = tpu.matmul %61, %62, %cst_22 {dimension_numbers = #tpu.dot_dimension_numbers<[1], [1], [0], [0], [0, 0, 1, 0], [], []>} : vector<34x8xf32>, vector<34x8xf32>, vector<34x34xf32> -> vector<34x34xf32>
    %65 = arith.addf %64, %7 : vector<34x34xf32>
    %cst_23 = arith.constant dense<0xFF800000> : vector<34xf32>
    %66 = vector.multi_reduction <maximumf>, %65, %cst_23 [1] : vector<34x34xf32> to vector<34xf32>
    %67 = vector.shape_cast %66 : vector<34xf32> to vector<34x1xf32>
    %68 = vector.broadcast %67 : vector<34x1xf32> to vector<34x34xf32>
    %69 = arith.subf %65, %68 : vector<34x34xf32>
    %70 = math.exp %69 : vector<34x34xf32>
    %cst_24 = arith.constant dense<0.000000e+00> : vector<34xf32>
    %71 = vector.multi_reduction <add>, %70, %cst_24 [1] : vector<34x34xf32> to vector<34xf32>
    %72 = vector.shape_cast %71 : vector<34xf32> to vector<34x1xf32>
    %73 = tpu.reciprocal %72 {approx = true} : vector<34x1xf32> -> vector<34x1xf32>
    %74 = vector.broadcast %73 : vector<34x1xf32> to vector<34x34xf32>
    %75 = arith.mulf %70, %74 : vector<34x34xf32>
    %cst_25 = arith.constant dense<0.000000e+00> : vector<34x8xf32>
    %76 = tpu.matmul %75, %63, %cst_25 {dimension_numbers = #tpu.dot_dimension_numbers<[1], [0], [0], [1], [0, 0, 1, 1], [], []>} : vector<34x34xf32>, vector<34x8xf32>, vector<34x8xf32> -> vector<34x8xf32>
    %77 = vector.extract_strided_slice %40 {offsets = [8, 0], sizes = [8, 32], strides = [1, 1]} : vector<32x32xf32> to vector<8x32xf32>
    %cst_26 = arith.constant dense<0.000000e+00> : vector<34x32xf32>
    %78 = tpu.matmul %76, %77, %cst_26 {dimension_numbers = #tpu.dot_dimension_numbers<[1], [0], [0], [1], [0, 0, 1, 1], [], []>} : vector<34x8xf32>, vector<8x32xf32>, vector<34x32xf32> -> vector<34x32xf32>
    %79 = arith.addf %60, %78 : vector<34x32xf32>
    %80 = vector.extract_strided_slice %39 {offsets = [0, 16], sizes = [34, 8], strides = [1, 1]} : vector<34x96xf32> to vector<34x8xf32>
    %81 = vector.extract_strided_slice %39 {offsets = [0, 48], sizes = [34, 8], strides = [1, 1]} : vector<34x96xf32> to vector<34x8xf32>
    %82 = vector.extract_strided_slice %39 {offsets = [0, 80], sizes = [34, 8], strides = [1, 1]} : vector<34x96xf32> to vector<34x8xf32>
    %cst_27 = arith.constant dense<0.000000e+00> : vector<34x34xf32>
    %83 = tpu.matmul %80, %81, %cst_27 {dimension_numbers = #tpu.dot_dimension_numbers<[1], [1], [0], [0], [0, 0, 1, 0], [], []>} : vector<34x8xf32>, vector<34x8xf32>, vector<34x34xf32> -> vector<34x34xf32>
    %84 = arith.addf %83, %7 : vector<34x34xf32>
    %cst_28 = arith.constant dense<0xFF800000> : vector<34xf32>
    %85 = vector.multi_reduction <maximumf>, %84, %cst_28 [1] : vector<34x34xf32> to vector<34xf32>
    %86 = vector.shape_cast %85 : vector<34xf32> to vector<34x1xf32>
    %87 = vector.broadcast %86 : vector<34x1xf32> to vector<34x34xf32>
    %88 = arith.subf %84, %87 : vector<34x34xf32>
    %89 = math.exp %88 : vector<34x34xf32>
    %cst_29 = arith.constant dense<0.000000e+00> : vector<34xf32>
    %90 = vector.multi_reduction <add>, %89, %cst_29 [1] : vector<34x34xf32> to vector<34xf32>
    %91 = vector.shape_cast %90 : vector<34xf32> to vector<34x1xf32>
    %92 = tpu.reciprocal %91 {approx = true} : vector<34x1xf32> -> vector<34x1xf32>
    %93 = vector.broadcast %92 : vector<34x1xf32> to vector<34x34xf32>
    %94 = arith.mulf %89, %93 : vector<34x34xf32>
    %cst_30 = arith.constant dense<0.000000e+00> : vector<34x8xf32>
    %95 = tpu.matmul %94, %82, %cst_30 {dimension_numbers = #tpu.dot_dimension_numbers<[1], [0], [0], [1], [0, 0, 1, 1], [], []>} : vector<34x34xf32>, vector<34x8xf32>, vector<34x8xf32> -> vector<34x8xf32>
    %96 = vector.extract_strided_slice %40 {offsets = [16, 0], sizes = [8, 32], strides = [1, 1]} : vector<32x32xf32> to vector<8x32xf32>
    %cst_31 = arith.constant dense<0.000000e+00> : vector<34x32xf32>
    %97 = tpu.matmul %95, %96, %cst_31 {dimension_numbers = #tpu.dot_dimension_numbers<[1], [0], [0], [1], [0, 0, 1, 1], [], []>} : vector<34x8xf32>, vector<8x32xf32>, vector<34x32xf32> -> vector<34x32xf32>
    %98 = arith.addf %79, %97 : vector<34x32xf32>
    %99 = vector.extract_strided_slice %39 {offsets = [0, 24], sizes = [34, 8], strides = [1, 1]} : vector<34x96xf32> to vector<34x8xf32>
    %100 = vector.extract_strided_slice %39 {offsets = [0, 56], sizes = [34, 8], strides = [1, 1]} : vector<34x96xf32> to vector<34x8xf32>
    %101 = vector.extract_strided_slice %39 {offsets = [0, 88], sizes = [34, 8], strides = [1, 1]} : vector<34x96xf32> to vector<34x8xf32>
    %cst_32 = arith.constant dense<0.000000e+00> : vector<34x34xf32>
    %102 = tpu.matmul %99, %100, %cst_32 {dimension_numbers = #tpu.dot_dimension_numbers<[1], [1], [0], [0], [0, 0, 1, 0], [], []>} : vector<34x8xf32>, vector<34x8xf32>, vector<34x34xf32> -> vector<34x34xf32>
    %103 = arith.addf %102, %7 : vector<34x34xf32>
    %cst_33 = arith.constant dense<0xFF800000> : vector<34xf32>
    %104 = vector.multi_reduction <maximumf>, %103, %cst_33 [1] : vector<34x34xf32> to vector<34xf32>
    %105 = vector.shape_cast %104 : vector<34xf32> to vector<34x1xf32>
    %106 = vector.broadcast %105 : vector<34x1xf32> to vector<34x34xf32>
    %107 = arith.subf %103, %106 : vector<34x34xf32>
    %108 = math.exp %107 : vector<34x34xf32>
    %cst_34 = arith.constant dense<0.000000e+00> : vector<34xf32>
    %109 = vector.multi_reduction <add>, %108, %cst_34 [1] : vector<34x34xf32> to vector<34xf32>
    %110 = vector.shape_cast %109 : vector<34xf32> to vector<34x1xf32>
    %111 = tpu.reciprocal %110 {approx = true} : vector<34x1xf32> -> vector<34x1xf32>
    %112 = vector.broadcast %111 : vector<34x1xf32> to vector<34x34xf32>
    %113 = arith.mulf %108, %112 : vector<34x34xf32>
    %cst_35 = arith.constant dense<0.000000e+00> : vector<34x8xf32>
    %114 = tpu.matmul %113, %101, %cst_35 {dimension_numbers = #tpu.dot_dimension_numbers<[1], [0], [0], [1], [0, 0, 1, 1], [], []>} : vector<34x34xf32>, vector<34x8xf32>, vector<34x8xf32> -> vector<34x8xf32>
    %115 = vector.extract_strided_slice %40 {offsets = [24, 0], sizes = [8, 32], strides = [1, 1]} : vector<32x32xf32> to vector<8x32xf32>
    %cst_36 = arith.constant dense<0.000000e+00> : vector<34x32xf32>
    %116 = tpu.matmul %114, %115, %cst_36 {dimension_numbers = #tpu.dot_dimension_numbers<[1], [0], [0], [1], [0, 0, 1, 1], [], []>} : vector<34x8xf32>, vector<8x32xf32>, vector<34x32xf32> -> vector<34x32xf32>
    %117 = arith.addf %98, %116 : vector<34x32xf32>
    %118 = arith.addf %6, %117 : vector<34x32xf32>
    %119 = vector.broadcast %11 : vector<1x32xf32> to vector<34x32xf32>
    %120 = arith.addf %118, %119 : vector<34x32xf32>
    %cst_37 = arith.constant dense<0.000000e+00> : vector<34xf32>
    %121 = vector.multi_reduction <add>, %120, %cst_37 [1] : vector<34x32xf32> to vector<34xf32>
    %122 = vector.shape_cast %121 : vector<34xf32> to vector<34x1xf32>
    %cst_38 = arith.constant 3.200000e+01 : f32
    %123 = vector.broadcast %cst_38 : f32 to vector<34x1xf32>
    %124 = arith.divf %122, %123 : vector<34x1xf32>
    %125 = vector.broadcast %124 : vector<34x1xf32> to vector<34x32xf32>
    %126 = arith.subf %120, %125 : vector<34x32xf32>
    %127 = arith.mulf %126, %126 : vector<34x32xf32>
    %cst_39 = arith.constant dense<0.000000e+00> : vector<34xf32>
    %128 = vector.multi_reduction <add>, %127, %cst_39 [1] : vector<34x32xf32> to vector<34xf32>
    %129 = vector.shape_cast %128 : vector<34xf32> to vector<34x1xf32>
    %cst_40 = arith.constant 3.200000e+01 : f32
    %130 = vector.broadcast %cst_40 : f32 to vector<34x1xf32>
    %131 = arith.divf %129, %130 : vector<34x1xf32>
    %132 = vector.broadcast %124 : vector<34x1xf32> to vector<34x32xf32>
    %133 = arith.subf %120, %132 : vector<34x32xf32>
    %cst_41 = arith.constant 9.99999974E-6 : f32
    %134 = vector.broadcast %cst_41 : f32 to vector<34x1xf32>
    %135 = arith.addf %131, %134 : vector<34x1xf32>
    %136 = math.rsqrt %135 : vector<34x1xf32>
    %137 = vector.broadcast %136 : vector<34x1xf32> to vector<34x32xf32>
    %138 = arith.mulf %133, %137 : vector<34x32xf32>
    %139 = vector.broadcast %12 : vector<1x32xf32> to vector<34x32xf32>
    %140 = arith.mulf %138, %139 : vector<34x32xf32>
    %141 = vector.broadcast %13 : vector<1x32xf32> to vector<34x32xf32>
    %142 = arith.addf %140, %141 : vector<34x32xf32>
    %c240 = arith.constant 240 : index
    %c0_42 = arith.constant 0 : index
    %143 = vector.load %arg1[%c240, %c0_42] : memref<904x128xf32, #tpu.memory_space<vmem>>, vector<32x32xf32>
    %cst_43 = arith.constant dense<0.000000e+00> : vector<34x32xf32>
    %144 = tpu.matmul %142, %143, %cst_43 {dimension_numbers = #tpu.dot_dimension_numbers<[1], [0], [0], [1], [0, 0, 1, 1], [], []>} : vector<34x32xf32>, vector<32x32xf32>, vector<34x32xf32> -> vector<34x32xf32>
    %145 = vector.broadcast %14 : vector<1x32xf32> to vector<34x32xf32>
    %146 = arith.addf %144, %145 : vector<34x32xf32>
    %cst_44 = arith.constant 5.000000e-01 : f32
    %147 = vector.broadcast %cst_44 : f32 to vector<34x32xf32>
    %148 = arith.mulf %147, %146 : vector<34x32xf32>
    %cst_45 = arith.constant 1.41421354 : f32
    %149 = vector.broadcast %cst_45 : f32 to vector<34x32xf32>
    %150 = arith.divf %146, %149 : vector<34x32xf32>
    %cst_46 = arith.constant 0.000000e+00 : f32
    %151 = vector.broadcast %cst_46 : f32 to vector<34x32xf32>
    %152 = arith.cmpf oge, %150, %151 : vector<34x32xf32>
    %cst_47 = arith.constant 1.000000e+00 : f32
    %cst_48 = arith.constant -1.000000e+00 : f32
    %153 = vector.broadcast %cst_47 : f32 to vector<34x32xf32>
    %154 = vector.broadcast %cst_48 : f32 to vector<34x32xf32>
    %155 = arith.select %152, %153, %154 : vector<34x32xi1>, vector<34x32xf32>
    %156 = math.absf %150 : vector<34x32xf32>
    %cst_49 = arith.constant 0.327591091 : f32
    %157 = vector.broadcast %cst_49 : f32 to vector<34x32xf32>
    %158 = arith.mulf %157, %156 : vector<34x32xf32>
    %cst_50 = arith.constant 1.000000e+00 : f32
    %159 = vector.broadcast %cst_50 : f32 to vector<34x32xf32>
    %160 = arith.addf %159, %158 : vector<34x32xf32>
    %cst_51 = arith.constant 1.000000e+00 : f32
    %161 = vector.broadcast %cst_51 : f32 to vector<34x32xf32>
    %162 = arith.divf %161, %160 : vector<34x32xf32>
    %cst_52 = arith.constant 1.06140542 : f32
    %163 = vector.broadcast %cst_52 : f32 to vector<34x32xf32>
    %164 = arith.mulf %163, %162 : vector<34x32xf32>
    %cst_53 = arith.constant -1.45315206 : f32
    %165 = vector.broadcast %cst_53 : f32 to vector<34x32xf32>
    %166 = arith.addf %164, %165 : vector<34x32xf32>
    %167 = arith.mulf %166, %162 : vector<34x32xf32>
    %cst_54 = arith.constant 1.42141378 : f32
    %168 = vector.broadcast %cst_54 : f32 to vector<34x32xf32>
    %169 = arith.addf %167, %168 : vector<34x32xf32>
    %170 = arith.mulf %169, %162 : vector<34x32xf32>
    %cst_55 = arith.constant -0.284496725 : f32
    %171 = vector.broadcast %cst_55 : f32 to vector<34x32xf32>
    %172 = arith.addf %170, %171 : vector<34x32xf32>
    %173 = arith.mulf %172, %162 : vector<34x32xf32>
    %cst_56 = arith.constant 0.254829586 : f32
    %174 = vector.broadcast %cst_56 : f32 to vector<34x32xf32>
    %175 = arith.addf %173, %174 : vector<34x32xf32>
    %176 = arith.mulf %175, %162 : vector<34x32xf32>
    %cst_57 = arith.constant 0.000000e+00 : f32
    %177 = vector.broadcast %cst_57 : f32 to vector<34x32xf32>
    %178 = arith.subf %177, %156 : vector<34x32xf32>
    %179 = arith.mulf %178, %156 : vector<34x32xf32>
    %180 = math.exp %179 : vector<34x32xf32>
    %181 = arith.mulf %176, %180 : vector<34x32xf32>
    %cst_58 = arith.constant 1.000000e+00 : f32
    %182 = vector.broadcast %cst_58 : f32 to vector<34x32xf32>
    %183 = arith.subf %182, %181 : vector<34x32xf32>
    %184 = arith.mulf %155, %183 : vector<34x32xf32>
    %cst_59 = arith.constant 1.000000e+00 : f32
    %185 = vector.broadcast %cst_59 : f32 to vector<34x32xf32>
    %186 = arith.addf %185, %184 : vector<34x32xf32>
    %187 = arith.mulf %148, %186 : vector<34x32xf32>
    %c272 = arith.constant 272 : index
    %c0_60 = arith.constant 0 : index
    %188 = vector.load %arg1[%c272, %c0_60] : memref<904x128xf32, #tpu.memory_space<vmem>>, vector<32x32xf32>
    %cst_61 = arith.constant dense<0.000000e+00> : vector<34x32xf32>
    %189 = tpu.matmul %187, %188, %cst_61 {dimension_numbers = #tpu.dot_dimension_numbers<[1], [0], [0], [1], [0, 0, 1, 1], [], []>} : vector<34x32xf32>, vector<32x32xf32>, vector<34x32xf32> -> vector<34x32xf32>
    %190 = arith.addf %120, %189 : vector<34x32xf32>
    %191 = vector.broadcast %15 : vector<1x32xf32> to vector<34x32xf32>
    %192 = arith.addf %190, %191 : vector<34x32xf32>
    %c440 = arith.constant 440 : index
    %c0_62 = arith.constant 0 : index
    %193 = vector.load %arg1[%c440, %c0_62] : memref<904x128xf32, #tpu.memory_space<vmem>>, vector<7x32xf32>
    %194 = vector.extract_strided_slice %193 {offsets = [0, 0], sizes = [1, 32], strides = [1, 1]} : vector<7x32xf32> to vector<1x32xf32>
    %195 = vector.extract_strided_slice %193 {offsets = [1, 0], sizes = [1, 32], strides = [1, 1]} : vector<7x32xf32> to vector<1x32xf32>
    %196 = vector.extract_strided_slice %193 {offsets = [2, 0], sizes = [1, 32], strides = [1, 1]} : vector<7x32xf32> to vector<1x32xf32>
    %197 = vector.extract_strided_slice %193 {offsets = [3, 0], sizes = [1, 32], strides = [1, 1]} : vector<7x32xf32> to vector<1x32xf32>
    %198 = vector.extract_strided_slice %193 {offsets = [4, 0], sizes = [1, 32], strides = [1, 1]} : vector<7x32xf32> to vector<1x32xf32>
    %199 = vector.extract_strided_slice %193 {offsets = [5, 0], sizes = [1, 32], strides = [1, 1]} : vector<7x32xf32> to vector<1x32xf32>
    %200 = vector.extract_strided_slice %193 {offsets = [6, 0], sizes = [1, 32], strides = [1, 1]} : vector<7x32xf32> to vector<1x32xf32>
    %cst_63 = arith.constant dense<0.000000e+00> : vector<34xf32>
    %201 = vector.multi_reduction <add>, %192, %cst_63 [1] : vector<34x32xf32> to vector<34xf32>
    %202 = vector.shape_cast %201 : vector<34xf32> to vector<34x1xf32>
    %cst_64 = arith.constant 3.200000e+01 : f32
    %203 = vector.broadcast %cst_64 : f32 to vector<34x1xf32>
    %204 = arith.divf %202, %203 : vector<34x1xf32>
    %205 = vector.broadcast %204 : vector<34x1xf32> to vector<34x32xf32>
    %206 = arith.subf %192, %205 : vector<34x32xf32>
    %207 = arith.mulf %206, %206 : vector<34x32xf32>
    %cst_65 = arith.constant dense<0.000000e+00> : vector<34xf32>
    %208 = vector.multi_reduction <add>, %207, %cst_65 [1] : vector<34x32xf32> to vector<34xf32>
    %209 = vector.shape_cast %208 : vector<34xf32> to vector<34x1xf32>
    %cst_66 = arith.constant 3.200000e+01 : f32
    %210 = vector.broadcast %cst_66 : f32 to vector<34x1xf32>
    %211 = arith.divf %209, %210 : vector<34x1xf32>
    %212 = vector.broadcast %204 : vector<34x1xf32> to vector<34x32xf32>
    %213 = arith.subf %192, %212 : vector<34x32xf32>
    %cst_67 = arith.constant 9.99999974E-6 : f32
    %214 = vector.broadcast %cst_67 : f32 to vector<34x1xf32>
    %215 = arith.addf %211, %214 : vector<34x1xf32>
    %216 = math.rsqrt %215 : vector<34x1xf32>
    %217 = vector.broadcast %216 : vector<34x1xf32> to vector<34x32xf32>
    %218 = arith.mulf %213, %217 : vector<34x32xf32>
    %219 = vector.broadcast %194 : vector<1x32xf32> to vector<34x32xf32>
    %220 = arith.mulf %218, %219 : vector<34x32xf32>
    %221 = vector.broadcast %195 : vector<1x32xf32> to vector<34x32xf32>
    %222 = arith.addf %220, %221 : vector<34x32xf32>
    %c312 = arith.constant 312 : index
    %c0_68 = arith.constant 0 : index
    %223 = vector.load %arg1[%c312, %c0_68] : memref<904x128xf32, #tpu.memory_space<vmem>>, vector<32x96xf32>
    %cst_69 = arith.constant dense<0.000000e+00> : vector<34x96xf32>
    %224 = tpu.matmul %222, %223, %cst_69 {dimension_numbers = #tpu.dot_dimension_numbers<[1], [0], [0], [1], [0, 0, 1, 1], [], []>} : vector<34x32xf32>, vector<32x96xf32>, vector<34x96xf32> -> vector<34x96xf32>
    %c344 = arith.constant 344 : index
    %c0_70 = arith.constant 0 : index
    %225 = vector.load %arg1[%c344, %c0_70] : memref<904x128xf32, #tpu.memory_space<vmem>>, vector<32x32xf32>
    %cst_71 = arith.constant 0.000000e+00 : f32
    %226 = vector.broadcast %cst_71 : f32 to vector<34x32xf32>
    %227 = vector.extract_strided_slice %224 {offsets = [0, 0], sizes = [34, 8], strides = [1, 1]} : vector<34x96xf32> to vector<34x8xf32>
    %228 = vector.extract_strided_slice %224 {offsets = [0, 32], sizes = [34, 8], strides = [1, 1]} : vector<34x96xf32> to vector<34x8xf32>
    %229 = vector.extract_strided_slice %224 {offsets = [0, 64], sizes = [34, 8], strides = [1, 1]} : vector<34x96xf32> to vector<34x8xf32>
    %cst_72 = arith.constant dense<0.000000e+00> : vector<34x34xf32>
    %230 = tpu.matmul %227, %228, %cst_72 {dimension_numbers = #tpu.dot_dimension_numbers<[1], [1], [0], [0], [0, 0, 1, 0], [], []>} : vector<34x8xf32>, vector<34x8xf32>, vector<34x34xf32> -> vector<34x34xf32>
    %231 = arith.addf %230, %7 : vector<34x34xf32>
    %cst_73 = arith.constant dense<0xFF800000> : vector<34xf32>
    %232 = vector.multi_reduction <maximumf>, %231, %cst_73 [1] : vector<34x34xf32> to vector<34xf32>
    %233 = vector.shape_cast %232 : vector<34xf32> to vector<34x1xf32>
    %234 = vector.broadcast %233 : vector<34x1xf32> to vector<34x34xf32>
    %235 = arith.subf %231, %234 : vector<34x34xf32>
    %236 = math.exp %235 : vector<34x34xf32>
    %cst_74 = arith.constant dense<0.000000e+00> : vector<34xf32>
    %237 = vector.multi_reduction <add>, %236, %cst_74 [1] : vector<34x34xf32> to vector<34xf32>
    %238 = vector.shape_cast %237 : vector<34xf32> to vector<34x1xf32>
    %239 = tpu.reciprocal %238 {approx = true} : vector<34x1xf32> -> vector<34x1xf32>
    %240 = vector.broadcast %239 : vector<34x1xf32> to vector<34x34xf32>
    %241 = arith.mulf %236, %240 : vector<34x34xf32>
    %cst_75 = arith.constant dense<0.000000e+00> : vector<34x8xf32>
    %242 = tpu.matmul %241, %229, %cst_75 {dimension_numbers = #tpu.dot_dimension_numbers<[1], [0], [0], [1], [0, 0, 1, 1], [], []>} : vector<34x34xf32>, vector<34x8xf32>, vector<34x8xf32> -> vector<34x8xf32>
    %243 = vector.extract_strided_slice %225 {offsets = [0, 0], sizes = [8, 32], strides = [1, 1]} : vector<32x32xf32> to vector<8x32xf32>
    %cst_76 = arith.constant dense<0.000000e+00> : vector<34x32xf32>
    %244 = tpu.matmul %242, %243, %cst_76 {dimension_numbers = #tpu.dot_dimension_numbers<[1], [0], [0], [1], [0, 0, 1, 1], [], []>} : vector<34x8xf32>, vector<8x32xf32>, vector<34x32xf32> -> vector<34x32xf32>
    %245 = arith.addf %226, %244 : vector<34x32xf32>
    %246 = vector.extract_strided_slice %224 {offsets = [0, 8], sizes = [34, 8], strides = [1, 1]} : vector<34x96xf32> to vector<34x8xf32>
    %247 = vector.extract_strided_slice %224 {offsets = [0, 40], sizes = [34, 8], strides = [1, 1]} : vector<34x96xf32> to vector<34x8xf32>
    %248 = vector.extract_strided_slice %224 {offsets = [0, 72], sizes = [34, 8], strides = [1, 1]} : vector<34x96xf32> to vector<34x8xf32>
    %cst_77 = arith.constant dense<0.000000e+00> : vector<34x34xf32>
    %249 = tpu.matmul %246, %247, %cst_77 {dimension_numbers = #tpu.dot_dimension_numbers<[1], [1], [0], [0], [0, 0, 1, 0], [], []>} : vector<34x8xf32>, vector<34x8xf32>, vector<34x34xf32> -> vector<34x34xf32>
    %250 = arith.addf %249, %7 : vector<34x34xf32>
    %cst_78 = arith.constant dense<0xFF800000> : vector<34xf32>
    %251 = vector.multi_reduction <maximumf>, %250, %cst_78 [1] : vector<34x34xf32> to vector<34xf32>
    %252 = vector.shape_cast %251 : vector<34xf32> to vector<34x1xf32>
    %253 = vector.broadcast %252 : vector<34x1xf32> to vector<34x34xf32>
    %254 = arith.subf %250, %253 : vector<34x34xf32>
    %255 = math.exp %254 : vector<34x34xf32>
    %cst_79 = arith.constant dense<0.000000e+00> : vector<34xf32>
    %256 = vector.multi_reduction <add>, %255, %cst_79 [1] : vector<34x34xf32> to vector<34xf32>
    %257 = vector.shape_cast %256 : vector<34xf32> to vector<34x1xf32>
    %258 = tpu.reciprocal %257 {approx = true} : vector<34x1xf32> -> vector<34x1xf32>
    %259 = vector.broadcast %258 : vector<34x1xf32> to vector<34x34xf32>
    %260 = arith.mulf %255, %259 : vector<34x34xf32>
    %cst_80 = arith.constant dense<0.000000e+00> : vector<34x8xf32>
    %261 = tpu.matmul %260, %248, %cst_80 {dimension_numbers = #tpu.dot_dimension_numbers<[1], [0], [0], [1], [0, 0, 1, 1], [], []>} : vector<34x34xf32>, vector<34x8xf32>, vector<34x8xf32> -> vector<34x8xf32>
    %262 = vector.extract_strided_slice %225 {offsets = [8, 0], sizes = [8, 32], strides = [1, 1]} : vector<32x32xf32> to vector<8x32xf32>
    %cst_81 = arith.constant dense<0.000000e+00> : vector<34x32xf32>
    %263 = tpu.matmul %261, %262, %cst_81 {dimension_numbers = #tpu.dot_dimension_numbers<[1], [0], [0], [1], [0, 0, 1, 1], [], []>} : vector<34x8xf32>, vector<8x32xf32>, vector<34x32xf32> -> vector<34x32xf32>
    %264 = arith.addf %245, %263 : vector<34x32xf32>
    %265 = vector.extract_strided_slice %224 {offsets = [0, 16], sizes = [34, 8], strides = [1, 1]} : vector<34x96xf32> to vector<34x8xf32>
    %266 = vector.extract_strided_slice %224 {offsets = [0, 48], sizes = [34, 8], strides = [1, 1]} : vector<34x96xf32> to vector<34x8xf32>
    %267 = vector.extract_strided_slice %224 {offsets = [0, 80], sizes = [34, 8], strides = [1, 1]} : vector<34x96xf32> to vector<34x8xf32>
    %cst_82 = arith.constant dense<0.000000e+00> : vector<34x34xf32>
    %268 = tpu.matmul %265, %266, %cst_82 {dimension_numbers = #tpu.dot_dimension_numbers<[1], [1], [0], [0], [0, 0, 1, 0], [], []>} : vector<34x8xf32>, vector<34x8xf32>, vector<34x34xf32> -> vector<34x34xf32>
    %269 = arith.addf %268, %7 : vector<34x34xf32>
    %cst_83 = arith.constant dense<0xFF800000> : vector<34xf32>
    %270 = vector.multi_reduction <maximumf>, %269, %cst_83 [1] : vector<34x34xf32> to vector<34xf32>
    %271 = vector.shape_cast %270 : vector<34xf32> to vector<34x1xf32>
    %272 = vector.broadcast %271 : vector<34x1xf32> to vector<34x34xf32>
    %273 = arith.subf %269, %272 : vector<34x34xf32>
    %274 = math.exp %273 : vector<34x34xf32>
    %cst_84 = arith.constant dense<0.000000e+00> : vector<34xf32>
    %275 = vector.multi_reduction <add>, %274, %cst_84 [1] : vector<34x34xf32> to vector<34xf32>
    %276 = vector.shape_cast %275 : vector<34xf32> to vector<34x1xf32>
    %277 = tpu.reciprocal %276 {approx = true} : vector<34x1xf32> -> vector<34x1xf32>
    %278 = vector.broadcast %277 : vector<34x1xf32> to vector<34x34xf32>
    %279 = arith.mulf %274, %278 : vector<34x34xf32>
    %cst_85 = arith.constant dense<0.000000e+00> : vector<34x8xf32>
    %280 = tpu.matmul %279, %267, %cst_85 {dimension_numbers = #tpu.dot_dimension_numbers<[1], [0], [0], [1], [0, 0, 1, 1], [], []>} : vector<34x34xf32>, vector<34x8xf32>, vector<34x8xf32> -> vector<34x8xf32>
    %281 = vector.extract_strided_slice %225 {offsets = [16, 0], sizes = [8, 32], strides = [1, 1]} : vector<32x32xf32> to vector<8x32xf32>
    %cst_86 = arith.constant dense<0.000000e+00> : vector<34x32xf32>
    %282 = tpu.matmul %280, %281, %cst_86 {dimension_numbers = #tpu.dot_dimension_numbers<[1], [0], [0], [1], [0, 0, 1, 1], [], []>} : vector<34x8xf32>, vector<8x32xf32>, vector<34x32xf32> -> vector<34x32xf32>
    %283 = arith.addf %264, %282 : vector<34x32xf32>
    %284 = vector.extract_strided_slice %224 {offsets = [0, 24], sizes = [34, 8], strides = [1, 1]} : vector<34x96xf32> to vector<34x8xf32>
    %285 = vector.extract_strided_slice %224 {offsets = [0, 56], sizes = [34, 8], strides = [1, 1]} : vector<34x96xf32> to vector<34x8xf32>
    %286 = vector.extract_strided_slice %224 {offsets = [0, 88], sizes = [34, 8], strides = [1, 1]} : vector<34x96xf32> to vector<34x8xf32>
    %cst_87 = arith.constant dense<0.000000e+00> : vector<34x34xf32>
    %287 = tpu.matmul %284, %285, %cst_87 {dimension_numbers = #tpu.dot_dimension_numbers<[1], [1], [0], [0], [0, 0, 1, 0], [], []>} : vector<34x8xf32>, vector<34x8xf32>, vector<34x34xf32> -> vector<34x34xf32>
    %288 = arith.addf %287, %7 : vector<34x34xf32>
    %cst_88 = arith.constant dense<0xFF800000> : vector<34xf32>
    %289 = vector.multi_reduction <maximumf>, %288, %cst_88 [1] : vector<34x34xf32> to vector<34xf32>
    %290 = vector.shape_cast %289 : vector<34xf32> to vector<34x1xf32>
    %291 = vector.broadcast %290 : vector<34x1xf32> to vector<34x34xf32>
    %292 = arith.subf %288, %291 : vector<34x34xf32>
    %293 = math.exp %292 : vector<34x34xf32>
    %cst_89 = arith.constant dense<0.000000e+00> : vector<34xf32>
    %294 = vector.multi_reduction <add>, %293, %cst_89 [1] : vector<34x34xf32> to vector<34xf32>
    %295 = vector.shape_cast %294 : vector<34xf32> to vector<34x1xf32>
    %296 = tpu.reciprocal %295 {approx = true} : vector<34x1xf32> -> vector<34x1xf32>
    %297 = vector.broadcast %296 : vector<34x1xf32> to vector<34x34xf32>
    %298 = arith.mulf %293, %297 : vector<34x34xf32>
    %cst_90 = arith.constant dense<0.000000e+00> : vector<34x8xf32>
    %299 = tpu.matmul %298, %286, %cst_90 {dimension_numbers = #tpu.dot_dimension_numbers<[1], [0], [0], [1], [0, 0, 1, 1], [], []>} : vector<34x34xf32>, vector<34x8xf32>, vector<34x8xf32> -> vector<34x8xf32>
    %300 = vector.extract_strided_slice %225 {offsets = [24, 0], sizes = [8, 32], strides = [1, 1]} : vector<32x32xf32> to vector<8x32xf32>
    %cst_91 = arith.constant dense<0.000000e+00> : vector<34x32xf32>
    %301 = tpu.matmul %299, %300, %cst_91 {dimension_numbers = #tpu.dot_dimension_numbers<[1], [0], [0], [1], [0, 0, 1, 1], [], []>} : vector<34x8xf32>, vector<8x32xf32>, vector<34x32xf32> -> vector<34x32xf32>
    %302 = arith.addf %283, %301 : vector<34x32xf32>
    %303 = arith.addf %192, %302 : vector<34x32xf32>
    %304 = vector.broadcast %196 : vector<1x32xf32> to vector<34x32xf32>
    %305 = arith.addf %303, %304 : vector<34x32xf32>
    %cst_92 = arith.constant dense<0.000000e+00> : vector<34xf32>
    %306 = vector.multi_reduction <add>, %305, %cst_92 [1] : vector<34x32xf32> to vector<34xf32>
    %307 = vector.shape_cast %306 : vector<34xf32> to vector<34x1xf32>
    %cst_93 = arith.constant 3.200000e+01 : f32
    %308 = vector.broadcast %cst_93 : f32 to vector<34x1xf32>
    %309 = arith.divf %307, %308 : vector<34x1xf32>
    %310 = vector.broadcast %309 : vector<34x1xf32> to vector<34x32xf32>
    %311 = arith.subf %305, %310 : vector<34x32xf32>
    %312 = arith.mulf %311, %311 : vector<34x32xf32>
    %cst_94 = arith.constant dense<0.000000e+00> : vector<34xf32>
    %313 = vector.multi_reduction <add>, %312, %cst_94 [1] : vector<34x32xf32> to vector<34xf32>
    %314 = vector.shape_cast %313 : vector<34xf32> to vector<34x1xf32>
    %cst_95 = arith.constant 3.200000e+01 : f32
    %315 = vector.broadcast %cst_95 : f32 to vector<34x1xf32>
    %316 = arith.divf %314, %315 : vector<34x1xf32>
    %317 = vector.broadcast %309 : vector<34x1xf32> to vector<34x32xf32>
    %318 = arith.subf %305, %317 : vector<34x32xf32>
    %cst_96 = arith.constant 9.99999974E-6 : f32
    %319 = vector.broadcast %cst_96 : f32 to vector<34x1xf32>
    %320 = arith.addf %316, %319 : vector<34x1xf32>
    %321 = math.rsqrt %320 : vector<34x1xf32>
    %322 = vector.broadcast %321 : vector<34x1xf32> to vector<34x32xf32>
    %323 = arith.mulf %318, %322 : vector<34x32xf32>
    %324 = vector.broadcast %197 : vector<1x32xf32> to vector<34x32xf32>
    %325 = arith.mulf %323, %324 : vector<34x32xf32>
    %326 = vector.broadcast %198 : vector<1x32xf32> to vector<34x32xf32>
    %327 = arith.addf %325, %326 : vector<34x32xf32>
    %c376 = arith.constant 376 : index
    %c0_97 = arith.constant 0 : index
    %328 = vector.load %arg1[%c376, %c0_97] : memref<904x128xf32, #tpu.memory_space<vmem>>, vector<32x32xf32>
    %cst_98 = arith.constant dense<0.000000e+00> : vector<34x32xf32>
    %329 = tpu.matmul %327, %328, %cst_98 {dimension_numbers = #tpu.dot_dimension_numbers<[1], [0], [0], [1], [0, 0, 1, 1], [], []>} : vector<34x32xf32>, vector<32x32xf32>, vector<34x32xf32> -> vector<34x32xf32>
    %330 = vector.broadcast %199 : vector<1x32xf32> to vector<34x32xf32>
    %331 = arith.addf %329, %330 : vector<34x32xf32>
    %cst_99 = arith.constant 5.000000e-01 : f32
    %332 = vector.broadcast %cst_99 : f32 to vector<34x32xf32>
    %333 = arith.mulf %332, %331 : vector<34x32xf32>
    %cst_100 = arith.constant 1.41421354 : f32
    %334 = vector.broadcast %cst_100 : f32 to vector<34x32xf32>
    %335 = arith.divf %331, %334 : vector<34x32xf32>
    %cst_101 = arith.constant 0.000000e+00 : f32
    %336 = vector.broadcast %cst_101 : f32 to vector<34x32xf32>
    %337 = arith.cmpf oge, %335, %336 : vector<34x32xf32>
    %cst_102 = arith.constant 1.000000e+00 : f32
    %cst_103 = arith.constant -1.000000e+00 : f32
    %338 = vector.broadcast %cst_102 : f32 to vector<34x32xf32>
    %339 = vector.broadcast %cst_103 : f32 to vector<34x32xf32>
    %340 = arith.select %337, %338, %339 : vector<34x32xi1>, vector<34x32xf32>
    %341 = math.absf %335 : vector<34x32xf32>
    %cst_104 = arith.constant 0.327591091 : f32
    %342 = vector.broadcast %cst_104 : f32 to vector<34x32xf32>
    %343 = arith.mulf %342, %341 : vector<34x32xf32>
    %cst_105 = arith.constant 1.000000e+00 : f32
    %344 = vector.broadcast %cst_105 : f32 to vector<34x32xf32>
    %345 = arith.addf %344, %343 : vector<34x32xf32>
    %cst_106 = arith.constant 1.000000e+00 : f32
    %346 = vector.broadcast %cst_106 : f32 to vector<34x32xf32>
    %347 = arith.divf %346, %345 : vector<34x32xf32>
    %cst_107 = arith.constant 1.06140542 : f32
    %348 = vector.broadcast %cst_107 : f32 to vector<34x32xf32>
    %349 = arith.mulf %348, %347 : vector<34x32xf32>
    %cst_108 = arith.constant -1.45315206 : f32
    %350 = vector.broadcast %cst_108 : f32 to vector<34x32xf32>
    %351 = arith.addf %349, %350 : vector<34x32xf32>
    %352 = arith.mulf %351, %347 : vector<34x32xf32>
    %cst_109 = arith.constant 1.42141378 : f32
    %353 = vector.broadcast %cst_109 : f32 to vector<34x32xf32>
    %354 = arith.addf %352, %353 : vector<34x32xf32>
    %355 = arith.mulf %354, %347 : vector<34x32xf32>
    %cst_110 = arith.constant -0.284496725 : f32
    %356 = vector.broadcast %cst_110 : f32 to vector<34x32xf32>
    %357 = arith.addf %355, %356 : vector<34x32xf32>
    %358 = arith.mulf %357, %347 : vector<34x32xf32>
    %cst_111 = arith.constant 0.254829586 : f32
    %359 = vector.broadcast %cst_111 : f32 to vector<34x32xf32>
    %360 = arith.addf %358, %359 : vector<34x32xf32>
    %361 = arith.mulf %360, %347 : vector<34x32xf32>
    %cst_112 = arith.constant 0.000000e+00 : f32
    %362 = vector.broadcast %cst_112 : f32 to vector<34x32xf32>
    %363 = arith.subf %362, %341 : vector<34x32xf32>
    %364 = arith.mulf %363, %341 : vector<34x32xf32>
    %365 = math.exp %364 : vector<34x32xf32>
    %366 = arith.mulf %361, %365 : vector<34x32xf32>
    %cst_113 = arith.constant 1.000000e+00 : f32
    %367 = vector.broadcast %cst_113 : f32 to vector<34x32xf32>
    %368 = arith.subf %367, %366 : vector<34x32xf32>
    %369 = arith.mulf %340, %368 : vector<34x32xf32>
    %cst_114 = arith.constant 1.000000e+00 : f32
    %370 = vector.broadcast %cst_114 : f32 to vector<34x32xf32>
    %371 = arith.addf %370, %369 : vector<34x32xf32>
    %372 = arith.mulf %333, %371 : vector<34x32xf32>
    %c408 = arith.constant 408 : index
    %c0_115 = arith.constant 0 : index
    %373 = vector.load %arg1[%c408, %c0_115] : memref<904x128xf32, #tpu.memory_space<vmem>>, vector<32x32xf32>
    %cst_116 = arith.constant dense<0.000000e+00> : vector<34x32xf32>
    %374 = tpu.matmul %372, %373, %cst_116 {dimension_numbers = #tpu.dot_dimension_numbers<[1], [0], [0], [1], [0, 0, 1, 1], [], []>} : vector<34x32xf32>, vector<32x32xf32>, vector<34x32xf32> -> vector<34x32xf32>
    %375 = arith.addf %305, %374 : vector<34x32xf32>
    %376 = vector.broadcast %200 : vector<1x32xf32> to vector<34x32xf32>
    %377 = arith.addf %375, %376 : vector<34x32xf32>
    %c576 = arith.constant 576 : index
    %c0_117 = arith.constant 0 : index
    %378 = vector.load %arg1[%c576, %c0_117] : memref<904x128xf32, #tpu.memory_space<vmem>>, vector<7x32xf32>
    %379 = vector.extract_strided_slice %378 {offsets = [0, 0], sizes = [1, 32], strides = [1, 1]} : vector<7x32xf32> to vector<1x32xf32>
    %380 = vector.extract_strided_slice %378 {offsets = [1, 0], sizes = [1, 32], strides = [1, 1]} : vector<7x32xf32> to vector<1x32xf32>
    %381 = vector.extract_strided_slice %378 {offsets = [2, 0], sizes = [1, 32], strides = [1, 1]} : vector<7x32xf32> to vector<1x32xf32>
    %382 = vector.extract_strided_slice %378 {offsets = [3, 0], sizes = [1, 32], strides = [1, 1]} : vector<7x32xf32> to vector<1x32xf32>
    %383 = vector.extract_strided_slice %378 {offsets = [4, 0], sizes = [1, 32], strides = [1, 1]} : vector<7x32xf32> to vector<1x32xf32>
    %384 = vector.extract_strided_slice %378 {offsets = [5, 0], sizes = [1, 32], strides = [1, 1]} : vector<7x32xf32> to vector<1x32xf32>
    %385 = vector.extract_strided_slice %378 {offsets = [6, 0], sizes = [1, 32], strides = [1, 1]} : vector<7x32xf32> to vector<1x32xf32>
    %cst_118 = arith.constant dense<0.000000e+00> : vector<34xf32>
    %386 = vector.multi_reduction <add>, %377, %cst_118 [1] : vector<34x32xf32> to vector<34xf32>
    %387 = vector.shape_cast %386 : vector<34xf32> to vector<34x1xf32>
    %cst_119 = arith.constant 3.200000e+01 : f32
    %388 = vector.broadcast %cst_119 : f32 to vector<34x1xf32>
    %389 = arith.divf %387, %388 : vector<34x1xf32>
    %390 = vector.broadcast %389 : vector<34x1xf32> to vector<34x32xf32>
    %391 = arith.subf %377, %390 : vector<34x32xf32>
    %392 = arith.mulf %391, %391 : vector<34x32xf32>
    %cst_120 = arith.constant dense<0.000000e+00> : vector<34xf32>
    %393 = vector.multi_reduction <add>, %392, %cst_120 [1] : vector<34x32xf32> to vector<34xf32>
    %394 = vector.shape_cast %393 : vector<34xf32> to vector<34x1xf32>
    %cst_121 = arith.constant 3.200000e+01 : f32
    %395 = vector.broadcast %cst_121 : f32 to vector<34x1xf32>
    %396 = arith.divf %394, %395 : vector<34x1xf32>
    %397 = vector.broadcast %389 : vector<34x1xf32> to vector<34x32xf32>
    %398 = arith.subf %377, %397 : vector<34x32xf32>
    %cst_122 = arith.constant 9.99999974E-6 : f32
    %399 = vector.broadcast %cst_122 : f32 to vector<34x1xf32>
    %400 = arith.addf %396, %399 : vector<34x1xf32>
    %401 = math.rsqrt %400 : vector<34x1xf32>
    %402 = vector.broadcast %401 : vector<34x1xf32> to vector<34x32xf32>
    %403 = arith.mulf %398, %402 : vector<34x32xf32>
    %404 = vector.broadcast %379 : vector<1x32xf32> to vector<34x32xf32>
    %405 = arith.mulf %403, %404 : vector<34x32xf32>
    %406 = vector.broadcast %380 : vector<1x32xf32> to vector<34x32xf32>
    %407 = arith.addf %405, %406 : vector<34x32xf32>
    %c448 = arith.constant 448 : index
    %c0_123 = arith.constant 0 : index
    %408 = vector.load %arg1[%c448, %c0_123] : memref<904x128xf32, #tpu.memory_space<vmem>>, vector<32x96xf32>
    %cst_124 = arith.constant dense<0.000000e+00> : vector<34x96xf32>
    %409 = tpu.matmul %407, %408, %cst_124 {dimension_numbers = #tpu.dot_dimension_numbers<[1], [0], [0], [1], [0, 0, 1, 1], [], []>} : vector<34x32xf32>, vector<32x96xf32>, vector<34x96xf32> -> vector<34x96xf32>
    %c480 = arith.constant 480 : index
    %c0_125 = arith.constant 0 : index
    %410 = vector.load %arg1[%c480, %c0_125] : memref<904x128xf32, #tpu.memory_space<vmem>>, vector<32x32xf32>
    %cst_126 = arith.constant 0.000000e+00 : f32
    %411 = vector.broadcast %cst_126 : f32 to vector<34x32xf32>
    %412 = vector.extract_strided_slice %409 {offsets = [0, 0], sizes = [34, 8], strides = [1, 1]} : vector<34x96xf32> to vector<34x8xf32>
    %413 = vector.extract_strided_slice %409 {offsets = [0, 32], sizes = [34, 8], strides = [1, 1]} : vector<34x96xf32> to vector<34x8xf32>
    %414 = vector.extract_strided_slice %409 {offsets = [0, 64], sizes = [34, 8], strides = [1, 1]} : vector<34x96xf32> to vector<34x8xf32>
    %cst_127 = arith.constant dense<0.000000e+00> : vector<34x34xf32>
    %415 = tpu.matmul %412, %413, %cst_127 {dimension_numbers = #tpu.dot_dimension_numbers<[1], [1], [0], [0], [0, 0, 1, 0], [], []>} : vector<34x8xf32>, vector<34x8xf32>, vector<34x34xf32> -> vector<34x34xf32>
    %416 = arith.addf %415, %7 : vector<34x34xf32>
    %cst_128 = arith.constant dense<0xFF800000> : vector<34xf32>
    %417 = vector.multi_reduction <maximumf>, %416, %cst_128 [1] : vector<34x34xf32> to vector<34xf32>
    %418 = vector.shape_cast %417 : vector<34xf32> to vector<34x1xf32>
    %419 = vector.broadcast %418 : vector<34x1xf32> to vector<34x34xf32>
    %420 = arith.subf %416, %419 : vector<34x34xf32>
    %421 = math.exp %420 : vector<34x34xf32>
    %cst_129 = arith.constant dense<0.000000e+00> : vector<34xf32>
    %422 = vector.multi_reduction <add>, %421, %cst_129 [1] : vector<34x34xf32> to vector<34xf32>
    %423 = vector.shape_cast %422 : vector<34xf32> to vector<34x1xf32>
    %424 = tpu.reciprocal %423 {approx = true} : vector<34x1xf32> -> vector<34x1xf32>
    %425 = vector.broadcast %424 : vector<34x1xf32> to vector<34x34xf32>
    %426 = arith.mulf %421, %425 : vector<34x34xf32>
    %cst_130 = arith.constant dense<0.000000e+00> : vector<34x8xf32>
    %427 = tpu.matmul %426, %414, %cst_130 {dimension_numbers = #tpu.dot_dimension_numbers<[1], [0], [0], [1], [0, 0, 1, 1], [], []>} : vector<34x34xf32>, vector<34x8xf32>, vector<34x8xf32> -> vector<34x8xf32>
    %428 = vector.extract_strided_slice %410 {offsets = [0, 0], sizes = [8, 32], strides = [1, 1]} : vector<32x32xf32> to vector<8x32xf32>
    %cst_131 = arith.constant dense<0.000000e+00> : vector<34x32xf32>
    %429 = tpu.matmul %427, %428, %cst_131 {dimension_numbers = #tpu.dot_dimension_numbers<[1], [0], [0], [1], [0, 0, 1, 1], [], []>} : vector<34x8xf32>, vector<8x32xf32>, vector<34x32xf32> -> vector<34x32xf32>
    %430 = arith.addf %411, %429 : vector<34x32xf32>
    %431 = vector.extract_strided_slice %409 {offsets = [0, 8], sizes = [34, 8], strides = [1, 1]} : vector<34x96xf32> to vector<34x8xf32>
    %432 = vector.extract_strided_slice %409 {offsets = [0, 40], sizes = [34, 8], strides = [1, 1]} : vector<34x96xf32> to vector<34x8xf32>
    %433 = vector.extract_strided_slice %409 {offsets = [0, 72], sizes = [34, 8], strides = [1, 1]} : vector<34x96xf32> to vector<34x8xf32>
    %cst_132 = arith.constant dense<0.000000e+00> : vector<34x34xf32>
    %434 = tpu.matmul %431, %432, %cst_132 {dimension_numbers = #tpu.dot_dimension_numbers<[1], [1], [0], [0], [0, 0, 1, 0], [], []>} : vector<34x8xf32>, vector<34x8xf32>, vector<34x34xf32> -> vector<34x34xf32>
    %435 = arith.addf %434, %7 : vector<34x34xf32>
    %cst_133 = arith.constant dense<0xFF800000> : vector<34xf32>
    %436 = vector.multi_reduction <maximumf>, %435, %cst_133 [1] : vector<34x34xf32> to vector<34xf32>
    %437 = vector.shape_cast %436 : vector<34xf32> to vector<34x1xf32>
    %438 = vector.broadcast %437 : vector<34x1xf32> to vector<34x34xf32>
    %439 = arith.subf %435, %438 : vector<34x34xf32>
    %440 = math.exp %439 : vector<34x34xf32>
    %cst_134 = arith.constant dense<0.000000e+00> : vector<34xf32>
    %441 = vector.multi_reduction <add>, %440, %cst_134 [1] : vector<34x34xf32> to vector<34xf32>
    %442 = vector.shape_cast %441 : vector<34xf32> to vector<34x1xf32>
    %443 = tpu.reciprocal %442 {approx = true} : vector<34x1xf32> -> vector<34x1xf32>
    %444 = vector.broadcast %443 : vector<34x1xf32> to vector<34x34xf32>
    %445 = arith.mulf %440, %444 : vector<34x34xf32>
    %cst_135 = arith.constant dense<0.000000e+00> : vector<34x8xf32>
    %446 = tpu.matmul %445, %433, %cst_135 {dimension_numbers = #tpu.dot_dimension_numbers<[1], [0], [0], [1], [0, 0, 1, 1], [], []>} : vector<34x34xf32>, vector<34x8xf32>, vector<34x8xf32> -> vector<34x8xf32>
    %447 = vector.extract_strided_slice %410 {offsets = [8, 0], sizes = [8, 32], strides = [1, 1]} : vector<32x32xf32> to vector<8x32xf32>
    %cst_136 = arith.constant dense<0.000000e+00> : vector<34x32xf32>
    %448 = tpu.matmul %446, %447, %cst_136 {dimension_numbers = #tpu.dot_dimension_numbers<[1], [0], [0], [1], [0, 0, 1, 1], [], []>} : vector<34x8xf32>, vector<8x32xf32>, vector<34x32xf32> -> vector<34x32xf32>
    %449 = arith.addf %430, %448 : vector<34x32xf32>
    %450 = vector.extract_strided_slice %409 {offsets = [0, 16], sizes = [34, 8], strides = [1, 1]} : vector<34x96xf32> to vector<34x8xf32>
    %451 = vector.extract_strided_slice %409 {offsets = [0, 48], sizes = [34, 8], strides = [1, 1]} : vector<34x96xf32> to vector<34x8xf32>
    %452 = vector.extract_strided_slice %409 {offsets = [0, 80], sizes = [34, 8], strides = [1, 1]} : vector<34x96xf32> to vector<34x8xf32>
    %cst_137 = arith.constant dense<0.000000e+00> : vector<34x34xf32>
    %453 = tpu.matmul %450, %451, %cst_137 {dimension_numbers = #tpu.dot_dimension_numbers<[1], [1], [0], [0], [0, 0, 1, 0], [], []>} : vector<34x8xf32>, vector<34x8xf32>, vector<34x34xf32> -> vector<34x34xf32>
    %454 = arith.addf %453, %7 : vector<34x34xf32>
    %cst_138 = arith.constant dense<0xFF800000> : vector<34xf32>
    %455 = vector.multi_reduction <maximumf>, %454, %cst_138 [1] : vector<34x34xf32> to vector<34xf32>
    %456 = vector.shape_cast %455 : vector<34xf32> to vector<34x1xf32>
    %457 = vector.broadcast %456 : vector<34x1xf32> to vector<34x34xf32>
    %458 = arith.subf %454, %457 : vector<34x34xf32>
    %459 = math.exp %458 : vector<34x34xf32>
    %cst_139 = arith.constant dense<0.000000e+00> : vector<34xf32>
    %460 = vector.multi_reduction <add>, %459, %cst_139 [1] : vector<34x34xf32> to vector<34xf32>
    %461 = vector.shape_cast %460 : vector<34xf32> to vector<34x1xf32>
    %462 = tpu.reciprocal %461 {approx = true} : vector<34x1xf32> -> vector<34x1xf32>
    %463 = vector.broadcast %462 : vector<34x1xf32> to vector<34x34xf32>
    %464 = arith.mulf %459, %463 : vector<34x34xf32>
    %cst_140 = arith.constant dense<0.000000e+00> : vector<34x8xf32>
    %465 = tpu.matmul %464, %452, %cst_140 {dimension_numbers = #tpu.dot_dimension_numbers<[1], [0], [0], [1], [0, 0, 1, 1], [], []>} : vector<34x34xf32>, vector<34x8xf32>, vector<34x8xf32> -> vector<34x8xf32>
    %466 = vector.extract_strided_slice %410 {offsets = [16, 0], sizes = [8, 32], strides = [1, 1]} : vector<32x32xf32> to vector<8x32xf32>
    %cst_141 = arith.constant dense<0.000000e+00> : vector<34x32xf32>
    %467 = tpu.matmul %465, %466, %cst_141 {dimension_numbers = #tpu.dot_dimension_numbers<[1], [0], [0], [1], [0, 0, 1, 1], [], []>} : vector<34x8xf32>, vector<8x32xf32>, vector<34x32xf32> -> vector<34x32xf32>
    %468 = arith.addf %449, %467 : vector<34x32xf32>
    %469 = vector.extract_strided_slice %409 {offsets = [0, 24], sizes = [34, 8], strides = [1, 1]} : vector<34x96xf32> to vector<34x8xf32>
    %470 = vector.extract_strided_slice %409 {offsets = [0, 56], sizes = [34, 8], strides = [1, 1]} : vector<34x96xf32> to vector<34x8xf32>
    %471 = vector.extract_strided_slice %409 {offsets = [0, 88], sizes = [34, 8], strides = [1, 1]} : vector<34x96xf32> to vector<34x8xf32>
    %cst_142 = arith.constant dense<0.000000e+00> : vector<34x34xf32>
    %472 = tpu.matmul %469, %470, %cst_142 {dimension_numbers = #tpu.dot_dimension_numbers<[1], [1], [0], [0], [0, 0, 1, 0], [], []>} : vector<34x8xf32>, vector<34x8xf32>, vector<34x34xf32> -> vector<34x34xf32>
    %473 = arith.addf %472, %7 : vector<34x34xf32>
    %cst_143 = arith.constant dense<0xFF800000> : vector<34xf32>
    %474 = vector.multi_reduction <maximumf>, %473, %cst_143 [1] : vector<34x34xf32> to vector<34xf32>
    %475 = vector.shape_cast %474 : vector<34xf32> to vector<34x1xf32>
    %476 = vector.broadcast %475 : vector<34x1xf32> to vector<34x34xf32>
    %477 = arith.subf %473, %476 : vector<34x34xf32>
    %478 = math.exp %477 : vector<34x34xf32>
    %cst_144 = arith.constant dense<0.000000e+00> : vector<34xf32>
    %479 = vector.multi_reduction <add>, %478, %cst_144 [1] : vector<34x34xf32> to vector<34xf32>
    %480 = vector.shape_cast %479 : vector<34xf32> to vector<34x1xf32>
    %481 = tpu.reciprocal %480 {approx = true} : vector<34x1xf32> -> vector<34x1xf32>
    %482 = vector.broadcast %481 : vector<34x1xf32> to vector<34x34xf32>
    %483 = arith.mulf %478, %482 : vector<34x34xf32>
    %cst_145 = arith.constant dense<0.000000e+00> : vector<34x8xf32>
    %484 = tpu.matmul %483, %471, %cst_145 {dimension_numbers = #tpu.dot_dimension_numbers<[1], [0], [0], [1], [0, 0, 1, 1], [], []>} : vector<34x34xf32>, vector<34x8xf32>, vector<34x8xf32> -> vector<34x8xf32>
    %485 = vector.extract_strided_slice %410 {offsets = [24, 0], sizes = [8, 32], strides = [1, 1]} : vector<32x32xf32> to vector<8x32xf32>
    %cst_146 = arith.constant dense<0.000000e+00> : vector<34x32xf32>
    %486 = tpu.matmul %484, %485, %cst_146 {dimension_numbers = #tpu.dot_dimension_numbers<[1], [0], [0], [1], [0, 0, 1, 1], [], []>} : vector<34x8xf32>, vector<8x32xf32>, vector<34x32xf32> -> vector<34x32xf32>
    %487 = arith.addf %468, %486 : vector<34x32xf32>
    %488 = arith.addf %377, %487 : vector<34x32xf32>
    %489 = vector.broadcast %381 : vector<1x32xf32> to vector<34x32xf32>
    %490 = arith.addf %488, %489 : vector<34x32xf32>
    %cst_147 = arith.constant dense<0.000000e+00> : vector<34xf32>
    %491 = vector.multi_reduction <add>, %490, %cst_147 [1] : vector<34x32xf32> to vector<34xf32>
    %492 = vector.shape_cast %491 : vector<34xf32> to vector<34x1xf32>
    %cst_148 = arith.constant 3.200000e+01 : f32
    %493 = vector.broadcast %cst_148 : f32 to vector<34x1xf32>
    %494 = arith.divf %492, %493 : vector<34x1xf32>
    %495 = vector.broadcast %494 : vector<34x1xf32> to vector<34x32xf32>
    %496 = arith.subf %490, %495 : vector<34x32xf32>
    %497 = arith.mulf %496, %496 : vector<34x32xf32>
    %cst_149 = arith.constant dense<0.000000e+00> : vector<34xf32>
    %498 = vector.multi_reduction <add>, %497, %cst_149 [1] : vector<34x32xf32> to vector<34xf32>
    %499 = vector.shape_cast %498 : vector<34xf32> to vector<34x1xf32>
    %cst_150 = arith.constant 3.200000e+01 : f32
    %500 = vector.broadcast %cst_150 : f32 to vector<34x1xf32>
    %501 = arith.divf %499, %500 : vector<34x1xf32>
    %502 = vector.broadcast %494 : vector<34x1xf32> to vector<34x32xf32>
    %503 = arith.subf %490, %502 : vector<34x32xf32>
    %cst_151 = arith.constant 9.99999974E-6 : f32
    %504 = vector.broadcast %cst_151 : f32 to vector<34x1xf32>
    %505 = arith.addf %501, %504 : vector<34x1xf32>
    %506 = math.rsqrt %505 : vector<34x1xf32>
    %507 = vector.broadcast %506 : vector<34x1xf32> to vector<34x32xf32>
    %508 = arith.mulf %503, %507 : vector<34x32xf32>
    %509 = vector.broadcast %382 : vector<1x32xf32> to vector<34x32xf32>
    %510 = arith.mulf %508, %509 : vector<34x32xf32>
    %511 = vector.broadcast %383 : vector<1x32xf32> to vector<34x32xf32>
    %512 = arith.addf %510, %511 : vector<34x32xf32>
    %c512 = arith.constant 512 : index
    %c0_152 = arith.constant 0 : index
    %513 = vector.load %arg1[%c512, %c0_152] : memref<904x128xf32, #tpu.memory_space<vmem>>, vector<32x32xf32>
    %cst_153 = arith.constant dense<0.000000e+00> : vector<34x32xf32>
    %514 = tpu.matmul %512, %513, %cst_153 {dimension_numbers = #tpu.dot_dimension_numbers<[1], [0], [0], [1], [0, 0, 1, 1], [], []>} : vector<34x32xf32>, vector<32x32xf32>, vector<34x32xf32> -> vector<34x32xf32>
    %515 = vector.broadcast %384 : vector<1x32xf32> to vector<34x32xf32>
    %516 = arith.addf %514, %515 : vector<34x32xf32>
    %cst_154 = arith.constant 5.000000e-01 : f32
    %517 = vector.broadcast %cst_154 : f32 to vector<34x32xf32>
    %518 = arith.mulf %517, %516 : vector<34x32xf32>
    %cst_155 = arith.constant 1.41421354 : f32
    %519 = vector.broadcast %cst_155 : f32 to vector<34x32xf32>
    %520 = arith.divf %516, %519 : vector<34x32xf32>
    %cst_156 = arith.constant 0.000000e+00 : f32
    %521 = vector.broadcast %cst_156 : f32 to vector<34x32xf32>
    %522 = arith.cmpf oge, %520, %521 : vector<34x32xf32>
    %cst_157 = arith.constant 1.000000e+00 : f32
    %cst_158 = arith.constant -1.000000e+00 : f32
    %523 = vector.broadcast %cst_157 : f32 to vector<34x32xf32>
    %524 = vector.broadcast %cst_158 : f32 to vector<34x32xf32>
    %525 = arith.select %522, %523, %524 : vector<34x32xi1>, vector<34x32xf32>
    %526 = math.absf %520 : vector<34x32xf32>
    %cst_159 = arith.constant 0.327591091 : f32
    %527 = vector.broadcast %cst_159 : f32 to vector<34x32xf32>
    %528 = arith.mulf %527, %526 : vector<34x32xf32>
    %cst_160 = arith.constant 1.000000e+00 : f32
    %529 = vector.broadcast %cst_160 : f32 to vector<34x32xf32>
    %530 = arith.addf %529, %528 : vector<34x32xf32>
    %cst_161 = arith.constant 1.000000e+00 : f32
    %531 = vector.broadcast %cst_161 : f32 to vector<34x32xf32>
    %532 = arith.divf %531, %530 : vector<34x32xf32>
    %cst_162 = arith.constant 1.06140542 : f32
    %533 = vector.broadcast %cst_162 : f32 to vector<34x32xf32>
    %534 = arith.mulf %533, %532 : vector<34x32xf32>
    %cst_163 = arith.constant -1.45315206 : f32
    %535 = vector.broadcast %cst_163 : f32 to vector<34x32xf32>
    %536 = arith.addf %534, %535 : vector<34x32xf32>
    %537 = arith.mulf %536, %532 : vector<34x32xf32>
    %cst_164 = arith.constant 1.42141378 : f32
    %538 = vector.broadcast %cst_164 : f32 to vector<34x32xf32>
    %539 = arith.addf %537, %538 : vector<34x32xf32>
    %540 = arith.mulf %539, %532 : vector<34x32xf32>
    %cst_165 = arith.constant -0.284496725 : f32
    %541 = vector.broadcast %cst_165 : f32 to vector<34x32xf32>
    %542 = arith.addf %540, %541 : vector<34x32xf32>
    %543 = arith.mulf %542, %532 : vector<34x32xf32>
    %cst_166 = arith.constant 0.254829586 : f32
    %544 = vector.broadcast %cst_166 : f32 to vector<34x32xf32>
    %545 = arith.addf %543, %544 : vector<34x32xf32>
    %546 = arith.mulf %545, %532 : vector<34x32xf32>
    %cst_167 = arith.constant 0.000000e+00 : f32
    %547 = vector.broadcast %cst_167 : f32 to vector<34x32xf32>
    %548 = arith.subf %547, %526 : vector<34x32xf32>
    %549 = arith.mulf %548, %526 : vector<34x32xf32>
    %550 = math.exp %549 : vector<34x32xf32>
    %551 = arith.mulf %546, %550 : vector<34x32xf32>
    %cst_168 = arith.constant 1.000000e+00 : f32
    %552 = vector.broadcast %cst_168 : f32 to vector<34x32xf32>
    %553 = arith.subf %552, %551 : vector<34x32xf32>
    %554 = arith.mulf %525, %553 : vector<34x32xf32>
    %cst_169 = arith.constant 1.000000e+00 : f32
    %555 = vector.broadcast %cst_169 : f32 to vector<34x32xf32>
    %556 = arith.addf %555, %554 : vector<34x32xf32>
    %557 = arith.mulf %518, %556 : vector<34x32xf32>
    %c544 = arith.constant 544 : index
    %c0_170 = arith.constant 0 : index
    %558 = vector.load %arg1[%c544, %c0_170] : memref<904x128xf32, #tpu.memory_space<vmem>>, vector<32x32xf32>
    %cst_171 = arith.constant dense<0.000000e+00> : vector<34x32xf32>
    %559 = tpu.matmul %557, %558, %cst_171 {dimension_numbers = #tpu.dot_dimension_numbers<[1], [0], [0], [1], [0, 0, 1, 1], [], []>} : vector<34x32xf32>, vector<32x32xf32>, vector<34x32xf32> -> vector<34x32xf32>
    %560 = arith.addf %490, %559 : vector<34x32xf32>
    %561 = vector.broadcast %385 : vector<1x32xf32> to vector<34x32xf32>
    %562 = arith.addf %560, %561 : vector<34x32xf32>
    %c712 = arith.constant 712 : index
    %c0_172 = arith.constant 0 : index
    %563 = vector.load %arg1[%c712, %c0_172] : memref<904x128xf32, #tpu.memory_space<vmem>>, vector<7x32xf32>
    %564 = vector.extract_strided_slice %563 {offsets = [0, 0], sizes = [1, 32], strides = [1, 1]} : vector<7x32xf32> to vector<1x32xf32>
    %565 = vector.extract_strided_slice %563 {offsets = [1, 0], sizes = [1, 32], strides = [1, 1]} : vector<7x32xf32> to vector<1x32xf32>
    %566 = vector.extract_strided_slice %563 {offsets = [2, 0], sizes = [1, 32], strides = [1, 1]} : vector<7x32xf32> to vector<1x32xf32>
    %567 = vector.extract_strided_slice %563 {offsets = [3, 0], sizes = [1, 32], strides = [1, 1]} : vector<7x32xf32> to vector<1x32xf32>
    %568 = vector.extract_strided_slice %563 {offsets = [4, 0], sizes = [1, 32], strides = [1, 1]} : vector<7x32xf32> to vector<1x32xf32>
    %569 = vector.extract_strided_slice %563 {offsets = [5, 0], sizes = [1, 32], strides = [1, 1]} : vector<7x32xf32> to vector<1x32xf32>
    %570 = vector.extract_strided_slice %563 {offsets = [6, 0], sizes = [1, 32], strides = [1, 1]} : vector<7x32xf32> to vector<1x32xf32>
    %cst_173 = arith.constant dense<0.000000e+00> : vector<34xf32>
    %571 = vector.multi_reduction <add>, %562, %cst_173 [1] : vector<34x32xf32> to vector<34xf32>
    %572 = vector.shape_cast %571 : vector<34xf32> to vector<34x1xf32>
    %cst_174 = arith.constant 3.200000e+01 : f32
    %573 = vector.broadcast %cst_174 : f32 to vector<34x1xf32>
    %574 = arith.divf %572, %573 : vector<34x1xf32>
    %575 = vector.broadcast %574 : vector<34x1xf32> to vector<34x32xf32>
    %576 = arith.subf %562, %575 : vector<34x32xf32>
    %577 = arith.mulf %576, %576 : vector<34x32xf32>
    %cst_175 = arith.constant dense<0.000000e+00> : vector<34xf32>
    %578 = vector.multi_reduction <add>, %577, %cst_175 [1] : vector<34x32xf32> to vector<34xf32>
    %579 = vector.shape_cast %578 : vector<34xf32> to vector<34x1xf32>
    %cst_176 = arith.constant 3.200000e+01 : f32
    %580 = vector.broadcast %cst_176 : f32 to vector<34x1xf32>
    %581 = arith.divf %579, %580 : vector<34x1xf32>
    %582 = vector.broadcast %574 : vector<34x1xf32> to vector<34x32xf32>
    %583 = arith.subf %562, %582 : vector<34x32xf32>
    %cst_177 = arith.constant 9.99999974E-6 : f32
    %584 = vector.broadcast %cst_177 : f32 to vector<34x1xf32>
    %585 = arith.addf %581, %584 : vector<34x1xf32>
    %586 = math.rsqrt %585 : vector<34x1xf32>
    %587 = vector.broadcast %586 : vector<34x1xf32> to vector<34x32xf32>
    %588 = arith.mulf %583, %587 : vector<34x32xf32>
    %589 = vector.broadcast %564 : vector<1x32xf32> to vector<34x32xf32>
    %590 = arith.mulf %588, %589 : vector<34x32xf32>
    %591 = vector.broadcast %565 : vector<1x32xf32> to vector<34x32xf32>
    %592 = arith.addf %590, %591 : vector<34x32xf32>
    %c584 = arith.constant 584 : index
    %c0_178 = arith.constant 0 : index
    %593 = vector.load %arg1[%c584, %c0_178] : memref<904x128xf32, #tpu.memory_space<vmem>>, vector<32x96xf32>
    %cst_179 = arith.constant dense<0.000000e+00> : vector<34x96xf32>
    %594 = tpu.matmul %592, %593, %cst_179 {dimension_numbers = #tpu.dot_dimension_numbers<[1], [0], [0], [1], [0, 0, 1, 1], [], []>} : vector<34x32xf32>, vector<32x96xf32>, vector<34x96xf32> -> vector<34x96xf32>
    %c616 = arith.constant 616 : index
    %c0_180 = arith.constant 0 : index
    %595 = vector.load %arg1[%c616, %c0_180] : memref<904x128xf32, #tpu.memory_space<vmem>>, vector<32x32xf32>
    %cst_181 = arith.constant 0.000000e+00 : f32
    %596 = vector.broadcast %cst_181 : f32 to vector<34x32xf32>
    %597 = vector.extract_strided_slice %594 {offsets = [0, 0], sizes = [34, 8], strides = [1, 1]} : vector<34x96xf32> to vector<34x8xf32>
    %598 = vector.extract_strided_slice %594 {offsets = [0, 32], sizes = [34, 8], strides = [1, 1]} : vector<34x96xf32> to vector<34x8xf32>
    %599 = vector.extract_strided_slice %594 {offsets = [0, 64], sizes = [34, 8], strides = [1, 1]} : vector<34x96xf32> to vector<34x8xf32>
    %cst_182 = arith.constant dense<0.000000e+00> : vector<34x34xf32>
    %600 = tpu.matmul %597, %598, %cst_182 {dimension_numbers = #tpu.dot_dimension_numbers<[1], [1], [0], [0], [0, 0, 1, 0], [], []>} : vector<34x8xf32>, vector<34x8xf32>, vector<34x34xf32> -> vector<34x34xf32>
    %601 = arith.addf %600, %7 : vector<34x34xf32>
    %cst_183 = arith.constant dense<0xFF800000> : vector<34xf32>
    %602 = vector.multi_reduction <maximumf>, %601, %cst_183 [1] : vector<34x34xf32> to vector<34xf32>
    %603 = vector.shape_cast %602 : vector<34xf32> to vector<34x1xf32>
    %604 = vector.broadcast %603 : vector<34x1xf32> to vector<34x34xf32>
    %605 = arith.subf %601, %604 : vector<34x34xf32>
    %606 = math.exp %605 : vector<34x34xf32>
    %cst_184 = arith.constant dense<0.000000e+00> : vector<34xf32>
    %607 = vector.multi_reduction <add>, %606, %cst_184 [1] : vector<34x34xf32> to vector<34xf32>
    %608 = vector.shape_cast %607 : vector<34xf32> to vector<34x1xf32>
    %609 = tpu.reciprocal %608 {approx = true} : vector<34x1xf32> -> vector<34x1xf32>
    %610 = vector.broadcast %609 : vector<34x1xf32> to vector<34x34xf32>
    %611 = arith.mulf %606, %610 : vector<34x34xf32>
    %cst_185 = arith.constant dense<0.000000e+00> : vector<34x8xf32>
    %612 = tpu.matmul %611, %599, %cst_185 {dimension_numbers = #tpu.dot_dimension_numbers<[1], [0], [0], [1], [0, 0, 1, 1], [], []>} : vector<34x34xf32>, vector<34x8xf32>, vector<34x8xf32> -> vector<34x8xf32>
    %613 = vector.extract_strided_slice %595 {offsets = [0, 0], sizes = [8, 32], strides = [1, 1]} : vector<32x32xf32> to vector<8x32xf32>
    %cst_186 = arith.constant dense<0.000000e+00> : vector<34x32xf32>
    %614 = tpu.matmul %612, %613, %cst_186 {dimension_numbers = #tpu.dot_dimension_numbers<[1], [0], [0], [1], [0, 0, 1, 1], [], []>} : vector<34x8xf32>, vector<8x32xf32>, vector<34x32xf32> -> vector<34x32xf32>
    %615 = arith.addf %596, %614 : vector<34x32xf32>
    %616 = vector.extract_strided_slice %594 {offsets = [0, 8], sizes = [34, 8], strides = [1, 1]} : vector<34x96xf32> to vector<34x8xf32>
    %617 = vector.extract_strided_slice %594 {offsets = [0, 40], sizes = [34, 8], strides = [1, 1]} : vector<34x96xf32> to vector<34x8xf32>
    %618 = vector.extract_strided_slice %594 {offsets = [0, 72], sizes = [34, 8], strides = [1, 1]} : vector<34x96xf32> to vector<34x8xf32>
    %cst_187 = arith.constant dense<0.000000e+00> : vector<34x34xf32>
    %619 = tpu.matmul %616, %617, %cst_187 {dimension_numbers = #tpu.dot_dimension_numbers<[1], [1], [0], [0], [0, 0, 1, 0], [], []>} : vector<34x8xf32>, vector<34x8xf32>, vector<34x34xf32> -> vector<34x34xf32>
    %620 = arith.addf %619, %7 : vector<34x34xf32>
    %cst_188 = arith.constant dense<0xFF800000> : vector<34xf32>
    %621 = vector.multi_reduction <maximumf>, %620, %cst_188 [1] : vector<34x34xf32> to vector<34xf32>
    %622 = vector.shape_cast %621 : vector<34xf32> to vector<34x1xf32>
    %623 = vector.broadcast %622 : vector<34x1xf32> to vector<34x34xf32>
    %624 = arith.subf %620, %623 : vector<34x34xf32>
    %625 = math.exp %624 : vector<34x34xf32>
    %cst_189 = arith.constant dense<0.000000e+00> : vector<34xf32>
    %626 = vector.multi_reduction <add>, %625, %cst_189 [1] : vector<34x34xf32> to vector<34xf32>
    %627 = vector.shape_cast %626 : vector<34xf32> to vector<34x1xf32>
    %628 = tpu.reciprocal %627 {approx = true} : vector<34x1xf32> -> vector<34x1xf32>
    %629 = vector.broadcast %628 : vector<34x1xf32> to vector<34x34xf32>
    %630 = arith.mulf %625, %629 : vector<34x34xf32>
    %cst_190 = arith.constant dense<0.000000e+00> : vector<34x8xf32>
    %631 = tpu.matmul %630, %618, %cst_190 {dimension_numbers = #tpu.dot_dimension_numbers<[1], [0], [0], [1], [0, 0, 1, 1], [], []>} : vector<34x34xf32>, vector<34x8xf32>, vector<34x8xf32> -> vector<34x8xf32>
    %632 = vector.extract_strided_slice %595 {offsets = [8, 0], sizes = [8, 32], strides = [1, 1]} : vector<32x32xf32> to vector<8x32xf32>
    %cst_191 = arith.constant dense<0.000000e+00> : vector<34x32xf32>
    %633 = tpu.matmul %631, %632, %cst_191 {dimension_numbers = #tpu.dot_dimension_numbers<[1], [0], [0], [1], [0, 0, 1, 1], [], []>} : vector<34x8xf32>, vector<8x32xf32>, vector<34x32xf32> -> vector<34x32xf32>
    %634 = arith.addf %615, %633 : vector<34x32xf32>
    %635 = vector.extract_strided_slice %594 {offsets = [0, 16], sizes = [34, 8], strides = [1, 1]} : vector<34x96xf32> to vector<34x8xf32>
    %636 = vector.extract_strided_slice %594 {offsets = [0, 48], sizes = [34, 8], strides = [1, 1]} : vector<34x96xf32> to vector<34x8xf32>
    %637 = vector.extract_strided_slice %594 {offsets = [0, 80], sizes = [34, 8], strides = [1, 1]} : vector<34x96xf32> to vector<34x8xf32>
    %cst_192 = arith.constant dense<0.000000e+00> : vector<34x34xf32>
    %638 = tpu.matmul %635, %636, %cst_192 {dimension_numbers = #tpu.dot_dimension_numbers<[1], [1], [0], [0], [0, 0, 1, 0], [], []>} : vector<34x8xf32>, vector<34x8xf32>, vector<34x34xf32> -> vector<34x34xf32>
    %639 = arith.addf %638, %7 : vector<34x34xf32>
    %cst_193 = arith.constant dense<0xFF800000> : vector<34xf32>
    %640 = vector.multi_reduction <maximumf>, %639, %cst_193 [1] : vector<34x34xf32> to vector<34xf32>
    %641 = vector.shape_cast %640 : vector<34xf32> to vector<34x1xf32>
    %642 = vector.broadcast %641 : vector<34x1xf32> to vector<34x34xf32>
    %643 = arith.subf %639, %642 : vector<34x34xf32>
    %644 = math.exp %643 : vector<34x34xf32>
    %cst_194 = arith.constant dense<0.000000e+00> : vector<34xf32>
    %645 = vector.multi_reduction <add>, %644, %cst_194 [1] : vector<34x34xf32> to vector<34xf32>
    %646 = vector.shape_cast %645 : vector<34xf32> to vector<34x1xf32>
    %647 = tpu.reciprocal %646 {approx = true} : vector<34x1xf32> -> vector<34x1xf32>
    %648 = vector.broadcast %647 : vector<34x1xf32> to vector<34x34xf32>
    %649 = arith.mulf %644, %648 : vector<34x34xf32>
    %cst_195 = arith.constant dense<0.000000e+00> : vector<34x8xf32>
    %650 = tpu.matmul %649, %637, %cst_195 {dimension_numbers = #tpu.dot_dimension_numbers<[1], [0], [0], [1], [0, 0, 1, 1], [], []>} : vector<34x34xf32>, vector<34x8xf32>, vector<34x8xf32> -> vector<34x8xf32>
    %651 = vector.extract_strided_slice %595 {offsets = [16, 0], sizes = [8, 32], strides = [1, 1]} : vector<32x32xf32> to vector<8x32xf32>
    %cst_196 = arith.constant dense<0.000000e+00> : vector<34x32xf32>
    %652 = tpu.matmul %650, %651, %cst_196 {dimension_numbers = #tpu.dot_dimension_numbers<[1], [0], [0], [1], [0, 0, 1, 1], [], []>} : vector<34x8xf32>, vector<8x32xf32>, vector<34x32xf32> -> vector<34x32xf32>
    %653 = arith.addf %634, %652 : vector<34x32xf32>
    %654 = vector.extract_strided_slice %594 {offsets = [0, 24], sizes = [34, 8], strides = [1, 1]} : vector<34x96xf32> to vector<34x8xf32>
    %655 = vector.extract_strided_slice %594 {offsets = [0, 56], sizes = [34, 8], strides = [1, 1]} : vector<34x96xf32> to vector<34x8xf32>
    %656 = vector.extract_strided_slice %594 {offsets = [0, 88], sizes = [34, 8], strides = [1, 1]} : vector<34x96xf32> to vector<34x8xf32>
    %cst_197 = arith.constant dense<0.000000e+00> : vector<34x34xf32>
    %657 = tpu.matmul %654, %655, %cst_197 {dimension_numbers = #tpu.dot_dimension_numbers<[1], [1], [0], [0], [0, 0, 1, 0], [], []>} : vector<34x8xf32>, vector<34x8xf32>, vector<34x34xf32> -> vector<34x34xf32>
    %658 = arith.addf %657, %7 : vector<34x34xf32>
    %cst_198 = arith.constant dense<0xFF800000> : vector<34xf32>
    %659 = vector.multi_reduction <maximumf>, %658, %cst_198 [1] : vector<34x34xf32> to vector<34xf32>
    %660 = vector.shape_cast %659 : vector<34xf32> to vector<34x1xf32>
    %661 = vector.broadcast %660 : vector<34x1xf32> to vector<34x34xf32>
    %662 = arith.subf %658, %661 : vector<34x34xf32>
    %663 = math.exp %662 : vector<34x34xf32>
    %cst_199 = arith.constant dense<0.000000e+00> : vector<34xf32>
    %664 = vector.multi_reduction <add>, %663, %cst_199 [1] : vector<34x34xf32> to vector<34xf32>
    %665 = vector.shape_cast %664 : vector<34xf32> to vector<34x1xf32>
    %666 = tpu.reciprocal %665 {approx = true} : vector<34x1xf32> -> vector<34x1xf32>
    %667 = vector.broadcast %666 : vector<34x1xf32> to vector<34x34xf32>
    %668 = arith.mulf %663, %667 : vector<34x34xf32>
    %cst_200 = arith.constant dense<0.000000e+00> : vector<34x8xf32>
    %669 = tpu.matmul %668, %656, %cst_200 {dimension_numbers = #tpu.dot_dimension_numbers<[1], [0], [0], [1], [0, 0, 1, 1], [], []>} : vector<34x34xf32>, vector<34x8xf32>, vector<34x8xf32> -> vector<34x8xf32>
    %670 = vector.extract_strided_slice %595 {offsets = [24, 0], sizes = [8, 32], strides = [1, 1]} : vector<32x32xf32> to vector<8x32xf32>
    %cst_201 = arith.constant dense<0.000000e+00> : vector<34x32xf32>
    %671 = tpu.matmul %669, %670, %cst_201 {dimension_numbers = #tpu.dot_dimension_numbers<[1], [0], [0], [1], [0, 0, 1, 1], [], []>} : vector<34x8xf32>, vector<8x32xf32>, vector<34x32xf32> -> vector<34x32xf32>
    %672 = arith.addf %653, %671 : vector<34x32xf32>
    %673 = arith.addf %562, %672 : vector<34x32xf32>
    %674 = vector.broadcast %566 : vector<1x32xf32> to vector<34x32xf32>
    %675 = arith.addf %673, %674 : vector<34x32xf32>
    %cst_202 = arith.constant dense<0.000000e+00> : vector<34xf32>
    %676 = vector.multi_reduction <add>, %675, %cst_202 [1] : vector<34x32xf32> to vector<34xf32>
    %677 = vector.shape_cast %676 : vector<34xf32> to vector<34x1xf32>
    %cst_203 = arith.constant 3.200000e+01 : f32
    %678 = vector.broadcast %cst_203 : f32 to vector<34x1xf32>
    %679 = arith.divf %677, %678 : vector<34x1xf32>
    %680 = vector.broadcast %679 : vector<34x1xf32> to vector<34x32xf32>
    %681 = arith.subf %675, %680 : vector<34x32xf32>
    %682 = arith.mulf %681, %681 : vector<34x32xf32>
    %cst_204 = arith.constant dense<0.000000e+00> : vector<34xf32>
    %683 = vector.multi_reduction <add>, %682, %cst_204 [1] : vector<34x32xf32> to vector<34xf32>
    %684 = vector.shape_cast %683 : vector<34xf32> to vector<34x1xf32>
    %cst_205 = arith.constant 3.200000e+01 : f32
    %685 = vector.broadcast %cst_205 : f32 to vector<34x1xf32>
    %686 = arith.divf %684, %685 : vector<34x1xf32>
    %687 = vector.broadcast %679 : vector<34x1xf32> to vector<34x32xf32>
    %688 = arith.subf %675, %687 : vector<34x32xf32>
    %cst_206 = arith.constant 9.99999974E-6 : f32
    %689 = vector.broadcast %cst_206 : f32 to vector<34x1xf32>
    %690 = arith.addf %686, %689 : vector<34x1xf32>
    %691 = math.rsqrt %690 : vector<34x1xf32>
    %692 = vector.broadcast %691 : vector<34x1xf32> to vector<34x32xf32>
    %693 = arith.mulf %688, %692 : vector<34x32xf32>
    %694 = vector.broadcast %567 : vector<1x32xf32> to vector<34x32xf32>
    %695 = arith.mulf %693, %694 : vector<34x32xf32>
    %696 = vector.broadcast %568 : vector<1x32xf32> to vector<34x32xf32>
    %697 = arith.addf %695, %696 : vector<34x32xf32>
    %c648 = arith.constant 648 : index
    %c0_207 = arith.constant 0 : index
    %698 = vector.load %arg1[%c648, %c0_207] : memref<904x128xf32, #tpu.memory_space<vmem>>, vector<32x32xf32>
    %cst_208 = arith.constant dense<0.000000e+00> : vector<34x32xf32>
    %699 = tpu.matmul %697, %698, %cst_208 {dimension_numbers = #tpu.dot_dimension_numbers<[1], [0], [0], [1], [0, 0, 1, 1], [], []>} : vector<34x32xf32>, vector<32x32xf32>, vector<34x32xf32> -> vector<34x32xf32>
    %700 = vector.broadcast %569 : vector<1x32xf32> to vector<34x32xf32>
    %701 = arith.addf %699, %700 : vector<34x32xf32>
    %cst_209 = arith.constant 5.000000e-01 : f32
    %702 = vector.broadcast %cst_209 : f32 to vector<34x32xf32>
    %703 = arith.mulf %702, %701 : vector<34x32xf32>
    %cst_210 = arith.constant 1.41421354 : f32
    %704 = vector.broadcast %cst_210 : f32 to vector<34x32xf32>
    %705 = arith.divf %701, %704 : vector<34x32xf32>
    %cst_211 = arith.constant 0.000000e+00 : f32
    %706 = vector.broadcast %cst_211 : f32 to vector<34x32xf32>
    %707 = arith.cmpf oge, %705, %706 : vector<34x32xf32>
    %cst_212 = arith.constant 1.000000e+00 : f32
    %cst_213 = arith.constant -1.000000e+00 : f32
    %708 = vector.broadcast %cst_212 : f32 to vector<34x32xf32>
    %709 = vector.broadcast %cst_213 : f32 to vector<34x32xf32>
    %710 = arith.select %707, %708, %709 : vector<34x32xi1>, vector<34x32xf32>
    %711 = math.absf %705 : vector<34x32xf32>
    %cst_214 = arith.constant 0.327591091 : f32
    %712 = vector.broadcast %cst_214 : f32 to vector<34x32xf32>
    %713 = arith.mulf %712, %711 : vector<34x32xf32>
    %cst_215 = arith.constant 1.000000e+00 : f32
    %714 = vector.broadcast %cst_215 : f32 to vector<34x32xf32>
    %715 = arith.addf %714, %713 : vector<34x32xf32>
    %cst_216 = arith.constant 1.000000e+00 : f32
    %716 = vector.broadcast %cst_216 : f32 to vector<34x32xf32>
    %717 = arith.divf %716, %715 : vector<34x32xf32>
    %cst_217 = arith.constant 1.06140542 : f32
    %718 = vector.broadcast %cst_217 : f32 to vector<34x32xf32>
    %719 = arith.mulf %718, %717 : vector<34x32xf32>
    %cst_218 = arith.constant -1.45315206 : f32
    %720 = vector.broadcast %cst_218 : f32 to vector<34x32xf32>
    %721 = arith.addf %719, %720 : vector<34x32xf32>
    %722 = arith.mulf %721, %717 : vector<34x32xf32>
    %cst_219 = arith.constant 1.42141378 : f32
    %723 = vector.broadcast %cst_219 : f32 to vector<34x32xf32>
    %724 = arith.addf %722, %723 : vector<34x32xf32>
    %725 = arith.mulf %724, %717 : vector<34x32xf32>
    %cst_220 = arith.constant -0.284496725 : f32
    %726 = vector.broadcast %cst_220 : f32 to vector<34x32xf32>
    %727 = arith.addf %725, %726 : vector<34x32xf32>
    %728 = arith.mulf %727, %717 : vector<34x32xf32>
    %cst_221 = arith.constant 0.254829586 : f32
    %729 = vector.broadcast %cst_221 : f32 to vector<34x32xf32>
    %730 = arith.addf %728, %729 : vector<34x32xf32>
    %731 = arith.mulf %730, %717 : vector<34x32xf32>
    %cst_222 = arith.constant 0.000000e+00 : f32
    %732 = vector.broadcast %cst_222 : f32 to vector<34x32xf32>
    %733 = arith.subf %732, %711 : vector<34x32xf32>
    %734 = arith.mulf %733, %711 : vector<34x32xf32>
    %735 = math.exp %734 : vector<34x32xf32>
    %736 = arith.mulf %731, %735 : vector<34x32xf32>
    %cst_223 = arith.constant 1.000000e+00 : f32
    %737 = vector.broadcast %cst_223 : f32 to vector<34x32xf32>
    %738 = arith.subf %737, %736 : vector<34x32xf32>
    %739 = arith.mulf %710, %738 : vector<34x32xf32>
    %cst_224 = arith.constant 1.000000e+00 : f32
    %740 = vector.broadcast %cst_224 : f32 to vector<34x32xf32>
    %741 = arith.addf %740, %739 : vector<34x32xf32>
    %742 = arith.mulf %703, %741 : vector<34x32xf32>
    %c680 = arith.constant 680 : index
    %c0_225 = arith.constant 0 : index
    %743 = vector.load %arg1[%c680, %c0_225] : memref<904x128xf32, #tpu.memory_space<vmem>>, vector<32x32xf32>
    %cst_226 = arith.constant dense<0.000000e+00> : vector<34x32xf32>
    %744 = tpu.matmul %742, %743, %cst_226 {dimension_numbers = #tpu.dot_dimension_numbers<[1], [0], [0], [1], [0, 0, 1, 1], [], []>} : vector<34x32xf32>, vector<32x32xf32>, vector<34x32xf32> -> vector<34x32xf32>
    %745 = arith.addf %675, %744 : vector<34x32xf32>
    %746 = vector.broadcast %570 : vector<1x32xf32> to vector<34x32xf32>
    %747 = arith.addf %745, %746 : vector<34x32xf32>
    %c168 = arith.constant 168 : index
    %c0_227 = arith.constant 0 : index
    %748 = vector.load %arg1[%c168, %c0_227] : memref<904x128xf32, #tpu.memory_space<vmem>>, vector<2x34xf32>
    %cst_228 = arith.constant dense<0.000000e+00> : vector<2x32xf32>
    %749 = tpu.matmul %748, %747, %cst_228 {dimension_numbers = #tpu.dot_dimension_numbers<[1], [0], [0], [1], [0, 0, 1, 1], [], []>} : vector<2x34xf32>, vector<34x32xf32>, vector<2x32xf32> -> vector<2x32xf32>
    %c784 = arith.constant 784 : index
    %c0_229 = arith.constant 0 : index
    %750 = vector.load %arg1[%c784, %c0_229] : memref<904x128xf32, #tpu.memory_space<vmem>>, vector<2x32xf32>
    %c720 = arith.constant 720 : index
    %c0_230 = arith.constant 0 : index
    %751 = vector.load %arg1[%c720, %c0_230] : memref<904x128xf32, #tpu.memory_space<vmem>>, vector<32x32xf32>
    %cst_231 = arith.constant dense<0.000000e+00> : vector<2x32xf32>
    %752 = tpu.matmul %749, %751, %cst_231 {dimension_numbers = #tpu.dot_dimension_numbers<[1], [0], [0], [1], [0, 0, 1, 1], [], []>} : vector<2x32xf32>, vector<32x32xf32>, vector<2x32xf32> -> vector<2x32xf32>
    %753 = vector.extract_strided_slice %750 {offsets = [0, 0], sizes = [1, 32], strides = [1, 1]} : vector<2x32xf32> to vector<1x32xf32>
    %754 = vector.broadcast %753 : vector<1x32xf32> to vector<2x32xf32>
    %755 = arith.addf %752, %754 : vector<2x32xf32>
    %cst_232 = arith.constant 0.000000e+00 : f32
    %756 = vector.broadcast %cst_232 : f32 to vector<2x32xf32>
    %757 = arith.maximumf %755, %756 : vector<2x32xf32>
    %c752 = arith.constant 752 : index
    %c0_233 = arith.constant 0 : index
    %758 = vector.load %arg1[%c752, %c0_233] : memref<904x128xf32, #tpu.memory_space<vmem>>, vector<32x32xf32>
    %cst_234 = arith.constant dense<0.000000e+00> : vector<2x32xf32>
    %759 = tpu.matmul %757, %758, %cst_234 {dimension_numbers = #tpu.dot_dimension_numbers<[1], [0], [0], [1], [0, 0, 1, 1], [], []>} : vector<2x32xf32>, vector<32x32xf32>, vector<2x32xf32> -> vector<2x32xf32>
    %760 = vector.extract_strided_slice %750 {offsets = [1, 0], sizes = [1, 32], strides = [1, 1]} : vector<2x32xf32> to vector<1x32xf32>
    %761 = vector.broadcast %760 : vector<1x32xf32> to vector<2x32xf32>
    %762 = arith.addf %759, %761 : vector<2x32xf32>
    %c856 = arith.constant 856 : index
    %c0_235 = arith.constant 0 : index
    %763 = vector.load %arg1[%c856, %c0_235] : memref<904x128xf32, #tpu.memory_space<vmem>>, vector<2x32xf32>
    %c792 = arith.constant 792 : index
    %c0_236 = arith.constant 0 : index
    %764 = vector.load %arg1[%c792, %c0_236] : memref<904x128xf32, #tpu.memory_space<vmem>>, vector<32x32xf32>
    %cst_237 = arith.constant dense<0.000000e+00> : vector<2x32xf32>
    %765 = tpu.matmul %762, %764, %cst_237 {dimension_numbers = #tpu.dot_dimension_numbers<[1], [0], [0], [1], [0, 0, 1, 1], [], []>} : vector<2x32xf32>, vector<32x32xf32>, vector<2x32xf32> -> vector<2x32xf32>
    %766 = vector.extract_strided_slice %763 {offsets = [0, 0], sizes = [1, 32], strides = [1, 1]} : vector<2x32xf32> to vector<1x32xf32>
    %767 = vector.broadcast %766 : vector<1x32xf32> to vector<2x32xf32>
    %768 = arith.addf %765, %767 : vector<2x32xf32>
    %cst_238 = arith.constant 0.000000e+00 : f32
    %769 = vector.broadcast %cst_238 : f32 to vector<2x32xf32>
    %770 = arith.maximumf %768, %769 : vector<2x32xf32>
    %c824 = arith.constant 824 : index
    %c0_239 = arith.constant 0 : index
    %771 = vector.load %arg1[%c824, %c0_239] : memref<904x128xf32, #tpu.memory_space<vmem>>, vector<32x32xf32>
    %cst_240 = arith.constant dense<0.000000e+00> : vector<2x32xf32>
    %772 = tpu.matmul %770, %771, %cst_240 {dimension_numbers = #tpu.dot_dimension_numbers<[1], [0], [0], [1], [0, 0, 1, 1], [], []>} : vector<2x32xf32>, vector<32x32xf32>, vector<2x32xf32> -> vector<2x32xf32>
    %773 = vector.extract_strided_slice %763 {offsets = [1, 0], sizes = [1, 32], strides = [1, 1]} : vector<2x32xf32> to vector<1x32xf32>
    %774 = vector.broadcast %773 : vector<1x32xf32> to vector<2x32xf32>
    %775 = arith.addf %772, %774 : vector<2x32xf32>
    %c864 = arith.constant 864 : index
    %c0_241 = arith.constant 0 : index
    %776 = vector.load %arg1[%c864, %c0_241] : memref<904x128xf32, #tpu.memory_space<vmem>>, vector<32x16xf32>
    %cst_242 = arith.constant dense<0.000000e+00> : vector<2x16xf32>
    %777 = tpu.matmul %775, %776, %cst_242 {dimension_numbers = #tpu.dot_dimension_numbers<[1], [0], [0], [1], [0, 0, 1, 1], [], []>} : vector<2x32xf32>, vector<32x16xf32>, vector<2x16xf32> -> vector<2x16xf32>
    %c896 = arith.constant 896 : index
    %c0_243 = arith.constant 0 : index
    %778 = vector.load %arg1[%c896, %c0_243] : memref<904x128xf32, #tpu.memory_space<vmem>>, vector<1x16xf32>
    %779 = vector.broadcast %778 : vector<1x16xf32> to vector<2x16xf32>
    %780 = arith.addf %777, %779 : vector<2x16xf32>
    %c0_244 = arith.constant 0 : index
    %c0_245 = arith.constant 0 : index
    %781 = vector.load %arg2[%c0_244, %c0_245] : memref<2x16xf32, #tpu.memory_space<vmem>>, vector<2x16xf32>
    tpu.vector_store %arg2[%c0_244, %c0_245], %780 {strides = array<i32>} : memref<2x16xf32, #tpu.memory_space<vmem>>, vector<2x16xf32>,
    return
  }
}

</mosaic_0001>

<llo_original>
// kernel: fwd.1
$region0: #{fwd.1}
  #allocation0 [shape = 'u32[]', space=smem, size = 0x4, offset = 0x4, fixed_abs, tag = 'smem constant byte address 0x4 - core index']
  #allocation1 [shape = 'u32[144,128]{1,0:T(1,128)}', space=vmem, size = 0x12000, scoped, tag = 'internal scratch']
  %s0 = inlined_call_operand.vmem [shape: f32[32,48], index: 0, kind: input, shape index: {}]
  %s1 = inlined_call_operand.vmem [shape: f32[904,128], index: 1, kind: input, shape index: {}]
  %s2 = inlined_call_operand.hbm [shape: f32[2,16], index: 2, kind: output, shape index: {}]
  %s3 = sld [smem:[#allocation0]]
  $region18: #{fwd.1} parent=0
    _
  %s5 = ssub.s32 1, %s3
  %s6 = scalar_select 0, %s5, %s3
  $region1: #{fwd.1} parent=0
    #allocation2 [shape = 'u8[1024]{0}', space=vmem, size = 0x400, scoped, tag = 'output window, operand 0, single buffered']
    #allocation3 [shape = 's32[1]{0}', space=sflag, size = 0x4, scoped, tag = 'scoped memory for fwd.1']
    %7 = vsyncpa [#allocation3], 0
    // Predicated region
    $region2: #{fwd.1} parent=1 // pred_check
      _
    $region3: #{fwd.1} parent=1 // pred_check_branch
      %9 = sbr.rel (0) target = $region5
    $region4: #{fwd.1} parent=1 // pred_region
      _
    $region5: #{fwd.1} parent=1 // pred_fallthru
      _
    // Predicated region
    $region6: #{fwd.1} parent=1 // pred_check
      _
    $region7: #{fwd.1} parent=1 // pred_check_branch
      %11 = sbr.rel (0) target = $region9
    $region8: #{fwd.1} parent=1 // pred_region
      _
    $region9: #{fwd.1} parent=1 // pred_fallthru
      _
    %v12 = vld [vmem:[%s0] sm:$0xff]
    %v13 = vld [vmem:[%s0 + $0x8] sm:$0xff]
    %v14 = vld [vmem:[%s0 + $0x10] sm:$0xff]
    %v15 = vld [vmem:[%s0 + $0x18] sm:$0xff]
    %v16 = vld [vmem:[%s1] sm:$0xff]
    %v17 = vld [vmem:[%s1 + $0x8] sm:$0xff]
    %v18 = vld [vmem:[%s1 + $0x10] sm:$0xff]
    %v19 = vld [vmem:[%s1 + $0x18] sm:$0xff]
    %v20 = vld [vmem:[%s1 + $0x20] sm:$0xff]
    %v21 = vld [vmem:[%s1 + $0x28] sm:$0xff]
    %vm22 = vcmask 392192
    %v24 = vsel %vm22, %v12, 0
    %v27 = vsel %vm22, %v13, 0
    %v30 = vsel %vm22, %v14, 0
    %v33 = vsel %vm22, %v15, 0
    %35 = vmatprep.subr.mxu0 0.0
    %36 = vmatpush1.msra.mxu0 %v16
    %37 = vmatprep.subr.mxu0 0.0
    %38 = vmatpush1.msra.mxu0 %v17
    %39 = vmatprep.subr.mxu0 0.0
    %40 = vmatpush1.msra.mxu0 %v18
    %41 = vmatprep.subr.mxu0 0.0
    %42 = vmatpush1.msra.mxu0 %v19
    %43 = vmatprep.subr.mxu0 0.0
    %44 = vmatpush1.msra.mxu0 %v20
    %45 = vmatprep.subr.mxu0 0.0
    %46 = vmatpush1.msra.mxu0 %v21
    %47 = vmatprep.subr.mxu0 0.0
    %48 = vmatpush1.msra.mxu0 0.0
    %49 = vmatprep.subr.mxu0 0.0
    %50 = vmatpush1.msra.mxu0 0.0
    %51 = vmatprep.subr.mxu0 0.0
    %52 = vmatpush1.msra.mxu0 0.0
    %53 = vmatprep.subr.mxu0 0.0
    %54 = vmatpush1.msra.mxu0 0.0
    %55 = vmatprep.subr.mxu0 0.0
    %56 = vmatpush1.msra.mxu0 0.0
    %57 = vmatprep.subr.mxu0 0.0
    %58 = vmatpush1.msra.mxu0 0.0
    %59 = vmatprep.subr.mxu0 0.0
    %60 = vmatpush1.msra.mxu0 0.0
    %61 = vmatprep.subr.mxu0 0.0
    %62 = vmatpush1.msra.mxu0 0.0
    %63 = vmatprep.subr.mxu0 0.0
    %64 = vmatpush1.msra.mxu0 0.0
    %65 = vmatprep.subr.mxu0 0.0
    %66 = vmatpush1.msra.mxu0 0.0
    %67 = vmatprep.subr.mxu0 0.0
    %68 = vmatpush1.msra.mxu0 0.0
    %69 = vmatprep.subr.mxu0 0.0
    %70 = vmatpush1.msra.mxu0 0.0
    %71 = vmatprep.subr.mxu0 0.0
    %72 = vmatpush1.msra.mxu0 0.0
    %73 = vmatprep.subr.mxu0 0.0
    %74 = vmatpush1.msra.mxu0 0.0
    %75 = vmatprep.subr.mxu0 0.0
    %76 = vmatpush1.msra.mxu0 0.0
    %77 = vmatprep.subr.mxu0 0.0
    %78 = vmatpush1.msra.mxu0 0.0
    %79 = vmatprep.subr.mxu0 0.0
    %80 = vmatpush1.msra.mxu0 0.0
    %81 = vmatprep.subr.mxu0 0.0
    %82 = vmatpush1.msra.mxu0 0.0
    %83 = vmatprep.subr.mxu0 0.0
    %84 = vmatpush1.msra.mxu0 0.0
    %85 = vmatprep.subr.mxu0 0.0
    %86 = vmatpush1.msra.mxu0 0.0
    %87 = vmatprep.subr.mxu0 0.0
    %88 = vmatpush1.msra.mxu0 0.0
    %89 = vmatprep.subr.mxu0 0.0
    %90 = vmatpush1.msra.mxu0 0.0
    %91 = vmatprep.subr.mxu0 0.0
    %92 = vmatpush1.msra.mxu0 0.0
    %93 = vmatprep.subr.mxu0 0.0
    %94 = vmatpush1.msra.mxu0 0.0
    %95 = vmatprep.subr.mxu0 0.0
    %96 = vmatpush1.msra.mxu0 0.0
    %97 = vmatprep.subr.mxu0 0.0
    %98 = vmatpush1.msra.mxu0 0.0
    %99 = vmatprep.mubr.f32.mxu0 0.0
    %100 = vmatmul.mubr.f32.gmra.mrb[0].mxu0 %v24
    %v101 = vpop.f32.mrb[0].mxu0
    %v102 = vadd.f32 0.0, %v101
    %v103 = vpop.f32.mrb[0].mxu0
    %104 = vmatprep.mubr.f32.mxu0 0.0
    %105 = vmatmul.mubr.f32.gmra.mrb[0].mxu0 %v27
    %v106 = vpop.f32.mrb[0].mxu0
    %v107 = vadd.f32 0.0, %v106
    %v108 = vpop.f32.mrb[0].mxu0
    %109 = vmatprep.mubr.f32.mxu0 0.0
    %110 = vmatmul.mubr.f32.gmra.mrb[0].mxu0 %v30
    %v111 = vpop.f32.mrb[0].mxu0
    %v112 = vadd.f32 0.0, %v111
    %v113 = vpop.f32.mrb[0].mxu0
    %114 = vmatprep.mubr.f32.mxu0 0.0
    %115 = vmatmul.mubr.f32.gmra.mrb[0].mxu0 %v33
    %v116 = vpop.f32.mrb[0].mxu0
    %v117 = vadd.f32 0.0, %v116
    %v118 = vpop.f32.mrb[0].mxu0
    %119 = vdwg.mxu0
    %v120 = vld [vmem:[%s1 + $0x58] sm:$0xff]
    %v121 = vld [vmem:[%s1 + $0x60] sm:$0xff]
    %v122 = vld [vmem:[%s1 + $0x68] sm:$0xff]
    %v123 = vld [vmem:[%s1 + $0x70] sm:$0xff]
    %v124 = vld [vmem:[%s1 + $0x78] sm:$0x3]
    %v125 = vld [vmem:[%s1 + $0x30] sm:$0xff]
    %v126 = vld [vmem:[%s1 + $0x38] sm:$0xff]
    %v127 = vld [vmem:[%s1 + $0x40] sm:$0xff]
    %v128 = vld [vmem:[%s1 + $0x48] sm:$0xff]
    %v129 = vld [vmem:[%s1 + $0x50] sm:$0x3]
    %vm130 = vcmask 261120
    %v132 = vsel %vm130, %v120, 0
    %v135 = vsel %vm130, %v121, 0
    %v138 = vsel %vm130, %v122, 0
    %v141 = vsel %vm130, %v123, 0
    %v144 = vsel %vm130, %v124, 0
    %146 = vmatprep.subr.mxu0 0.0
    %147 = vmatpush1.msra.mxu0 %v102
    %148 = vmatprep.subr.mxu0 0.0
    %149 = vmatpush1.msra.mxu0 %v107
    %150 = vmatprep.subr.mxu0 0.0
    %151 = vmatpush1.msra.mxu0 %v112
    %152 = vmatprep.subr.mxu0 0.0
    %153 = vmatpush1.msra.mxu0 %v117
    %154 = vmatprep.subr.mxu0 0.0
    %155 = vmatpush1.msra.mxu0 0.0
    %156 = vmatprep.subr.mxu0 0.0
    %157 = vmatpush1.msra.mxu0 0.0
    %158 = vmatprep.subr.mxu0 0.0
    %159 = vmatpush1.msra.mxu0 0.0
    %160 = vmatprep.subr.mxu0 0.0
    %161 = vmatpush1.msra.mxu0 0.0
    %162 = vmatprep.subr.mxu0 0.0
    %163 = vmatpush1.msra.mxu0 0.0
    %164 = vmatprep.subr.mxu0 0.0
    %165 = vmatpush1.msra.mxu0 0.0
    %166 = vmatprep.subr.mxu0 0.0
    %167 = vmatpush1.msra.mxu0 0.0
    %168 = vmatprep.subr.mxu0 0.0
    %169 = vmatpush1.msra.mxu0 0.0
    %170 = vmatprep.subr.mxu0 0.0
    %171 = vmatpush1.msra.mxu0 0.0
    %172 = vmatprep.subr.mxu0 0.0
    %173 = vmatpush1.msra.mxu0 0.0
    %174 = vmatprep.subr.mxu0 0.0
    %175 = vmatpush1.msra.mxu0 0.0
    %176 = vmatprep.subr.mxu0 0.0
    %177 = vmatpush1.msra.mxu0 0.0
    %178 = vmatprep.subr.mxu0 0.0
    %179 = vmatpush1.msra.mxu0 0.0
    %180 = vmatprep.subr.mxu0 0.0
    %181 = vmatpush1.msra.mxu0 0.0
    %182 = vmatprep.subr.mxu0 0.0
    %183 = vmatpush1.msra.mxu0 0.0
    %184 = vmatprep.subr.mxu0 0.0
    %185 = vmatpush1.msra.mxu0 0.0
    %186 = vmatprep.subr.mxu0 0.0
    %187 = vmatpush1.msra.mxu0 0.0
    %188 = vmatprep.subr.mxu0 0.0
    %189 = vmatpush1.msra.mxu0 0.0
    %190 = vmatprep.subr.mxu0 0.0
    %191 = vmatpush1.msra.mxu0 0.0
    %192 = vmatprep.subr.mxu0 0.0
    %193 = vmatpush1.msra.mxu0 0.0
    %194 = vmatprep.subr.mxu0 0.0
    %195 = vmatpush1.msra.mxu0 0.0
    %196 = vmatprep.subr.mxu0 0.0
    %197 = vmatpush1.msra.mxu0 0.0
    %198 = vmatprep.subr.mxu0 0.0
    %199 = vmatpush1.msra.mxu0 0.0
    %200 = vmatprep.subr.mxu0 0.0
    %201 = vmatpush1.msra.mxu0 0.0
    %202 = vmatprep.subr.mxu0 0.0
    %203 = vmatpush1.msra.mxu0 0.0
    %204 = vmatprep.subr.mxu0 0.0
    %205 = vmatpush1.msra.mxu0 0.0
    %206 = vmatprep.subr.mxu0 0.0
    %207 = vmatpush1.msra.mxu0 0.0
    %208 = vmatprep.subr.mxu0 0.0
    %209 = vmatpush1.msra.mxu0 0.0
    %210 = vmatprep.mubr.f32.mxu0 0.0
    %211 = vmatmul.mubr.f32.gmra.mrb[0].mxu0 %v132
    %v212 = vpop.f32.mrb[0].mxu0
    %v213 = vadd.f32 %v125, %v212
    %v214 = vpop.f32.mrb[0].mxu0
    %215 = vmatprep.mubr.f32.mxu0 0.0
    %216 = vmatmul.mubr.f32.gmra.mrb[0].mxu0 %v135
    %v217 = vpop.f32.mrb[0].mxu0
    %v218 = vadd.f32 %v126, %v217
    %v219 = vpop.f32.mrb[0].mxu0
    %220 = vmatprep.mubr.f32.mxu0 0.0
    %221 = vmatmul.mubr.f32.gmra.mrb[0].mxu0 %v138
    %v222 = vpop.f32.mrb[0].mxu0
    %v223 = vadd.f32 %v127, %v222
    %v224 = vpop.f32.mrb[0].mxu0
    %225 = vmatprep.mubr.f32.mxu0 0.0
    %226 = vmatmul.mubr.f32.gmra.mrb[0].mxu0 %v141
    %v227 = vpop.f32.mrb[0].mxu0
    %v228 = vadd.f32 %v128, %v227
    %v229 = vpop.f32.mrb[0].mxu0
    %230 = vmatprep.mubr.f32.mxu0 0.0
    %231 = vmatmul.mubr.f32.gmra.mrb[0].mxu0 %v144
    %v232 = vpop.f32.mrb[0].mxu0
    %v233 = vadd.f32 %v129, %v232
    %v234 = vpop.f32.mrb[0].mxu0
    %235 = vdwg.mxu0
    %v236 = vld [vmem:[%s1 + $0x80] sm:$0xff]
    %v237 = vld [vmem:[%s1 + $0x88] sm:$0xff]
    %v238 = vld [vmem:[%s1 + $0x90] sm:$0xff]
    %v239 = vld [vmem:[%s1 + $0x98] sm:$0xff]
    %v240 = vld [vmem:[%s1 + $0xa0] sm:$0x3]
    %v241 = vld [vmem:[%s1 + $0x130] sm:$0x7f]
    %v242 = vsel %vm130, %v213, 0.0
    %243 = vadd.xlane.f32.xlu0 %v242
    %v244 = vpop.xlane.xlu0 %243
    %v245 = vsel %vm130, %v218, 0.0
    %246 = vadd.xlane.f32.xlu0 %v245
    %v247 = vpop.xlane.xlu0 %246
    %v248 = vsel %vm130, %v223, 0.0
    %249 = vadd.xlane.f32.xlu0 %v248
    %v250 = vpop.xlane.xlu0 %249
    %v251 = vsel %vm130, %v228, 0.0
    %252 = vadd.xlane.f32.xlu0 %v251
    %v253 = vpop.xlane.xlu0 %252
    %vm254 = vcmask 254976
    %v255 = vsel %vm254, %v233, 0.0
    %256 = vadd.xlane.f32.xlu0 %v255
    %v257 = vpop.xlane.xlu0 %256
    %v258 = vrcp.pop 32.0
    %v259 = vmul.f32 %v244, %v258
    %v260 = vmul.f32 %v247, %v258
    %v261 = vmul.f32 %v250, %v258
    %v262 = vmul.f32 %v253, %v258
    %v263 = vmul.f32 %v257, %v258
    %v264 = vsub.f32 %v213, %v259
    %v265 = vsub.f32 %v218, %v260
    %v266 = vsub.f32 %v223, %v261
    %v267 = vsub.f32 %v228, %v262
    %v268 = vsub.f32 %v233, %v263
    %v269 = vmul.f32 %v264, %v264
    %v270 = vmul.f32 %v265, %v265
    %v271 = vmul.f32 %v266, %v266
    %v272 = vmul.f32 %v267, %v267
    %v273 = vmul.f32 %v268, %v268
    %v274 = vsel %vm130, %v269, 0.0
    %275 = vadd.xlane.f32.xlu0 %v274
    %v276 = vpop.xlane.xlu0 %275
    %v277 = vsel %vm130, %v270, 0.0
    %278 = vadd.xlane.f32.xlu0 %v277
    %v279 = vpop.xlane.xlu0 %278
    %v280 = vsel %vm130, %v271, 0.0
    %281 = vadd.xlane.f32.xlu0 %v280
    %v282 = vpop.xlane.xlu0 %281
    %v283 = vsel %vm130, %v272, 0.0
    %284 = vadd.xlane.f32.xlu0 %v283
    %v285 = vpop.xlane.xlu0 %284
    %v286 = vsel %vm254, %v273, 0.0
    %287 = vadd.xlane.f32.xlu0 %v286
    %v288 = vpop.xlane.xlu0 %287
    %v289 = vmul.f32 %v276, %v258
    %v290 = vmul.f32 %v279, %v258
    %v291 = vmul.f32 %v282, %v258
    %v292 = vmul.f32 %v285, %v258
    %v293 = vmul.f32 %v288, %v258
    %v294 = vadd.f32 %v289, 1e-05
    %v295 = vadd.f32 %v290, 1e-05
    %v296 = vadd.f32 %v291, 1e-05
    %v297 = vadd.f32 %v292, 1e-05
    %v298 = vadd.f32 %v293, 1e-05
    %v299 = vrsqrt.pop %v294
    %v300 = vrsqrt.pop %v295
    %v301 = vrsqrt.pop %v296
    %v302 = vrsqrt.pop %v297
    %v303 = vrsqrt.pop %v298
    %v304 = vmul.f32 %v264, %v299
    %v305 = vmul.f32 %v265, %v300
    %v306 = vmul.f32 %v266, %v301
    %v307 = vmul.f32 %v267, %v302
    %v308 = vmul.f32 %v268, %v303
    %v309 = vlaneseq
    %v310 = vshrl.u32 %v309, 7
    %v311 = vsub.s32 0, %v310
    %v312 = vrot.slane %v241, %v311
    %v313 = vmul.f32 %v304, %v312
    %v314 = vmul.f32 %v305, %v312
    %v315 = vmul.f32 %v306, %v312
    %v316 = vmul.f32 %v307, %v312
    %v317 = vmul.f32 %v308, %v312
    %v318 = vlaneseq
    %v319 = vshrl.u32 %v318, 7
    %v320 = vsub.s32 1, %v319
    %v321 = vrot.slane %v241, %v320
    %v322 = vadd.f32 %v313, %v321
    %v323 = vadd.f32 %v314, %v321
    %v324 = vadd.f32 %v315, %v321
    %v325 = vadd.f32 %v316, %v321
    %v326 = vadd.f32 %v317, %v321
    %v327 = vld [vmem:[%s1 + $0xb0] sm:$0xff]
    %v328 = vld [vmem:[%s1 + $0xb8] sm:$0xff]
    %v329 = vld [vmem:[%s1 + $0xc0] sm:$0xff]
    %v330 = vld [vmem:[%s1 + $0xc8] sm:$0xff]
    %v332 = vsel %vm130, %v322, 0
    %v335 = vsel %vm130, %v323, 0
    %v338 = vsel %vm130, %v324, 0
    %v341 = vsel %vm130, %v325, 0
    %v344 = vsel %vm130, %v326, 0
    %346 = vmatprep.subr.mxu0 0.0
    %347 = vmatpush1.msra.mxu0 %v327
    %348 = vmatprep.subr.mxu0 0.0
    %349 = vmatpush1.msra.mxu0 %v328
    %350 = vmatprep.subr.mxu0 0.0
    %351 = vmatpush1.msra.mxu0 %v329
    %352 = vmatprep.subr.mxu0 0.0
    %353 = vmatpush1.msra.mxu0 %v330
    %354 = vmatprep.subr.mxu0 0.0
    %355 = vmatpush1.msra.mxu0 0.0
    %356 = vmatprep.subr.mxu0 0.0
    %357 = vmatpush1.msra.mxu0 0.0
    %358 = vmatprep.subr.mxu0 0.0
    %359 = vmatpush1.msra.mxu0 0.0
    %360 = vmatprep.subr.mxu0 0.0
    %361 = vmatpush1.msra.mxu0 0.0
    %362 = vmatprep.subr.mxu0 0.0
    %363 = vmatpush1.msra.mxu0 0.0
    %364 = vmatprep.subr.mxu0 0.0
    %365 = vmatpush1.msra.mxu0 0.0
    %366 = vmatprep.subr.mxu0 0.0
    %367 = vmatpush1.msra.mxu0 0.0
    %368 = vmatprep.subr.mxu0 0.0
    %369 = vmatpush1.msra.mxu0 0.0
    %370 = vmatprep.subr.mxu0 0.0
    %371 = vmatpush1.msra.mxu0 0.0
    %372 = vmatprep.subr.mxu0 0.0
    %373 = vmatpush1.msra.mxu0 0.0
    %374 = vmatprep.subr.mxu0 0.0
    %375 = vmatpush1.msra.mxu0 0.0
    %376 = vmatprep.subr.mxu0 0.0
    %377 = vmatpush1.msra.mxu0 0.0
    %378 = vmatprep.subr.mxu0 0.0
    %379 = vmatpush1.msra.mxu0 0.0
    %380 = vmatprep.subr.mxu0 0.0
    %381 = vmatpush1.msra.mxu0 0.0
    %382 = vmatprep.subr.mxu0 0.0
    %383 = vmatpush1.msra.mxu0 0.0
    %384 = vmatprep.subr.mxu0 0.0
    %385 = vmatpush1.msra.mxu0 0.0
    %386 = vmatprep.subr.mxu0 0.0
    %387 = vmatpush1.msra.mxu0 0.0
    %388 = vmatprep.subr.mxu0 0.0
    %389 = vmatpush1.msra.mxu0 0.0
    %390 = vmatprep.subr.mxu0 0.0
    %391 = vmatpush1.msra.mxu0 0.0
    %392 = vmatprep.subr.mxu0 0.0
    %393 = vmatpush1.msra.mxu0 0.0
    %394 = vmatprep.subr.mxu0 0.0
    %395 = vmatpush1.msra.mxu0 0.0
    %396 = vmatprep.subr.mxu0 0.0
    %397 = vmatpush1.msra.mxu0 0.0
    %398 = vmatprep.subr.mxu0 0.0
    %399 = vmatpush1.msra.mxu0 0.0
    %400 = vmatprep.subr.mxu0 0.0
    %401 = vmatpush1.msra.mxu0 0.0
    %402 = vmatprep.subr.mxu0 0.0
    %403 = vmatpush1.msra.mxu0 0.0
    %404 = vmatprep.subr.mxu0 0.0
    %405 = vmatpush1.msra.mxu0 0.0
    %406 = vmatprep.subr.mxu0 0.0
    %407 = vmatpush1.msra.mxu0 0.0
    %408 = vmatprep.subr.mxu0 0.0
    %409 = vmatpush1.msra.mxu0 0.0
    %410 = vmatprep.mubr.f32.mxu0 0.0
    %411 = vmatmul.mubr.f32.gmra.mrb[0].mxu0 %v332
    %v412 = vpop.f32.mrb[0].mxu0
    %v413 = vadd.f32 0.0, %v412
    %v414 = vpop.f32.mrb[0].mxu0
    %415 = vmatprep.mubr.f32.mxu0 0.0
    %416 = vmatmul.mubr.f32.gmra.mrb[0].mxu0 %v335
    %v417 = vpop.f32.mrb[0].mxu0
    %v418 = vadd.f32 0.0, %v417
    %v419 = vpop.f32.mrb[0].mxu0
    %420 = vmatprep.mubr.f32.mxu0 0.0
    %421 = vmatmul.mubr.f32.gmra.mrb[0].mxu0 %v338
    %v422 = vpop.f32.mrb[0].mxu0
    %v423 = vadd.f32 0.0, %v422
    %v424 = vpop.f32.mrb[0].mxu0
    %425 = vmatprep.mubr.f32.mxu0 0.0
    %426 = vmatmul.mubr.f32.gmra.mrb[0].mxu0 %v341
    %v427 = vpop.f32.mrb[0].mxu0
    %v428 = vadd.f32 0.0, %v427
    %v429 = vpop.f32.mrb[0].mxu0
    %430 = vmatprep.mubr.f32.mxu0 0.0
    %431 = vmatmul.mubr.f32.gmra.mrb[0].mxu0 %v344
    %v432 = vpop.f32.mrb[0].mxu0
    %v433 = vadd.f32 0.0, %v432
    %v434 = vpop.f32.mrb[0].mxu0
    %435 = vdwg.mxu0
    %v436 = vld [vmem:[%s1 + $0xd0] sm:$0xff]
    %v437 = vld [vmem:[%s1 + $0xd8] sm:$0xff]
    %v438 = vld [vmem:[%s1 + $0xe0] sm:$0xff]
    %v439 = vld [vmem:[%s1 + $0xe8] sm:$0xff]
    %445 = vrot.lane.b32.xlu0 %v413, 96
    %v446 = vpop.permute.xlu0 %445
    %447 = vrot.lane.b32.xlu0 %v418, 96
    %v448 = vpop.permute.xlu0 %447
    %449 = vrot.lane.b32.xlu0 %v423, 96
    %v450 = vpop.permute.xlu0 %449
    %451 = vrot.lane.b32.xlu0 %v428, 96
    %v452 = vpop.permute.xlu0 %451
    %453 = vrot.lane.b32.xlu0 %v433, 96
    %v454 = vpop.permute.xlu0 %453
    %vm455 = vcmask 64512
    %v456 = vsel %vm455, %v413, 0
    %v458 = vsel %vm455, %v418, 0
    %v460 = vsel %vm455, %v423, 0
    %v462 = vsel %vm455, %v428, 0
    %v464 = vsel %vm455, %v433, 0
    %v466 = vsel %vm455, %v446, 0
    %v468 = vsel %vm455, %v448, 0
    %v470 = vsel %vm455, %v450, 0
    %v472 = vsel %vm455, %v452, 0
    %v474 = vsel %vm455, %v454, 0
    %476 = vmatprep.subr.mxu0 0.0
    %477 = vmatpush1.xpose.msra.mxu0 %v466
    %478 = vmatprep.subr.mxu0 0.0
    %479 = vmatpush1.xpose.msra.mxu0 %v468
    %480 = vmatprep.subr.mxu0 0.0
    %481 = vmatpush1.xpose.msra.mxu0 %v470
    %482 = vmatprep.subr.mxu0 0.0
    %483 = vmatpush1.xpose.msra.mxu0 %v472
    %484 = vmatprep.subr.mxu0 0.0
    %485 = vmatpush1.xpose.msra.mxu0 %v474
    %486 = vmatprep.subr.mxu0 0.0
    %487 = vmatpush1.xpose.msra.mxu0 0.0
    %488 = vmatprep.subr.mxu0 0.0
    %489 = vmatpush1.xpose.msra.mxu0 0.0
    %490 = vmatprep.subr.mxu0 0.0
    %491 = vmatpush1.xpose.msra.mxu0 0.0
    %492 = vmatprep.subr.mxu0 0.0
    %493 = vmatpush1.xpose.msra.mxu0 0.0
    %494 = vmatprep.subr.mxu0 0.0
    %495 = vmatpush1.xpose.msra.mxu0 0.0
    %496 = vmatprep.subr.mxu0 0.0
    %497 = vmatpush1.xpose.msra.mxu0 0.0
    %498 = vmatprep.subr.mxu0 0.0
    %499 = vmatpush1.xpose.msra.mxu0 0.0
    %500 = vmatprep.subr.mxu0 0.0
    %501 = vmatpush1.xpose.msra.mxu0 0.0
    %502 = vmatprep.subr.mxu0 0.0
    %503 = vmatpush1.xpose.msra.mxu0 0.0
    %504 = vmatprep.subr.mxu0 0.0
    %505 = vmatpush1.xpose.msra.mxu0 0.0
    %506 = vmatprep.subr.mxu0 0.0
    %507 = vmatpush1.xpose.msra.mxu0 0.0
    %508 = vmatprep.subr.mxu0 0.0
    %509 = vmatpush1.xpose.msra.mxu0 0.0
    %510 = vmatprep.subr.mxu0 0.0
    %511 = vmatpush1.xpose.msra.mxu0 0.0
    %512 = vmatprep.subr.mxu0 0.0
    %513 = vmatpush1.xpose.msra.mxu0 0.0
    %514 = vmatprep.subr.mxu0 0.0
    %515 = vmatpush1.xpose.msra.mxu0 0.0
    %516 = vmatprep.subr.mxu0 0.0
    %517 = vmatpush1.xpose.msra.mxu0 0.0
    %518 = vmatprep.subr.mxu0 0.0
    %519 = vmatpush1.xpose.msra.mxu0 0.0
    %520 = vmatprep.subr.mxu0 0.0
    %521 = vmatpush1.xpose.msra.mxu0 0.0
    %522 = vmatprep.subr.mxu0 0.0
    %523 = vmatpush1.xpose.msra.mxu0 0.0
    %524 = vmatprep.subr.mxu0 0.0
    %525 = vmatpush1.xpose.msra.mxu0 0.0
    %526 = vmatprep.subr.mxu0 0.0
    %527 = vmatpush1.xpose.msra.mxu0 0.0
    %528 = vmatprep.subr.mxu0 0.0
    %529 = vmatpush1.xpose.msra.mxu0 0.0
    %530 = vmatprep.subr.mxu0 0.0
    %531 = vmatpush1.xpose.msra.mxu0 0.0
    %532 = vmatprep.subr.mxu0 0.0
    %533 = vmatpush1.xpose.msra.mxu0 0.0
    %534 = vmatprep.subr.mxu0 0.0
    %535 = vmatpush1.xpose.msra.mxu0 0.0
    %536 = vmatprep.subr.mxu0 0.0
    %537 = vmatpush1.xpose.msra.mxu0 0.0
    %538 = vmatprep.subr.mxu0 0.0
    %539 = vmatpush1.xpose.msra.mxu0 0.0
    %540 = vmatprep.mubr.f32.mxu0 0.0
    %541 = vmatmul.mubr.f32.gmra.mrb[0].mxu0 %v456
    %v542 = vpop.f32.mrb[0].mxu0
    %v543 = vadd.f32 %v236, %v542
    %v544 = vpop.f32.mrb[0].mxu0
    %545 = vmatprep.mubr.f32.mxu0 0.0
    %546 = vmatmul.mubr.f32.gmra.mrb[0].mxu0 %v458
    %v547 = vpop.f32.mrb[0].mxu0
    %v548 = vadd.f32 %v237, %v547
    %v549 = vpop.f32.mrb[0].mxu0
    %550 = vmatprep.mubr.f32.mxu0 0.0
    %551 = vmatmul.mubr.f32.gmra.mrb[0].mxu0 %v460
    %v552 = vpop.f32.mrb[0].mxu0
    %v553 = vadd.f32 %v238, %v552
    %v554 = vpop.f32.mrb[0].mxu0
    %555 = vmatprep.mubr.f32.mxu0 0.0
    %556 = vmatmul.mubr.f32.gmra.mrb[0].mxu0 %v462
    %v557 = vpop.f32.mrb[0].mxu0
    %v558 = vadd.f32 %v239, %v557
    %v559 = vpop.f32.mrb[0].mxu0
    %560 = vmatprep.mubr.f32.mxu0 0.0
    %561 = vmatmul.mubr.f32.gmra.mrb[0].mxu0 %v464
    %v562 = vpop.f32.mrb[0].mxu0
    %v563 = vadd.f32 %v240, %v562
    %v564 = vpop.f32.mrb[0].mxu0
    %565 = vdwg.mxu0
    %vm566 = vcmask 277504
    %v567 = vsel %vm566, %v543, -inf
    %568 = vmax.xlane.f32.xlu0 %v567
    %v569 = vpop.xlane.xlu0 %568
    %v570 = vsel %vm566, %v548, -inf
    %571 = vmax.xlane.f32.xlu0 %v570
    %v572 = vpop.xlane.xlu0 %571
    %v573 = vsel %vm566, %v553, -inf
    %574 = vmax.xlane.f32.xlu0 %v573
    %v575 = vpop.xlane.xlu0 %574
    %v576 = vsel %vm566, %v558, -inf
    %577 = vmax.xlane.f32.xlu0 %v576
    %v578 = vpop.xlane.xlu0 %577
    %vm579 = vcmask 271360
    %v580 = vsel %vm579, %v563, -inf
    %581 = vmax.xlane.f32.xlu0 %v580
    %v582 = vpop.xlane.xlu0 %581
    %v583 = vsub.f32 %v543, %v569
    %v584 = vsub.f32 %v548, %v572
    %v585 = vsub.f32 %v553, %v575
    %v586 = vsub.f32 %v558, %v578
    %v587 = vsub.f32 %v563, %v582
    %v588 = vmul.f32 %v583, 1.442695
    %v589 = vpow.pop %v588
    %v590 = vmul.f32 %v584, 1.442695
    %v591 = vpow.pop %v590
    %v592 = vmul.f32 %v585, 1.442695
    %v593 = vpow.pop %v592
    %v594 = vmul.f32 %v586, 1.442695
    %v595 = vpow.pop %v594
    %v596 = vmul.f32 %v587, 1.442695
    %v597 = vpow.pop %v596
    %v598 = vsel %vm566, %v589, 0.0
    %599 = vadd.xlane.f32.xlu0 %v598
    %v600 = vpop.xlane.xlu0 %599
    %v601 = vsel %vm566, %v591, 0.0
    %602 = vadd.xlane.f32.xlu0 %v601
    %v603 = vpop.xlane.xlu0 %602
    %v604 = vsel %vm566, %v593, 0.0
    %605 = vadd.xlane.f32.xlu0 %v604
    %v606 = vpop.xlane.xlu0 %605
    %v607 = vsel %vm566, %v595, 0.0
    %608 = vadd.xlane.f32.xlu0 %v607
    %v609 = vpop.xlane.xlu0 %608
    %v610 = vsel %vm579, %v597, 0.0
    %611 = vadd.xlane.f32.xlu0 %v610
    %v612 = vpop.xlane.xlu0 %611
    %v613 = vrcp.pop %v600
    %v614 = vrcp.pop %v603
    %v615 = vrcp.pop %v606
    %v616 = vrcp.pop %v609
    %v617 = vrcp.pop %v612
    %v618 = vmul.f32 %v589, %v613
    %v619 = vmul.f32 %v591, %v614
    %v620 = vmul.f32 %v593, %v615
    %v621 = vmul.f32 %v595, %v616
    %v622 = vmul.f32 %v597, %v617
    %623 = vrot.lane.b32.xlu0 %v413, 64
    %v624 = vpop.permute.xlu0 %623
    %625 = vrot.lane.b32.xlu0 %v418, 64
    %v626 = vpop.permute.xlu0 %625
    %627 = vrot.lane.b32.xlu0 %v423, 64
    %v628 = vpop.permute.xlu0 %627
    %629 = vrot.lane.b32.xlu0 %v428, 64
    %v630 = vpop.permute.xlu0 %629
    %631 = vrot.lane.b32.xlu0 %v433, 64
    %v632 = vpop.permute.xlu0 %631
    %v638 = vsel %vm566, %v618, 0
    %v641 = vsel %vm566, %v619, 0
    %v644 = vsel %vm566, %v620, 0
    %v647 = vsel %vm566, %v621, 0
    %v650 = vsel %vm566, %v622, 0
    %vm652 = vcmask 1041408
    %v653 = vsel %vm652, %v632, 0
    %655 = vmatprep.subr.mxu0 0.0
    %656 = vmatpush1.msra.mxu0 %v624
    %657 = vmatprep.subr.mxu0 0.0
    %658 = vmatpush1.msra.mxu0 %v626
    %659 = vmatprep.subr.mxu0 0.0
    %660 = vmatpush1.msra.mxu0 %v628
    %661 = vmatprep.subr.mxu0 0.0
    %662 = vmatpush1.msra.mxu0 %v630
    %663 = vmatprep.subr.mxu0 0.0
    %664 = vmatpush1.msra.mxu0 %v653
    %665 = vmatprep.subr.mxu0 0.0
    %666 = vmatpush1.msra.mxu0 0.0
    %667 = vmatprep.subr.mxu0 0.0
    %668 = vmatpush1.msra.mxu0 0.0
    %669 = vmatprep.subr.mxu0 0.0
    %670 = vmatpush1.msra.mxu0 0.0
    %671 = vmatprep.subr.mxu0 0.0
    %672 = vmatpush1.msra.mxu0 0.0
    %673 = vmatprep.subr.mxu0 0.0
    %674 = vmatpush1.msra.mxu0 0.0
    %675 = vmatprep.subr.mxu0 0.0
    %676 = vmatpush1.msra.mxu0 0.0
    %677 = vmatprep.subr.mxu0 0.0
    %678 = vmatpush1.msra.mxu0 0.0
    %679 = vmatprep.subr.mxu0 0.0
    %680 = vmatpush1.msra.mxu0 0.0
    %681 = vmatprep.subr.mxu0 0.0
    %682 = vmatpush1.msra.mxu0 0.0
    %683 = vmatprep.subr.mxu0 0.0
    %684 = vmatpush1.msra.mxu0 0.0
    %685 = vmatprep.subr.mxu0 0.0
    %686 = vmatpush1.msra.mxu0 0.0
    %687 = vmatprep.subr.mxu0 0.0
    %688 = vmatpush1.msra.mxu0 0.0
    %689 = vmatprep.subr.mxu0 0.0
    %690 = vmatpush1.msra.mxu0 0.0
    %691 = vmatprep.subr.mxu0 0.0
    %692 = vmatpush1.msra.mxu0 0.0
    %693 = vmatprep.subr.mxu0 0.0
    %694 = vmatpush1.msra.mxu0 0.0
    %695 = vmatprep.subr.mxu0 0.0
    %696 = vmatpush1.msra.mxu0 0.0
    %697 = vmatprep.subr.mxu0 0.0
    %698 = vmatpush1.msra.mxu0 0.0
    %699 = vmatprep.subr.mxu0 0.0
    %700 = vmatpush1.msra.mxu0 0.0
    %701 = vmatprep.subr.mxu0 0.0
    %702 = vmatpush1.msra.mxu0 0.0
    %703 = vmatprep.subr.mxu0 0.0
    %704 = vmatpush1.msra.mxu0 0.0
    %705 = vmatprep.subr.mxu0 0.0
    %706 = vmatpush1.msra.mxu0 0.0
    %707 = vmatprep.subr.mxu0 0.0
    %708 = vmatpush1.msra.mxu0 0.0
    %709 = vmatprep.subr.mxu0 0.0
    %710 = vmatpush1.msra.mxu0 0.0
    %711 = vmatprep.subr.mxu0 0.0
    %712 = vmatpush1.msra.mxu0 0.0
    %713 = vmatprep.subr.mxu0 0.0
    %714 = vmatpush1.msra.mxu0 0.0
    %715 = vmatprep.subr.mxu0 0.0
    %716 = vmatpush1.msra.mxu0 0.0
    %717 = vmatprep.subr.mxu0 0.0
    %718 = vmatpush1.msra.mxu0 0.0
    %719 = vmatprep.mubr.f32.mxu0 0.0
    %720 = vmatmul.mubr.f32.gmra.mrb[0].mxu0 %v638
    %v721 = vpop.f32.mrb[0].mxu0
    %v722 = vadd.f32 0.0, %v721
    %v723 = vpop.f32.mrb[0].mxu0
    %724 = vmatprep.mubr.f32.mxu0 0.0
    %725 = vmatmul.mubr.f32.gmra.mrb[0].mxu0 %v641
    %v726 = vpop.f32.mrb[0].mxu0
    %v727 = vadd.f32 0.0, %v726
    %v728 = vpop.f32.mrb[0].mxu0
    %729 = vmatprep.mubr.f32.mxu0 0.0
    %730 = vmatmul.mubr.f32.gmra.mrb[0].mxu0 %v644
    %v731 = vpop.f32.mrb[0].mxu0
    %v732 = vadd.f32 0.0, %v731
    %v733 = vpop.f32.mrb[0].mxu0
    %734 = vmatprep.mubr.f32.mxu0 0.0
    %735 = vmatmul.mubr.f32.gmra.mrb[0].mxu0 %v647
    %v736 = vpop.f32.mrb[0].mxu0
    %v737 = vadd.f32 0.0, %v736
    %v738 = vpop.f32.mrb[0].mxu0
    %739 = vmatprep.mubr.f32.mxu0 0.0
    %740 = vmatmul.mubr.f32.gmra.mrb[0].mxu0 %v650
    %v741 = vpop.f32.mrb[0].mxu0
    %v742 = vadd.f32 0.0, %v741
    %v743 = vpop.f32.mrb[0].mxu0
    %744 = vdwg.mxu0
    %745 = vrot.lane.b32.xlu0 %v413, 120
    %v746 = vpop.permute.xlu0 %745
    %747 = vrot.lane.b32.xlu0 %v418, 120
    %v748 = vpop.permute.xlu0 %747
    %749 = vrot.lane.b32.xlu0 %v423, 120
    %v750 = vpop.permute.xlu0 %749
    %751 = vrot.lane.b32.xlu0 %v428, 120
    %v752 = vpop.permute.xlu0 %751
    %753 = vrot.lane.b32.xlu0 %v433, 120
    %v754 = vpop.permute.xlu0 %753
    %755 = vrot.lane.b32.xlu0 %v413, 88
    %v756 = vpop.permute.xlu0 %755
    %757 = vrot.lane.b32.xlu0 %v418, 88
    %v758 = vpop.permute.xlu0 %757
    %759 = vrot.lane.b32.xlu0 %v423, 88
    %v760 = vpop.permute.xlu0 %759
    %761 = vrot.lane.b32.xlu0 %v428, 88
    %v762 = vpop.permute.xlu0 %761
    %763 = vrot.lane.b32.xlu0 %v433, 88
    %v764 = vpop.permute.xlu0 %763
    %v765 = vsel %vm455, %v746, 0
    %v767 = vsel %vm455, %v748, 0
    %v769 = vsel %vm455, %v750, 0
    %v771 = vsel %vm455, %v752, 0
    %v773 = vsel %vm455, %v754, 0
    %v775 = vsel %vm455, %v756, 0
    %v777 = vsel %vm455, %v758, 0
    %v779 = vsel %vm455, %v760, 0
    %v781 = vsel %vm455, %v762, 0
    %v783 = vsel %vm455, %v764, 0
    %785 = vmatprep.subr.mxu0 0.0
    %786 = vmatpush1.xpose.msra.mxu0 %v775
    %787 = vmatprep.subr.mxu0 0.0
    %788 = vmatpush1.xpose.msra.mxu0 %v777
    %789 = vmatprep.subr.mxu0 0.0
    %790 = vmatpush1.xpose.msra.mxu0 %v779
    %791 = vmatprep.subr.mxu0 0.0
    %792 = vmatpush1.xpose.msra.mxu0 %v781
    %793 = vmatprep.subr.mxu0 0.0
    %794 = vmatpush1.xpose.msra.mxu0 %v783
    %795 = vmatprep.subr.mxu0 0.0
    %796 = vmatpush1.xpose.msra.mxu0 0.0
    %797 = vmatprep.subr.mxu0 0.0
    %798 = vmatpush1.xpose.msra.mxu0 0.0
    %799 = vmatprep.subr.mxu0 0.0
    %800 = vmatpush1.xpose.msra.mxu0 0.0
    %801 = vmatprep.subr.mxu0 0.0
    %802 = vmatpush1.xpose.msra.mxu0 0.0
    %803 = vmatprep.subr.mxu0 0.0
    %804 = vmatpush1.xpose.msra.mxu0 0.0
    %805 = vmatprep.subr.mxu0 0.0
    %806 = vmatpush1.xpose.msra.mxu0 0.0
    %807 = vmatprep.subr.mxu0 0.0
    %808 = vmatpush1.xpose.msra.mxu0 0.0
    %809 = vmatprep.subr.mxu0 0.0
    %810 = vmatpush1.xpose.msra.mxu0 0.0
    %811 = vmatprep.subr.mxu0 0.0
    %812 = vmatpush1.xpose.msra.mxu0 0.0
    %813 = vmatprep.subr.mxu0 0.0
    %814 = vmatpush1.xpose.msra.mxu0 0.0
    %815 = vmatprep.subr.mxu0 0.0
    %816 = vmatpush1.xpose.msra.mxu0 0.0
    %817 = vmatprep.subr.mxu0 0.0
    %818 = vmatpush1.xpose.msra.mxu0 0.0
    %819 = vmatprep.subr.mxu0 0.0
    %820 = vmatpush1.xpose.msra.mxu0 0.0
    %821 = vmatprep.subr.mxu0 0.0
    %822 = vmatpush1.xpose.msra.mxu0 0.0
    %823 = vmatprep.subr.mxu0 0.0
    %824 = vmatpush1.xpose.msra.mxu0 0.0
    %825 = vmatprep.subr.mxu0 0.0
    %826 = vmatpush1.xpose.msra.mxu0 0.0
    %827 = vmatprep.subr.mxu0 0.0
    %828 = vmatpush1.xpose.msra.mxu0 0.0
    %829 = vmatprep.subr.mxu0 0.0
    %830 = vmatpush1.xpose.msra.mxu0 0.0
    %831 = vmatprep.subr.mxu0 0.0
    %832 = vmatpush1.xpose.msra.mxu0 0.0
    %833 = vmatprep.subr.mxu0 0.0
    %834 = vmatpush1.xpose.msra.mxu0 0.0
    %835 = vmatprep.subr.mxu0 0.0
    %836 = vmatpush1.xpose.msra.mxu0 0.0
    %837 = vmatprep.subr.mxu0 0.0
    %838 = vmatpush1.xpose.msra.mxu0 0.0
    %839 = vmatprep.subr.mxu0 0.0
    %840 = vmatpush1.xpose.msra.mxu0 0.0
    %841 = vmatprep.subr.mxu0 0.0
    %842 = vmatpush1.xpose.msra.mxu0 0.0
    %843 = vmatprep.subr.mxu0 0.0
    %844 = vmatpush1.xpose.msra.mxu0 0.0
    %845 = vmatprep.subr.mxu0 0.0
    %846 = vmatpush1.xpose.msra.mxu0 0.0
    %847 = vmatprep.subr.mxu0 0.0
    %848 = vmatpush1.xpose.msra.mxu0 0.0
    %849 = vmatprep.mubr.f32.mxu0 0.0
    %850 = vmatmul.mubr.f32.gmra.mrb[0].mxu0 %v765
    %v851 = vpop.f32.mrb[0].mxu0
    %v852 = vadd.f32 %v236, %v851
    %v853 = vpop.f32.mrb[0].mxu0
    %854 = vmatprep.mubr.f32.mxu0 0.0
    %855 = vmatmul.mubr.f32.gmra.mrb[0].mxu0 %v767
    %v856 = vpop.f32.mrb[0].mxu0
    %v857 = vadd.f32 %v237, %v856
    %v858 = vpop.f32.mrb[0].mxu0
    %859 = vmatprep.mubr.f32.mxu0 0.0
    %860 = vmatmul.mubr.f32.gmra.mrb[0].mxu0 %v769
    %v861 = vpop.f32.mrb[0].mxu0
    %v862 = vadd.f32 %v238, %v861
    %v863 = vpop.f32.mrb[0].mxu0
    %864 = vmatprep.mubr.f32.mxu0 0.0
    %865 = vmatmul.mubr.f32.gmra.mrb[0].mxu0 %v771
    %v866 = vpop.f32.mrb[0].mxu0
    %v867 = vadd.f32 %v239, %v866
    %v868 = vpop.f32.mrb[0].mxu0
    %869 = vmatprep.mubr.f32.mxu0 0.0
    %870 = vmatmul.mubr.f32.gmra.mrb[0].mxu0 %v773
    %v871 = vpop.f32.mrb[0].mxu0
    %v872 = vadd.f32 %v240, %v871
    %v873 = vpop.f32.mrb[0].mxu0
    %874 = vdwg.mxu0
    %v875 = vsel %vm566, %v852, -inf
    %876 = vmax.xlane.f32.xlu0 %v875
    %v877 = vpop.xlane.xlu0 %876
    %v878 = vsel %vm566, %v857, -inf
    %879 = vmax.xlane.f32.xlu0 %v878
    %v880 = vpop.xlane.xlu0 %879
    %v881 = vsel %vm566, %v862, -inf
    %882 = vmax.xlane.f32.xlu0 %v881
    %v883 = vpop.xlane.xlu0 %882
    %v884 = vsel %vm566, %v867, -inf
    %885 = vmax.xlane.f32.xlu0 %v884
    %v886 = vpop.xlane.xlu0 %885
    %v887 = vsel %vm579, %v872, -inf
    %888 = vmax.xlane.f32.xlu0 %v887
    %v889 = vpop.xlane.xlu0 %888
    %v890 = vsub.f32 %v852, %v877
    %v891 = vsub.f32 %v857, %v880
    %v892 = vsub.f32 %v862, %v883
    %v893 = vsub.f32 %v867, %v886
    %v894 = vsub.f32 %v872, %v889
    %v895 = vmul.f32 %v890, 1.442695
    %v896 = vpow.pop %v895
    %v897 = vmul.f32 %v891, 1.442695
    %v898 = vpow.pop %v897
    %v899 = vmul.f32 %v892, 1.442695
    %v900 = vpow.pop %v899
    %v901 = vmul.f32 %v893, 1.442695
    %v902 = vpow.pop %v901
    %v903 = vmul.f32 %v894, 1.442695
    %v904 = vpow.pop %v903
    %v905 = vsel %vm566, %v896, 0.0
    %906 = vadd.xlane.f32.xlu0 %v905
    %v907 = vpop.xlane.xlu0 %906
    %v908 = vsel %vm566, %v898, 0.0
    %909 = vadd.xlane.f32.xlu0 %v908
    %v910 = vpop.xlane.xlu0 %909
    %v911 = vsel %vm566, %v900, 0.0
    %912 = vadd.xlane.f32.xlu0 %v911
    %v913 = vpop.xlane.xlu0 %912
    %v914 = vsel %vm566, %v902, 0.0
    %915 = vadd.xlane.f32.xlu0 %v914
    %v916 = vpop.xlane.xlu0 %915
    %v917 = vsel %vm579, %v904, 0.0
    %918 = vadd.xlane.f32.xlu0 %v917
    %v919 = vpop.xlane.xlu0 %918
    %v920 = vrcp.pop %v907
    %v921 = vrcp.pop %v910
    %v922 = vrcp.pop %v913
    %v923 = vrcp.pop %v916
    %v924 = vrcp.pop %v919
    %v925 = vmul.f32 %v896, %v920
    %v926 = vmul.f32 %v898, %v921
    %v927 = vmul.f32 %v900, %v922
    %v928 = vmul.f32 %v902, %v923
    %v929 = vmul.f32 %v904, %v924
    %930 = vrot.lane.b32.xlu0 %v413, 56
    %v931 = vpop.permute.xlu0 %930
    %932 = vrot.lane.b32.xlu0 %v418, 56
    %v933 = vpop.permute.xlu0 %932
    %934 = vrot.lane.b32.xlu0 %v423, 56
    %v935 = vpop.permute.xlu0 %934
    %936 = vrot.lane.b32.xlu0 %v428, 56
    %v937 = vpop.permute.xlu0 %936
    %938 = vrot.lane.b32.xlu0 %v433, 56
    %v939 = vpop.permute.xlu0 %938
    %v945 = vsel %vm566, %v925, 0
    %v948 = vsel %vm566, %v926, 0
    %v951 = vsel %vm566, %v927, 0
    %v954 = vsel %vm566, %v928, 0
    %v957 = vsel %vm566, %v929, 0
    %v959 = vsel %vm652, %v939, 0
    %961 = vmatprep.subr.mxu0 0.0
    %962 = vmatpush1.msra.mxu0 %v931
    %963 = vmatprep.subr.mxu0 0.0
    %964 = vmatpush1.msra.mxu0 %v933
    %965 = vmatprep.subr.mxu0 0.0
    %966 = vmatpush1.msra.mxu0 %v935
    %967 = vmatprep.subr.mxu0 0.0
    %968 = vmatpush1.msra.mxu0 %v937
    %969 = vmatprep.subr.mxu0 0.0
    %970 = vmatpush1.msra.mxu0 %v959
    %971 = vmatprep.subr.mxu0 0.0
    %972 = vmatpush1.msra.mxu0 0.0
    %973 = vmatprep.subr.mxu0 0.0
    %974 = vmatpush1.msra.mxu0 0.0
    %975 = vmatprep.subr.mxu0 0.0
    %976 = vmatpush1.msra.mxu0 0.0
    %977 = vmatprep.subr.mxu0 0.0
    %978 = vmatpush1.msra.mxu0 0.0
    %979 = vmatprep.subr.mxu0 0.0
    %980 = vmatpush1.msra.mxu0 0.0
    %981 = vmatprep.subr.mxu0 0.0
    %982 = vmatpush1.msra.mxu0 0.0
    %983 = vmatprep.subr.mxu0 0.0
    %984 = vmatpush1.msra.mxu0 0.0
    %985 = vmatprep.subr.mxu0 0.0
    %986 = vmatpush1.msra.mxu0 0.0
    %987 = vmatprep.subr.mxu0 0.0
    %988 = vmatpush1.msra.mxu0 0.0
    %989 = vmatprep.subr.mxu0 0.0
    %990 = vmatpush1.msra.mxu0 0.0
    %991 = vmatprep.subr.mxu0 0.0
    %992 = vmatpush1.msra.mxu0 0.0
    %993 = vmatprep.subr.mxu0 0.0
    %994 = vmatpush1.msra.mxu0 0.0
    %995 = vmatprep.subr.mxu0 0.0
    %996 = vmatpush1.msra.mxu0 0.0
    %997 = vmatprep.subr.mxu0 0.0
    %998 = vmatpush1.msra.mxu0 0.0
    %999 = vmatprep.subr.mxu0 0.0
    %1000 = vmatpush1.msra.mxu0 0.0
    %1001 = vmatprep.subr.mxu0 0.0
    %1002 = vmatpush1.msra.mxu0 0.0
    %1003 = vmatprep.subr.mxu0 0.0
    %1004 = vmatpush1.msra.mxu0 0.0
    %1005 = vmatprep.subr.mxu0 0.0
    %1006 = vmatpush1.msra.mxu0 0.0
    %1007 = vmatprep.subr.mxu0 0.0
    %1008 = vmatpush1.msra.mxu0 0.0
    %1009 = vmatprep.subr.mxu0 0.0
    %1010 = vmatpush1.msra.mxu0 0.0
    %1011 = vmatprep.subr.mxu0 0.0
    %1012 = vmatpush1.msra.mxu0 0.0
    %1013 = vmatprep.subr.mxu0 0.0
    %1014 = vmatpush1.msra.mxu0 0.0
    %1015 = vmatprep.subr.mxu0 0.0
    %1016 = vmatpush1.msra.mxu0 0.0
    %1017 = vmatprep.subr.mxu0 0.0
    %1018 = vmatpush1.msra.mxu0 0.0
    %1019 = vmatprep.subr.mxu0 0.0
    %1020 = vmatpush1.msra.mxu0 0.0
    %1021 = vmatprep.subr.mxu0 0.0
    %1022 = vmatpush1.msra.mxu0 0.0
    %1023 = vmatprep.subr.mxu0 0.0
    %1024 = vmatpush1.msra.mxu0 0.0
    %1025 = vmatprep.mubr.f32.mxu0 0.0
    %1026 = vmatmul.mubr.f32.gmra.mrb[0].mxu0 %v945
    %v1027 = vpop.f32.mrb[0].mxu0
    %v1028 = vadd.f32 0.0, %v1027
    %v1029 = vpop.f32.mrb[0].mxu0
    %1030 = vmatprep.mubr.f32.mxu0 0.0
    %1031 = vmatmul.mubr.f32.gmra.mrb[0].mxu0 %v948
    %v1032 = vpop.f32.mrb[0].mxu0
    %v1033 = vadd.f32 0.0, %v1032
    %v1034 = vpop.f32.mrb[0].mxu0
    %1035 = vmatprep.mubr.f32.mxu0 0.0
    %1036 = vmatmul.mubr.f32.gmra.mrb[0].mxu0 %v951
    %v1037 = vpop.f32.mrb[0].mxu0
    %v1038 = vadd.f32 0.0, %v1037
    %v1039 = vpop.f32.mrb[0].mxu0
    %1040 = vmatprep.mubr.f32.mxu0 0.0
    %1041 = vmatmul.mubr.f32.gmra.mrb[0].mxu0 %v954
    %v1042 = vpop.f32.mrb[0].mxu0
    %v1043 = vadd.f32 0.0, %v1042
    %v1044 = vpop.f32.mrb[0].mxu0
    %1045 = vmatprep.mubr.f32.mxu0 0.0
    %1046 = vmatmul.mubr.f32.gmra.mrb[0].mxu0 %v957
    %v1047 = vpop.f32.mrb[0].mxu0
    %v1048 = vadd.f32 0.0, %v1047
    %v1049 = vpop.f32.mrb[0].mxu0
    %1050 = vdwg.mxu0
    %v1052 = vsel %vm455, %v1028, 0
    %v1055 = vsel %vm455, %v1033, 0
    %v1058 = vsel %vm455, %v1038, 0
    %v1061 = vsel %vm455, %v1043, 0
    %v1064 = vsel %vm455, %v1048, 0
    %1066 = vmatprep.subr.mxu0 0.0
    %1067 = vmatpush1.msra.mxu0 %v437
    %1068 = vmatprep.subr.mxu0 0.0
    %1069 = vmatpush1.msra.mxu0 0.0
    %1070 = vmatprep.subr.mxu0 0.0
    %1071 = vmatpush1.msra.mxu0 0.0
    %1072 = vmatprep.subr.mxu0 0.0
    %1073 = vmatpush1.msra.mxu0 0.0
    %1074 = vmatprep.subr.mxu0 0.0
    %1075 = vmatpush1.msra.mxu0 0.0
    %1076 = vmatprep.subr.mxu0 0.0
    %1077 = vmatpush1.msra.mxu0 0.0
    %1078 = vmatprep.subr.mxu0 0.0
    %1079 = vmatpush1.msra.mxu0 0.0
    %1080 = vmatprep.subr.mxu0 0.0
    %1081 = vmatpush1.msra.mxu0 0.0
    %1082 = vmatprep.subr.mxu0 0.0
    %1083 = vmatpush1.msra.mxu0 0.0
    %1084 = vmatprep.subr.mxu0 0.0
    %1085 = vmatpush1.msra.mxu0 0.0
    %1086 = vmatprep.subr.mxu0 0.0
    %1087 = vmatpush1.msra.mxu0 0.0
    %1088 = vmatprep.subr.mxu0 0.0
    %1089 = vmatpush1.msra.mxu0 0.0
    %1090 = vmatprep.subr.mxu0 0.0
    %1091 = vmatpush1.msra.mxu0 0.0
    %1092 = vmatprep.subr.mxu0 0.0
    %1093 = vmatpush1.msra.mxu0 0.0
    %1094 = vmatprep.subr.mxu0 0.0
    %1095 = vmatpush1.msra.mxu0 0.0
    %1096 = vmatprep.subr.mxu0 0.0
    %1097 = vmatpush1.msra.mxu0 0.0
    %1098 = vmatprep.subr.mxu0 0.0
    %1099 = vmatpush1.msra.mxu0 0.0
    %1100 = vmatprep.subr.mxu0 0.0
    %1101 = vmatpush1.msra.mxu0 0.0
    %1102 = vmatprep.subr.mxu0 0.0
    %1103 = vmatpush1.msra.mxu0 0.0
    %1104 = vmatprep.subr.mxu0 0.0
    %1105 = vmatpush1.msra.mxu0 0.0
    %1106 = vmatprep.subr.mxu0 0.0
    %1107 = vmatpush1.msra.mxu0 0.0
    %1108 = vmatprep.subr.mxu0 0.0
    %1109 = vmatpush1.msra.mxu0 0.0
    %1110 = vmatprep.subr.mxu0 0.0
    %1111 = vmatpush1.msra.mxu0 0.0
    %1112 = vmatprep.subr.mxu0 0.0
    %1113 = vmatpush1.msra.mxu0 0.0
    %1114 = vmatprep.subr.mxu0 0.0
    %1115 = vmatpush1.msra.mxu0 0.0
    %1116 = vmatprep.subr.mxu0 0.0
    %1117 = vmatpush1.msra.mxu0 0.0
    %1118 = vmatprep.subr.mxu0 0.0
    %1119 = vmatpush1.msra.mxu0 0.0
    %1120 = vmatprep.subr.mxu0 0.0
    %1121 = vmatpush1.msra.mxu0 0.0
    %1122 = vmatprep.subr.mxu0 0.0
    %1123 = vmatpush1.msra.mxu0 0.0
    %1124 = vmatprep.subr.mxu0 0.0
    %1125 = vmatpush1.msra.mxu0 0.0
    %1126 = vmatprep.subr.mxu0 0.0
    %1127 = vmatpush1.msra.mxu0 0.0
    %1128 = vmatprep.subr.mxu0 0.0
    %1129 = vmatpush1.msra.mxu0 0.0
    %1130 = vmatprep.mubr.f32.mxu0 0.0
    %1131 = vmatmul.mubr.f32.gmra.mrb[0].mxu0 %v1052
    %v1132 = vpop.f32.mrb[0].mxu0
    %v1133 = vadd.f32 0.0, %v1132
    %v1134 = vpop.f32.mrb[0].mxu0
    %1135 = vmatprep.mubr.f32.mxu0 0.0
    %1136 = vmatmul.mubr.f32.gmra.mrb[0].mxu0 %v1055
    %v1137 = vpop.f32.mrb[0].mxu0
    %v1138 = vadd.f32 0.0, %v1137
    %v1139 = vpop.f32.mrb[0].mxu0
    %1140 = vmatprep.mubr.f32.mxu0 0.0
    %1141 = vmatmul.mubr.f32.gmra.mrb[0].mxu0 %v1058
    %v1142 = vpop.f32.mrb[0].mxu0
    %v1143 = vadd.f32 0.0, %v1142
    %v1144 = vpop.f32.mrb[0].mxu0
    %1145 = vmatprep.mubr.f32.mxu0 0.0
    %1146 = vmatmul.mubr.f32.gmra.mrb[0].mxu0 %v1061
    %v1147 = vpop.f32.mrb[0].mxu0
    %v1148 = vadd.f32 0.0, %v1147
    %v1149 = vpop.f32.mrb[0].mxu0
    %1150 = vmatprep.mubr.f32.mxu0 0.0
    %1151 = vmatmul.mubr.f32.gmra.mrb[0].mxu0 %v1064
    %v1152 = vpop.f32.mrb[0].mxu0
    %v1153 = vadd.f32 0.0, %v1152
    %v1154 = vpop.f32.mrb[0].mxu0
    %1155 = vdwg.mxu0
    %v1157 = vsel %vm455, %v722, 0
    %v1160 = vsel %vm455, %v727, 0
    %v1163 = vsel %vm455, %v732, 0
    %v1166 = vsel %vm455, %v737, 0
    %v1169 = vsel %vm455, %v742, 0
    %1171 = vmatprep.subr.mxu0 0.0
    %1172 = vmatpush1.msra.mxu0 %v436
    %1173 = vmatprep.subr.mxu0 0.0
    %1174 = vmatpush1.msra.mxu0 0.0
    %1175 = vmatprep.subr.mxu0 0.0
    %1176 = vmatpush1.msra.mxu0 0.0
    %1177 = vmatprep.subr.mxu0 0.0
    %1178 = vmatpush1.msra.mxu0 0.0
    %1179 = vmatprep.subr.mxu0 0.0
    %1180 = vmatpush1.msra.mxu0 0.0
    %1181 = vmatprep.subr.mxu0 0.0
    %1182 = vmatpush1.msra.mxu0 0.0
    %1183 = vmatprep.subr.mxu0 0.0
    %1184 = vmatpush1.msra.mxu0 0.0
    %1185 = vmatprep.subr.mxu0 0.0
    %1186 = vmatpush1.msra.mxu0 0.0
    %1187 = vmatprep.subr.mxu0 0.0
    %1188 = vmatpush1.msra.mxu0 0.0
    %1189 = vmatprep.subr.mxu0 0.0
    %1190 = vmatpush1.msra.mxu0 0.0
    %1191 = vmatprep.subr.mxu0 0.0
    %1192 = vmatpush1.msra.mxu0 0.0
    %1193 = vmatprep.subr.mxu0 0.0
    %1194 = vmatpush1.msra.mxu0 0.0
    %1195 = vmatprep.subr.mxu0 0.0
    %1196 = vmatpush1.msra.mxu0 0.0
    %1197 = vmatprep.subr.mxu0 0.0
    %1198 = vmatpush1.msra.mxu0 0.0
    %1199 = vmatprep.subr.mxu0 0.0
    %1200 = vmatpush1.msra.mxu0 0.0
    %1201 = vmatprep.subr.mxu0 0.0
    %1202 = vmatpush1.msra.mxu0 0.0
    %1203 = vmatprep.subr.mxu0 0.0
    %1204 = vmatpush1.msra.mxu0 0.0
    %1205 = vmatprep.subr.mxu0 0.0
    %1206 = vmatpush1.msra.mxu0 0.0
    %1207 = vmatprep.subr.mxu0 0.0
    %1208 = vmatpush1.msra.mxu0 0.0
    %1209 = vmatprep.subr.mxu0 0.0
    %1210 = vmatpush1.msra.mxu0 0.0
    %1211 = vmatprep.subr.mxu0 0.0
    %1212 = vmatpush1.msra.mxu0 0.0
    %1213 = vmatprep.subr.mxu0 0.0
    %1214 = vmatpush1.msra.mxu0 0.0
    %1215 = vmatprep.subr.mxu0 0.0
    %1216 = vmatpush1.msra.mxu0 0.0
    %1217 = vmatprep.subr.mxu0 0.0
    %1218 = vmatpush1.msra.mxu0 0.0
    %1219 = vmatprep.subr.mxu0 0.0
    %1220 = vmatpush1.msra.mxu0 0.0
    %1221 = vmatprep.subr.mxu0 0.0
    %1222 = vmatpush1.msra.mxu0 0.0
    %1223 = vmatprep.subr.mxu0 0.0
    %1224 = vmatpush1.msra.mxu0 0.0
    %1225 = vmatprep.subr.mxu0 0.0
    %1226 = vmatpush1.msra.mxu0 0.0
    %1227 = vmatprep.subr.mxu0 0.0
    %1228 = vmatpush1.msra.mxu0 0.0
    %1229 = vmatprep.subr.mxu0 0.0
    %1230 = vmatpush1.msra.mxu0 0.0
    %1231 = vmatprep.subr.mxu0 0.0
    %1232 = vmatpush1.msra.mxu0 0.0
    %1233 = vmatprep.subr.mxu0 0.0
    %1234 = vmatpush1.msra.mxu0 0.0
    %1235 = vmatprep.mubr.f32.mxu0 0.0
    %1236 = vmatmul.mubr.f32.gmra.mrb[0].mxu0 %v1157
    %v1237 = vpop.f32.mrb[0].mxu0
    %v1238 = vadd.f32 %v1133, %v1237
    %v1239 = vpop.f32.mrb[0].mxu0
    %1240 = vmatprep.mubr.f32.mxu0 0.0
    %1241 = vmatmul.mubr.f32.gmra.mrb[0].mxu0 %v1160
    %v1242 = vpop.f32.mrb[0].mxu0
    %v1243 = vadd.f32 %v1138, %v1242
    %v1244 = vpop.f32.mrb[0].mxu0
    %1245 = vmatprep.mubr.f32.mxu0 0.0
    %1246 = vmatmul.mubr.f32.gmra.mrb[0].mxu0 %v1163
    %v1247 = vpop.f32.mrb[0].mxu0
    %v1248 = vadd.f32 %v1143, %v1247
    %v1249 = vpop.f32.mrb[0].mxu0
    %1250 = vmatprep.mubr.f32.mxu0 0.0
    %1251 = vmatmul.mubr.f32.gmra.mrb[0].mxu0 %v1166
    %v1252 = vpop.f32.mrb[0].mxu0
    %v1253 = vadd.f32 %v1148, %v1252
    %v1254 = vpop.f32.mrb[0].mxu0
    %1255 = vmatprep.mubr.f32.mxu0 0.0
    %1256 = vmatmul.mubr.f32.gmra.mrb[0].mxu0 %v1169
    %v1257 = vpop.f32.mrb[0].mxu0
    %v1258 = vadd.f32 %v1153, %v1257
    %v1259 = vpop.f32.mrb[0].mxu0
    %1260 = vdwg.mxu0
    %1261 = vrot.lane.b32.xlu0 %v413, 112
    %v1262 = vpop.permute.xlu0 %1261
    %1263 = vrot.lane.b32.xlu0 %v418, 112
    %v1264 = vpop.permute.xlu0 %1263
    %1265 = vrot.lane.b32.xlu0 %v423, 112
    %v1266 = vpop.permute.xlu0 %1265
    %1267 = vrot.lane.b32.xlu0 %v428, 112
    %v1268 = vpop.permute.xlu0 %1267
    %1269 = vrot.lane.b32.xlu0 %v433, 112
    %v1270 = vpop.permute.xlu0 %1269
    %1271 = vrot.lane.b32.xlu0 %v413, 80
    %v1272 = vpop.permute.xlu0 %1271
    %1273 = vrot.lane.b32.xlu0 %v418, 80
    %v1274 = vpop.permute.xlu0 %1273
    %1275 = vrot.lane.b32.xlu0 %v423, 80
    %v1276 = vpop.permute.xlu0 %1275
    %1277 = vrot.lane.b32.xlu0 %v428, 80
    %v1278 = vpop.permute.xlu0 %1277
    %1279 = vrot.lane.b32.xlu0 %v433, 80
    %v1280 = vpop.permute.xlu0 %1279
    %v1281 = vsel %vm455, %v1262, 0
    %v1283 = vsel %vm455, %v1264, 0
    %v1285 = vsel %vm455, %v1266, 0
    %v1287 = vsel %vm455, %v1268, 0
    %v1289 = vsel %vm455, %v1270, 0
    %v1291 = vsel %vm455, %v1272, 0
    %v1293 = vsel %vm455, %v1274, 0
    %v1295 = vsel %vm455, %v1276, 0
    %v1297 = vsel %vm455, %v1278, 0
    %v1299 = vsel %vm455, %v1280, 0
    %1301 = vmatprep.subr.mxu0 0.0
    %1302 = vmatpush1.xpose.msra.mxu0 %v1291
    %1303 = vmatprep.subr.mxu0 0.0
    %1304 = vmatpush1.xpose.msra.mxu0 %v1293
    %1305 = vmatprep.subr.mxu0 0.0
    %1306 = vmatpush1.xpose.msra.mxu0 %v1295
    %1307 = vmatprep.subr.mxu0 0.0
    %1308 = vmatpush1.xpose.msra.mxu0 %v1297
    %1309 = vmatprep.subr.mxu0 0.0
    %1310 = vmatpush1.xpose.msra.mxu0 %v1299
    %1311 = vmatprep.subr.mxu0 0.0
    %1312 = vmatpush1.xpose.msra.mxu0 0.0
    %1313 = vmatprep.subr.mxu0 0.0
    %1314 = vmatpush1.xpose.msra.mxu0 0.0
    %1315 = vmatprep.subr.mxu0 0.0
    %1316 = vmatpush1.xpose.msra.mxu0 0.0
    %1317 = vmatprep.subr.mxu0 0.0
    %1318 = vmatpush1.xpose.msra.mxu0 0.0
    %1319 = vmatprep.subr.mxu0 0.0
    %1320 = vmatpush1.xpose.msra.mxu0 0.0
    %1321 = vmatprep.subr.mxu0 0.0
    %1322 = vmatpush1.xpose.msra.mxu0 0.0
    %1323 = vmatprep.subr.mxu0 0.0
    %1324 = vmatpush1.xpose.msra.mxu0 0.0
    %1325 = vmatprep.subr.mxu0 0.0
    %1326 = vmatpush1.xpose.msra.mxu0 0.0
    %1327 = vmatprep.subr.mxu0 0.0
    %1328 = vmatpush1.xpose.msra.mxu0 0.0
    %1329 = vmatprep.subr.mxu0 0.0
    %1330 = vmatpush1.xpose.msra.mxu0 0.0
    %1331 = vmatprep.subr.mxu0 0.0
    %1332 = vmatpush1.xpose.msra.mxu0 0.0
    %1333 = vmatprep.subr.mxu0 0.0
    %1334 = vmatpush1.xpose.msra.mxu0 0.0
    %1335 = vmatprep.subr.mxu0 0.0
    %1336 = vmatpush1.xpose.msra.mxu0 0.0
    %1337 = vmatprep.subr.mxu0 0.0
    %1338 = vmatpush1.xpose.msra.mxu0 0.0
    %1339 = vmatprep.subr.mxu0 0.0
    %1340 = vmatpush1.xpose.msra.mxu0 0.0
    %1341 = vmatprep.subr.mxu0 0.0
    %1342 = vmatpush1.xpose.msra.mxu0 0.0
    %1343 = vmatprep.subr.mxu0 0.0
    %1344 = vmatpush1.xpose.msra.mxu0 0.0
    %1345 = vmatprep.subr.mxu0 0.0
    %1346 = vmatpush1.xpose.msra.mxu0 0.0
    %1347 = vmatprep.subr.mxu0 0.0
    %1348 = vmatpush1.xpose.msra.mxu0 0.0
    %1349 = vmatprep.subr.mxu0 0.0
    %1350 = vmatpush1.xpose.msra.mxu0 0.0
    %1351 = vmatprep.subr.mxu0 0.0
    %1352 = vmatpush1.xpose.msra.mxu0 0.0
    %1353 = vmatprep.subr.mxu0 0.0
    %1354 = vmatpush1.xpose.msra.mxu0 0.0
    %1355 = vmatprep.subr.mxu0 0.0
    %1356 = vmatpush1.xpose.msra.mxu0 0.0
    %1357 = vmatprep.subr.mxu0 0.0
    %1358 = vmatpush1.xpose.msra.mxu0 0.0
    %1359 = vmatprep.subr.mxu0 0.0
    %1360 = vmatpush1.xpose.msra.mxu0 0.0
    %1361 = vmatprep.subr.mxu0 0.0
    %1362 = vmatpush1.xpose.msra.mxu0 0.0
    %1363 = vmatprep.subr.mxu0 0.0
    %1364 = vmatpush1.xpose.msra.mxu0 0.0
    %1365 = vmatprep.mubr.f32.mxu0 0.0
    %1366 = vmatmul.mubr.f32.gmra.mrb[0].mxu0 %v1281
    %v1367 = vpop.f32.mrb[0].mxu0
    %v1368 = vadd.f32 %v236, %v1367
    %v1369 = vpop.f32.mrb[0].mxu0
    %1370 = vmatprep.mubr.f32.mxu0 0.0
    %1371 = vmatmul.mubr.f32.gmra.mrb[0].mxu0 %v1283
    %v1372 = vpop.f32.mrb[0].mxu0
    %v1373 = vadd.f32 %v237, %v1372
    %v1374 = vpop.f32.mrb[0].mxu0
    %1375 = vmatprep.mubr.f32.mxu0 0.0
    %1376 = vmatmul.mubr.f32.gmra.mrb[0].mxu0 %v1285
    %v1377 = vpop.f32.mrb[0].mxu0
    %v1378 = vadd.f32 %v238, %v1377
    %v1379 = vpop.f32.mrb[0].mxu0
    %1380 = vmatprep.mubr.f32.mxu0 0.0
    %1381 = vmatmul.mubr.f32.gmra.mrb[0].mxu0 %v1287
    %v1382 = vpop.f32.mrb[0].mxu0
    %v1383 = vadd.f32 %v239, %v1382
    %v1384 = vpop.f32.mrb[0].mxu0
    %1385 = vmatprep.mubr.f32.mxu0 0.0
    %1386 = vmatmul.mubr.f32.gmra.mrb[0].mxu0 %v1289
    %v1387 = vpop.f32.mrb[0].mxu0
    %v1388 = vadd.f32 %v240, %v1387
    %v1389 = vpop.f32.mrb[0].mxu0
    %1390 = vdwg.mxu0
    %v1391 = vsel %vm566, %v1368, -inf
    %1392 = vmax.xlane.f32.xlu0 %v1391
    %v1393 = vpop.xlane.xlu0 %1392
    %v1394 = vsel %vm566, %v1373, -inf
    %1395 = vmax.xlane.f32.xlu0 %v1394
    %v1396 = vpop.xlane.xlu0 %1395
    %v1397 = vsel %vm566, %v1378, -inf
    %1398 = vmax.xlane.f32.xlu0 %v1397
    %v1399 = vpop.xlane.xlu0 %1398
    %v1400 = vsel %vm566, %v1383, -inf
    %1401 = vmax.xlane.f32.xlu0 %v1400
    %v1402 = vpop.xlane.xlu0 %1401
    %v1403 = vsel %vm579, %v1388, -inf
    %1404 = vmax.xlane.f32.xlu0 %v1403
    %v1405 = vpop.xlane.xlu0 %1404
    %v1406 = vsub.f32 %v1368, %v1393
    %v1407 = vsub.f32 %v1373, %v1396
    %v1408 = vsub.f32 %v1378, %v1399
    %v1409 = vsub.f32 %v1383, %v1402
    %v1410 = vsub.f32 %v1388, %v1405
    %v1411 = vmul.f32 %v1406, 1.442695
    %v1412 = vpow.pop %v1411
    %v1413 = vmul.f32 %v1407, 1.442695
    %v1414 = vpow.pop %v1413
    %v1415 = vmul.f32 %v1408, 1.442695
    %v1416 = vpow.pop %v1415
    %v1417 = vmul.f32 %v1409, 1.442695
    %v1418 = vpow.pop %v1417
    %v1419 = vmul.f32 %v1410, 1.442695
    %v1420 = vpow.pop %v1419
    %v1421 = vsel %vm566, %v1412, 0.0
    %1422 = vadd.xlane.f32.xlu0 %v1421
    %v1423 = vpop.xlane.xlu0 %1422
    %v1424 = vsel %vm566, %v1414, 0.0
    %1425 = vadd.xlane.f32.xlu0 %v1424
    %v1426 = vpop.xlane.xlu0 %1425
    %v1427 = vsel %vm566, %v1416, 0.0
    %1428 = vadd.xlane.f32.xlu0 %v1427
    %v1429 = vpop.xlane.xlu0 %1428
    %v1430 = vsel %vm566, %v1418, 0.0
    %1431 = vadd.xlane.f32.xlu0 %v1430
    %v1432 = vpop.xlane.xlu0 %1431
    %v1433 = vsel %vm579, %v1420, 0.0
    %1434 = vadd.xlane.f32.xlu0 %v1433
    %v1435 = vpop.xlane.xlu0 %1434
    %v1436 = vrcp.pop %v1423
    %v1437 = vrcp.pop %v1426
    %v1438 = vrcp.pop %v1429
    %v1439 = vrcp.pop %v1432
    %v1440 = vrcp.pop %v1435
    %v1441 = vmul.f32 %v1412, %v1436
    %v1442 = vmul.f32 %v1414, %v1437
    %v1443 = vmul.f32 %v1416, %v1438
    %v1444 = vmul.f32 %v1418, %v1439
    %v1445 = vmul.f32 %v1420, %v1440
    %1446 = vrot.lane.b32.xlu0 %v413, 48
    %v1447 = vpop.permute.xlu0 %1446
    %1448 = vrot.lane.b32.xlu0 %v418, 48
    %v1449 = vpop.permute.xlu0 %1448
    %1450 = vrot.lane.b32.xlu0 %v423, 48
    %v1451 = vpop.permute.xlu0 %1450
    %1452 = vrot.lane.b32.xlu0 %v428, 48
    %v1453 = vpop.permute.xlu0 %1452
    %1454 = vrot.lane.b32.xlu0 %v433, 48
    %v1455 = vpop.permute.xlu0 %1454
    %v1461 = vsel %vm566, %v1441, 0
    %v1464 = vsel %vm566, %v1442, 0
    %v1467 = vsel %vm566, %v1443, 0
    %v1470 = vsel %vm566, %v1444, 0
    %v1473 = vsel %vm566, %v1445, 0
    %v1475 = vsel %vm652, %v1455, 0
    %1477 = vmatprep.subr.mxu0 0.0
    %1478 = vmatpush1.msra.mxu0 %v1447
    %1479 = vmatprep.subr.mxu0 0.0
    %1480 = vmatpush1.msra.mxu0 %v1449
    %1481 = vmatprep.subr.mxu0 0.0
    %1482 = vmatpush1.msra.mxu0 %v1451
    %1483 = vmatprep.subr.mxu0 0.0
    %1484 = vmatpush1.msra.mxu0 %v1453
    %1485 = vmatprep.subr.mxu0 0.0
    %1486 = vmatpush1.msra.mxu0 %v1475
    %1487 = vmatprep.subr.mxu0 0.0
    %1488 = vmatpush1.msra.mxu0 0.0
    %1489 = vmatprep.subr.mxu0 0.0
    %1490 = vmatpush1.msra.mxu0 0.0
    %1491 = vmatprep.subr.mxu0 0.0
    %1492 = vmatpush1.msra.mxu0 0.0
    %1493 = vmatprep.subr.mxu0 0.0
    %1494 = vmatpush1.msra.mxu0 0.0
    %1495 = vmatprep.subr.mxu0 0.0
    %1496 = vmatpush1.msra.mxu0 0.0
    %1497 = vmatprep.subr.mxu0 0.0
    %1498 = vmatpush1.msra.mxu0 0.0
    %1499 = vmatprep.subr.mxu0 0.0
    %1500 = vmatpush1.msra.mxu0 0.0
    %1501 = vmatprep.subr.mxu0 0.0
    %1502 = vmatpush1.msra.mxu0 0.0
    %1503 = vmatprep.subr.mxu0 0.0
    %1504 = vmatpush1.msra.mxu0 0.0
    %1505 = vmatprep.subr.mxu0 0.0
    %1506 = vmatpush1.msra.mxu0 0.0
    %1507 = vmatprep.subr.mxu0 0.0
    %1508 = vmatpush1.msra.mxu0 0.0
    %1509 = vmatprep.subr.mxu0 0.0
    %1510 = vmatpush1.msra.mxu0 0.0
    %1511 = vmatprep.subr.mxu0 0.0
    %1512 = vmatpush1.msra.mxu0 0.0
    %1513 = vmatprep.subr.mxu0 0.0
    %1514 = vmatpush1.msra.mxu0 0.0
    %1515 = vmatprep.subr.mxu0 0.0
    %1516 = vmatpush1.msra.mxu0 0.0
    %1517 = vmatprep.subr.mxu0 0.0
    %1518 = vmatpush1.msra.mxu0 0.0
    %1519 = vmatprep.subr.mxu0 0.0
    %1520 = vmatpush1.msra.mxu0 0.0
    %1521 = vmatprep.subr.mxu0 0.0
    %1522 = vmatpush1.msra.mxu0 0.0
    %1523 = vmatprep.subr.mxu0 0.0
    %1524 = vmatpush1.msra.mxu0 0.0
    %1525 = vmatprep.subr.mxu0 0.0
    %1526 = vmatpush1.msra.mxu0 0.0
    %1527 = vmatprep.subr.mxu0 0.0
    %1528 = vmatpush1.msra.mxu0 0.0
    %1529 = vmatprep.subr.mxu0 0.0
    %1530 = vmatpush1.msra.mxu0 0.0
    %1531 = vmatprep.subr.mxu0 0.0
    %1532 = vmatpush1.msra.mxu0 0.0
    %1533 = vmatprep.subr.mxu0 0.0
    %1534 = vmatpush1.msra.mxu0 0.0
    %1535 = vmatprep.subr.mxu0 0.0
    %1536 = vmatpush1.msra.mxu0 0.0
    %1537 = vmatprep.subr.mxu0 0.0
    %1538 = vmatpush1.msra.mxu0 0.0
    %1539 = vmatprep.subr.mxu0 0.0
    %1540 = vmatpush1.msra.mxu0 0.0
    %1541 = vmatprep.mubr.f32.mxu0 0.0
    %1542 = vmatmul.mubr.f32.gmra.mrb[0].mxu0 %v1461
    %v1543 = vpop.f32.mrb[0].mxu0
    %v1544 = vadd.f32 0.0, %v1543
    %v1545 = vpop.f32.mrb[0].mxu0
    %1546 = vmatprep.mubr.f32.mxu0 0.0
    %1547 = vmatmul.mubr.f32.gmra.mrb[0].mxu0 %v1464
    %v1548 = vpop.f32.mrb[0].mxu0
    %v1549 = vadd.f32 0.0, %v1548
    %v1550 = vpop.f32.mrb[0].mxu0
    %1551 = vmatprep.mubr.f32.mxu0 0.0
    %1552 = vmatmul.mubr.f32.gmra.mrb[0].mxu0 %v1467
    %v1553 = vpop.f32.mrb[0].mxu0
    %v1554 = vadd.f32 0.0, %v1553
    %v1555 = vpop.f32.mrb[0].mxu0
    %1556 = vmatprep.mubr.f32.mxu0 0.0
    %1557 = vmatmul.mubr.f32.gmra.mrb[0].mxu0 %v1470
    %v1558 = vpop.f32.mrb[0].mxu0
    %v1559 = vadd.f32 0.0, %v1558
    %v1560 = vpop.f32.mrb[0].mxu0
    %1561 = vmatprep.mubr.f32.mxu0 0.0
    %1562 = vmatmul.mubr.f32.gmra.mrb[0].mxu0 %v1473
    %v1563 = vpop.f32.mrb[0].mxu0
    %v1564 = vadd.f32 0.0, %v1563
    %v1565 = vpop.f32.mrb[0].mxu0
    %1566 = vdwg.mxu0
    %v1568 = vsel %vm455, %v1544, 0
    %v1571 = vsel %vm455, %v1549, 0
    %v1574 = vsel %vm455, %v1554, 0
    %v1577 = vsel %vm455, %v1559, 0
    %v1580 = vsel %vm455, %v1564, 0
    %1582 = vmatprep.subr.mxu0 0.0
    %1583 = vmatpush1.msra.mxu0 %v438
    %1584 = vmatprep.subr.mxu0 0.0
    %1585 = vmatpush1.msra.mxu0 0.0
    %1586 = vmatprep.subr.mxu0 0.0
    %1587 = vmatpush1.msra.mxu0 0.0
    %1588 = vmatprep.subr.mxu0 0.0
    %1589 = vmatpush1.msra.mxu0 0.0
    %1590 = vmatprep.subr.mxu0 0.0
    %1591 = vmatpush1.msra.mxu0 0.0
    %1592 = vmatprep.subr.mxu0 0.0
    %1593 = vmatpush1.msra.mxu0 0.0
    %1594 = vmatprep.subr.mxu0 0.0
    %1595 = vmatpush1.msra.mxu0 0.0
    %1596 = vmatprep.subr.mxu0 0.0
    %1597 = vmatpush1.msra.mxu0 0.0
    %1598 = vmatprep.subr.mxu0 0.0
    %1599 = vmatpush1.msra.mxu0 0.0
    %1600 = vmatprep.subr.mxu0 0.0
    %1601 = vmatpush1.msra.mxu0 0.0
    %1602 = vmatprep.subr.mxu0 0.0
    %1603 = vmatpush1.msra.mxu0 0.0
    %1604 = vmatprep.subr.mxu0 0.0
    %1605 = vmatpush1.msra.mxu0 0.0
    %1606 = vmatprep.subr.mxu0 0.0
    %1607 = vmatpush1.msra.mxu0 0.0
    %1608 = vmatprep.subr.mxu0 0.0
    %1609 = vmatpush1.msra.mxu0 0.0
    %1610 = vmatprep.subr.mxu0 0.0
    %1611 = vmatpush1.msra.mxu0 0.0
    %1612 = vmatprep.subr.mxu0 0.0
    %1613 = vmatpush1.msra.mxu0 0.0
    %1614 = vmatprep.subr.mxu0 0.0
    %1615 = vmatpush1.msra.mxu0 0.0
    %1616 = vmatprep.subr.mxu0 0.0
    %1617 = vmatpush1.msra.mxu0 0.0
    %1618 = vmatprep.subr.mxu0 0.0
    %1619 = vmatpush1.msra.mxu0 0.0
    %1620 = vmatprep.subr.mxu0 0.0
    %1621 = vmatpush1.msra.mxu0 0.0
    %1622 = vmatprep.subr.mxu0 0.0
    %1623 = vmatpush1.msra.mxu0 0.0
    %1624 = vmatprep.subr.mxu0 0.0
    %1625 = vmatpush1.msra.mxu0 0.0
    %1626 = vmatprep.subr.mxu0 0.0
    %1627 = vmatpush1.msra.mxu0 0.0
    %1628 = vmatprep.subr.mxu0 0.0
    %1629 = vmatpush1.msra.mxu0 0.0
    %1630 = vmatprep.subr.mxu0 0.0
    %1631 = vmatpush1.msra.mxu0 0.0
    %1632 = vmatprep.subr.mxu0 0.0
    %1633 = vmatpush1.msra.mxu0 0.0
    %1634 = vmatprep.subr.mxu0 0.0
    %1635 = vmatpush1.msra.mxu0 0.0
    %1636 = vmatprep.subr.mxu0 0.0
    %1637 = vmatpush1.msra.mxu0 0.0
    %1638 = vmatprep.subr.mxu0 0.0
    %1639 = vmatpush1.msra.mxu0 0.0
    %1640 = vmatprep.subr.mxu0 0.0
    %1641 = vmatpush1.msra.mxu0 0.0
    %1642 = vmatprep.subr.mxu0 0.0
    %1643 = vmatpush1.msra.mxu0 0.0
    %1644 = vmatprep.subr.mxu0 0.0
    %1645 = vmatpush1.msra.mxu0 0.0
    %1646 = vmatprep.mubr.f32.mxu0 0.0
    %1647 = vmatmul.mubr.f32.gmra.mrb[0].mxu0 %v1568
    %v1648 = vpop.f32.mrb[0].mxu0
    %v1649 = vadd.f32 0.0, %v1648
    %v1650 = vpop.f32.mrb[0].mxu0
    %1651 = vmatprep.mubr.f32.mxu0 0.0
    %1652 = vmatmul.mubr.f32.gmra.mrb[0].mxu0 %v1571
    %v1653 = vpop.f32.mrb[0].mxu0
    %v1654 = vadd.f32 0.0, %v1653
    %v1655 = vpop.f32.mrb[0].mxu0
    %1656 = vmatprep.mubr.f32.mxu0 0.0
    %1657 = vmatmul.mubr.f32.gmra.mrb[0].mxu0 %v1574
    %v1658 = vpop.f32.mrb[0].mxu0
    %v1659 = vadd.f32 0.0, %v1658
    %v1660 = vpop.f32.mrb[0].mxu0
    %1661 = vmatprep.mubr.f32.mxu0 0.0
    %1662 = vmatmul.mubr.f32.gmra.mrb[0].mxu0 %v1577
    %v1663 = vpop.f32.mrb[0].mxu0
    %v1664 = vadd.f32 0.0, %v1663
    %v1665 = vpop.f32.mrb[0].mxu0
    %1666 = vmatprep.mubr.f32.mxu0 0.0
    %1667 = vmatmul.mubr.f32.gmra.mrb[0].mxu0 %v1580
    %v1668 = vpop.f32.mrb[0].mxu0
    %v1669 = vadd.f32 0.0, %v1668
    %v1670 = vpop.f32.mrb[0].mxu0
    %1671 = vdwg.mxu0
    %v1672 = vadd.f32 %v1238, %v1649
    %v1673 = vadd.f32 %v1243, %v1654
    %v1674 = vadd.f32 %v1248, %v1659
    %v1675 = vadd.f32 %v1253, %v1664
    %v1676 = vadd.f32 %v1258, %v1669
    %1677 = vrot.lane.b32.xlu0 %v413, 104
    %v1678 = vpop.permute.xlu0 %1677
    %1679 = vrot.lane.b32.xlu0 %v418, 104
    %v1680 = vpop.permute.xlu0 %1679
    %1681 = vrot.lane.b32.xlu0 %v423, 104
    %v1682 = vpop.permute.xlu0 %1681
    %1683 = vrot.lane.b32.xlu0 %v428, 104
    %v1684 = vpop.permute.xlu0 %1683
    %1685 = vrot.lane.b32.xlu0 %v433, 104
    %v1686 = vpop.permute.xlu0 %1685
    %1687 = vrot.lane.b32.xlu0 %v413, 72
    %v1688 = vpop.permute.xlu0 %1687
    %1689 = vrot.lane.b32.xlu0 %v418, 72
    %v1690 = vpop.permute.xlu0 %1689
    %1691 = vrot.lane.b32.xlu0 %v423, 72
    %v1692 = vpop.permute.xlu0 %1691
    %1693 = vrot.lane.b32.xlu0 %v428, 72
    %v1694 = vpop.permute.xlu0 %1693
    %1695 = vrot.lane.b32.xlu0 %v433, 72
    %v1696 = vpop.permute.xlu0 %1695
    %v1697 = vsel %vm455, %v1678, 0
    %v1699 = vsel %vm455, %v1680, 0
    %v1701 = vsel %vm455, %v1682, 0
    %v1703 = vsel %vm455, %v1684, 0
    %v1705 = vsel %vm455, %v1686, 0
    %v1707 = vsel %vm455, %v1688, 0
    %v1709 = vsel %vm455, %v1690, 0
    %v1711 = vsel %vm455, %v1692, 0
    %v1713 = vsel %vm455, %v1694, 0
    %v1715 = vsel %vm455, %v1696, 0
    %1717 = vmatprep.subr.mxu0 0.0
    %1718 = vmatpush1.xpose.msra.mxu0 %v1707
    %1719 = vmatprep.subr.mxu0 0.0
    %1720 = vmatpush1.xpose.msra.mxu0 %v1709
    %1721 = vmatprep.subr.mxu0 0.0
    %1722 = vmatpush1.xpose.msra.mxu0 %v1711
    %1723 = vmatprep.subr.mxu0 0.0
    %1724 = vmatpush1.xpose.msra.mxu0 %v1713
    %1725 = vmatprep.subr.mxu0 0.0
    %1726 = vmatpush1.xpose.msra.mxu0 %v1715
    %1727 = vmatprep.subr.mxu0 0.0
    %1728 = vmatpush1.xpose.msra.mxu0 0.0
    %1729 = vmatprep.subr.mxu0 0.0
    %1730 = vmatpush1.xpose.msra.mxu0 0.0
    %1731 = vmatprep.subr.mxu0 0.0
    %1732 = vmatpush1.xpose.msra.mxu0 0.0
    %1733 = vmatprep.subr.mxu0 0.0
    %1734 = vmatpush1.xpose.msra.mxu0 0.0
    %1735 = vmatprep.subr.mxu0 0.0
    %1736 = vmatpush1.xpose.msra.mxu0 0.0
    %1737 = vmatprep.subr.mxu0 0.0
    %1738 = vmatpush1.xpose.msra.mxu0 0.0
    %1739 = vmatprep.subr.mxu0 0.0
    %1740 = vmatpush1.xpose.msra.mxu0 0.0
    %1741 = vmatprep.subr.mxu0 0.0
    %1742 = vmatpush1.xpose.msra.mxu0 0.0
    %1743 = vmatprep.subr.mxu0 0.0
    %1744 = vmatpush1.xpose.msra.mxu0 0.0
    %1745 = vmatprep.subr.mxu0 0.0
    %1746 = vmatpush1.xpose.msra.mxu0 0.0
    %1747 = vmatprep.subr.mxu0 0.0
    %1748 = vmatpush1.xpose.msra.mxu0 0.0
    %1749 = vmatprep.subr.mxu0 0.0
    %1750 = vmatpush1.xpose.msra.mxu0 0.0
    %1751 = vmatprep.subr.mxu0 0.0
    %1752 = vmatpush1.xpose.msra.mxu0 0.0
    %1753 = vmatprep.subr.mxu0 0.0
    %1754 = vmatpush1.xpose.msra.mxu0 0.0
    %1755 = vmatprep.subr.mxu0 0.0
    %1756 = vmatpush1.xpose.msra.mxu0 0.0
    %1757 = vmatprep.subr.mxu0 0.0
    %1758 = vmatpush1.xpose.msra.mxu0 0.0
    %1759 = vmatprep.subr.mxu0 0.0
    %1760 = vmatpush1.xpose.msra.mxu0 0.0
    %1761 = vmatprep.subr.mxu0 0.0
    %1762 = vmatpush1.xpose.msra.mxu0 0.0
    %1763 = vmatprep.subr.mxu0 0.0
    %1764 = vmatpush1.xpose.msra.mxu0 0.0
    %1765 = vmatprep.subr.mxu0 0.0
    %1766 = vmatpush1.xpose.msra.mxu0 0.0
    %1767 = vmatprep.subr.mxu0 0.0
    %1768 = vmatpush1.xpose.msra.mxu0 0.0
    %1769 = vmatprep.subr.mxu0 0.0
    %1770 = vmatpush1.xpose.msra.mxu0 0.0
    %1771 = vmatprep.subr.mxu0 0.0
    %1772 = vmatpush1.xpose.msra.mxu0 0.0
    %1773 = vmatprep.subr.mxu0 0.0
    %1774 = vmatpush1.xpose.msra.mxu0 0.0
    %1775 = vmatprep.subr.mxu0 0.0
    %1776 = vmatpush1.xpose.msra.mxu0 0.0
    %1777 = vmatprep.subr.mxu0 0.0
    %1778 = vmatpush1.xpose.msra.mxu0 0.0
    %1779 = vmatprep.subr.mxu0 0.0
    %1780 = vmatpush1.xpose.msra.mxu0 0.0
    %1781 = vmatprep.mubr.f32.mxu0 0.0
    %1782 = vmatmul.mubr.f32.gmra.mrb[0].mxu0 %v1697
    %v1783 = vpop.f32.mrb[0].mxu0
    %v1784 = vadd.f32 %v236, %v1783
    %v1785 = vpop.f32.mrb[0].mxu0
    %1786 = vmatprep.mubr.f32.mxu0 0.0
    %1787 = vmatmul.mubr.f32.gmra.mrb[0].mxu0 %v1699
    %v1788 = vpop.f32.mrb[0].mxu0
    %v1789 = vadd.f32 %v237, %v1788
    %v1790 = vpop.f32.mrb[0].mxu0
    %1791 = vmatprep.mubr.f32.mxu0 0.0
    %1792 = vmatmul.mubr.f32.gmra.mrb[0].mxu0 %v1701
    %v1793 = vpop.f32.mrb[0].mxu0
    %v1794 = vadd.f32 %v238, %v1793
    %v1795 = vpop.f32.mrb[0].mxu0
    %1796 = vmatprep.mubr.f32.mxu0 0.0
    %1797 = vmatmul.mubr.f32.gmra.mrb[0].mxu0 %v1703
    %v1798 = vpop.f32.mrb[0].mxu0
    %v1799 = vadd.f32 %v239, %v1798
    %v1800 = vpop.f32.mrb[0].mxu0
    %1801 = vmatprep.mubr.f32.mxu0 0.0
    %1802 = vmatmul.mubr.f32.gmra.mrb[0].mxu0 %v1705
    %v1803 = vpop.f32.mrb[0].mxu0
    %v1804 = vadd.f32 %v240, %v1803
    %v1805 = vpop.f32.mrb[0].mxu0
    %1806 = vdwg.mxu0
    %v1807 = vsel %vm566, %v1784, -inf
    %1808 = vmax.xlane.f32.xlu0 %v1807
    %v1809 = vpop.xlane.xlu0 %1808
    %v1810 = vsel %vm566, %v1789, -inf
    %1811 = vmax.xlane.f32.xlu0 %v1810
    %v1812 = vpop.xlane.xlu0 %1811
    %v1813 = vsel %vm566, %v1794, -inf
    %1814 = vmax.xlane.f32.xlu0 %v1813
    %v1815 = vpop.xlane.xlu0 %1814
    %v1816 = vsel %vm566, %v1799, -inf
    %1817 = vmax.xlane.f32.xlu0 %v1816
    %v1818 = vpop.xlane.xlu0 %1817
    %v1819 = vsel %vm579, %v1804, -inf
    %1820 = vmax.xlane.f32.xlu0 %v1819
    %v1821 = vpop.xlane.xlu0 %1820
    %v1822 = vsub.f32 %v1784, %v1809
    %v1823 = vsub.f32 %v1789, %v1812
    %v1824 = vsub.f32 %v1794, %v1815
    %v1825 = vsub.f32 %v1799, %v1818
    %v1826 = vsub.f32 %v1804, %v1821
    %v1827 = vmul.f32 %v1822, 1.442695
    %v1828 = vpow.pop %v1827
    %v1829 = vmul.f32 %v1823, 1.442695
    %v1830 = vpow.pop %v1829
    %v1831 = vmul.f32 %v1824, 1.442695
    %v1832 = vpow.pop %v1831
    %v1833 = vmul.f32 %v1825, 1.442695
    %v1834 = vpow.pop %v1833
    %v1835 = vmul.f32 %v1826, 1.442695
    %v1836 = vpow.pop %v1835
    %v1837 = vsel %vm566, %v1828, 0.0
    %1838 = vadd.xlane.f32.xlu0 %v1837
    %v1839 = vpop.xlane.xlu0 %1838
    %v1840 = vsel %vm566, %v1830, 0.0
    %1841 = vadd.xlane.f32.xlu0 %v1840
    %v1842 = vpop.xlane.xlu0 %1841
    %v1843 = vsel %vm566, %v1832, 0.0
    %1844 = vadd.xlane.f32.xlu0 %v1843
    %v1845 = vpop.xlane.xlu0 %1844
    %v1846 = vsel %vm566, %v1834, 0.0
    %1847 = vadd.xlane.f32.xlu0 %v1846
    %v1848 = vpop.xlane.xlu0 %1847
    %v1849 = vsel %vm579, %v1836, 0.0
    %1850 = vadd.xlane.f32.xlu0 %v1849
    %v1851 = vpop.xlane.xlu0 %1850
    %v1852 = vrcp.pop %v1839
    %v1853 = vrcp.pop %v1842
    %v1854 = vrcp.pop %v1845
    %v1855 = vrcp.pop %v1848
    %v1856 = vrcp.pop %v1851
    %v1857 = vmul.f32 %v1828, %v1852
    %v1858 = vmul.f32 %v1830, %v1853
    %v1859 = vmul.f32 %v1832, %v1854
    %v1860 = vmul.f32 %v1834, %v1855
    %v1861 = vmul.f32 %v1836, %v1856
    %1862 = vrot.lane.b32.xlu0 %v413, 40
    %v1863 = vpop.permute.xlu0 %1862
    %1864 = vrot.lane.b32.xlu0 %v418, 40
    %v1865 = vpop.permute.xlu0 %1864
    %1866 = vrot.lane.b32.xlu0 %v423, 40
    %v1867 = vpop.permute.xlu0 %1866
    %1868 = vrot.lane.b32.xlu0 %v428, 40
    %v1869 = vpop.permute.xlu0 %1868
    %1870 = vrot.lane.b32.xlu0 %v433, 40
    %v1871 = vpop.permute.xlu0 %1870
    %v1877 = vsel %vm566, %v1857, 0
    %v1880 = vsel %vm566, %v1858, 0
    %v1883 = vsel %vm566, %v1859, 0
    %v1886 = vsel %vm566, %v1860, 0
    %v1889 = vsel %vm566, %v1861, 0
    %v1891 = vsel %vm652, %v1871, 0
    %1893 = vmatprep.subr.mxu0 0.0
    %1894 = vmatpush1.msra.mxu0 %v1863
    %1895 = vmatprep.subr.mxu0 0.0
    %1896 = vmatpush1.msra.mxu0 %v1865
    %1897 = vmatprep.subr.mxu0 0.0
    %1898 = vmatpush1.msra.mxu0 %v1867
    %1899 = vmatprep.subr.mxu0 0.0
    %1900 = vmatpush1.msra.mxu0 %v1869
    %1901 = vmatprep.subr.mxu0 0.0
    %1902 = vmatpush1.msra.mxu0 %v1891
    %1903 = vmatprep.subr.mxu0 0.0
    %1904 = vmatpush1.msra.mxu0 0.0
    %1905 = vmatprep.subr.mxu0 0.0
    %1906 = vmatpush1.msra.mxu0 0.0
    %1907 = vmatprep.subr.mxu0 0.0
    %1908 = vmatpush1.msra.mxu0 0.0
    %1909 = vmatprep.subr.mxu0 0.0
    %1910 = vmatpush1.msra.mxu0 0.0
    %1911 = vmatprep.subr.mxu0 0.0
    %1912 = vmatpush1.msra.mxu0 0.0
    %1913 = vmatprep.subr.mxu0 0.0
    %1914 = vmatpush1.msra.mxu0 0.0
    %1915 = vmatprep.subr.mxu0 0.0
    %1916 = vmatpush1.msra.mxu0 0.0
    %1917 = vmatprep.subr.mxu0 0.0
    %1918 = vmatpush1.msra.mxu0 0.0
    %1919 = vmatprep.subr.mxu0 0.0
    %1920 = vmatpush1.msra.mxu0 0.0
    %1921 = vmatprep.subr.mxu0 0.0
    %1922 = vmatpush1.msra.mxu0 0.0
    %1923 = vmatprep.subr.mxu0 0.0
    %1924 = vmatpush1.msra.mxu0 0.0
    %1925 = vmatprep.subr.mxu0 0.0
    %1926 = vmatpush1.msra.mxu0 0.0
    %1927 = vmatprep.subr.mxu0 0.0
    %1928 = vmatpush1.msra.mxu0 0.0
    %1929 = vmatprep.subr.mxu0 0.0
    %1930 = vmatpush1.msra.mxu0 0.0
    %1931 = vmatprep.subr.mxu0 0.0
    %1932 = vmatpush1.msra.mxu0 0.0
    %1933 = vmatprep.subr.mxu0 0.0
    %1934 = vmatpush1.msra.mxu0 0.0
    %1935 = vmatprep.subr.mxu0 0.0
    %1936 = vmatpush1.msra.mxu0 0.0
    %1937 = vmatprep.subr.mxu0 0.0
    %1938 = vmatpush1.msra.mxu0 0.0
    %1939 = vmatprep.subr.mxu0 0.0
    %1940 = vmatpush1.msra.mxu0 0.0
    %1941 = vmatprep.subr.mxu0 0.0
    %1942 = vmatpush1.msra.mxu0 0.0
    %1943 = vmatprep.subr.mxu0 0.0
    %1944 = vmatpush1.msra.mxu0 0.0
    %1945 = vmatprep.subr.mxu0 0.0
    %1946 = vmatpush1.msra.mxu0 0.0
    %1947 = vmatprep.subr.mxu0 0.0
    %1948 = vmatpush1.msra.mxu0 0.0
    %1949 = vmatprep.subr.mxu0 0.0
    %1950 = vmatpush1.msra.mxu0 0.0
    %1951 = vmatprep.subr.mxu0 0.0
    %1952 = vmatpush1.msra.mxu0 0.0
    %1953 = vmatprep.subr.mxu0 0.0
    %1954 = vmatpush1.msra.mxu0 0.0
    %1955 = vmatprep.subr.mxu0 0.0
    %1956 = vmatpush1.msra.mxu0 0.0
    %1957 = vmatprep.mubr.f32.mxu0 0.0
    %1958 = vmatmul.mubr.f32.gmra.mrb[0].mxu0 %v1877
    %v1959 = vpop.f32.mrb[0].mxu0
    %v1960 = vadd.f32 0.0, %v1959
    %v1961 = vpop.f32.mrb[0].mxu0
    %1962 = vmatprep.mubr.f32.mxu0 0.0
    %1963 = vmatmul.mubr.f32.gmra.mrb[0].mxu0 %v1880
    %v1964 = vpop.f32.mrb[0].mxu0
    %v1965 = vadd.f32 0.0, %v1964
    %v1966 = vpop.f32.mrb[0].mxu0
    %1967 = vmatprep.mubr.f32.mxu0 0.0
    %1968 = vmatmul.mubr.f32.gmra.mrb[0].mxu0 %v1883
    %v1969 = vpop.f32.mrb[0].mxu0
    %v1970 = vadd.f32 0.0, %v1969
    %v1971 = vpop.f32.mrb[0].mxu0
    %1972 = vmatprep.mubr.f32.mxu0 0.0
    %1973 = vmatmul.mubr.f32.gmra.mrb[0].mxu0 %v1886
    %v1974 = vpop.f32.mrb[0].mxu0
    %v1975 = vadd.f32 0.0, %v1974
    %v1976 = vpop.f32.mrb[0].mxu0
    %1977 = vmatprep.mubr.f32.mxu0 0.0
    %1978 = vmatmul.mubr.f32.gmra.mrb[0].mxu0 %v1889
    %v1979 = vpop.f32.mrb[0].mxu0
    %v1980 = vadd.f32 0.0, %v1979
    %v1981 = vpop.f32.mrb[0].mxu0
    %1982 = vdwg.mxu0
    %v1984 = vsel %vm455, %v1960, 0
    %v1987 = vsel %vm455, %v1965, 0
    %v1990 = vsel %vm455, %v1970, 0
    %v1993 = vsel %vm455, %v1975, 0
    %v1996 = vsel %vm455, %v1980, 0
    %1998 = vmatprep.subr.mxu0 0.0
    %1999 = vmatpush1.msra.mxu0 %v439
    %2000 = vmatprep.subr.mxu0 0.0
    %2001 = vmatpush1.msra.mxu0 0.0
    %2002 = vmatprep.subr.mxu0 0.0
    %2003 = vmatpush1.msra.mxu0 0.0
    %2004 = vmatprep.subr.mxu0 0.0
    %2005 = vmatpush1.msra.mxu0 0.0
    %2006 = vmatprep.subr.mxu0 0.0
    %2007 = vmatpush1.msra.mxu0 0.0
    %2008 = vmatprep.subr.mxu0 0.0
    %2009 = vmatpush1.msra.mxu0 0.0
    %2010 = vmatprep.subr.mxu0 0.0
    %2011 = vmatpush1.msra.mxu0 0.0
    %2012 = vmatprep.subr.mxu0 0.0
    %2013 = vmatpush1.msra.mxu0 0.0
    %2014 = vmatprep.subr.mxu0 0.0
    %2015 = vmatpush1.msra.mxu0 0.0
    %2016 = vmatprep.subr.mxu0 0.0
    %2017 = vmatpush1.msra.mxu0 0.0
    %2018 = vmatprep.subr.mxu0 0.0
    %2019 = vmatpush1.msra.mxu0 0.0
    %2020 = vmatprep.subr.mxu0 0.0
    %2021 = vmatpush1.msra.mxu0 0.0
    %2022 = vmatprep.subr.mxu0 0.0
    %2023 = vmatpush1.msra.mxu0 0.0
    %2024 = vmatprep.subr.mxu0 0.0
    %2025 = vmatpush1.msra.mxu0 0.0
    %2026 = vmatprep.subr.mxu0 0.0
    %2027 = vmatpush1.msra.mxu0 0.0
    %2028 = vmatprep.subr.mxu0 0.0
    %2029 = vmatpush1.msra.mxu0 0.0
    %2030 = vmatprep.subr.mxu0 0.0
    %2031 = vmatpush1.msra.mxu0 0.0
    %2032 = vmatprep.subr.mxu0 0.0
    %2033 = vmatpush1.msra.mxu0 0.0
    %2034 = vmatprep.subr.mxu0 0.0
    %2035 = vmatpush1.msra.mxu0 0.0
    %2036 = vmatprep.subr.mxu0 0.0
    %2037 = vmatpush1.msra.mxu0 0.0
    %2038 = vmatprep.subr.mxu0 0.0
    %2039 = vmatpush1.msra.mxu0 0.0
    %2040 = vmatprep.subr.mxu0 0.0
    %2041 = vmatpush1.msra.mxu0 0.0
    %2042 = vmatprep.subr.mxu0 0.0
    %2043 = vmatpush1.msra.mxu0 0.0
    %2044 = vmatprep.subr.mxu0 0.0
    %2045 = vmatpush1.msra.mxu0 0.0
    %2046 = vmatprep.subr.mxu0 0.0
    %2047 = vmatpush1.msra.mxu0 0.0
    %2048 = vmatprep.subr.mxu0 0.0
    %2049 = vmatpush1.msra.mxu0 0.0
    %2050 = vmatprep.subr.mxu0 0.0
    %2051 = vmatpush1.msra.mxu0 0.0
    %2052 = vmatprep.subr.mxu0 0.0
    %2053 = vmatpush1.msra.mxu0 0.0
    %2054 = vmatprep.subr.mxu0 0.0
    %2055 = vmatpush1.msra.mxu0 0.0
    %2056 = vmatprep.subr.mxu0 0.0
    %2057 = vmatpush1.msra.mxu0 0.0
    %2058 = vmatprep.subr.mxu0 0.0
    %2059 = vmatpush1.msra.mxu0 0.0
    %2060 = vmatprep.subr.mxu0 0.0
    %2061 = vmatpush1.msra.mxu0 0.0
    %2062 = vmatprep.mubr.f32.mxu0 0.0
    %2063 = vmatmul.mubr.f32.gmra.mrb[0].mxu0 %v1984
    %v2064 = vpop.f32.mrb[0].mxu0
    %v2065 = vadd.f32 0.0, %v2064
    %v2066 = vpop.f32.mrb[0].mxu0
    %2067 = vmatprep.mubr.f32.mxu0 0.0
    %2068 = vmatmul.mubr.f32.gmra.mrb[0].mxu0 %v1987
    %v2069 = vpop.f32.mrb[0].mxu0
    %v2070 = vadd.f32 0.0, %v2069
    %v2071 = vpop.f32.mrb[0].mxu0
    %2072 = vmatprep.mubr.f32.mxu0 0.0
    %2073 = vmatmul.mubr.f32.gmra.mrb[0].mxu0 %v1990
    %v2074 = vpop.f32.mrb[0].mxu0
    %v2075 = vadd.f32 0.0, %v2074
    %v2076 = vpop.f32.mrb[0].mxu0
    %2077 = vmatprep.mubr.f32.mxu0 0.0
    %2078 = vmatmul.mubr.f32.gmra.mrb[0].mxu0 %v1993
    %v2079 = vpop.f32.mrb[0].mxu0
    %v2080 = vadd.f32 0.0, %v2079
    %v2081 = vpop.f32.mrb[0].mxu0
    %2082 = vmatprep.mubr.f32.mxu0 0.0
    %2083 = vmatmul.mubr.f32.gmra.mrb[0].mxu0 %v1996
    %v2084 = vpop.f32.mrb[0].mxu0
    %v2085 = vadd.f32 0.0, %v2084
    %v2086 = vpop.f32.mrb[0].mxu0
    %2087 = vdwg.mxu0
    %v2088 = vadd.f32 %v1672, %v2065
    %v2089 = vadd.f32 %v1673, %v2070
    %v2090 = vadd.f32 %v1674, %v2075
    %v2091 = vadd.f32 %v1675, %v2080
    %v2092 = vadd.f32 %v1676, %v2085
    %v2093 = vadd.f32 %v213, %v2088
    %v2094 = vadd.f32 %v218, %v2089
    %v2095 = vadd.f32 %v223, %v2090
    %v2096 = vadd.f32 %v228, %v2091
    %v2097 = vadd.f32 %v233, %v2092
    %v2098 = vlaneseq
    %v2099 = vshrl.u32 %v2098, 7
    %v2100 = vsub.s32 2, %v2099
    %v2101 = vrot.slane %v241, %v2100
    %v2102 = vadd.f32 %v2093, %v2101
    %v2103 = vadd.f32 %v2094, %v2101
    %v2104 = vadd.f32 %v2095, %v2101
    %v2105 = vadd.f32 %v2096, %v2101
    %v2106 = vadd.f32 %v2097, %v2101
    %v2107 = vsel %vm130, %v2102, 0.0
    %2108 = vadd.xlane.f32.xlu0 %v2107
    %v2109 = vpop.xlane.xlu0 %2108
    %v2110 = vsel %vm130, %v2103, 0.0
    %2111 = vadd.xlane.f32.xlu0 %v2110
    %v2112 = vpop.xlane.xlu0 %2111
    %v2113 = vsel %vm130, %v2104, 0.0
    %2114 = vadd.xlane.f32.xlu0 %v2113
    %v2115 = vpop.xlane.xlu0 %2114
    %v2116 = vsel %vm130, %v2105, 0.0
    %2117 = vadd.xlane.f32.xlu0 %v2116
    %v2118 = vpop.xlane.xlu0 %2117
    %v2119 = vsel %vm254, %v2106, 0.0
    %2120 = vadd.xlane.f32.xlu0 %v2119
    %v2121 = vpop.xlane.xlu0 %2120
    %v2122 = vmul.f32 %v2109, %v258
    %v2123 = vmul.f32 %v2112, %v258
    %v2124 = vmul.f32 %v2115, %v258
    %v2125 = vmul.f32 %v2118, %v258
    %v2126 = vmul.f32 %v2121, %v258
    %v2127 = vsub.f32 %v2102, %v2122
    %v2128 = vsub.f32 %v2103, %v2123
    %v2129 = vsub.f32 %v2104, %v2124
    %v2130 = vsub.f32 %v2105, %v2125
    %v2131 = vsub.f32 %v2106, %v2126
    %v2132 = vmul.f32 %v2127, %v2127
    %v2133 = vmul.f32 %v2128, %v2128
    %v2134 = vmul.f32 %v2129, %v2129
    %v2135 = vmul.f32 %v2130, %v2130
    %v2136 = vmul.f32 %v2131, %v2131
    %v2137 = vsel %vm130, %v2132, 0.0
    %2138 = vadd.xlane.f32.xlu0 %v2137
    %v2139 = vpop.xlane.xlu0 %2138
    %v2140 = vsel %vm130, %v2133, 0.0
    %2141 = vadd.xlane.f32.xlu0 %v2140
    %v2142 = vpop.xlane.xlu0 %2141
    %v2143 = vsel %vm130, %v2134, 0.0
    %2144 = vadd.xlane.f32.xlu0 %v2143
    %v2145 = vpop.xlane.xlu0 %2144
    %v2146 = vsel %vm130, %v2135, 0.0
    %2147 = vadd.xlane.f32.xlu0 %v2146
    %v2148 = vpop.xlane.xlu0 %2147
    %v2149 = vsel %vm254, %v2136, 0.0
    %2150 = vadd.xlane.f32.xlu0 %v2149
    %v2151 = vpop.xlane.xlu0 %2150
    %v2152 = vmul.f32 %v2139, %v258
    %v2153 = vmul.f32 %v2142, %v258
    %v2154 = vmul.f32 %v2145, %v258
    %v2155 = vmul.f32 %v2148, %v258
    %v2156 = vmul.f32 %v2151, %v258
    %v2157 = vadd.f32 %v2152, 1e-05
    %v2158 = vadd.f32 %v2153, 1e-05
    %v2159 = vadd.f32 %v2154, 1e-05
    %v2160 = vadd.f32 %v2155, 1e-05
    %v2161 = vadd.f32 %v2156, 1e-05
    %v2162 = vrsqrt.pop %v2157
    %v2163 = vrsqrt.pop %v2158
    %v2164 = vrsqrt.pop %v2159
    %v2165 = vrsqrt.pop %v2160
    %v2166 = vrsqrt.pop %v2161
    %v2167 = vmul.f32 %v2127, %v2162
    %v2168 = vmul.f32 %v2128, %v2163
    %v2169 = vmul.f32 %v2129, %v2164
    %v2170 = vmul.f32 %v2130, %v2165
    %v2171 = vmul.f32 %v2131, %v2166
    %v2172 = vlaneseq
    %v2173 = vshrl.u32 %v2172, 7
    %v2174 = vsub.s32 3, %v2173
    %v2175 = vrot.slane %v241, %v2174
    %v2176 = vmul.f32 %v2167, %v2175
    %v2177 = vmul.f32 %v2168, %v2175
    %v2178 = vmul.f32 %v2169, %v2175
    %v2179 = vmul.f32 %v2170, %v2175
    %v2180 = vmul.f32 %v2171, %v2175
    %v2181 = vlaneseq
    %v2182 = vshrl.u32 %v2181, 7
    %v2183 = vsub.s32 4, %v2182
    %v2184 = vrot.slane %v241, %v2183
    %v2185 = vadd.f32 %v2176, %v2184
    %v2186 = vadd.f32 %v2177, %v2184
    %v2187 = vadd.f32 %v2178, %v2184
    %v2188 = vadd.f32 %v2179, %v2184
    %v2189 = vadd.f32 %v2180, %v2184
    %v2190 = vld [vmem:[%s1 + $0xf0] sm:$0xff]
    %v2191 = vld [vmem:[%s1 + $0xf8] sm:$0xff]
    %v2192 = vld [vmem:[%s1 + $0x100] sm:$0xff]
    %v2193 = vld [vmem:[%s1 + $0x108] sm:$0xff]
    %v2194 = vlaneseq
    %v2195 = vshrl.u32 %v2194, 7
    %v2196 = vsub.s32 5, %v2195
    %v2197 = vrot.slane %v241, %v2196
    %v2199 = vsel %vm130, %v2185, 0
    %v2202 = vsel %vm130, %v2186, 0
    %v2205 = vsel %vm130, %v2187, 0
    %v2208 = vsel %vm130, %v2188, 0
    %v2211 = vsel %vm130, %v2189, 0
    %2213 = vmatprep.subr.mxu0 0.0
    %2214 = vmatpush1.msra.mxu0 %v2190
    %2215 = vmatprep.subr.mxu0 0.0
    %2216 = vmatpush1.msra.mxu0 %v2191
    %2217 = vmatprep.subr.mxu0 0.0
    %2218 = vmatpush1.msra.mxu0 %v2192
    %2219 = vmatprep.subr.mxu0 0.0
    %2220 = vmatpush1.msra.mxu0 %v2193
    %2221 = vmatprep.subr.mxu0 0.0
    %2222 = vmatpush1.msra.mxu0 0.0
    %2223 = vmatprep.subr.mxu0 0.0
    %2224 = vmatpush1.msra.mxu0 0.0
    %2225 = vmatprep.subr.mxu0 0.0
    %2226 = vmatpush1.msra.mxu0 0.0
    %2227 = vmatprep.subr.mxu0 0.0
    %2228 = vmatpush1.msra.mxu0 0.0
    %2229 = vmatprep.subr.mxu0 0.0
    %2230 = vmatpush1.msra.mxu0 0.0
    %2231 = vmatprep.subr.mxu0 0.0
    %2232 = vmatpush1.msra.mxu0 0.0
    %2233 = vmatprep.subr.mxu0 0.0
    %2234 = vmatpush1.msra.mxu0 0.0
    %2235 = vmatprep.subr.mxu0 0.0
    %2236 = vmatpush1.msra.mxu0 0.0
    %2237 = vmatprep.subr.mxu0 0.0
    %2238 = vmatpush1.msra.mxu0 0.0
    %2239 = vmatprep.subr.mxu0 0.0
    %2240 = vmatpush1.msra.mxu0 0.0
    %2241 = vmatprep.subr.mxu0 0.0
    %2242 = vmatpush1.msra.mxu0 0.0
    %2243 = vmatprep.subr.mxu0 0.0
    %2244 = vmatpush1.msra.mxu0 0.0
    %2245 = vmatprep.subr.mxu0 0.0
    %2246 = vmatpush1.msra.mxu0 0.0
    %2247 = vmatprep.subr.mxu0 0.0
    %2248 = vmatpush1.msra.mxu0 0.0
    %2249 = vmatprep.subr.mxu0 0.0
    %2250 = vmatpush1.msra.mxu0 0.0
    %2251 = vmatprep.subr.mxu0 0.0
    %2252 = vmatpush1.msra.mxu0 0.0
    %2253 = vmatprep.subr.mxu0 0.0
    %2254 = vmatpush1.msra.mxu0 0.0
    %2255 = vmatprep.subr.mxu0 0.0
    %2256 = vmatpush1.msra.mxu0 0.0
    %2257 = vmatprep.subr.mxu0 0.0
    %2258 = vmatpush1.msra.mxu0 0.0
    %2259 = vmatprep.subr.mxu0 0.0
    %2260 = vmatpush1.msra.mxu0 0.0
    %2261 = vmatprep.subr.mxu0 0.0
    %2262 = vmatpush1.msra.mxu0 0.0
    %2263 = vmatprep.subr.mxu0 0.0
    %2264 = vmatpush1.msra.mxu0 0.0
    %2265 = vmatprep.subr.mxu0 0.0
    %2266 = vmatpush1.msra.mxu0 0.0
    %2267 = vmatprep.subr.mxu0 0.0
    %2268 = vmatpush1.msra.mxu0 0.0
    %2269 = vmatprep.subr.mxu0 0.0
    %2270 = vmatpush1.msra.mxu0 0.0
    %2271 = vmatprep.subr.mxu0 0.0
    %2272 = vmatpush1.msra.mxu0 0.0
    %2273 = vmatprep.subr.mxu0 0.0
    %2274 = vmatpush1.msra.mxu0 0.0
    %2275 = vmatprep.subr.mxu0 0.0
    %2276 = vmatpush1.msra.mxu0 0.0
    %2277 = vmatprep.mubr.f32.mxu0 0.0
    %2278 = vmatmul.mubr.f32.gmra.mrb[0].mxu0 %v2199
    %v2279 = vpop.f32.mrb[0].mxu0
    %v2280 = vadd.f32 %v2197, %v2279
    %v2281 = vpop.f32.mrb[0].mxu0
    %2282 = vmatprep.mubr.f32.mxu0 0.0
    %2283 = vmatmul.mubr.f32.gmra.mrb[0].mxu0 %v2202
    %v2284 = vpop.f32.mrb[0].mxu0
    %v2285 = vadd.f32 %v2197, %v2284
    %v2286 = vpop.f32.mrb[0].mxu0
    %2287 = vmatprep.mubr.f32.mxu0 0.0
    %2288 = vmatmul.mubr.f32.gmra.mrb[0].mxu0 %v2205
    %v2289 = vpop.f32.mrb[0].mxu0
    %v2290 = vadd.f32 %v2197, %v2289
    %v2291 = vpop.f32.mrb[0].mxu0
    %2292 = vmatprep.mubr.f32.mxu0 0.0
    %2293 = vmatmul.mubr.f32.gmra.mrb[0].mxu0 %v2208
    %v2294 = vpop.f32.mrb[0].mxu0
    %v2295 = vadd.f32 %v2197, %v2294
    %v2296 = vpop.f32.mrb[0].mxu0
    %2297 = vmatprep.mubr.f32.mxu0 0.0
    %2298 = vmatmul.mubr.f32.gmra.mrb[0].mxu0 %v2211
    %v2299 = vpop.f32.mrb[0].mxu0
    %v2300 = vadd.f32 %v2197, %v2299
    %v2301 = vpop.f32.mrb[0].mxu0
    %2302 = vdwg.mxu0
    %v2303 = vmul.f32 %v2280, 0.5
    %v2304 = vmul.f32 %v2285, 0.5
    %v2305 = vmul.f32 %v2290, 0.5
    %v2306 = vmul.f32 %v2295, 0.5
    %v2307 = vmul.f32 %v2300, 0.5
    %v2308 = vrcp.pop 1.4142135
    %v2309 = vmul.f32 %v2280, %v2308
    %v2310 = vmul.f32 %v2285, %v2308
    %v2311 = vmul.f32 %v2290, %v2308
    %v2312 = vmul.f32 %v2295, %v2308
    %v2313 = vmul.f32 %v2300, %v2308
    %vm2314 = vcmp.ge.f32.partialorder %v2309, 0.0
    %vm2315 = vcmp.ge.f32.partialorder %v2310, 0.0
    %vm2316 = vcmp.ge.f32.partialorder %v2311, 0.0
    %vm2317 = vcmp.ge.f32.partialorder %v2312, 0.0
    %vm2318 = vcmp.ge.f32.partialorder %v2313, 0.0
    %v2319 = vsel %vm2314, 1.0, -1.0
    %v2320 = vsel %vm2315, 1.0, -1.0
    %v2321 = vsel %vm2316, 1.0, -1.0
    %v2322 = vsel %vm2317, 1.0, -1.0
    %v2323 = vsel %vm2318, 1.0, -1.0
    %v2324 = vand.u32 2147483647, %v2309
    %v2325 = vand.u32 2147483647, %v2310
    %v2326 = vand.u32 2147483647, %v2311
    %v2327 = vand.u32 2147483647, %v2312
    %v2328 = vand.u32 2147483647, %v2313
    %v2329 = vmul.f32 %v2324, 0.3275911
    %v2330 = vmul.f32 %v2325, 0.3275911
    %v2331 = vmul.f32 %v2326, 0.3275911
    %v2332 = vmul.f32 %v2327, 0.3275911
    %v2333 = vmul.f32 %v2328, 0.3275911
    %v2334 = vadd.f32 %v2329, 1.0
    %v2335 = vadd.f32 %v2330, 1.0
    %v2336 = vadd.f32 %v2331, 1.0
    %v2337 = vadd.f32 %v2332, 1.0
    %v2338 = vadd.f32 %v2333, 1.0
    %v2339 = vrcp.pop %v2334
    %v2340 = vmul.f32 1.0, %v2339
    %v2341 = vrcp.pop %v2335
    %v2342 = vmul.f32 1.0, %v2341
    %v2343 = vrcp.pop %v2336
    %v2344 = vmul.f32 1.0, %v2343
    %v2345 = vrcp.pop %v2337
    %v2346 = vmul.f32 1.0, %v2345
    %v2347 = vrcp.pop %v2338
    %v2348 = vmul.f32 1.0, %v2347
    %v2349 = vmul.f32 %v2340, 1.0614054
    %v2350 = vmul.f32 %v2342, 1.0614054
    %v2351 = vmul.f32 %v2344, 1.0614054
    %v2352 = vmul.f32 %v2346, 1.0614054
    %v2353 = vmul.f32 %v2348, 1.0614054
    %v2354 = vadd.f32 %v2349, -1.4531521
    %v2355 = vadd.f32 %v2350, -1.4531521
    %v2356 = vadd.f32 %v2351, -1.4531521
    %v2357 = vadd.f32 %v2352, -1.4531521
    %v2358 = vadd.f32 %v2353, -1.4531521
    %v2359 = vmul.f32 %v2354, %v2340
    %v2360 = vmul.f32 %v2355, %v2342
    %v2361 = vmul.f32 %v2356, %v2344
    %v2362 = vmul.f32 %v2357, %v2346
    %v2363 = vmul.f32 %v2358, %v2348
    %v2364 = vadd.f32 %v2359, 1.4214138
    %v2365 = vadd.f32 %v2360, 1.4214138
    %v2366 = vadd.f32 %v2361, 1.4214138
    %v2367 = vadd.f32 %v2362, 1.4214138
    %v2368 = vadd.f32 %v2363, 1.4214138
    %v2369 = vmul.f32 %v2364, %v2340
    %v2370 = vmul.f32 %v2365, %v2342
    %v2371 = vmul.f32 %v2366, %v2344
    %v2372 = vmul.f32 %v2367, %v2346
    %v2373 = vmul.f32 %v2368, %v2348
    %v2374 = vadd.f32 %v2369, -0.28449672
    %v2375 = vadd.f32 %v2370, -0.28449672
    %v2376 = vadd.f32 %v2371, -0.28449672
    %v2377 = vadd.f32 %v2372, -0.28449672
    %v2378 = vadd.f32 %v2373, -0.28449672
    %v2379 = vmul.f32 %v2374, %v2340
    %v2380 = vmul.f32 %v2375, %v2342
    %v2381 = vmul.f32 %v2376, %v2344
    %v2382 = vmul.f32 %v2377, %v2346
    %v2383 = vmul.f32 %v2378, %v2348
    %v2384 = vadd.f32 %v2379, 0.2548296
    %v2385 = vadd.f32 %v2380, 0.2548296
    %v2386 = vadd.f32 %v2381, 0.2548296
    %v2387 = vadd.f32 %v2382, 0.2548296
    %v2388 = vadd.f32 %v2383, 0.2548296
    %v2389 = vmul.f32 %v2384, %v2340
    %v2390 = vmul.f32 %v2385, %v2342
    %v2391 = vmul.f32 %v2386, %v2344
    %v2392 = vmul.f32 %v2387, %v2346
    %v2393 = vmul.f32 %v2388, %v2348
    %v2394 = vsub.f32 0.0, %v2324
    %v2395 = vsub.f32 0.0, %v2325
    %v2396 = vsub.f32 0.0, %v2326
    %v2397 = vsub.f32 0.0, %v2327
    %v2398 = vsub.f32 0.0, %v2328
    %v2399 = vmul.f32 %v2394, %v2324
    %v2400 = vmul.f32 %v2395, %v2325
    %v2401 = vmul.f32 %v2396, %v2326
    %v2402 = vmul.f32 %v2397, %v2327
    %v2403 = vmul.f32 %v2398, %v2328
    %v2404 = vmul.f32 %v2399, 1.442695
    %v2405 = vpow.pop %v2404
    %v2406 = vmul.f32 %v2400, 1.442695
    %v2407 = vpow.pop %v2406
    %v2408 = vmul.f32 %v2401, 1.442695
    %v2409 = vpow.pop %v2408
    %v2410 = vmul.f32 %v2402, 1.442695
    %v2411 = vpow.pop %v2410
    %v2412 = vmul.f32 %v2403, 1.442695
    %v2413 = vpow.pop %v2412
    %v2414 = vmul.f32 %v2389, %v2405
    %v2415 = vmul.f32 %v2390, %v2407
    %v2416 = vmul.f32 %v2391, %v2409
    %v2417 = vmul.f32 %v2392, %v2411
    %v2418 = vmul.f32 %v2393, %v2413
    %v2419 = vsub.f32 1.0, %v2414
    %v2420 = vsub.f32 1.0, %v2415
    %v2421 = vsub.f32 1.0, %v2416
    %v2422 = vsub.f32 1.0, %v2417
    %v2423 = vsub.f32 1.0, %v2418
    %v2424 = vmul.f32 %v2319, %v2419
    %v2425 = vmul.f32 %v2320, %v2420
    %v2426 = vmul.f32 %v2321, %v2421
    %v2427 = vmul.f32 %v2322, %v2422
    %v2428 = vmul.f32 %v2323, %v2423
    %v2429 = vadd.f32 %v2424, 1.0
    %v2430 = vadd.f32 %v2425, 1.0
    %v2431 = vadd.f32 %v2426, 1.0
    %v2432 = vadd.f32 %v2427, 1.0
    %v2433 = vadd.f32 %v2428, 1.0
    %v2434 = vmul.f32 %v2303, %v2429
    %v2435 = vmul.f32 %v2304, %v2430
    %v2436 = vmul.f32 %v2305, %v2431
    %v2437 = vmul.f32 %v2306, %v2432
    %v2438 = vmul.f32 %v2307, %v2433
    %v2439 = vld [vmem:[%s1 + $0x110] sm:$0xff]
    %v2440 = vld [vmem:[%s1 + $0x118] sm:$0xff]
    %v2441 = vld [vmem:[%s1 + $0x120] sm:$0xff]
    %v2442 = vld [vmem:[%s1 + $0x128] sm:$0xff]
    %v2444 = vsel %vm130, %v2434, 0
    %v2447 = vsel %vm130, %v2435, 0
    %v2450 = vsel %vm130, %v2436, 0
    %v2453 = vsel %vm130, %v2437, 0
    %v2456 = vsel %vm130, %v2438, 0
    %2458 = vmatprep.subr.mxu0 0.0
    %2459 = vmatpush1.msra.mxu0 %v2439
    %2460 = vmatprep.subr.mxu0 0.0
    %2461 = vmatpush1.msra.mxu0 %v2440
    %2462 = vmatprep.subr.mxu0 0.0
    %2463 = vmatpush1.msra.mxu0 %v2441
    %2464 = vmatprep.subr.mxu0 0.0
    %2465 = vmatpush1.msra.mxu0 %v2442
    %2466 = vmatprep.subr.mxu0 0.0
    %2467 = vmatpush1.msra.mxu0 0.0
    %2468 = vmatprep.subr.mxu0 0.0
    %2469 = vmatpush1.msra.mxu0 0.0
    %2470 = vmatprep.subr.mxu0 0.0
    %2471 = vmatpush1.msra.mxu0 0.0
    %2472 = vmatprep.subr.mxu0 0.0
    %2473 = vmatpush1.msra.mxu0 0.0
    %2474 = vmatprep.subr.mxu0 0.0
    %2475 = vmatpush1.msra.mxu0 0.0
    %2476 = vmatprep.subr.mxu0 0.0
    %2477 = vmatpush1.msra.mxu0 0.0
    %2478 = vmatprep.subr.mxu0 0.0
    %2479 = vmatpush1.msra.mxu0 0.0
    %2480 = vmatprep.subr.mxu0 0.0
    %2481 = vmatpush1.msra.mxu0 0.0
    %2482 = vmatprep.subr.mxu0 0.0
    %2483 = vmatpush1.msra.mxu0 0.0
    %2484 = vmatprep.subr.mxu0 0.0
    %2485 = vmatpush1.msra.mxu0 0.0
    %2486 = vmatprep.subr.mxu0 0.0
    %2487 = vmatpush1.msra.mxu0 0.0
    %2488 = vmatprep.subr.mxu0 0.0
    %2489 = vmatpush1.msra.mxu0 0.0
    %2490 = vmatprep.subr.mxu0 0.0
    %2491 = vmatpush1.msra.mxu0 0.0
    %2492 = vmatprep.subr.mxu0 0.0
    %2493 = vmatpush1.msra.mxu0 0.0
    %2494 = vmatprep.subr.mxu0 0.0
    %2495 = vmatpush1.msra.mxu0 0.0
    %2496 = vmatprep.subr.mxu0 0.0
    %2497 = vmatpush1.msra.mxu0 0.0
    %2498 = vmatprep.subr.mxu0 0.0
    %2499 = vmatpush1.msra.mxu0 0.0
    %2500 = vmatprep.subr.mxu0 0.0
    %2501 = vmatpush1.msra.mxu0 0.0
    %2502 = vmatprep.subr.mxu0 0.0
    %2503 = vmatpush1.msra.mxu0 0.0
    %2504 = vmatprep.subr.mxu0 0.0
    %2505 = vmatpush1.msra.mxu0 0.0
    %2506 = vmatprep.subr.mxu0 0.0
    %2507 = vmatpush1.msra.mxu0 0.0
    %2508 = vmatprep.subr.mxu0 0.0
    %2509 = vmatpush1.msra.mxu0 0.0
    %2510 = vmatprep.subr.mxu0 0.0
    %2511 = vmatpush1.msra.mxu0 0.0
    %2512 = vmatprep.subr.mxu0 0.0
    %2513 = vmatpush1.msra.mxu0 0.0
    %2514 = vmatprep.subr.mxu0 0.0
    %2515 = vmatpush1.msra.mxu0 0.0
    %2516 = vmatprep.subr.mxu0 0.0
    %2517 = vmatpush1.msra.mxu0 0.0
    %2518 = vmatprep.subr.mxu0 0.0
    %2519 = vmatpush1.msra.mxu0 0.0
    %2520 = vmatprep.subr.mxu0 0.0
    %2521 = vmatpush1.msra.mxu0 0.0
    %2522 = vmatprep.mubr.f32.mxu0 0.0
    %2523 = vmatmul.mubr.f32.gmra.mrb[0].mxu0 %v2444
    %v2524 = vpop.f32.mrb[0].mxu0
    %v2525 = vadd.f32 0.0, %v2524
    %v2526 = vpop.f32.mrb[0].mxu0
    %2527 = vmatprep.mubr.f32.mxu0 0.0
    %2528 = vmatmul.mubr.f32.gmra.mrb[0].mxu0 %v2447
    %v2529 = vpop.f32.mrb[0].mxu0
    %v2530 = vadd.f32 0.0, %v2529
    %v2531 = vpop.f32.mrb[0].mxu0
    %2532 = vmatprep.mubr.f32.mxu0 0.0
    %2533 = vmatmul.mubr.f32.gmra.mrb[0].mxu0 %v2450
    %v2534 = vpop.f32.mrb[0].mxu0
    %v2535 = vadd.f32 0.0, %v2534
    %v2536 = vpop.f32.mrb[0].mxu0
    %2537 = vmatprep.mubr.f32.mxu0 0.0
    %2538 = vmatmul.mubr.f32.gmra.mrb[0].mxu0 %v2453
    %v2539 = vpop.f32.mrb[0].mxu0
    %v2540 = vadd.f32 0.0, %v2539
    %v2541 = vpop.f32.mrb[0].mxu0
    %2542 = vmatprep.mubr.f32.mxu0 0.0
    %2543 = vmatmul.mubr.f32.gmra.mrb[0].mxu0 %v2456
    %v2544 = vpop.f32.mrb[0].mxu0
    %v2545 = vadd.f32 0.0, %v2544
    %v2546 = vpop.f32.mrb[0].mxu0
    %2547 = vdwg.mxu0
    %v2548 = vadd.f32 %v2102, %v2525
    %v2549 = vadd.f32 %v2103, %v2530
    %v2550 = vadd.f32 %v2104, %v2535
    %v2551 = vadd.f32 %v2105, %v2540
    %v2552 = vadd.f32 %v2106, %v2545
    %v2553 = vlaneseq
    %v2554 = vshrl.u32 %v2553, 7
    %v2555 = vsub.s32 6, %v2554
    %v2556 = vrot.slane %v241, %v2555
    %v2557 = vadd.f32 %v2548, %v2556
    %v2558 = vadd.f32 %v2549, %v2556
    %v2559 = vadd.f32 %v2550, %v2556
    %v2560 = vadd.f32 %v2551, %v2556
    %v2561 = vadd.f32 %v2552, %v2556
    %v2562 = vld [vmem:[%s1 + $0x1b8] sm:$0x7f]
    %v2563 = vsel %vm130, %v2557, 0.0
    %2564 = vadd.xlane.f32.xlu0 %v2563
    %v2565 = vpop.xlane.xlu0 %2564
    %v2566 = vsel %vm130, %v2558, 0.0
    %2567 = vadd.xlane.f32.xlu0 %v2566
    %v2568 = vpop.xlane.xlu0 %2567
    %v2569 = vsel %vm130, %v2559, 0.0
    %2570 = vadd.xlane.f32.xlu0 %v2569
    %v2571 = vpop.xlane.xlu0 %2570
    %v2572 = vsel %vm130, %v2560, 0.0
    %2573 = vadd.xlane.f32.xlu0 %v2572
    %v2574 = vpop.xlane.xlu0 %2573
    %v2575 = vsel %vm254, %v2561, 0.0
    %2576 = vadd.xlane.f32.xlu0 %v2575
    %v2577 = vpop.xlane.xlu0 %2576
    %v2578 = vmul.f32 %v2565, %v258
    %v2579 = vmul.f32 %v2568, %v258
    %v2580 = vmul.f32 %v2571, %v258
    %v2581 = vmul.f32 %v2574, %v258
    %v2582 = vmul.f32 %v2577, %v258
    %v2583 = vsub.f32 %v2557, %v2578
    %v2584 = vsub.f32 %v2558, %v2579
    %v2585 = vsub.f32 %v2559, %v2580
    %v2586 = vsub.f32 %v2560, %v2581
    %v2587 = vsub.f32 %v2561, %v2582
    %v2588 = vmul.f32 %v2583, %v2583
    %v2589 = vmul.f32 %v2584, %v2584
    %v2590 = vmul.f32 %v2585, %v2585
    %v2591 = vmul.f32 %v2586, %v2586
    %v2592 = vmul.f32 %v2587, %v2587
    %v2593 = vsel %vm130, %v2588, 0.0
    %2594 = vadd.xlane.f32.xlu0 %v2593
    %v2595 = vpop.xlane.xlu0 %2594
    %v2596 = vsel %vm130, %v2589, 0.0
    %2597 = vadd.xlane.f32.xlu0 %v2596
    %v2598 = vpop.xlane.xlu0 %2597
    %v2599 = vsel %vm130, %v2590, 0.0
    %2600 = vadd.xlane.f32.xlu0 %v2599
    %v2601 = vpop.xlane.xlu0 %2600
    %v2602 = vsel %vm130, %v2591, 0.0
    %2603 = vadd.xlane.f32.xlu0 %v2602
    %v2604 = vpop.xlane.xlu0 %2603
    %v2605 = vsel %vm254, %v2592, 0.0
    %2606 = vadd.xlane.f32.xlu0 %v2605
    %v2607 = vpop.xlane.xlu0 %2606
    %v2608 = vmul.f32 %v2595, %v258
    %v2609 = vmul.f32 %v2598, %v258
    %v2610 = vmul.f32 %v2601, %v258
    %v2611 = vmul.f32 %v2604, %v258
    %v2612 = vmul.f32 %v2607, %v258
    %v2613 = vadd.f32 %v2608, 1e-05
    %v2614 = vadd.f32 %v2609, 1e-05
    %v2615 = vadd.f32 %v2610, 1e-05
    %v2616 = vadd.f32 %v2611, 1e-05
    %v2617 = vadd.f32 %v2612, 1e-05
    %v2618 = vrsqrt.pop %v2613
    %v2619 = vrsqrt.pop %v2614
    %v2620 = vrsqrt.pop %v2615
    %v2621 = vrsqrt.pop %v2616
    %v2622 = vrsqrt.pop %v2617
    %v2623 = vmul.f32 %v2583, %v2618
    %v2624 = vmul.f32 %v2584, %v2619
    %v2625 = vmul.f32 %v2585, %v2620
    %v2626 = vmul.f32 %v2586, %v2621
    %v2627 = vmul.f32 %v2587, %v2622
    %v2628 = vlaneseq
    %v2629 = vshrl.u32 %v2628, 7
    %v2630 = vsub.s32 0, %v2629
    %v2631 = vrot.slane %v2562, %v2630
    %v2632 = vmul.f32 %v2623, %v2631
    %v2633 = vmul.f32 %v2624, %v2631
    %v2634 = vmul.f32 %v2625, %v2631
    %v2635 = vmul.f32 %v2626, %v2631
    %v2636 = vmul.f32 %v2627, %v2631
    %v2637 = vlaneseq
    %v2638 = vshrl.u32 %v2637, 7
    %v2639 = vsub.s32 1, %v2638
    %v2640 = vrot.slane %v2562, %v2639
    %v2641 = vadd.f32 %v2632, %v2640
    %v2642 = vadd.f32 %v2633, %v2640
    %v2643 = vadd.f32 %v2634, %v2640
    %v2644 = vadd.f32 %v2635, %v2640
    %v2645 = vadd.f32 %v2636, %v2640
    %v2646 = vld [vmem:[%s1 + $0x138] sm:$0xff]
    %v2647 = vld [vmem:[%s1 + $0x140] sm:$0xff]
    %v2648 = vld [vmem:[%s1 + $0x148] sm:$0xff]
    %v2649 = vld [vmem:[%s1 + $0x150] sm:$0xff]
    %v2651 = vsel %vm130, %v2641, 0
    %v2654 = vsel %vm130, %v2642, 0
    %v2657 = vsel %vm130, %v2643, 0
    %v2660 = vsel %vm130, %v2644, 0
    %v2663 = vsel %vm130, %v2645, 0
    %2665 = vmatprep.subr.mxu0 0.0
    %2666 = vmatpush1.msra.mxu0 %v2646
    %2667 = vmatprep.subr.mxu0 0.0
    %2668 = vmatpush1.msra.mxu0 %v2647
    %2669 = vmatprep.subr.mxu0 0.0
    %2670 = vmatpush1.msra.mxu0 %v2648
    %2671 = vmatprep.subr.mxu0 0.0
    %2672 = vmatpush1.msra.mxu0 %v2649
    %2673 = vmatprep.subr.mxu0 0.0
    %2674 = vmatpush1.msra.mxu0 0.0
    %2675 = vmatprep.subr.mxu0 0.0
    %2676 = vmatpush1.msra.mxu0 0.0
    %2677 = vmatprep.subr.mxu0 0.0
    %2678 = vmatpush1.msra.mxu0 0.0
    %2679 = vmatprep.subr.mxu0 0.0
    %2680 = vmatpush1.msra.mxu0 0.0
    %2681 = vmatprep.subr.mxu0 0.0
    %2682 = vmatpush1.msra.mxu0 0.0
    %2683 = vmatprep.subr.mxu0 0.0
    %2684 = vmatpush1.msra.mxu0 0.0
    %2685 = vmatprep.subr.mxu0 0.0
    %2686 = vmatpush1.msra.mxu0 0.0
    %2687 = vmatprep.subr.mxu0 0.0
    %2688 = vmatpush1.msra.mxu0 0.0
    %2689 = vmatprep.subr.mxu0 0.0
    %2690 = vmatpush1.msra.mxu0 0.0
    %2691 = vmatprep.subr.mxu0 0.0
    %2692 = vmatpush1.msra.mxu0 0.0
    %2693 = vmatprep.subr.mxu0 0.0
    %2694 = vmatpush1.msra.mxu0 0.0
    %2695 = vmatprep.subr.mxu0 0.0
    %2696 = vmatpush1.msra.mxu0 0.0
    %2697 = vmatprep.subr.mxu0 0.0
    %2698 = vmatpush1.msra.mxu0 0.0
    %2699 = vmatprep.subr.mxu0 0.0
    %2700 = vmatpush1.msra.mxu0 0.0
    %2701 = vmatprep.subr.mxu0 0.0
    %2702 = vmatpush1.msra.mxu0 0.0
    %2703 = vmatprep.subr.mxu0 0.0
    %2704 = vmatpush1.msra.mxu0 0.0
    %2705 = vmatprep.subr.mxu0 0.0
    %2706 = vmatpush1.msra.mxu0 0.0
    %2707 = vmatprep.subr.mxu0 0.0
    %2708 = vmatpush1.msra.mxu0 0.0
    %2709 = vmatprep.subr.mxu0 0.0
    %2710 = vmatpush1.msra.mxu0 0.0
    %2711 = vmatprep.subr.mxu0 0.0
    %2712 = vmatpush1.msra.mxu0 0.0
    %2713 = vmatprep.subr.mxu0 0.0
    %2714 = vmatpush1.msra.mxu0 0.0
    %2715 = vmatprep.subr.mxu0 0.0
    %2716 = vmatpush1.msra.mxu0 0.0
    %2717 = vmatprep.subr.mxu0 0.0
    %2718 = vmatpush1.msra.mxu0 0.0
    %2719 = vmatprep.subr.mxu0 0.0
    %2720 = vmatpush1.msra.mxu0 0.0
    %2721 = vmatprep.subr.mxu0 0.0
    %2722 = vmatpush1.msra.mxu0 0.0
    %2723 = vmatprep.subr.mxu0 0.0
    %2724 = vmatpush1.msra.mxu0 0.0
    %2725 = vmatprep.subr.mxu0 0.0
    %2726 = vmatpush1.msra.mxu0 0.0
    %2727 = vmatprep.subr.mxu0 0.0
    %2728 = vmatpush1.msra.mxu0 0.0
    %2729 = vmatprep.mubr.f32.mxu0 0.0
    %2730 = vmatmul.mubr.f32.gmra.mrb[0].mxu0 %v2651
    %v2731 = vpop.f32.mrb[0].mxu0
    %v2732 = vadd.f32 0.0, %v2731
    %v2733 = vpop.f32.mrb[0].mxu0
    %2734 = vmatprep.mubr.f32.mxu0 0.0
    %2735 = vmatmul.mubr.f32.gmra.mrb[0].mxu0 %v2654
    %v2736 = vpop.f32.mrb[0].mxu0
    %v2737 = vadd.f32 0.0, %v2736
    %v2738 = vpop.f32.mrb[0].mxu0
    %2739 = vmatprep.mubr.f32.mxu0 0.0
    %2740 = vmatmul.mubr.f32.gmra.mrb[0].mxu0 %v2657
    %v2741 = vpop.f32.mrb[0].mxu0
    %v2742 = vadd.f32 0.0, %v2741
    %v2743 = vpop.f32.mrb[0].mxu0
    %2744 = vmatprep.mubr.f32.mxu0 0.0
    %2745 = vmatmul.mubr.f32.gmra.mrb[0].mxu0 %v2660
    %v2746 = vpop.f32.mrb[0].mxu0
    %v2747 = vadd.f32 0.0, %v2746
    %v2748 = vpop.f32.mrb[0].mxu0
    %2749 = vmatprep.mubr.f32.mxu0 0.0
    %2750 = vmatmul.mubr.f32.gmra.mrb[0].mxu0 %v2663
    %v2751 = vpop.f32.mrb[0].mxu0
    %v2752 = vadd.f32 0.0, %v2751
    %v2753 = vpop.f32.mrb[0].mxu0
    %2754 = vdwg.mxu0
    %v2755 = vld [vmem:[%s1 + $0x158] sm:$0xff]
    %v2756 = vld [vmem:[%s1 + $0x160] sm:$0xff]
    %v2757 = vld [vmem:[%s1 + $0x168] sm:$0xff]
    %v2758 = vld [vmem:[%s1 + $0x170] sm:$0xff]
    %2764 = vrot.lane.b32.xlu0 %v2732, 96
    %v2765 = vpop.permute.xlu0 %2764
    %2766 = vrot.lane.b32.xlu0 %v2737, 96
    %v2767 = vpop.permute.xlu0 %2766
    %2768 = vrot.lane.b32.xlu0 %v2742, 96
    %v2769 = vpop.permute.xlu0 %2768
    %2770 = vrot.lane.b32.xlu0 %v2747, 96
    %v2771 = vpop.permute.xlu0 %2770
    %2772 = vrot.lane.b32.xlu0 %v2752, 96
    %v2773 = vpop.permute.xlu0 %2772
    %v2774 = vsel %vm455, %v2732, 0
    %v2776 = vsel %vm455, %v2737, 0
    %v2778 = vsel %vm455, %v2742, 0
    %v2780 = vsel %vm455, %v2747, 0
    %v2782 = vsel %vm455, %v2752, 0
    %v2784 = vsel %vm455, %v2765, 0
    %v2786 = vsel %vm455, %v2767, 0
    %v2788 = vsel %vm455, %v2769, 0
    %v2790 = vsel %vm455, %v2771, 0
    %v2792 = vsel %vm455, %v2773, 0
    %2794 = vmatprep.subr.mxu0 0.0
    %2795 = vmatpush1.xpose.msra.mxu0 %v2784
    %2796 = vmatprep.subr.mxu0 0.0
    %2797 = vmatpush1.xpose.msra.mxu0 %v2786
    %2798 = vmatprep.subr.mxu0 0.0
    %2799 = vmatpush1.xpose.msra.mxu0 %v2788
    %2800 = vmatprep.subr.mxu0 0.0
    %2801 = vmatpush1.xpose.msra.mxu0 %v2790
    %2802 = vmatprep.subr.mxu0 0.0
    %2803 = vmatpush1.xpose.msra.mxu0 %v2792
    %2804 = vmatprep.subr.mxu0 0.0
    %2805 = vmatpush1.xpose.msra.mxu0 0.0
    %2806 = vmatprep.subr.mxu0 0.0
    %2807 = vmatpush1.xpose.msra.mxu0 0.0
    %2808 = vmatprep.subr.mxu0 0.0
    %2809 = vmatpush1.xpose.msra.mxu0 0.0
    %2810 = vmatprep.subr.mxu0 0.0
    %2811 = vmatpush1.xpose.msra.mxu0 0.0
    %2812 = vmatprep.subr.mxu0 0.0
    %2813 = vmatpush1.xpose.msra.mxu0 0.0
    %2814 = vmatprep.subr.mxu0 0.0
    %2815 = vmatpush1.xpose.msra.mxu0 0.0
    %2816 = vmatprep.subr.mxu0 0.0
    %2817 = vmatpush1.xpose.msra.mxu0 0.0
    %2818 = vmatprep.subr.mxu0 0.0
    %2819 = vmatpush1.xpose.msra.mxu0 0.0
    %2820 = vmatprep.subr.mxu0 0.0
    %2821 = vmatpush1.xpose.msra.mxu0 0.0
    %2822 = vmatprep.subr.mxu0 0.0
    %2823 = vmatpush1.xpose.msra.mxu0 0.0
    %2824 = vmatprep.subr.mxu0 0.0
    %2825 = vmatpush1.xpose.msra.mxu0 0.0
    %2826 = vmatprep.subr.mxu0 0.0
    %2827 = vmatpush1.xpose.msra.mxu0 0.0
    %2828 = vmatprep.subr.mxu0 0.0
    %2829 = vmatpush1.xpose.msra.mxu0 0.0
    %2830 = vmatprep.subr.mxu0 0.0
    %2831 = vmatpush1.xpose.msra.mxu0 0.0
    %2832 = vmatprep.subr.mxu0 0.0
    %2833 = vmatpush1.xpose.msra.mxu0 0.0
    %2834 = vmatprep.subr.mxu0 0.0
    %2835 = vmatpush1.xpose.msra.mxu0 0.0
    %2836 = vmatprep.subr.mxu0 0.0
    %2837 = vmatpush1.xpose.msra.mxu0 0.0
    %2838 = vmatprep.subr.mxu0 0.0
    %2839 = vmatpush1.xpose.msra.mxu0 0.0
    %2840 = vmatprep.subr.mxu0 0.0
    %2841 = vmatpush1.xpose.msra.mxu0 0.0
    %2842 = vmatprep.subr.mxu0 0.0
    %2843 = vmatpush1.xpose.msra.mxu0 0.0
    %2844 = vmatprep.subr.mxu0 0.0
    %2845 = vmatpush1.xpose.msra.mxu0 0.0
    %2846 = vmatprep.subr.mxu0 0.0
    %2847 = vmatpush1.xpose.msra.mxu0 0.0
    %2848 = vmatprep.subr.mxu0 0.0
    %2849 = vmatpush1.xpose.msra.mxu0 0.0
    %2850 = vmatprep.subr.mxu0 0.0
    %2851 = vmatpush1.xpose.msra.mxu0 0.0
    %2852 = vmatprep.subr.mxu0 0.0
    %2853 = vmatpush1.xpose.msra.mxu0 0.0
    %2854 = vmatprep.subr.mxu0 0.0
    %2855 = vmatpush1.xpose.msra.mxu0 0.0
    %2856 = vmatprep.subr.mxu0 0.0
    %2857 = vmatpush1.xpose.msra.mxu0 0.0
    %2858 = vmatprep.mubr.f32.mxu0 0.0
    %2859 = vmatmul.mubr.f32.gmra.mrb[0].mxu0 %v2774
    %v2860 = vpop.f32.mrb[0].mxu0
    %v2861 = vadd.f32 %v236, %v2860
    %v2862 = vpop.f32.mrb[0].mxu0
    %2863 = vmatprep.mubr.f32.mxu0 0.0
    %2864 = vmatmul.mubr.f32.gmra.mrb[0].mxu0 %v2776
    %v2865 = vpop.f32.mrb[0].mxu0
    %v2866 = vadd.f32 %v237, %v2865
    %v2867 = vpop.f32.mrb[0].mxu0
    %2868 = vmatprep.mubr.f32.mxu0 0.0
    %2869 = vmatmul.mubr.f32.gmra.mrb[0].mxu0 %v2778
    %v2870 = vpop.f32.mrb[0].mxu0
    %v2871 = vadd.f32 %v238, %v2870
    %v2872 = vpop.f32.mrb[0].mxu0
    %2873 = vmatprep.mubr.f32.mxu0 0.0
    %2874 = vmatmul.mubr.f32.gmra.mrb[0].mxu0 %v2780
    %v2875 = vpop.f32.mrb[0].mxu0
    %v2876 = vadd.f32 %v239, %v2875
    %v2877 = vpop.f32.mrb[0].mxu0
    %2878 = vmatprep.mubr.f32.mxu0 0.0
    %2879 = vmatmul.mubr.f32.gmra.mrb[0].mxu0 %v2782
    %v2880 = vpop.f32.mrb[0].mxu0
    %v2881 = vadd.f32 %v240, %v2880
    %v2882 = vpop.f32.mrb[0].mxu0
    %2883 = vdwg.mxu0
    %v2884 = vsel %vm566, %v2861, -inf
    %2885 = vmax.xlane.f32.xlu0 %v2884
    %v2886 = vpop.xlane.xlu0 %2885
    %v2887 = vsel %vm566, %v2866, -inf
    %2888 = vmax.xlane.f32.xlu0 %v2887
    %v2889 = vpop.xlane.xlu0 %2888
    %v2890 = vsel %vm566, %v2871, -inf
    %2891 = vmax.xlane.f32.xlu0 %v2890
    %v2892 = vpop.xlane.xlu0 %2891
    %v2893 = vsel %vm566, %v2876, -inf
    %2894 = vmax.xlane.f32.xlu0 %v2893
    %v2895 = vpop.xlane.xlu0 %2894
    %v2896 = vsel %vm579, %v2881, -inf
    %2897 = vmax.xlane.f32.xlu0 %v2896
    %v2898 = vpop.xlane.xlu0 %2897
    %v2899 = vsub.f32 %v2861, %v2886
    %v2900 = vsub.f32 %v2866, %v2889
    %v2901 = vsub.f32 %v2871, %v2892
    %v2902 = vsub.f32 %v2876, %v2895
    %v2903 = vsub.f32 %v2881, %v2898
    %v2904 = vmul.f32 %v2899, 1.442695
    %v2905 = vpow.pop %v2904
    %v2906 = vmul.f32 %v2900, 1.442695
    %v2907 = vpow.pop %v2906
    %v2908 = vmul.f32 %v2901, 1.442695
    %v2909 = vpow.pop %v2908
    %v2910 = vmul.f32 %v2902, 1.442695
    %v2911 = vpow.pop %v2910
    %v2912 = vmul.f32 %v2903, 1.442695
    %v2913 = vpow.pop %v2912
    %v2914 = vsel %vm566, %v2905, 0.0
    %2915 = vadd.xlane.f32.xlu0 %v2914
    %v2916 = vpop.xlane.xlu0 %2915
    %v2917 = vsel %vm566, %v2907, 0.0
    %2918 = vadd.xlane.f32.xlu0 %v2917
    %v2919 = vpop.xlane.xlu0 %2918
    %v2920 = vsel %vm566, %v2909, 0.0
    %2921 = vadd.xlane.f32.xlu0 %v2920
    %v2922 = vpop.xlane.xlu0 %2921
    %v2923 = vsel %vm566, %v2911, 0.0
    %2924 = vadd.xlane.f32.xlu0 %v2923
    %v2925 = vpop.xlane.xlu0 %2924
    %v2926 = vsel %vm579, %v2913, 0.0
    %2927 = vadd.xlane.f32.xlu0 %v2926
    %v2928 = vpop.xlane.xlu0 %2927
    %v2929 = vrcp.pop %v2916
    %v2930 = vrcp.pop %v2919
    %v2931 = vrcp.pop %v2922
    %v2932 = vrcp.pop %v2925
    %v2933 = vrcp.pop %v2928
    %v2934 = vmul.f32 %v2905, %v2929
    %v2935 = vmul.f32 %v2907, %v2930
    %v2936 = vmul.f32 %v2909, %v2931
    %v2937 = vmul.f32 %v2911, %v2932
    %v2938 = vmul.f32 %v2913, %v2933
    %2939 = vrot.lane.b32.xlu0 %v2732, 64
    %v2940 = vpop.permute.xlu0 %2939
    %2941 = vrot.lane.b32.xlu0 %v2737, 64
    %v2942 = vpop.permute.xlu0 %2941
    %2943 = vrot.lane.b32.xlu0 %v2742, 64
    %v2944 = vpop.permute.xlu0 %2943
    %2945 = vrot.lane.b32.xlu0 %v2747, 64
    %v2946 = vpop.permute.xlu0 %2945
    %2947 = vrot.lane.b32.xlu0 %v2752, 64
    %v2948 = vpop.permute.xlu0 %2947
    %v2954 = vsel %vm566, %v2934, 0
    %v2957 = vsel %vm566, %v2935, 0
    %v2960 = vsel %vm566, %v2936, 0
    %v2963 = vsel %vm566, %v2937, 0
    %v2966 = vsel %vm566, %v2938, 0
    %v2968 = vsel %vm652, %v2948, 0
    %2970 = vmatprep.subr.mxu0 0.0
    %2971 = vmatpush1.msra.mxu0 %v2940
    %2972 = vmatprep.subr.mxu0 0.0
    %2973 = vmatpush1.msra.mxu0 %v2942
    %2974 = vmatprep.subr.mxu0 0.0
    %2975 = vmatpush1.msra.mxu0 %v2944
    %2976 = vmatprep.subr.mxu0 0.0
    %2977 = vmatpush1.msra.mxu0 %v2946
    %2978 = vmatprep.subr.mxu0 0.0
    %2979 = vmatpush1.msra.mxu0 %v2968
    %2980 = vmatprep.subr.mxu0 0.0
    %2981 = vmatpush1.msra.mxu0 0.0
    %2982 = vmatprep.subr.mxu0 0.0
    %2983 = vmatpush1.msra.mxu0 0.0
    %2984 = vmatprep.subr.mxu0 0.0
    %2985 = vmatpush1.msra.mxu0 0.0
    %2986 = vmatprep.subr.mxu0 0.0
    %2987 = vmatpush1.msra.mxu0 0.0
    %2988 = vmatprep.subr.mxu0 0.0
    %2989 = vmatpush1.msra.mxu0 0.0
    %2990 = vmatprep.subr.mxu0 0.0
    %2991 = vmatpush1.msra.mxu0 0.0
    %2992 = vmatprep.subr.mxu0 0.0
    %2993 = vmatpush1.msra.mxu0 0.0
    %2994 = vmatprep.subr.mxu0 0.0
    %2995 = vmatpush1.msra.mxu0 0.0
    %2996 = vmatprep.subr.mxu0 0.0
    %2997 = vmatpush1.msra.mxu0 0.0
    %2998 = vmatprep.subr.mxu0 0.0
    %2999 = vmatpush1.msra.mxu0 0.0
    %3000 = vmatprep.subr.mxu0 0.0
    %3001 = vmatpush1.msra.mxu0 0.0
    %3002 = vmatprep.subr.mxu0 0.0
    %3003 = vmatpush1.msra.mxu0 0.0
    %3004 = vmatprep.subr.mxu0 0.0
    %3005 = vmatpush1.msra.mxu0 0.0
    %3006 = vmatprep.subr.mxu0 0.0
    %3007 = vmatpush1.msra.mxu0 0.0
    %3008 = vmatprep.subr.mxu0 0.0
    %3009 = vmatpush1.msra.mxu0 0.0
    %3010 = vmatprep.subr.mxu0 0.0
    %3011 = vmatpush1.msra.mxu0 0.0
    %3012 = vmatprep.subr.mxu0 0.0
    %3013 = vmatpush1.msra.mxu0 0.0
    %3014 = vmatprep.subr.mxu0 0.0
    %3015 = vmatpush1.msra.mxu0 0.0
    %3016 = vmatprep.subr.mxu0 0.0
    %3017 = vmatpush1.msra.mxu0 0.0
    %3018 = vmatprep.subr.mxu0 0.0
    %3019 = vmatpush1.msra.mxu0 0.0
    %3020 = vmatprep.subr.mxu0 0.0
    %3021 = vmatpush1.msra.mxu0 0.0
    %3022 = vmatprep.subr.mxu0 0.0
    %3023 = vmatpush1.msra.mxu0 0.0
    %3024 = vmatprep.subr.mxu0 0.0
    %3025 = vmatpush1.msra.mxu0 0.0
    %3026 = vmatprep.subr.mxu0 0.0
    %3027 = vmatpush1.msra.mxu0 0.0
    %3028 = vmatprep.subr.mxu0 0.0
    %3029 = vmatpush1.msra.mxu0 0.0
    %3030 = vmatprep.subr.mxu0 0.0
    %3031 = vmatpush1.msra.mxu0 0.0
    %3032 = vmatprep.subr.mxu0 0.0
    %3033 = vmatpush1.msra.mxu0 0.0
    %3034 = vmatprep.mubr.f32.mxu0 0.0
    %3035 = vmatmul.mubr.f32.gmra.mrb[0].mxu0 %v2954
    %v3036 = vpop.f32.mrb[0].mxu0
    %v3037 = vadd.f32 0.0, %v3036
    %v3038 = vpop.f32.mrb[0].mxu0
    %3039 = vmatprep.mubr.f32.mxu0 0.0
    %3040 = vmatmul.mubr.f32.gmra.mrb[0].mxu0 %v2957
    %v3041 = vpop.f32.mrb[0].mxu0
    %v3042 = vadd.f32 0.0, %v3041
    %v3043 = vpop.f32.mrb[0].mxu0
    %3044 = vmatprep.mubr.f32.mxu0 0.0
    %3045 = vmatmul.mubr.f32.gmra.mrb[0].mxu0 %v2960
    %v3046 = vpop.f32.mrb[0].mxu0
    %v3047 = vadd.f32 0.0, %v3046
    %v3048 = vpop.f32.mrb[0].mxu0
    %3049 = vmatprep.mubr.f32.mxu0 0.0
    %3050 = vmatmul.mubr.f32.gmra.mrb[0].mxu0 %v2963
    %v3051 = vpop.f32.mrb[0].mxu0
    %v3052 = vadd.f32 0.0, %v3051
    %v3053 = vpop.f32.mrb[0].mxu0
    %3054 = vmatprep.mubr.f32.mxu0 0.0
    %3055 = vmatmul.mubr.f32.gmra.mrb[0].mxu0 %v2966
    %v3056 = vpop.f32.mrb[0].mxu0
    %v3057 = vadd.f32 0.0, %v3056
    %v3058 = vpop.f32.mrb[0].mxu0
    %3059 = vdwg.mxu0
    %3060 = vrot.lane.b32.xlu0 %v2732, 120
    %v3061 = vpop.permute.xlu0 %3060
    %3062 = vrot.lane.b32.xlu0 %v2737, 120
    %v3063 = vpop.permute.xlu0 %3062
    %3064 = vrot.lane.b32.xlu0 %v2742, 120
    %v3065 = vpop.permute.xlu0 %3064
    %3066 = vrot.lane.b32.xlu0 %v2747, 120
    %v3067 = vpop.permute.xlu0 %3066
    %3068 = vrot.lane.b32.xlu0 %v2752, 120
    %v3069 = vpop.permute.xlu0 %3068
    %3070 = vrot.lane.b32.xlu0 %v2732, 88
    %v3071 = vpop.permute.xlu0 %3070
    %3072 = vrot.lane.b32.xlu0 %v2737, 88
    %v3073 = vpop.permute.xlu0 %3072
    %3074 = vrot.lane.b32.xlu0 %v2742, 88
    %v3075 = vpop.permute.xlu0 %3074
    %3076 = vrot.lane.b32.xlu0 %v2747, 88
    %v3077 = vpop.permute.xlu0 %3076
    %3078 = vrot.lane.b32.xlu0 %v2752, 88
    %v3079 = vpop.permute.xlu0 %3078
    %v3080 = vsel %vm455, %v3061, 0
    %v3082 = vsel %vm455, %v3063, 0
    %v3084 = vsel %vm455, %v3065, 0
    %v3086 = vsel %vm455, %v3067, 0
    %v3088 = vsel %vm455, %v3069, 0
    %v3090 = vsel %vm455, %v3071, 0
    %v3092 = vsel %vm455, %v3073, 0
    %v3094 = vsel %vm455, %v3075, 0
    %v3096 = vsel %vm455, %v3077, 0
    %v3098 = vsel %vm455, %v3079, 0
    %3100 = vmatprep.subr.mxu0 0.0
    %3101 = vmatpush1.xpose.msra.mxu0 %v3090
    %3102 = vmatprep.subr.mxu0 0.0
    %3103 = vmatpush1.xpose.msra.mxu0 %v3092
    %3104 = vmatprep.subr.mxu0 0.0
    %3105 = vmatpush1.xpose.msra.mxu0 %v3094
    %3106 = vmatprep.subr.mxu0 0.0
    %3107 = vmatpush1.xpose.msra.mxu0 %v3096
    %3108 = vmatprep.subr.mxu0 0.0
    %3109 = vmatpush1.xpose.msra.mxu0 %v3098
    %3110 = vmatprep.subr.mxu0 0.0
    %3111 = vmatpush1.xpose.msra.mxu0 0.0
    %3112 = vmatprep.subr.mxu0 0.0
    %3113 = vmatpush1.xpose.msra.mxu0 0.0
    %3114 = vmatprep.subr.mxu0 0.0
    %3115 = vmatpush1.xpose.msra.mxu0 0.0
    %3116 = vmatprep.subr.mxu0 0.0
    %3117 = vmatpush1.xpose.msra.mxu0 0.0
    %3118 = vmatprep.subr.mxu0 0.0
    %3119 = vmatpush1.xpose.msra.mxu0 0.0
    %3120 = vmatprep.subr.mxu0 0.0
    %3121 = vmatpush1.xpose.msra.mxu0 0.0
    %3122 = vmatprep.subr.mxu0 0.0
    %3123 = vmatpush1.xpose.msra.mxu0 0.0
    %3124 = vmatprep.subr.mxu0 0.0
    %3125 = vmatpush1.xpose.msra.mxu0 0.0
    %3126 = vmatprep.subr.mxu0 0.0
    %3127 = vmatpush1.xpose.msra.mxu0 0.0
    %3128 = vmatprep.subr.mxu0 0.0
    %3129 = vmatpush1.xpose.msra.mxu0 0.0
    %3130 = vmatprep.subr.mxu0 0.0
    %3131 = vmatpush1.xpose.msra.mxu0 0.0
    %3132 = vmatprep.subr.mxu0 0.0
    %3133 = vmatpush1.xpose.msra.mxu0 0.0
    %3134 = vmatprep.subr.mxu0 0.0
    %3135 = vmatpush1.xpose.msra.mxu0 0.0
    %3136 = vmatprep.subr.mxu0 0.0
    %3137 = vmatpush1.xpose.msra.mxu0 0.0
    %3138 = vmatprep.subr.mxu0 0.0
    %3139 = vmatpush1.xpose.msra.mxu0 0.0
    %3140 = vmatprep.subr.mxu0 0.0
    %3141 = vmatpush1.xpose.msra.mxu0 0.0
    %3142 = vmatprep.subr.mxu0 0.0
    %3143 = vmatpush1.xpose.msra.mxu0 0.0
    %3144 = vmatprep.subr.mxu0 0.0
    %3145 = vmatpush1.xpose.msra.mxu0 0.0
    %3146 = vmatprep.subr.mxu0 0.0
    %3147 = vmatpush1.xpose.msra.mxu0 0.0
    %3148 = vmatprep.subr.mxu0 0.0
    %3149 = vmatpush1.xpose.msra.mxu0 0.0
    %3150 = vmatprep.subr.mxu0 0.0
    %3151 = vmatpush1.xpose.msra.mxu0 0.0
    %3152 = vmatprep.subr.mxu0 0.0
    %3153 = vmatpush1.xpose.msra.mxu0 0.0
    %3154 = vmatprep.subr.mxu0 0.0
    %3155 = vmatpush1.xpose.msra.mxu0 0.0
    %3156 = vmatprep.subr.mxu0 0.0
    %3157 = vmatpush1.xpose.msra.mxu0 0.0
    %3158 = vmatprep.subr.mxu0 0.0
    %3159 = vmatpush1.xpose.msra.mxu0 0.0
    %3160 = vmatprep.subr.mxu0 0.0
    %3161 = vmatpush1.xpose.msra.mxu0 0.0
    %3162 = vmatprep.subr.mxu0 0.0
    %3163 = vmatpush1.xpose.msra.mxu0 0.0
    %3164 = vmatprep.mubr.f32.mxu0 0.0
    %3165 = vmatmul.mubr.f32.gmra.mrb[0].mxu0 %v3080
    %v3166 = vpop.f32.mrb[0].mxu0
    %v3167 = vadd.f32 %v236, %v3166
    %v3168 = vpop.f32.mrb[0].mxu0
    %3169 = vmatprep.mubr.f32.mxu0 0.0
    %3170 = vmatmul.mubr.f32.gmra.mrb[0].mxu0 %v3082
    %v3171 = vpop.f32.mrb[0].mxu0
    %v3172 = vadd.f32 %v237, %v3171
    %v3173 = vpop.f32.mrb[0].mxu0
    %3174 = vmatprep.mubr.f32.mxu0 0.0
    %3175 = vmatmul.mubr.f32.gmra.mrb[0].mxu0 %v3084
    %v3176 = vpop.f32.mrb[0].mxu0
    %v3177 = vadd.f32 %v238, %v3176
    %v3178 = vpop.f32.mrb[0].mxu0
    %3179 = vmatprep.mubr.f32.mxu0 0.0
    %3180 = vmatmul.mubr.f32.gmra.mrb[0].mxu0 %v3086
    %v3181 = vpop.f32.mrb[0].mxu0
    %v3182 = vadd.f32 %v239, %v3181
    %v3183 = vpop.f32.mrb[0].mxu0
    %3184 = vmatprep.mubr.f32.mxu0 0.0
    %3185 = vmatmul.mubr.f32.gmra.mrb[0].mxu0 %v3088
    %v3186 = vpop.f32.mrb[0].mxu0
    %v3187 = vadd.f32 %v240, %v3186
    %v3188 = vpop.f32.mrb[0].mxu0
    %3189 = vdwg.mxu0
    %v3190 = vsel %vm566, %v3167, -inf
    %3191 = vmax.xlane.f32.xlu0 %v3190
    %v3192 = vpop.xlane.xlu0 %3191
    %v3193 = vsel %vm566, %v3172, -inf
    %3194 = vmax.xlane.f32.xlu0 %v3193
    %v3195 = vpop.xlane.xlu0 %3194
    %v3196 = vsel %vm566, %v3177, -inf
    %3197 = vmax.xlane.f32.xlu0 %v3196
    %v3198 = vpop.xlane.xlu0 %3197
    %v3199 = vsel %vm566, %v3182, -inf
    %3200 = vmax.xlane.f32.xlu0 %v3199
    %v3201 = vpop.xlane.xlu0 %3200
    %v3202 = vsel %vm579, %v3187, -inf
    %3203 = vmax.xlane.f32.xlu0 %v3202
    %v3204 = vpop.xlane.xlu0 %3203
    %v3205 = vsub.f32 %v3167, %v3192
    %v3206 = vsub.f32 %v3172, %v3195
    %v3207 = vsub.f32 %v3177, %v3198
    %v3208 = vsub.f32 %v3182, %v3201
    %v3209 = vsub.f32 %v3187, %v3204
    %v3210 = vmul.f32 %v3205, 1.442695
    %v3211 = vpow.pop %v3210
    %v3212 = vmul.f32 %v3206, 1.442695
    %v3213 = vpow.pop %v3212
    %v3214 = vmul.f32 %v3207, 1.442695
    %v3215 = vpow.pop %v3214
    %v3216 = vmul.f32 %v3208, 1.442695
    %v3217 = vpow.pop %v3216
    %v3218 = vmul.f32 %v3209, 1.442695
    %v3219 = vpow.pop %v3218
    %v3220 = vsel %vm566, %v3211, 0.0
    %3221 = vadd.xlane.f32.xlu0 %v3220
    %v3222 = vpop.xlane.xlu0 %3221
    %v3223 = vsel %vm566, %v3213, 0.0
    %3224 = vadd.xlane.f32.xlu0 %v3223
    %v3225 = vpop.xlane.xlu0 %3224
    %v3226 = vsel %vm566, %v3215, 0.0
    %3227 = vadd.xlane.f32.xlu0 %v3226
    %v3228 = vpop.xlane.xlu0 %3227
    %v3229 = vsel %vm566, %v3217, 0.0
    %3230 = vadd.xlane.f32.xlu0 %v3229
    %v3231 = vpop.xlane.xlu0 %3230
    %v3232 = vsel %vm579, %v3219, 0.0
    %3233 = vadd.xlane.f32.xlu0 %v3232
    %v3234 = vpop.xlane.xlu0 %3233
    %v3235 = vrcp.pop %v3222
    %v3236 = vrcp.pop %v3225
    %v3237 = vrcp.pop %v3228
    %v3238 = vrcp.pop %v3231
    %v3239 = vrcp.pop %v3234
    %v3240 = vmul.f32 %v3211, %v3235
    %v3241 = vmul.f32 %v3213, %v3236
    %v3242 = vmul.f32 %v3215, %v3237
    %v3243 = vmul.f32 %v3217, %v3238
    %v3244 = vmul.f32 %v3219, %v3239
    %3245 = vrot.lane.b32.xlu0 %v2732, 56
    %v3246 = vpop.permute.xlu0 %3245
    %3247 = vrot.lane.b32.xlu0 %v2737, 56
    %v3248 = vpop.permute.xlu0 %3247
    %3249 = vrot.lane.b32.xlu0 %v2742, 56
    %v3250 = vpop.permute.xlu0 %3249
    %3251 = vrot.lane.b32.xlu0 %v2747, 56
    %v3252 = vpop.permute.xlu0 %3251
    %3253 = vrot.lane.b32.xlu0 %v2752, 56
    %v3254 = vpop.permute.xlu0 %3253
    %v3260 = vsel %vm566, %v3240, 0
    %v3263 = vsel %vm566, %v3241, 0
    %v3266 = vsel %vm566, %v3242, 0
    %v3269 = vsel %vm566, %v3243, 0
    %v3272 = vsel %vm566, %v3244, 0
    %v3274 = vsel %vm652, %v3254, 0
    %3276 = vmatprep.subr.mxu0 0.0
    %3277 = vmatpush1.msra.mxu0 %v3246
    %3278 = vmatprep.subr.mxu0 0.0
    %3279 = vmatpush1.msra.mxu0 %v3248
    %3280 = vmatprep.subr.mxu0 0.0
    %3281 = vmatpush1.msra.mxu0 %v3250
    %3282 = vmatprep.subr.mxu0 0.0
    %3283 = vmatpush1.msra.mxu0 %v3252
    %3284 = vmatprep.subr.mxu0 0.0
    %3285 = vmatpush1.msra.mxu0 %v3274
    %3286 = vmatprep.subr.mxu0 0.0
    %3287 = vmatpush1.msra.mxu0 0.0
    %3288 = vmatprep.subr.mxu0 0.0
    %3289 = vmatpush1.msra.mxu0 0.0
    %3290 = vmatprep.subr.mxu0 0.0
    %3291 = vmatpush1.msra.mxu0 0.0
    %3292 = vmatprep.subr.mxu0 0.0
    %3293 = vmatpush1.msra.mxu0 0.0
    %3294 = vmatprep.subr.mxu0 0.0
    %3295 = vmatpush1.msra.mxu0 0.0
    %3296 = vmatprep.subr.mxu0 0.0
    %3297 = vmatpush1.msra.mxu0 0.0
    %3298 = vmatprep.subr.mxu0 0.0
    %3299 = vmatpush1.msra.mxu0 0.0
    %3300 = vmatprep.subr.mxu0 0.0
    %3301 = vmatpush1.msra.mxu0 0.0
    %3302 = vmatprep.subr.mxu0 0.0
    %3303 = vmatpush1.msra.mxu0 0.0
    %3304 = vmatprep.subr.mxu0 0.0
    %3305 = vmatpush1.msra.mxu0 0.0
    %3306 = vmatprep.subr.mxu0 0.0
    %3307 = vmatpush1.msra.mxu0 0.0
    %3308 = vmatprep.subr.mxu0 0.0
    %3309 = vmatpush1.msra.mxu0 0.0
    %3310 = vmatprep.subr.mxu0 0.0
    %3311 = vmatpush1.msra.mxu0 0.0
    %3312 = vmatprep.subr.mxu0 0.0
    %3313 = vmatpush1.msra.mxu0 0.0
    %3314 = vmatprep.subr.mxu0 0.0
    %3315 = vmatpush1.msra.mxu0 0.0
    %3316 = vmatprep.subr.mxu0 0.0
    %3317 = vmatpush1.msra.mxu0 0.0
    %3318 = vmatprep.subr.mxu0 0.0
    %3319 = vmatpush1.msra.mxu0 0.0
    %3320 = vmatprep.subr.mxu0 0.0
    %3321 = vmatpush1.msra.mxu0 0.0
    %3322 = vmatprep.subr.mxu0 0.0
    %3323 = vmatpush1.msra.mxu0 0.0
    %3324 = vmatprep.subr.mxu0 0.0
    %3325 = vmatpush1.msra.mxu0 0.0
    %3326 = vmatprep.subr.mxu0 0.0
    %3327 = vmatpush1.msra.mxu0 0.0
    %3328 = vmatprep.subr.mxu0 0.0
    %3329 = vmatpush1.msra.mxu0 0.0
    %3330 = vmatprep.subr.mxu0 0.0
    %3331 = vmatpush1.msra.mxu0 0.0
    %3332 = vmatprep.subr.mxu0 0.0
    %3333 = vmatpush1.msra.mxu0 0.0
    %3334 = vmatprep.subr.mxu0 0.0
    %3335 = vmatpush1.msra.mxu0 0.0
    %3336 = vmatprep.subr.mxu0 0.0
    %3337 = vmatpush1.msra.mxu0 0.0
    %3338 = vmatprep.subr.mxu0 0.0
    %3339 = vmatpush1.msra.mxu0 0.0
    %3340 = vmatprep.mubr.f32.mxu0 0.0
    %3341 = vmatmul.mubr.f32.gmra.mrb[0].mxu0 %v3260
    %v3342 = vpop.f32.mrb[0].mxu0
    %v3343 = vadd.f32 0.0, %v3342
    %v3344 = vpop.f32.mrb[0].mxu0
    %3345 = vmatprep.mubr.f32.mxu0 0.0
    %3346 = vmatmul.mubr.f32.gmra.mrb[0].mxu0 %v3263
    %v3347 = vpop.f32.mrb[0].mxu0
    %v3348 = vadd.f32 0.0, %v3347
    %v3349 = vpop.f32.mrb[0].mxu0
    %3350 = vmatprep.mubr.f32.mxu0 0.0
    %3351 = vmatmul.mubr.f32.gmra.mrb[0].mxu0 %v3266
    %v3352 = vpop.f32.mrb[0].mxu0
    %v3353 = vadd.f32 0.0, %v3352
    %v3354 = vpop.f32.mrb[0].mxu0
    %3355 = vmatprep.mubr.f32.mxu0 0.0
    %3356 = vmatmul.mubr.f32.gmra.mrb[0].mxu0 %v3269
    %v3357 = vpop.f32.mrb[0].mxu0
    %v3358 = vadd.f32 0.0, %v3357
    %v3359 = vpop.f32.mrb[0].mxu0
    %3360 = vmatprep.mubr.f32.mxu0 0.0
    %3361 = vmatmul.mubr.f32.gmra.mrb[0].mxu0 %v3272
    %v3362 = vpop.f32.mrb[0].mxu0
    %v3363 = vadd.f32 0.0, %v3362
    %v3364 = vpop.f32.mrb[0].mxu0
    %3365 = vdwg.mxu0
    %v3367 = vsel %vm455, %v3343, 0
    %v3370 = vsel %vm455, %v3348, 0
    %v3373 = vsel %vm455, %v3353, 0
    %v3376 = vsel %vm455, %v3358, 0
    %v3379 = vsel %vm455, %v3363, 0
    %3381 = vmatprep.subr.mxu0 0.0
    %3382 = vmatpush1.msra.mxu0 %v2756
    %3383 = vmatprep.subr.mxu0 0.0
    %3384 = vmatpush1.msra.mxu0 0.0
    %3385 = vmatprep.subr.mxu0 0.0
    %3386 = vmatpush1.msra.mxu0 0.0
    %3387 = vmatprep.subr.mxu0 0.0
    %3388 = vmatpush1.msra.mxu0 0.0
    %3389 = vmatprep.subr.mxu0 0.0
    %3390 = vmatpush1.msra.mxu0 0.0
    %3391 = vmatprep.subr.mxu0 0.0
    %3392 = vmatpush1.msra.mxu0 0.0
    %3393 = vmatprep.subr.mxu0 0.0
    %3394 = vmatpush1.msra.mxu0 0.0
    %3395 = vmatprep.subr.mxu0 0.0
    %3396 = vmatpush1.msra.mxu0 0.0
    %3397 = vmatprep.subr.mxu0 0.0
    %3398 = vmatpush1.msra.mxu0 0.0
    %3399 = vmatprep.subr.mxu0 0.0
    %3400 = vmatpush1.msra.mxu0 0.0
    %3401 = vmatprep.subr.mxu0 0.0
    %3402 = vmatpush1.msra.mxu0 0.0
    %3403 = vmatprep.subr.mxu0 0.0
    %3404 = vmatpush1.msra.mxu0 0.0
    %3405 = vmatprep.subr.mxu0 0.0
    %3406 = vmatpush1.msra.mxu0 0.0
    %3407 = vmatprep.subr.mxu0 0.0
    %3408 = vmatpush1.msra.mxu0 0.0
    %3409 = vmatprep.subr.mxu0 0.0
    %3410 = vmatpush1.msra.mxu0 0.0
    %3411 = vmatprep.subr.mxu0 0.0
    %3412 = vmatpush1.msra.mxu0 0.0
    %3413 = vmatprep.subr.mxu0 0.0
    %3414 = vmatpush1.msra.mxu0 0.0
    %3415 = vmatprep.subr.mxu0 0.0
    %3416 = vmatpush1.msra.mxu0 0.0
    %3417 = vmatprep.subr.mxu0 0.0
    %3418 = vmatpush1.msra.mxu0 0.0
    %3419 = vmatprep.subr.mxu0 0.0
    %3420 = vmatpush1.msra.mxu0 0.0
    %3421 = vmatprep.subr.mxu0 0.0
    %3422 = vmatpush1.msra.mxu0 0.0
    %3423 = vmatprep.subr.mxu0 0.0
    %3424 = vmatpush1.msra.mxu0 0.0
    %3425 = vmatprep.subr.mxu0 0.0
    %3426 = vmatpush1.msra.mxu0 0.0
    %3427 = vmatprep.subr.mxu0 0.0
    %3428 = vmatpush1.msra.mxu0 0.0
    %3429 = vmatprep.subr.mxu0 0.0
    %3430 = vmatpush1.msra.mxu0 0.0
    %3431 = vmatprep.subr.mxu0 0.0
    %3432 = vmatpush1.msra.mxu0 0.0
    %3433 = vmatprep.subr.mxu0 0.0
    %3434 = vmatpush1.msra.mxu0 0.0
    %3435 = vmatprep.subr.mxu0 0.0
    %3436 = vmatpush1.msra.mxu0 0.0
    %3437 = vmatprep.subr.mxu0 0.0
    %3438 = vmatpush1.msra.mxu0 0.0
    %3439 = vmatprep.subr.mxu0 0.0
    %3440 = vmatpush1.msra.mxu0 0.0
    %3441 = vmatprep.subr.mxu0 0.0
    %3442 = vmatpush1.msra.mxu0 0.0
    %3443 = vmatprep.subr.mxu0 0.0
    %3444 = vmatpush1.msra.mxu0 0.0
    %3445 = vmatprep.mubr.f32.mxu0 0.0
    %3446 = vmatmul.mubr.f32.gmra.mrb[0].mxu0 %v3367
    %v3447 = vpop.f32.mrb[0].mxu0
    %v3448 = vadd.f32 0.0, %v3447
    %v3449 = vpop.f32.mrb[0].mxu0
    %3450 = vmatprep.mubr.f32.mxu0 0.0
    %3451 = vmatmul.mubr.f32.gmra.mrb[0].mxu0 %v3370
    %v3452 = vpop.f32.mrb[0].mxu0
    %v3453 = vadd.f32 0.0, %v3452
    %v3454 = vpop.f32.mrb[0].mxu0
    %3455 = vmatprep.mubr.f32.mxu0 0.0
    %3456 = vmatmul.mubr.f32.gmra.mrb[0].mxu0 %v3373
    %v3457 = vpop.f32.mrb[0].mxu0
    %v3458 = vadd.f32 0.0, %v3457
    %v3459 = vpop.f32.mrb[0].mxu0
    %3460 = vmatprep.mubr.f32.mxu0 0.0
    %3461 = vmatmul.mubr.f32.gmra.mrb[0].mxu0 %v3376
    %v3462 = vpop.f32.mrb[0].mxu0
    %v3463 = vadd.f32 0.0, %v3462
    %v3464 = vpop.f32.mrb[0].mxu0
    %3465 = vmatprep.mubr.f32.mxu0 0.0
    %3466 = vmatmul.mubr.f32.gmra.mrb[0].mxu0 %v3379
    %v3467 = vpop.f32.mrb[0].mxu0
    %v3468 = vadd.f32 0.0, %v3467
    %v3469 = vpop.f32.mrb[0].mxu0
    %3470 = vdwg.mxu0
    %v3472 = vsel %vm455, %v3037, 0
    %v3475 = vsel %vm455, %v3042, 0
    %v3478 = vsel %vm455, %v3047, 0
    %v3481 = vsel %vm455, %v3052, 0
    %v3484 = vsel %vm455, %v3057, 0
    %3486 = vmatprep.subr.mxu0 0.0
    %3487 = vmatpush1.msra.mxu0 %v2755
    %3488 = vmatprep.subr.mxu0 0.0
    %3489 = vmatpush1.msra.mxu0 0.0
    %3490 = vmatprep.subr.mxu0 0.0
    %3491 = vmatpush1.msra.mxu0 0.0
    %3492 = vmatprep.subr.mxu0 0.0
    %3493 = vmatpush1.msra.mxu0 0.0
    %3494 = vmatprep.subr.mxu0 0.0
    %3495 = vmatpush1.msra.mxu0 0.0
    %3496 = vmatprep.subr.mxu0 0.0
    %3497 = vmatpush1.msra.mxu0 0.0
    %3498 = vmatprep.subr.mxu0 0.0
    %3499 = vmatpush1.msra.mxu0 0.0
    %3500 = vmatprep.subr.mxu0 0.0
    %3501 = vmatpush1.msra.mxu0 0.0
    %3502 = vmatprep.subr.mxu0 0.0
    %3503 = vmatpush1.msra.mxu0 0.0
    %3504 = vmatprep.subr.mxu0 0.0
    %3505 = vmatpush1.msra.mxu0 0.0
    %3506 = vmatprep.subr.mxu0 0.0
    %3507 = vmatpush1.msra.mxu0 0.0
    %3508 = vmatprep.subr.mxu0 0.0
    %3509 = vmatpush1.msra.mxu0 0.0
    %3510 = vmatprep.subr.mxu0 0.0
    %3511 = vmatpush1.msra.mxu0 0.0
    %3512 = vmatprep.subr.mxu0 0.0
    %3513 = vmatpush1.msra.mxu0 0.0
    %3514 = vmatprep.subr.mxu0 0.0
    %3515 = vmatpush1.msra.mxu0 0.0
    %3516 = vmatprep.subr.mxu0 0.0
    %3517 = vmatpush1.msra.mxu0 0.0
    %3518 = vmatprep.subr.mxu0 0.0
    %3519 = vmatpush1.msra.mxu0 0.0
    %3520 = vmatprep.subr.mxu0 0.0
    %3521 = vmatpush1.msra.mxu0 0.0
    %3522 = vmatprep.subr.mxu0 0.0
    %3523 = vmatpush1.msra.mxu0 0.0
    %3524 = vmatprep.subr.mxu0 0.0
    %3525 = vmatpush1.msra.mxu0 0.0
    %3526 = vmatprep.subr.mxu0 0.0
    %3527 = vmatpush1.msra.mxu0 0.0
    %3528 = vmatprep.subr.mxu0 0.0
    %3529 = vmatpush1.msra.mxu0 0.0
    %3530 = vmatprep.subr.mxu0 0.0
    %3531 = vmatpush1.msra.mxu0 0.0
    %3532 = vmatprep.subr.mxu0 0.0
    %3533 = vmatpush1.msra.mxu0 0.0
    %3534 = vmatprep.subr.mxu0 0.0
    %3535 = vmatpush1.msra.mxu0 0.0
    %3536 = vmatprep.subr.mxu0 0.0
    %3537 = vmatpush1.msra.mxu0 0.0
    %3538 = vmatprep.subr.mxu0 0.0
    %3539 = vmatpush1.msra.mxu0 0.0
    %3540 = vmatprep.subr.mxu0 0.0
    %3541 = vmatpush1.msra.mxu0 0.0
    %3542 = vmatprep.subr.mxu0 0.0
    %3543 = vmatpush1.msra.mxu0 0.0
    %3544 = vmatprep.subr.mxu0 0.0
    %3545 = vmatpush1.msra.mxu0 0.0
    %3546 = vmatprep.subr.mxu0 0.0
    %3547 = vmatpush1.msra.mxu0 0.0
    %3548 = vmatprep.subr.mxu0 0.0
    %3549 = vmatpush1.msra.mxu0 0.0
    %3550 = vmatprep.mubr.f32.mxu0 0.0
    %3551 = vmatmul.mubr.f32.gmra.mrb[0].mxu0 %v3472
    %v3552 = vpop.f32.mrb[0].mxu0
    %v3553 = vadd.f32 %v3448, %v3552
    %v3554 = vpop.f32.mrb[0].mxu0
    %3555 = vmatprep.mubr.f32.mxu0 0.0
    %3556 = vmatmul.mubr.f32.gmra.mrb[0].mxu0 %v3475
    %v3557 = vpop.f32.mrb[0].mxu0
    %v3558 = vadd.f32 %v3453, %v3557
    %v3559 = vpop.f32.mrb[0].mxu0
    %3560 = vmatprep.mubr.f32.mxu0 0.0
    %3561 = vmatmul.mubr.f32.gmra.mrb[0].mxu0 %v3478
    %v3562 = vpop.f32.mrb[0].mxu0
    %v3563 = vadd.f32 %v3458, %v3562
    %v3564 = vpop.f32.mrb[0].mxu0
    %3565 = vmatprep.mubr.f32.mxu0 0.0
    %3566 = vmatmul.mubr.f32.gmra.mrb[0].mxu0 %v3481
    %v3567 = vpop.f32.mrb[0].mxu0
    %v3568 = vadd.f32 %v3463, %v3567
    %v3569 = vpop.f32.mrb[0].mxu0
    %3570 = vmatprep.mubr.f32.mxu0 0.0
    %3571 = vmatmul.mubr.f32.gmra.mrb[0].mxu0 %v3484
    %v3572 = vpop.f32.mrb[0].mxu0
    %v3573 = vadd.f32 %v3468, %v3572
    %v3574 = vpop.f32.mrb[0].mxu0
    %3575 = vdwg.mxu0
    %3576 = vrot.lane.b32.xlu0 %v2732, 112
    %v3577 = vpop.permute.xlu0 %3576
    %3578 = vrot.lane.b32.xlu0 %v2737, 112
    %v3579 = vpop.permute.xlu0 %3578
    %3580 = vrot.lane.b32.xlu0 %v2742, 112
    %v3581 = vpop.permute.xlu0 %3580
    %3582 = vrot.lane.b32.xlu0 %v2747, 112
    %v3583 = vpop.permute.xlu0 %3582
    %3584 = vrot.lane.b32.xlu0 %v2752, 112
    %v3585 = vpop.permute.xlu0 %3584
    %3586 = vrot.lane.b32.xlu0 %v2732, 80
    %v3587 = vpop.permute.xlu0 %3586
    %3588 = vrot.lane.b32.xlu0 %v2737, 80
    %v3589 = vpop.permute.xlu0 %3588
    %3590 = vrot.lane.b32.xlu0 %v2742, 80
    %v3591 = vpop.permute.xlu0 %3590
    %3592 = vrot.lane.b32.xlu0 %v2747, 80
    %v3593 = vpop.permute.xlu0 %3592
    %3594 = vrot.lane.b32.xlu0 %v2752, 80
    %v3595 = vpop.permute.xlu0 %3594
    %v3596 = vsel %vm455, %v3577, 0
    %v3598 = vsel %vm455, %v3579, 0
    %v3600 = vsel %vm455, %v3581, 0
    %v3602 = vsel %vm455, %v3583, 0
    %v3604 = vsel %vm455, %v3585, 0
    %v3606 = vsel %vm455, %v3587, 0
    %v3608 = vsel %vm455, %v3589, 0
    %v3610 = vsel %vm455, %v3591, 0
    %v3612 = vsel %vm455, %v3593, 0
    %v3614 = vsel %vm455, %v3595, 0
    %3616 = vmatprep.subr.mxu0 0.0
    %3617 = vmatpush1.xpose.msra.mxu0 %v3606
    %3618 = vmatprep.subr.mxu0 0.0
    %3619 = vmatpush1.xpose.msra.mxu0 %v3608
    %3620 = vmatprep.subr.mxu0 0.0
    %3621 = vmatpush1.xpose.msra.mxu0 %v3610
    %3622 = vmatprep.subr.mxu0 0.0
    %3623 = vmatpush1.xpose.msra.mxu0 %v3612
    %3624 = vmatprep.subr.mxu0 0.0
    %3625 = vmatpush1.xpose.msra.mxu0 %v3614
    %3626 = vmatprep.subr.mxu0 0.0
    %3627 = vmatpush1.xpose.msra.mxu0 0.0
    %3628 = vmatprep.subr.mxu0 0.0
    %3629 = vmatpush1.xpose.msra.mxu0 0.0
    %3630 = vmatprep.subr.mxu0 0.0
    %3631 = vmatpush1.xpose.msra.mxu0 0.0
    %3632 = vmatprep.subr.mxu0 0.0
    %3633 = vmatpush1.xpose.msra.mxu0 0.0
    %3634 = vmatprep.subr.mxu0 0.0
    %3635 = vmatpush1.xpose.msra.mxu0 0.0
    %3636 = vmatprep.subr.mxu0 0.0
    %3637 = vmatpush1.xpose.msra.mxu0 0.0
    %3638 = vmatprep.subr.mxu0 0.0
    %3639 = vmatpush1.xpose.msra.mxu0 0.0
    %3640 = vmatprep.subr.mxu0 0.0
    %3641 = vmatpush1.xpose.msra.mxu0 0.0
    %3642 = vmatprep.subr.mxu0 0.0
    %3643 = vmatpush1.xpose.msra.mxu0 0.0
    %3644 = vmatprep.subr.mxu0 0.0
    %3645 = vmatpush1.xpose.msra.mxu0 0.0
    %3646 = vmatprep.subr.mxu0 0.0
    %3647 = vmatpush1.xpose.msra.mxu0 0.0
    %3648 = vmatprep.subr.mxu0 0.0
    %3649 = vmatpush1.xpose.msra.mxu0 0.0
    %3650 = vmatprep.subr.mxu0 0.0
    %3651 = vmatpush1.xpose.msra.mxu0 0.0
    %3652 = vmatprep.subr.mxu0 0.0
    %3653 = vmatpush1.xpose.msra.mxu0 0.0
    %3654 = vmatprep.subr.mxu0 0.0
    %3655 = vmatpush1.xpose.msra.mxu0 0.0
    %3656 = vmatprep.subr.mxu0 0.0
    %3657 = vmatpush1.xpose.msra.mxu0 0.0
    %3658 = vmatprep.subr.mxu0 0.0
    %3659 = vmatpush1.xpose.msra.mxu0 0.0
    %3660 = vmatprep.subr.mxu0 0.0
    %3661 = vmatpush1.xpose.msra.mxu0 0.0
    %3662 = vmatprep.subr.mxu0 0.0
    %3663 = vmatpush1.xpose.msra.mxu0 0.0
    %3664 = vmatprep.subr.mxu0 0.0
    %3665 = vmatpush1.xpose.msra.mxu0 0.0
    %3666 = vmatprep.subr.mxu0 0.0
    %3667 = vmatpush1.xpose.msra.mxu0 0.0
    %3668 = vmatprep.subr.mxu0 0.0
    %3669 = vmatpush1.xpose.msra.mxu0 0.0
    %3670 = vmatprep.subr.mxu0 0.0
    %3671 = vmatpush1.xpose.msra.mxu0 0.0
    %3672 = vmatprep.subr.mxu0 0.0
    %3673 = vmatpush1.xpose.msra.mxu0 0.0
    %3674 = vmatprep.subr.mxu0 0.0
    %3675 = vmatpush1.xpose.msra.mxu0 0.0
    %3676 = vmatprep.subr.mxu0 0.0
    %3677 = vmatpush1.xpose.msra.mxu0 0.0
    %3678 = vmatprep.subr.mxu0 0.0
    %3679 = vmatpush1.xpose.msra.mxu0 0.0
    %3680 = vmatprep.mubr.f32.mxu0 0.0
    %3681 = vmatmul.mubr.f32.gmra.mrb[0].mxu0 %v3596
    %v3682 = vpop.f32.mrb[0].mxu0
    %v3683 = vadd.f32 %v236, %v3682
    %v3684 = vpop.f32.mrb[0].mxu0
    %3685 = vmatprep.mubr.f32.mxu0 0.0
    %3686 = vmatmul.mubr.f32.gmra.mrb[0].mxu0 %v3598
    %v3687 = vpop.f32.mrb[0].mxu0
    %v3688 = vadd.f32 %v237, %v3687
    %v3689 = vpop.f32.mrb[0].mxu0
    %3690 = vmatprep.mubr.f32.mxu0 0.0
    %3691 = vmatmul.mubr.f32.gmra.mrb[0].mxu0 %v3600
    %v3692 = vpop.f32.mrb[0].mxu0
    %v3693 = vadd.f32 %v238, %v3692
    %v3694 = vpop.f32.mrb[0].mxu0
    %3695 = vmatprep.mubr.f32.mxu0 0.0
    %3696 = vmatmul.mubr.f32.gmra.mrb[0].mxu0 %v3602
    %v3697 = vpop.f32.mrb[0].mxu0
    %v3698 = vadd.f32 %v239, %v3697
    %v3699 = vpop.f32.mrb[0].mxu0
    %3700 = vmatprep.mubr.f32.mxu0 0.0
    %3701 = vmatmul.mubr.f32.gmra.mrb[0].mxu0 %v3604
    %v3702 = vpop.f32.mrb[0].mxu0
    %v3703 = vadd.f32 %v240, %v3702
    %v3704 = vpop.f32.mrb[0].mxu0
    %3705 = vdwg.mxu0
    %v3706 = vsel %vm566, %v3683, -inf
    %3707 = vmax.xlane.f32.xlu0 %v3706
    %v3708 = vpop.xlane.xlu0 %3707
    %v3709 = vsel %vm566, %v3688, -inf
    %3710 = vmax.xlane.f32.xlu0 %v3709
    %v3711 = vpop.xlane.xlu0 %3710
    %v3712 = vsel %vm566, %v3693, -inf
    %3713 = vmax.xlane.f32.xlu0 %v3712
    %v3714 = vpop.xlane.xlu0 %3713
    %v3715 = vsel %vm566, %v3698, -inf
    %3716 = vmax.xlane.f32.xlu0 %v3715
    %v3717 = vpop.xlane.xlu0 %3716
    %v3718 = vsel %vm579, %v3703, -inf
    %3719 = vmax.xlane.f32.xlu0 %v3718
    %v3720 = vpop.xlane.xlu0 %3719
    %v3721 = vsub.f32 %v3683, %v3708
    %v3722 = vsub.f32 %v3688, %v3711
    %v3723 = vsub.f32 %v3693, %v3714
    %v3724 = vsub.f32 %v3698, %v3717
    %v3725 = vsub.f32 %v3703, %v3720
    %v3726 = vmul.f32 %v3721, 1.442695
    %v3727 = vpow.pop %v3726
    %v3728 = vmul.f32 %v3722, 1.442695
    %v3729 = vpow.pop %v3728
    %v3730 = vmul.f32 %v3723, 1.442695
    %v3731 = vpow.pop %v3730
    %v3732 = vmul.f32 %v3724, 1.442695
    %v3733 = vpow.pop %v3732
    %v3734 = vmul.f32 %v3725, 1.442695
    %v3735 = vpow.pop %v3734
    %v3736 = vsel %vm566, %v3727, 0.0
    %3737 = vadd.xlane.f32.xlu0 %v3736
    %v3738 = vpop.xlane.xlu0 %3737
    %v3739 = vsel %vm566, %v3729, 0.0
    %3740 = vadd.xlane.f32.xlu0 %v3739
    %v3741 = vpop.xlane.xlu0 %3740
    %v3742 = vsel %vm566, %v3731, 0.0
    %3743 = vadd.xlane.f32.xlu0 %v3742
    %v3744 = vpop.xlane.xlu0 %3743
    %v3745 = vsel %vm566, %v3733, 0.0
    %3746 = vadd.xlane.f32.xlu0 %v3745
    %v3747 = vpop.xlane.xlu0 %3746
    %v3748 = vsel %vm579, %v3735, 0.0
    %3749 = vadd.xlane.f32.xlu0 %v3748
    %v3750 = vpop.xlane.xlu0 %3749
    %v3751 = vrcp.pop %v3738
    %v3752 = vrcp.pop %v3741
    %v3753 = vrcp.pop %v3744
    %v3754 = vrcp.pop %v3747
    %v3755 = vrcp.pop %v3750
    %v3756 = vmul.f32 %v3727, %v3751
    %v3757 = vmul.f32 %v3729, %v3752
    %v3758 = vmul.f32 %v3731, %v3753
    %v3759 = vmul.f32 %v3733, %v3754
    %v3760 = vmul.f32 %v3735, %v3755
    %3761 = vrot.lane.b32.xlu0 %v2732, 48
    %v3762 = vpop.permute.xlu0 %3761
    %3763 = vrot.lane.b32.xlu0 %v2737, 48
    %v3764 = vpop.permute.xlu0 %3763
    %3765 = vrot.lane.b32.xlu0 %v2742, 48
    %v3766 = vpop.permute.xlu0 %3765
    %3767 = vrot.lane.b32.xlu0 %v2747, 48
    %v3768 = vpop.permute.xlu0 %3767
    %3769 = vrot.lane.b32.xlu0 %v2752, 48
    %v3770 = vpop.permute.xlu0 %3769
    %v3776 = vsel %vm566, %v3756, 0
    %v3779 = vsel %vm566, %v3757, 0
    %v3782 = vsel %vm566, %v3758, 0
    %v3785 = vsel %vm566, %v3759, 0
    %v3788 = vsel %vm566, %v3760, 0
    %v3790 = vsel %vm652, %v3770, 0
    %3792 = vmatprep.subr.mxu0 0.0
    %3793 = vmatpush1.msra.mxu0 %v3762
    %3794 = vmatprep.subr.mxu0 0.0
    %3795 = vmatpush1.msra.mxu0 %v3764
    %3796 = vmatprep.subr.mxu0 0.0
    %3797 = vmatpush1.msra.mxu0 %v3766
    %3798 = vmatprep.subr.mxu0 0.0
    %3799 = vmatpush1.msra.mxu0 %v3768
    %3800 = vmatprep.subr.mxu0 0.0
    %3801 = vmatpush1.msra.mxu0 %v3790
    %3802 = vmatprep.subr.mxu0 0.0
    %3803 = vmatpush1.msra.mxu0 0.0
    %3804 = vmatprep.subr.mxu0 0.0
    %3805 = vmatpush1.msra.mxu0 0.0
    %3806 = vmatprep.subr.mxu0 0.0
    %3807 = vmatpush1.msra.mxu0 0.0
    %3808 = vmatprep.subr.mxu0 0.0
    %3809 = vmatpush1.msra.mxu0 0.0
    %3810 = vmatprep.subr.mxu0 0.0
    %3811 = vmatpush1.msra.mxu0 0.0
    %3812 = vmatprep.subr.mxu0 0.0
    %3813 = vmatpush1.msra.mxu0 0.0
    %3814 = vmatprep.subr.mxu0 0.0
    %3815 = vmatpush1.msra.mxu0 0.0
    %3816 = vmatprep.subr.mxu0 0.0
    %3817 = vmatpush1.msra.mxu0 0.0
    %3818 = vmatprep.subr.mxu0 0.0
    %3819 = vmatpush1.msra.mxu0 0.0
    %3820 = vmatprep.subr.mxu0 0.0
    %3821 = vmatpush1.msra.mxu0 0.0
    %3822 = vmatprep.subr.mxu0 0.0
    %3823 = vmatpush1.msra.mxu0 0.0
    %3824 = vmatprep.subr.mxu0 0.0
    %3825 = vmatpush1.msra.mxu0 0.0
    %3826 = vmatprep.subr.mxu0 0.0
    %3827 = vmatpush1.msra.mxu0 0.0
    %3828 = vmatprep.subr.mxu0 0.0
    %3829 = vmatpush1.msra.mxu0 0.0
    %3830 = vmatprep.subr.mxu0 0.0
    %3831 = vmatpush1.msra.mxu0 0.0
    %3832 = vmatprep.subr.mxu0 0.0
    %3833 = vmatpush1.msra.mxu0 0.0
    %3834 = vmatprep.subr.mxu0 0.0
    %3835 = vmatpush1.msra.mxu0 0.0
    %3836 = vmatprep.subr.mxu0 0.0
    %3837 = vmatpush1.msra.mxu0 0.0
    %3838 = vmatprep.subr.mxu0 0.0
    %3839 = vmatpush1.msra.mxu0 0.0
    %3840 = vmatprep.subr.mxu0 0.0
    %3841 = vmatpush1.msra.mxu0 0.0
    %3842 = vmatprep.subr.mxu0 0.0
    %3843 = vmatpush1.msra.mxu0 0.0
    %3844 = vmatprep.subr.mxu0 0.0
    %3845 = vmatpush1.msra.mxu0 0.0
    %3846 = vmatprep.subr.mxu0 0.0
    %3847 = vmatpush1.msra.mxu0 0.0
    %3848 = vmatprep.subr.mxu0 0.0
    %3849 = vmatpush1.msra.mxu0 0.0
    %3850 = vmatprep.subr.mxu0 0.0
    %3851 = vmatpush1.msra.mxu0 0.0
    %3852 = vmatprep.subr.mxu0 0.0
    %3853 = vmatpush1.msra.mxu0 0.0
    %3854 = vmatprep.subr.mxu0 0.0
    %3855 = vmatpush1.msra.mxu0 0.0
    %3856 = vmatprep.mubr.f32.mxu0 0.0
    %3857 = vmatmul.mubr.f32.gmra.mrb[0].mxu0 %v3776
    %v3858 = vpop.f32.mrb[0].mxu0
    %v3859 = vadd.f32 0.0, %v3858
    %v3860 = vpop.f32.mrb[0].mxu0
    %3861 = vmatprep.mubr.f32.mxu0 0.0
    %3862 = vmatmul.mubr.f32.gmra.mrb[0].mxu0 %v3779
    %v3863 = vpop.f32.mrb[0].mxu0
    %v3864 = vadd.f32 0.0, %v3863
    %v3865 = vpop.f32.mrb[0].mxu0
    %3866 = vmatprep.mubr.f32.mxu0 0.0
    %3867 = vmatmul.mubr.f32.gmra.mrb[0].mxu0 %v3782
    %v3868 = vpop.f32.mrb[0].mxu0
    %v3869 = vadd.f32 0.0, %v3868
    %v3870 = vpop.f32.mrb[0].mxu0
    %3871 = vmatprep.mubr.f32.mxu0 0.0
    %3872 = vmatmul.mubr.f32.gmra.mrb[0].mxu0 %v3785
    %v3873 = vpop.f32.mrb[0].mxu0
    %v3874 = vadd.f32 0.0, %v3873
    %v3875 = vpop.f32.mrb[0].mxu0
    %3876 = vmatprep.mubr.f32.mxu0 0.0
    %3877 = vmatmul.mubr.f32.gmra.mrb[0].mxu0 %v3788
    %v3878 = vpop.f32.mrb[0].mxu0
    %v3879 = vadd.f32 0.0, %v3878
    %v3880 = vpop.f32.mrb[0].mxu0
    %3881 = vdwg.mxu0
    %v3883 = vsel %vm455, %v3859, 0
    %v3886 = vsel %vm455, %v3864, 0
    %v3889 = vsel %vm455, %v3869, 0
    %v3892 = vsel %vm455, %v3874, 0
    %v3895 = vsel %vm455, %v3879, 0
    %3897 = vmatprep.subr.mxu0 0.0
    %3898 = vmatpush1.msra.mxu0 %v2757
    %3899 = vmatprep.subr.mxu0 0.0
    %3900 = vmatpush1.msra.mxu0 0.0
    %3901 = vmatprep.subr.mxu0 0.0
    %3902 = vmatpush1.msra.mxu0 0.0
    %3903 = vmatprep.subr.mxu0 0.0
    %3904 = vmatpush1.msra.mxu0 0.0
    %3905 = vmatprep.subr.mxu0 0.0
    %3906 = vmatpush1.msra.mxu0 0.0
    %3907 = vmatprep.subr.mxu0 0.0
    %3908 = vmatpush1.msra.mxu0 0.0
    %3909 = vmatprep.subr.mxu0 0.0
    %3910 = vmatpush1.msra.mxu0 0.0
    %3911 = vmatprep.subr.mxu0 0.0
    %3912 = vmatpush1.msra.mxu0 0.0
    %3913 = vmatprep.subr.mxu0 0.0
    %3914 = vmatpush1.msra.mxu0 0.0
    %3915 = vmatprep.subr.mxu0 0.0
    %3916 = vmatpush1.msra.mxu0 0.0
    %3917 = vmatprep.subr.mxu0 0.0
    %3918 = vmatpush1.msra.mxu0 0.0
    %3919 = vmatprep.subr.mxu0 0.0
    %3920 = vmatpush1.msra.mxu0 0.0
    %3921 = vmatprep.subr.mxu0 0.0
    %3922 = vmatpush1.msra.mxu0 0.0
    %3923 = vmatprep.subr.mxu0 0.0
    %3924 = vmatpush1.msra.mxu0 0.0
    %3925 = vmatprep.subr.mxu0 0.0
    %3926 = vmatpush1.msra.mxu0 0.0
    %3927 = vmatprep.subr.mxu0 0.0
    %3928 = vmatpush1.msra.mxu0 0.0
    %3929 = vmatprep.subr.mxu0 0.0
    %3930 = vmatpush1.msra.mxu0 0.0
    %3931 = vmatprep.subr.mxu0 0.0
    %3932 = vmatpush1.msra.mxu0 0.0
    %3933 = vmatprep.subr.mxu0 0.0
    %3934 = vmatpush1.msra.mxu0 0.0
    %3935 = vmatprep.subr.mxu0 0.0
    %3936 = vmatpush1.msra.mxu0 0.0
    %3937 = vmatprep.subr.mxu0 0.0
    %3938 = vmatpush1.msra.mxu0 0.0
    %3939 = vmatprep.subr.mxu0 0.0
    %3940 = vmatpush1.msra.mxu0 0.0
    %3941 = vmatprep.subr.mxu0 0.0
    %3942 = vmatpush1.msra.mxu0 0.0
    %3943 = vmatprep.subr.mxu0 0.0
    %3944 = vmatpush1.msra.mxu0 0.0
    %3945 = vmatprep.subr.mxu0 0.0
    %3946 = vmatpush1.msra.mxu0 0.0
    %3947 = vmatprep.subr.mxu0 0.0
    %3948 = vmatpush1.msra.mxu0 0.0
    %3949 = vmatprep.subr.mxu0 0.0
    %3950 = vmatpush1.msra.mxu0 0.0
    %3951 = vmatprep.subr.mxu0 0.0
    %3952 = vmatpush1.msra.mxu0 0.0
    %3953 = vmatprep.subr.mxu0 0.0
    %3954 = vmatpush1.msra.mxu0 0.0
    %3955 = vmatprep.subr.mxu0 0.0
    %3956 = vmatpush1.msra.mxu0 0.0
    %3957 = vmatprep.subr.mxu0 0.0
    %3958 = vmatpush1.msra.mxu0 0.0
    %3959 = vmatprep.subr.mxu0 0.0
    %3960 = vmatpush1.msra.mxu0 0.0
    %3961 = vmatprep.mubr.f32.mxu0 0.0
    %3962 = vmatmul.mubr.f32.gmra.mrb[0].mxu0 %v3883
    %v3963 = vpop.f32.mrb[0].mxu0
    %v3964 = vadd.f32 0.0, %v3963
    %v3965 = vpop.f32.mrb[0].mxu0
    %3966 = vmatprep.mubr.f32.mxu0 0.0
    %3967 = vmatmul.mubr.f32.gmra.mrb[0].mxu0 %v3886
    %v3968 = vpop.f32.mrb[0].mxu0
    %v3969 = vadd.f32 0.0, %v3968
    %v3970 = vpop.f32.mrb[0].mxu0
    %3971 = vmatprep.mubr.f32.mxu0 0.0
    %3972 = vmatmul.mubr.f32.gmra.mrb[0].mxu0 %v3889
    %v3973 = vpop.f32.mrb[0].mxu0
    %v3974 = vadd.f32 0.0, %v3973
    %v3975 = vpop.f32.mrb[0].mxu0
    %3976 = vmatprep.mubr.f32.mxu0 0.0
    %3977 = vmatmul.mubr.f32.gmra.mrb[0].mxu0 %v3892
    %v3978 = vpop.f32.mrb[0].mxu0
    %v3979 = vadd.f32 0.0, %v3978
    %v3980 = vpop.f32.mrb[0].mxu0
    %3981 = vmatprep.mubr.f32.mxu0 0.0
    %3982 = vmatmul.mubr.f32.gmra.mrb[0].mxu0 %v3895
    %v3983 = vpop.f32.mrb[0].mxu0
    %v3984 = vadd.f32 0.0, %v3983
    %v3985 = vpop.f32.mrb[0].mxu0
    %3986 = vdwg.mxu0
    %v3987 = vadd.f32 %v3553, %v3964
    %v3988 = vadd.f32 %v3558, %v3969
    %v3989 = vadd.f32 %v3563, %v3974
    %v3990 = vadd.f32 %v3568, %v3979
    %v3991 = vadd.f32 %v3573, %v3984
    %3992 = vrot.lane.b32.xlu0 %v2732, 104
    %v3993 = vpop.permute.xlu0 %3992
    %3994 = vrot.lane.b32.xlu0 %v2737, 104
    %v3995 = vpop.permute.xlu0 %3994
    %3996 = vrot.lane.b32.xlu0 %v2742, 104
    %v3997 = vpop.permute.xlu0 %3996
    %3998 = vrot.lane.b32.xlu0 %v2747, 104
    %v3999 = vpop.permute.xlu0 %3998
    %4000 = vrot.lane.b32.xlu0 %v2752, 104
    %v4001 = vpop.permute.xlu0 %4000
    %4002 = vrot.lane.b32.xlu0 %v2732, 72
    %v4003 = vpop.permute.xlu0 %4002
    %4004 = vrot.lane.b32.xlu0 %v2737, 72
    %v4005 = vpop.permute.xlu0 %4004
    %4006 = vrot.lane.b32.xlu0 %v2742, 72
    %v4007 = vpop.permute.xlu0 %4006
    %4008 = vrot.lane.b32.xlu0 %v2747, 72
    %v4009 = vpop.permute.xlu0 %4008
    %4010 = vrot.lane.b32.xlu0 %v2752, 72
    %v4011 = vpop.permute.xlu0 %4010
    %v4012 = vsel %vm455, %v3993, 0
    %v4014 = vsel %vm455, %v3995, 0
    %v4016 = vsel %vm455, %v3997, 0
    %v4018 = vsel %vm455, %v3999, 0
    %v4020 = vsel %vm455, %v4001, 0
    %v4022 = vsel %vm455, %v4003, 0
    %v4024 = vsel %vm455, %v4005, 0
    %v4026 = vsel %vm455, %v4007, 0
    %v4028 = vsel %vm455, %v4009, 0
    %v4030 = vsel %vm455, %v4011, 0
    %4032 = vmatprep.subr.mxu0 0.0
    %4033 = vmatpush1.xpose.msra.mxu0 %v4022
    %4034 = vmatprep.subr.mxu0 0.0
    %4035 = vmatpush1.xpose.msra.mxu0 %v4024
    %4036 = vmatprep.subr.mxu0 0.0
    %4037 = vmatpush1.xpose.msra.mxu0 %v4026
    %4038 = vmatprep.subr.mxu0 0.0
    %4039 = vmatpush1.xpose.msra.mxu0 %v4028
    %4040 = vmatprep.subr.mxu0 0.0
    %4041 = vmatpush1.xpose.msra.mxu0 %v4030
    %4042 = vmatprep.subr.mxu0 0.0
    %4043 = vmatpush1.xpose.msra.mxu0 0.0
    %4044 = vmatprep.subr.mxu0 0.0
    %4045 = vmatpush1.xpose.msra.mxu0 0.0
    %4046 = vmatprep.subr.mxu0 0.0
    %4047 = vmatpush1.xpose.msra.mxu0 0.0
    %4048 = vmatprep.subr.mxu0 0.0
    %4049 = vmatpush1.xpose.msra.mxu0 0.0
    %4050 = vmatprep.subr.mxu0 0.0
    %4051 = vmatpush1.xpose.msra.mxu0 0.0
    %4052 = vmatprep.subr.mxu0 0.0
    %4053 = vmatpush1.xpose.msra.mxu0 0.0
    %4054 = vmatprep.subr.mxu0 0.0
    %4055 = vmatpush1.xpose.msra.mxu0 0.0
    %4056 = vmatprep.subr.mxu0 0.0
    %4057 = vmatpush1.xpose.msra.mxu0 0.0
    %4058 = vmatprep.subr.mxu0 0.0
    %4059 = vmatpush1.xpose.msra.mxu0 0.0
    %4060 = vmatprep.subr.mxu0 0.0
    %4061 = vmatpush1.xpose.msra.mxu0 0.0
    %4062 = vmatprep.subr.mxu0 0.0
    %4063 = vmatpush1.xpose.msra.mxu0 0.0
    %4064 = vmatprep.subr.mxu0 0.0
    %4065 = vmatpush1.xpose.msra.mxu0 0.0
    %4066 = vmatprep.subr.mxu0 0.0
    %4067 = vmatpush1.xpose.msra.mxu0 0.0
    %4068 = vmatprep.subr.mxu0 0.0
    %4069 = vmatpush1.xpose.msra.mxu0 0.0
    %4070 = vmatprep.subr.mxu0 0.0
    %4071 = vmatpush1.xpose.msra.mxu0 0.0
    %4072 = vmatprep.subr.mxu0 0.0
    %4073 = vmatpush1.xpose.msra.mxu0 0.0
    %4074 = vmatprep.subr.mxu0 0.0
    %4075 = vmatpush1.xpose.msra.mxu0 0.0
    %4076 = vmatprep.subr.mxu0 0.0
    %4077 = vmatpush1.xpose.msra.mxu0 0.0
    %4078 = vmatprep.subr.mxu0 0.0
    %4079 = vmatpush1.xpose.msra.mxu0 0.0
    %4080 = vmatprep.subr.mxu0 0.0
    %4081 = vmatpush1.xpose.msra.mxu0 0.0
    %4082 = vmatprep.subr.mxu0 0.0
    %4083 = vmatpush1.xpose.msra.mxu0 0.0
    %4084 = vmatprep.subr.mxu0 0.0
    %4085 = vmatpush1.xpose.msra.mxu0 0.0
    %4086 = vmatprep.subr.mxu0 0.0
    %4087 = vmatpush1.xpose.msra.mxu0 0.0
    %4088 = vmatprep.subr.mxu0 0.0
    %4089 = vmatpush1.xpose.msra.mxu0 0.0
    %4090 = vmatprep.subr.mxu0 0.0
    %4091 = vmatpush1.xpose.msra.mxu0 0.0
    %4092 = vmatprep.subr.mxu0 0.0
    %4093 = vmatpush1.xpose.msra.mxu0 0.0
    %4094 = vmatprep.subr.mxu0 0.0
    %4095 = vmatpush1.xpose.msra.mxu0 0.0
    %4096 = vmatprep.mubr.f32.mxu0 0.0
    %4097 = vmatmul.mubr.f32.gmra.mrb[0].mxu0 %v4012
    %v4098 = vpop.f32.mrb[0].mxu0
    %v4099 = vadd.f32 %v236, %v4098
    %v4100 = vpop.f32.mrb[0].mxu0
    %4101 = vmatprep.mubr.f32.mxu0 0.0
    %4102 = vmatmul.mubr.f32.gmra.mrb[0].mxu0 %v4014
    %v4103 = vpop.f32.mrb[0].mxu0
    %v4104 = vadd.f32 %v237, %v4103
    %v4105 = vpop.f32.mrb[0].mxu0
    %4106 = vmatprep.mubr.f32.mxu0 0.0
    %4107 = vmatmul.mubr.f32.gmra.mrb[0].mxu0 %v4016
    %v4108 = vpop.f32.mrb[0].mxu0
    %v4109 = vadd.f32 %v238, %v4108
    %v4110 = vpop.f32.mrb[0].mxu0
    %4111 = vmatprep.mubr.f32.mxu0 0.0
    %4112 = vmatmul.mubr.f32.gmra.mrb[0].mxu0 %v4018
    %v4113 = vpop.f32.mrb[0].mxu0
    %v4114 = vadd.f32 %v239, %v4113
    %v4115 = vpop.f32.mrb[0].mxu0
    %4116 = vmatprep.mubr.f32.mxu0 0.0
    %4117 = vmatmul.mubr.f32.gmra.mrb[0].mxu0 %v4020
    %v4118 = vpop.f32.mrb[0].mxu0
    %v4119 = vadd.f32 %v240, %v4118
    %v4120 = vpop.f32.mrb[0].mxu0
    %4121 = vdwg.mxu0
    %v4122 = vsel %vm566, %v4099, -inf
    %4123 = vmax.xlane.f32.xlu0 %v4122
    %v4124 = vpop.xlane.xlu0 %4123
    %v4125 = vsel %vm566, %v4104, -inf
    %4126 = vmax.xlane.f32.xlu0 %v4125
    %v4127 = vpop.xlane.xlu0 %4126
    %v4128 = vsel %vm566, %v4109, -inf
    %4129 = vmax.xlane.f32.xlu0 %v4128
    %v4130 = vpop.xlane.xlu0 %4129
    %v4131 = vsel %vm566, %v4114, -inf
    %4132 = vmax.xlane.f32.xlu0 %v4131
    %v4133 = vpop.xlane.xlu0 %4132
    %v4134 = vsel %vm579, %v4119, -inf
    %4135 = vmax.xlane.f32.xlu0 %v4134
    %v4136 = vpop.xlane.xlu0 %4135
    %v4137 = vsub.f32 %v4099, %v4124
    %v4138 = vsub.f32 %v4104, %v4127
    %v4139 = vsub.f32 %v4109, %v4130
    %v4140 = vsub.f32 %v4114, %v4133
    %v4141 = vsub.f32 %v4119, %v4136
    %v4142 = vmul.f32 %v4137, 1.442695
    %v4143 = vpow.pop %v4142
    %v4144 = vmul.f32 %v4138, 1.442695
    %v4145 = vpow.pop %v4144
    %v4146 = vmul.f32 %v4139, 1.442695
    %v4147 = vpow.pop %v4146
    %v4148 = vmul.f32 %v4140, 1.442695
    %v4149 = vpow.pop %v4148
    %v4150 = vmul.f32 %v4141, 1.442695
    %v4151 = vpow.pop %v4150
    %v4152 = vsel %vm566, %v4143, 0.0
    %4153 = vadd.xlane.f32.xlu0 %v4152
    %v4154 = vpop.xlane.xlu0 %4153
    %v4155 = vsel %vm566, %v4145, 0.0
    %4156 = vadd.xlane.f32.xlu0 %v4155
    %v4157 = vpop.xlane.xlu0 %4156
    %v4158 = vsel %vm566, %v4147, 0.0
    %4159 = vadd.xlane.f32.xlu0 %v4158
    %v4160 = vpop.xlane.xlu0 %4159
    %v4161 = vsel %vm566, %v4149, 0.0
    %4162 = vadd.xlane.f32.xlu0 %v4161
    %v4163 = vpop.xlane.xlu0 %4162
    %v4164 = vsel %vm579, %v4151, 0.0
    %4165 = vadd.xlane.f32.xlu0 %v4164
    %v4166 = vpop.xlane.xlu0 %4165
    %v4167 = vrcp.pop %v4154
    %v4168 = vrcp.pop %v4157
    %v4169 = vrcp.pop %v4160
    %v4170 = vrcp.pop %v4163
    %v4171 = vrcp.pop %v4166
    %v4172 = vmul.f32 %v4143, %v4167
    %v4173 = vmul.f32 %v4145, %v4168
    %v4174 = vmul.f32 %v4147, %v4169
    %v4175 = vmul.f32 %v4149, %v4170
    %v4176 = vmul.f32 %v4151, %v4171
    %4177 = vrot.lane.b32.xlu0 %v2732, 40
    %v4178 = vpop.permute.xlu0 %4177
    %4179 = vrot.lane.b32.xlu0 %v2737, 40
    %v4180 = vpop.permute.xlu0 %4179
    %4181 = vrot.lane.b32.xlu0 %v2742, 40
    %v4182 = vpop.permute.xlu0 %4181
    %4183 = vrot.lane.b32.xlu0 %v2747, 40
    %v4184 = vpop.permute.xlu0 %4183
    %4185 = vrot.lane.b32.xlu0 %v2752, 40
    %v4186 = vpop.permute.xlu0 %4185
    %v4192 = vsel %vm566, %v4172, 0
    %v4195 = vsel %vm566, %v4173, 0
    %v4198 = vsel %vm566, %v4174, 0
    %v4201 = vsel %vm566, %v4175, 0
    %v4204 = vsel %vm566, %v4176, 0
    %v4206 = vsel %vm652, %v4186, 0
    %4208 = vmatprep.subr.mxu0 0.0
    %4209 = vmatpush1.msra.mxu0 %v4178
    %4210 = vmatprep.subr.mxu0 0.0
    %4211 = vmatpush1.msra.mxu0 %v4180
    %4212 = vmatprep.subr.mxu0 0.0
    %4213 = vmatpush1.msra.mxu0 %v4182
    %4214 = vmatprep.subr.mxu0 0.0
    %4215 = vmatpush1.msra.mxu0 %v4184
    %4216 = vmatprep.subr.mxu0 0.0
    %4217 = vmatpush1.msra.mxu0 %v4206
    %4218 = vmatprep.subr.mxu0 0.0
    %4219 = vmatpush1.msra.mxu0 0.0
    %4220 = vmatprep.subr.mxu0 0.0
    %4221 = vmatpush1.msra.mxu0 0.0
    %4222 = vmatprep.subr.mxu0 0.0
    %4223 = vmatpush1.msra.mxu0 0.0
    %4224 = vmatprep.subr.mxu0 0.0
    %4225 = vmatpush1.msra.mxu0 0.0
    %4226 = vmatprep.subr.mxu0 0.0
    %4227 = vmatpush1.msra.mxu0 0.0
    %4228 = vmatprep.subr.mxu0 0.0
    %4229 = vmatpush1.msra.mxu0 0.0
    %4230 = vmatprep.subr.mxu0 0.0
    %4231 = vmatpush1.msra.mxu0 0.0
    %4232 = vmatprep.subr.mxu0 0.0
    %4233 = vmatpush1.msra.mxu0 0.0
    %4234 = vmatprep.subr.mxu0 0.0
    %4235 = vmatpush1.msra.mxu0 0.0
    %4236 = vmatprep.subr.mxu0 0.0
    %4237 = vmatpush1.msra.mxu0 0.0
    %4238 = vmatprep.subr.mxu0 0.0
    %4239 = vmatpush1.msra.mxu0 0.0
    %4240 = vmatprep.subr.mxu0 0.0
    %4241 = vmatpush1.msra.mxu0 0.0
    %4242 = vmatprep.subr.mxu0 0.0
    %4243 = vmatpush1.msra.mxu0 0.0
    %4244 = vmatprep.subr.mxu0 0.0
    %4245 = vmatpush1.msra.mxu0 0.0
    %4246 = vmatprep.subr.mxu0 0.0
    %4247 = vmatpush1.msra.mxu0 0.0
    %4248 = vmatprep.subr.mxu0 0.0
    %4249 = vmatpush1.msra.mxu0 0.0
    %4250 = vmatprep.subr.mxu0 0.0
    %4251 = vmatpush1.msra.mxu0 0.0
    %4252 = vmatprep.subr.mxu0 0.0
    %4253 = vmatpush1.msra.mxu0 0.0
    %4254 = vmatprep.subr.mxu0 0.0
    %4255 = vmatpush1.msra.mxu0 0.0
    %4256 = vmatprep.subr.mxu0 0.0
    %4257 = vmatpush1.msra.mxu0 0.0
    %4258 = vmatprep.subr.mxu0 0.0
    %4259 = vmatpush1.msra.mxu0 0.0
    %4260 = vmatprep.subr.mxu0 0.0
    %4261 = vmatpush1.msra.mxu0 0.0
    %4262 = vmatprep.subr.mxu0 0.0
    %4263 = vmatpush1.msra.mxu0 0.0
    %4264 = vmatprep.subr.mxu0 0.0
    %4265 = vmatpush1.msra.mxu0 0.0
    %4266 = vmatprep.subr.mxu0 0.0
    %4267 = vmatpush1.msra.mxu0 0.0
    %4268 = vmatprep.subr.mxu0 0.0
    %4269 = vmatpush1.msra.mxu0 0.0
    %4270 = vmatprep.subr.mxu0 0.0
    %4271 = vmatpush1.msra.mxu0 0.0
    %4272 = vmatprep.mubr.f32.mxu0 0.0
    %4273 = vmatmul.mubr.f32.gmra.mrb[0].mxu0 %v4192
    %v4274 = vpop.f32.mrb[0].mxu0
    %v4275 = vadd.f32 0.0, %v4274
    %v4276 = vpop.f32.mrb[0].mxu0
    %4277 = vmatprep.mubr.f32.mxu0 0.0
    %4278 = vmatmul.mubr.f32.gmra.mrb[0].mxu0 %v4195
    %v4279 = vpop.f32.mrb[0].mxu0
    %v4280 = vadd.f32 0.0, %v4279
    %v4281 = vpop.f32.mrb[0].mxu0
    %4282 = vmatprep.mubr.f32.mxu0 0.0
    %4283 = vmatmul.mubr.f32.gmra.mrb[0].mxu0 %v4198
    %v4284 = vpop.f32.mrb[0].mxu0
    %v4285 = vadd.f32 0.0, %v4284
    %v4286 = vpop.f32.mrb[0].mxu0
    %4287 = vmatprep.mubr.f32.mxu0 0.0
    %4288 = vmatmul.mubr.f32.gmra.mrb[0].mxu0 %v4201
    %v4289 = vpop.f32.mrb[0].mxu0
    %v4290 = vadd.f32 0.0, %v4289
    %v4291 = vpop.f32.mrb[0].mxu0
    %4292 = vmatprep.mubr.f32.mxu0 0.0
    %4293 = vmatmul.mubr.f32.gmra.mrb[0].mxu0 %v4204
    %v4294 = vpop.f32.mrb[0].mxu0
    %v4295 = vadd.f32 0.0, %v4294
    %v4296 = vpop.f32.mrb[0].mxu0
    %4297 = vdwg.mxu0
    %v4299 = vsel %vm455, %v4275, 0
    %v4302 = vsel %vm455, %v4280, 0
    %v4305 = vsel %vm455, %v4285, 0
    %v4308 = vsel %vm455, %v4290, 0
    %v4311 = vsel %vm455, %v4295, 0
    %4313 = vmatprep.subr.mxu0 0.0
    %4314 = vmatpush1.msra.mxu0 %v2758
    %4315 = vmatprep.subr.mxu0 0.0
    %4316 = vmatpush1.msra.mxu0 0.0
    %4317 = vmatprep.subr.mxu0 0.0
    %4318 = vmatpush1.msra.mxu0 0.0
    %4319 = vmatprep.subr.mxu0 0.0
    %4320 = vmatpush1.msra.mxu0 0.0
    %4321 = vmatprep.subr.mxu0 0.0
    %4322 = vmatpush1.msra.mxu0 0.0
    %4323 = vmatprep.subr.mxu0 0.0
    %4324 = vmatpush1.msra.mxu0 0.0
    %4325 = vmatprep.subr.mxu0 0.0
    %4326 = vmatpush1.msra.mxu0 0.0
    %4327 = vmatprep.subr.mxu0 0.0
    %4328 = vmatpush1.msra.mxu0 0.0
    %4329 = vmatprep.subr.mxu0 0.0
    %4330 = vmatpush1.msra.mxu0 0.0
    %4331 = vmatprep.subr.mxu0 0.0
    %4332 = vmatpush1.msra.mxu0 0.0
    %4333 = vmatprep.subr.mxu0 0.0
    %4334 = vmatpush1.msra.mxu0 0.0
    %4335 = vmatprep.subr.mxu0 0.0
    %4336 = vmatpush1.msra.mxu0 0.0
    %4337 = vmatprep.subr.mxu0 0.0
    %4338 = vmatpush1.msra.mxu0 0.0
    %4339 = vmatprep.subr.mxu0 0.0
    %4340 = vmatpush1.msra.mxu0 0.0
    %4341 = vmatprep.subr.mxu0 0.0
    %4342 = vmatpush1.msra.mxu0 0.0
    %4343 = vmatprep.subr.mxu0 0.0
    %4344 = vmatpush1.msra.mxu0 0.0
    %4345 = vmatprep.subr.mxu0 0.0
    %4346 = vmatpush1.msra.mxu0 0.0
    %4347 = vmatprep.subr.mxu0 0.0
    %4348 = vmatpush1.msra.mxu0 0.0
    %4349 = vmatprep.subr.mxu0 0.0
    %4350 = vmatpush1.msra.mxu0 0.0
    %4351 = vmatprep.subr.mxu0 0.0
    %4352 = vmatpush1.msra.mxu0 0.0
    %4353 = vmatprep.subr.mxu0 0.0
    %4354 = vmatpush1.msra.mxu0 0.0
    %4355 = vmatprep.subr.mxu0 0.0
    %4356 = vmatpush1.msra.mxu0 0.0
    %4357 = vmatprep.subr.mxu0 0.0
    %4358 = vmatpush1.msra.mxu0 0.0
    %4359 = vmatprep.subr.mxu0 0.0
    %4360 = vmatpush1.msra.mxu0 0.0
    %4361 = vmatprep.subr.mxu0 0.0
    %4362 = vmatpush1.msra.mxu0 0.0
    %4363 = vmatprep.subr.mxu0 0.0
    %4364 = vmatpush1.msra.mxu0 0.0
    %4365 = vmatprep.subr.mxu0 0.0
    %4366 = vmatpush1.msra.mxu0 0.0
    %4367 = vmatprep.subr.mxu0 0.0
    %4368 = vmatpush1.msra.mxu0 0.0
    %4369 = vmatprep.subr.mxu0 0.0
    %4370 = vmatpush1.msra.mxu0 0.0
    %4371 = vmatprep.subr.mxu0 0.0
    %4372 = vmatpush1.msra.mxu0 0.0
    %4373 = vmatprep.subr.mxu0 0.0
    %4374 = vmatpush1.msra.mxu0 0.0
    %4375 = vmatprep.subr.mxu0 0.0
    %4376 = vmatpush1.msra.mxu0 0.0
    %4377 = vmatprep.mubr.f32.mxu0 0.0
    %4378 = vmatmul.mubr.f32.gmra.mrb[0].mxu0 %v4299
    %v4379 = vpop.f32.mrb[0].mxu0
    %v4380 = vadd.f32 0.0, %v4379
    %v4381 = vpop.f32.mrb[0].mxu0
    %4382 = vmatprep.mubr.f32.mxu0 0.0
    %4383 = vmatmul.mubr.f32.gmra.mrb[0].mxu0 %v4302
    %v4384 = vpop.f32.mrb[0].mxu0
    %v4385 = vadd.f32 0.0, %v4384
    %v4386 = vpop.f32.mrb[0].mxu0
    %4387 = vmatprep.mubr.f32.mxu0 0.0
    %4388 = vmatmul.mubr.f32.gmra.mrb[0].mxu0 %v4305
    %v4389 = vpop.f32.mrb[0].mxu0
    %v4390 = vadd.f32 0.0, %v4389
    %v4391 = vpop.f32.mrb[0].mxu0
    %4392 = vmatprep.mubr.f32.mxu0 0.0
    %4393 = vmatmul.mubr.f32.gmra.mrb[0].mxu0 %v4308
    %v4394 = vpop.f32.mrb[0].mxu0
    %v4395 = vadd.f32 0.0, %v4394
    %v4396 = vpop.f32.mrb[0].mxu0
    %4397 = vmatprep.mubr.f32.mxu0 0.0
    %4398 = vmatmul.mubr.f32.gmra.mrb[0].mxu0 %v4311
    %v4399 = vpop.f32.mrb[0].mxu0
    %v4400 = vadd.f32 0.0, %v4399
    %v4401 = vpop.f32.mrb[0].mxu0
    %4402 = vdwg.mxu0
    %v4403 = vadd.f32 %v3987, %v4380
    %v4404 = vadd.f32 %v3988, %v4385
    %v4405 = vadd.f32 %v3989, %v4390
    %v4406 = vadd.f32 %v3990, %v4395
    %v4407 = vadd.f32 %v3991, %v4400
    %v4408 = vadd.f32 %v2557, %v4403
    %v4409 = vadd.f32 %v2558, %v4404
    %v4410 = vadd.f32 %v2559, %v4405
    %v4411 = vadd.f32 %v2560, %v4406
    %v4412 = vadd.f32 %v2561, %v4407
    %v4413 = vlaneseq
    %v4414 = vshrl.u32 %v4413, 7
    %v4415 = vsub.s32 2, %v4414
    %v4416 = vrot.slane %v2562, %v4415
    %v4417 = vadd.f32 %v4408, %v4416
    %v4418 = vadd.f32 %v4409, %v4416
    %v4419 = vadd.f32 %v4410, %v4416
    %v4420 = vadd.f32 %v4411, %v4416
    %v4421 = vadd.f32 %v4412, %v4416
    %v4422 = vsel %vm130, %v4417, 0.0
    %4423 = vadd.xlane.f32.xlu0 %v4422
    %v4424 = vpop.xlane.xlu0 %4423
    %v4425 = vsel %vm130, %v4418, 0.0
    %4426 = vadd.xlane.f32.xlu0 %v4425
    %v4427 = vpop.xlane.xlu0 %4426
    %v4428 = vsel %vm130, %v4419, 0.0
    %4429 = vadd.xlane.f32.xlu0 %v4428
    %v4430 = vpop.xlane.xlu0 %4429
    %v4431 = vsel %vm130, %v4420, 0.0
    %4432 = vadd.xlane.f32.xlu0 %v4431
    %v4433 = vpop.xlane.xlu0 %4432
    %v4434 = vsel %vm254, %v4421, 0.0
    %4435 = vadd.xlane.f32.xlu0 %v4434
    %v4436 = vpop.xlane.xlu0 %4435
    %v4437 = vmul.f32 %v4424, %v258
    %v4438 = vmul.f32 %v4427, %v258
    %v4439 = vmul.f32 %v4430, %v258
    %v4440 = vmul.f32 %v4433, %v258
    %v4441 = vmul.f32 %v4436, %v258
    %v4442 = vsub.f32 %v4417, %v4437
    %v4443 = vsub.f32 %v4418, %v4438
    %v4444 = vsub.f32 %v4419, %v4439
    %v4445 = vsub.f32 %v4420, %v4440
    %v4446 = vsub.f32 %v4421, %v4441
    %v4447 = vmul.f32 %v4442, %v4442
    %v4448 = vmul.f32 %v4443, %v4443
    %v4449 = vmul.f32 %v4444, %v4444
    %v4450 = vmul.f32 %v4445, %v4445
    %v4451 = vmul.f32 %v4446, %v4446
    %v4452 = vsel %vm130, %v4447, 0.0
    %4453 = vadd.xlane.f32.xlu0 %v4452
    %v4454 = vpop.xlane.xlu0 %4453
    %v4455 = vsel %vm130, %v4448, 0.0
    %4456 = vadd.xlane.f32.xlu0 %v4455
    %v4457 = vpop.xlane.xlu0 %4456
    %v4458 = vsel %vm130, %v4449, 0.0
    %4459 = vadd.xlane.f32.xlu0 %v4458
    %v4460 = vpop.xlane.xlu0 %4459
    %v4461 = vsel %vm130, %v4450, 0.0
    %4462 = vadd.xlane.f32.xlu0 %v4461
    %v4463 = vpop.xlane.xlu0 %4462
    %v4464 = vsel %vm254, %v4451, 0.0
    %4465 = vadd.xlane.f32.xlu0 %v4464
    %v4466 = vpop.xlane.xlu0 %4465
    %v4467 = vmul.f32 %v4454, %v258
    %v4468 = vmul.f32 %v4457, %v258
    %v4469 = vmul.f32 %v4460, %v258
    %v4470 = vmul.f32 %v4463, %v258
    %v4471 = vmul.f32 %v4466, %v258
    %v4472 = vadd.f32 %v4467, 1e-05
    %v4473 = vadd.f32 %v4468, 1e-05
    %v4474 = vadd.f32 %v4469, 1e-05
    %v4475 = vadd.f32 %v4470, 1e-05
    %v4476 = vadd.f32 %v4471, 1e-05
    %v4477 = vrsqrt.pop %v4472
    %v4478 = vrsqrt.pop %v4473
    %v4479 = vrsqrt.pop %v4474
    %v4480 = vrsqrt.pop %v4475
    %v4481 = vrsqrt.pop %v4476
    %v4482 = vmul.f32 %v4442, %v4477
    %v4483 = vmul.f32 %v4443, %v4478
    %v4484 = vmul.f32 %v4444, %v4479
    %v4485 = vmul.f32 %v4445, %v4480
    %v4486 = vmul.f32 %v4446, %v4481
    %v4487 = vlaneseq
    %v4488 = vshrl.u32 %v4487, 7
    %v4489 = vsub.s32 3, %v4488
    %v4490 = vrot.slane %v2562, %v4489
    %v4491 = vmul.f32 %v4482, %v4490
    %v4492 = vmul.f32 %v4483, %v4490
    %v4493 = vmul.f32 %v4484, %v4490
    %v4494 = vmul.f32 %v4485, %v4490
    %v4495 = vmul.f32 %v4486, %v4490
    %v4496 = vlaneseq
    %v4497 = vshrl.u32 %v4496, 7
    %v4498 = vsub.s32 4, %v4497
    %v4499 = vrot.slane %v2562, %v4498
    %v4500 = vadd.f32 %v4491, %v4499
    %v4501 = vadd.f32 %v4492, %v4499
    %v4502 = vadd.f32 %v4493, %v4499
    %v4503 = vadd.f32 %v4494, %v4499
    %v4504 = vadd.f32 %v4495, %v4499
    %v4505 = vld [vmem:[%s1 + $0x178] sm:$0xff]
    %v4506 = vld [vmem:[%s1 + $0x180] sm:$0xff]
    %v4507 = vld [vmem:[%s1 + $0x188] sm:$0xff]
    %v4508 = vld [vmem:[%s1 + $0x190] sm:$0xff]
    %v4509 = vlaneseq
    %v4510 = vshrl.u32 %v4509, 7
    %v4511 = vsub.s32 5, %v4510
    %v4512 = vrot.slane %v2562, %v4511
    %v4514 = vsel %vm130, %v4500, 0
    %v4517 = vsel %vm130, %v4501, 0
    %v4520 = vsel %vm130, %v4502, 0
    %v4523 = vsel %vm130, %v4503, 0
    %v4526 = vsel %vm130, %v4504, 0
    %4528 = vmatprep.subr.mxu0 0.0
    %4529 = vmatpush1.msra.mxu0 %v4505
    %4530 = vmatprep.subr.mxu0 0.0
    %4531 = vmatpush1.msra.mxu0 %v4506
    %4532 = vmatprep.subr.mxu0 0.0
    %4533 = vmatpush1.msra.mxu0 %v4507
    %4534 = vmatprep.subr.mxu0 0.0
    %4535 = vmatpush1.msra.mxu0 %v4508
    %4536 = vmatprep.subr.mxu0 0.0
    %4537 = vmatpush1.msra.mxu0 0.0
    %4538 = vmatprep.subr.mxu0 0.0
    %4539 = vmatpush1.msra.mxu0 0.0
    %4540 = vmatprep.subr.mxu0 0.0
    %4541 = vmatpush1.msra.mxu0 0.0
    %4542 = vmatprep.subr.mxu0 0.0
    %4543 = vmatpush1.msra.mxu0 0.0
    %4544 = vmatprep.subr.mxu0 0.0
    %4545 = vmatpush1.msra.mxu0 0.0
    %4546 = vmatprep.subr.mxu0 0.0
    %4547 = vmatpush1.msra.mxu0 0.0
    %4548 = vmatprep.subr.mxu0 0.0
    %4549 = vmatpush1.msra.mxu0 0.0
    %4550 = vmatprep.subr.mxu0 0.0
    %4551 = vmatpush1.msra.mxu0 0.0
    %4552 = vmatprep.subr.mxu0 0.0
    %4553 = vmatpush1.msra.mxu0 0.0
    %4554 = vmatprep.subr.mxu0 0.0
    %4555 = vmatpush1.msra.mxu0 0.0
    %4556 = vmatprep.subr.mxu0 0.0
    %4557 = vmatpush1.msra.mxu0 0.0
    %4558 = vmatprep.subr.mxu0 0.0
    %4559 = vmatpush1.msra.mxu0 0.0
    %4560 = vmatprep.subr.mxu0 0.0
    %4561 = vmatpush1.msra.mxu0 0.0
    %4562 = vmatprep.subr.mxu0 0.0
    %4563 = vmatpush1.msra.mxu0 0.0
    %4564 = vmatprep.subr.mxu0 0.0
    %4565 = vmatpush1.msra.mxu0 0.0
    %4566 = vmatprep.subr.mxu0 0.0
    %4567 = vmatpush1.msra.mxu0 0.0
    %4568 = vmatprep.subr.mxu0 0.0
    %4569 = vmatpush1.msra.mxu0 0.0
    %4570 = vmatprep.subr.mxu0 0.0
    %4571 = vmatpush1.msra.mxu0 0.0
    %4572 = vmatprep.subr.mxu0 0.0
    %4573 = vmatpush1.msra.mxu0 0.0
    %4574 = vmatprep.subr.mxu0 0.0
    %4575 = vmatpush1.msra.mxu0 0.0
    %4576 = vmatprep.subr.mxu0 0.0
    %4577 = vmatpush1.msra.mxu0 0.0
    %4578 = vmatprep.subr.mxu0 0.0
    %4579 = vmatpush1.msra.mxu0 0.0
    %4580 = vmatprep.subr.mxu0 0.0
    %4581 = vmatpush1.msra.mxu0 0.0
    %4582 = vmatprep.subr.mxu0 0.0
    %4583 = vmatpush1.msra.mxu0 0.0
    %4584 = vmatprep.subr.mxu0 0.0
    %4585 = vmatpush1.msra.mxu0 0.0
    %4586 = vmatprep.subr.mxu0 0.0
    %4587 = vmatpush1.msra.mxu0 0.0
    %4588 = vmatprep.subr.mxu0 0.0
    %4589 = vmatpush1.msra.mxu0 0.0
    %4590 = vmatprep.subr.mxu0 0.0
    %4591 = vmatpush1.msra.mxu0 0.0
    %4592 = vmatprep.mubr.f32.mxu0 0.0
    %4593 = vmatmul.mubr.f32.gmra.mrb[0].mxu0 %v4514
    %v4594 = vpop.f32.mrb[0].mxu0
    %v4595 = vadd.f32 %v4512, %v4594
    %v4596 = vpop.f32.mrb[0].mxu0
    %4597 = vmatprep.mubr.f32.mxu0 0.0
    %4598 = vmatmul.mubr.f32.gmra.mrb[0].mxu0 %v4517
    %v4599 = vpop.f32.mrb[0].mxu0
    %v4600 = vadd.f32 %v4512, %v4599
    %v4601 = vpop.f32.mrb[0].mxu0
    %4602 = vmatprep.mubr.f32.mxu0 0.0
    %4603 = vmatmul.mubr.f32.gmra.mrb[0].mxu0 %v4520
    %v4604 = vpop.f32.mrb[0].mxu0
    %v4605 = vadd.f32 %v4512, %v4604
    %v4606 = vpop.f32.mrb[0].mxu0
    %4607 = vmatprep.mubr.f32.mxu0 0.0
    %4608 = vmatmul.mubr.f32.gmra.mrb[0].mxu0 %v4523
    %v4609 = vpop.f32.mrb[0].mxu0
    %v4610 = vadd.f32 %v4512, %v4609
    %v4611 = vpop.f32.mrb[0].mxu0
    %4612 = vmatprep.mubr.f32.mxu0 0.0
    %4613 = vmatmul.mubr.f32.gmra.mrb[0].mxu0 %v4526
    %v4614 = vpop.f32.mrb[0].mxu0
    %v4615 = vadd.f32 %v4512, %v4614
    %v4616 = vpop.f32.mrb[0].mxu0
    %4617 = vdwg.mxu0
    %v4618 = vmul.f32 %v4595, 0.5
    %v4619 = vmul.f32 %v4600, 0.5
    %v4620 = vmul.f32 %v4605, 0.5
    %v4621 = vmul.f32 %v4610, 0.5
    %v4622 = vmul.f32 %v4615, 0.5
    %v4623 = vmul.f32 %v4595, %v2308
    %v4624 = vmul.f32 %v4600, %v2308
    %v4625 = vmul.f32 %v4605, %v2308
    %v4626 = vmul.f32 %v4610, %v2308
    %v4627 = vmul.f32 %v4615, %v2308
    %vm4628 = vcmp.ge.f32.partialorder %v4623, 0.0
    %vm4629 = vcmp.ge.f32.partialorder %v4624, 0.0
    %vm4630 = vcmp.ge.f32.partialorder %v4625, 0.0
    %vm4631 = vcmp.ge.f32.partialorder %v4626, 0.0
    %vm4632 = vcmp.ge.f32.partialorder %v4627, 0.0
    %v4633 = vsel %vm4628, 1.0, -1.0
    %v4634 = vsel %vm4629, 1.0, -1.0
    %v4635 = vsel %vm4630, 1.0, -1.0
    %v4636 = vsel %vm4631, 1.0, -1.0
    %v4637 = vsel %vm4632, 1.0, -1.0
    %v4638 = vand.u32 2147483647, %v4623
    %v4639 = vand.u32 2147483647, %v4624
    %v4640 = vand.u32 2147483647, %v4625
    %v4641 = vand.u32 2147483647, %v4626
    %v4642 = vand.u32 2147483647, %v4627
    %v4643 = vmul.f32 %v4638, 0.3275911
    %v4644 = vmul.f32 %v4639, 0.3275911
    %v4645 = vmul.f32 %v4640, 0.3275911
    %v4646 = vmul.f32 %v4641, 0.3275911
    %v4647 = vmul.f32 %v4642, 0.3275911
    %v4648 = vadd.f32 %v4643, 1.0
    %v4649 = vadd.f32 %v4644, 1.0
    %v4650 = vadd.f32 %v4645, 1.0
    %v4651 = vadd.f32 %v4646, 1.0
    %v4652 = vadd.f32 %v4647, 1.0
    %v4653 = vrcp.pop %v4648
    %v4654 = vmul.f32 1.0, %v4653
    %v4655 = vrcp.pop %v4649
    %v4656 = vmul.f32 1.0, %v4655
    %v4657 = vrcp.pop %v4650
    %v4658 = vmul.f32 1.0, %v4657
    %v4659 = vrcp.pop %v4651
    %v4660 = vmul.f32 1.0, %v4659
    %v4661 = vrcp.pop %v4652
    %v4662 = vmul.f32 1.0, %v4661
    %v4663 = vmul.f32 %v4654, 1.0614054
    %v4664 = vmul.f32 %v4656, 1.0614054
    %v4665 = vmul.f32 %v4658, 1.0614054
    %v4666 = vmul.f32 %v4660, 1.0614054
    %v4667 = vmul.f32 %v4662, 1.0614054
    %v4668 = vadd.f32 %v4663, -1.4531521
    %v4669 = vadd.f32 %v4664, -1.4531521
    %v4670 = vadd.f32 %v4665, -1.4531521
    %v4671 = vadd.f32 %v4666, -1.4531521
    %v4672 = vadd.f32 %v4667, -1.4531521
    %v4673 = vmul.f32 %v4668, %v4654
    %v4674 = vmul.f32 %v4669, %v4656
    %v4675 = vmul.f32 %v4670, %v4658
    %v4676 = vmul.f32 %v4671, %v4660
    %v4677 = vmul.f32 %v4672, %v4662
    %v4678 = vadd.f32 %v4673, 1.4214138
    %v4679 = vadd.f32 %v4674, 1.4214138
    %v4680 = vadd.f32 %v4675, 1.4214138
    %v4681 = vadd.f32 %v4676, 1.4214138
    %v4682 = vadd.f32 %v4677, 1.4214138
    %v4683 = vmul.f32 %v4678, %v4654
    %v4684 = vmul.f32 %v4679, %v4656
    %v4685 = vmul.f32 %v4680, %v4658
    %v4686 = vmul.f32 %v4681, %v4660
    %v4687 = vmul.f32 %v4682, %v4662
    %v4688 = vadd.f32 %v4683, -0.28449672
    %v4689 = vadd.f32 %v4684, -0.28449672
    %v4690 = vadd.f32 %v4685, -0.28449672
    %v4691 = vadd.f32 %v4686, -0.28449672
    %v4692 = vadd.f32 %v4687, -0.28449672
    %v4693 = vmul.f32 %v4688, %v4654
    %v4694 = vmul.f32 %v4689, %v4656
    %v4695 = vmul.f32 %v4690, %v4658
    %v4696 = vmul.f32 %v4691, %v4660
    %v4697 = vmul.f32 %v4692, %v4662
    %v4698 = vadd.f32 %v4693, 0.2548296
    %v4699 = vadd.f32 %v4694, 0.2548296
    %v4700 = vadd.f32 %v4695, 0.2548296
    %v4701 = vadd.f32 %v4696, 0.2548296
    %v4702 = vadd.f32 %v4697, 0.2548296
    %v4703 = vmul.f32 %v4698, %v4654
    %v4704 = vmul.f32 %v4699, %v4656
    %v4705 = vmul.f32 %v4700, %v4658
    %v4706 = vmul.f32 %v4701, %v4660
    %v4707 = vmul.f32 %v4702, %v4662
    %v4708 = vsub.f32 0.0, %v4638
    %v4709 = vsub.f32 0.0, %v4639
    %v4710 = vsub.f32 0.0, %v4640
    %v4711 = vsub.f32 0.0, %v4641
    %v4712 = vsub.f32 0.0, %v4642
    %v4713 = vmul.f32 %v4708, %v4638
    %v4714 = vmul.f32 %v4709, %v4639
    %v4715 = vmul.f32 %v4710, %v4640
    %v4716 = vmul.f32 %v4711, %v4641
    %v4717 = vmul.f32 %v4712, %v4642
    %v4718 = vmul.f32 %v4713, 1.442695
    %v4719 = vpow.pop %v4718
    %v4720 = vmul.f32 %v4714, 1.442695
    %v4721 = vpow.pop %v4720
    %v4722 = vmul.f32 %v4715, 1.442695
    %v4723 = vpow.pop %v4722
    %v4724 = vmul.f32 %v4716, 1.442695
    %v4725 = vpow.pop %v4724
    %v4726 = vmul.f32 %v4717, 1.442695
    %v4727 = vpow.pop %v4726
    %v4728 = vmul.f32 %v4703, %v4719
    %v4729 = vmul.f32 %v4704, %v4721
    %v4730 = vmul.f32 %v4705, %v4723
    %v4731 = vmul.f32 %v4706, %v4725
    %v4732 = vmul.f32 %v4707, %v4727
    %v4733 = vsub.f32 1.0, %v4728
    %v4734 = vsub.f32 1.0, %v4729
    %v4735 = vsub.f32 1.0, %v4730
    %v4736 = vsub.f32 1.0, %v4731
    %v4737 = vsub.f32 1.0, %v4732
    %v4738 = vmul.f32 %v4633, %v4733
    %v4739 = vmul.f32 %v4634, %v4734
    %v4740 = vmul.f32 %v4635, %v4735
    %v4741 = vmul.f32 %v4636, %v4736
    %v4742 = vmul.f32 %v4637, %v4737
    %v4743 = vadd.f32 %v4738, 1.0
    %v4744 = vadd.f32 %v4739, 1.0
    %v4745 = vadd.f32 %v4740, 1.0
    %v4746 = vadd.f32 %v4741, 1.0
    %v4747 = vadd.f32 %v4742, 1.0
    %v4748 = vmul.f32 %v4618, %v4743
    %v4749 = vmul.f32 %v4619, %v4744
    %v4750 = vmul.f32 %v4620, %v4745
    %v4751 = vmul.f32 %v4621, %v4746
    %v4752 = vmul.f32 %v4622, %v4747
    %v4753 = vld [vmem:[%s1 + $0x198] sm:$0xff]
    %v4754 = vld [vmem:[%s1 + $0x1a0] sm:$0xff]
    %v4755 = vld [vmem:[%s1 + $0x1a8] sm:$0xff]
    %v4756 = vld [vmem:[%s1 + $0x1b0] sm:$0xff]
    %v4758 = vsel %vm130, %v4748, 0
    %v4761 = vsel %vm130, %v4749, 0
    %v4764 = vsel %vm130, %v4750, 0
    %v4767 = vsel %vm130, %v4751, 0
    %v4770 = vsel %vm130, %v4752, 0
    %4772 = vmatprep.subr.mxu0 0.0
    %4773 = vmatpush1.msra.mxu0 %v4753
    %4774 = vmatprep.subr.mxu0 0.0
    %4775 = vmatpush1.msra.mxu0 %v4754
    %4776 = vmatprep.subr.mxu0 0.0
    %4777 = vmatpush1.msra.mxu0 %v4755
    %4778 = vmatprep.subr.mxu0 0.0
    %4779 = vmatpush1.msra.mxu0 %v4756
    %4780 = vmatprep.subr.mxu0 0.0
    %4781 = vmatpush1.msra.mxu0 0.0
    %4782 = vmatprep.subr.mxu0 0.0
    %4783 = vmatpush1.msra.mxu0 0.0
    %4784 = vmatprep.subr.mxu0 0.0
    %4785 = vmatpush1.msra.mxu0 0.0
    %4786 = vmatprep.subr.mxu0 0.0
    %4787 = vmatpush1.msra.mxu0 0.0
    %4788 = vmatprep.subr.mxu0 0.0
    %4789 = vmatpush1.msra.mxu0 0.0
    %4790 = vmatprep.subr.mxu0 0.0
    %4791 = vmatpush1.msra.mxu0 0.0
    %4792 = vmatprep.subr.mxu0 0.0
    %4793 = vmatpush1.msra.mxu0 0.0
    %4794 = vmatprep.subr.mxu0 0.0
    %4795 = vmatpush1.msra.mxu0 0.0
    %4796 = vmatprep.subr.mxu0 0.0
    %4797 = vmatpush1.msra.mxu0 0.0
    %4798 = vmatprep.subr.mxu0 0.0
    %4799 = vmatpush1.msra.mxu0 0.0
    %4800 = vmatprep.subr.mxu0 0.0
    %4801 = vmatpush1.msra.mxu0 0.0
    %4802 = vmatprep.subr.mxu0 0.0
    %4803 = vmatpush1.msra.mxu0 0.0
    %4804 = vmatprep.subr.mxu0 0.0
    %4805 = vmatpush1.msra.mxu0 0.0
    %4806 = vmatprep.subr.mxu0 0.0
    %4807 = vmatpush1.msra.mxu0 0.0
    %4808 = vmatprep.subr.mxu0 0.0
    %4809 = vmatpush1.msra.mxu0 0.0
    %4810 = vmatprep.subr.mxu0 0.0
    %4811 = vmatpush1.msra.mxu0 0.0
    %4812 = vmatprep.subr.mxu0 0.0
    %4813 = vmatpush1.msra.mxu0 0.0
    %4814 = vmatprep.subr.mxu0 0.0
    %4815 = vmatpush1.msra.mxu0 0.0
    %4816 = vmatprep.subr.mxu0 0.0
    %4817 = vmatpush1.msra.mxu0 0.0
    %4818 = vmatprep.subr.mxu0 0.0
    %4819 = vmatpush1.msra.mxu0 0.0
    %4820 = vmatprep.subr.mxu0 0.0
    %4821 = vmatpush1.msra.mxu0 0.0
    %4822 = vmatprep.subr.mxu0 0.0
    %4823 = vmatpush1.msra.mxu0 0.0
    %4824 = vmatprep.subr.mxu0 0.0
    %4825 = vmatpush1.msra.mxu0 0.0
    %4826 = vmatprep.subr.mxu0 0.0
    %4827 = vmatpush1.msra.mxu0 0.0
    %4828 = vmatprep.subr.mxu0 0.0
    %4829 = vmatpush1.msra.mxu0 0.0
    %4830 = vmatprep.subr.mxu0 0.0
    %4831 = vmatpush1.msra.mxu0 0.0
    %4832 = vmatprep.subr.mxu0 0.0
    %4833 = vmatpush1.msra.mxu0 0.0
    %4834 = vmatprep.subr.mxu0 0.0
    %4835 = vmatpush1.msra.mxu0 0.0
    %4836 = vmatprep.mubr.f32.mxu0 0.0
    %4837 = vmatmul.mubr.f32.gmra.mrb[0].mxu0 %v4758
    %v4838 = vpop.f32.mrb[0].mxu0
    %v4839 = vadd.f32 0.0, %v4838
    %v4840 = vpop.f32.mrb[0].mxu0
    %4841 = vmatprep.mubr.f32.mxu0 0.0
    %4842 = vmatmul.mubr.f32.gmra.mrb[0].mxu0 %v4761
    %v4843 = vpop.f32.mrb[0].mxu0
    %v4844 = vadd.f32 0.0, %v4843
    %v4845 = vpop.f32.mrb[0].mxu0
    %4846 = vmatprep.mubr.f32.mxu0 0.0
    %4847 = vmatmul.mubr.f32.gmra.mrb[0].mxu0 %v4764
    %v4848 = vpop.f32.mrb[0].mxu0
    %v4849 = vadd.f32 0.0, %v4848
    %v4850 = vpop.f32.mrb[0].mxu0
    %4851 = vmatprep.mubr.f32.mxu0 0.0
    %4852 = vmatmul.mubr.f32.gmra.mrb[0].mxu0 %v4767
    %v4853 = vpop.f32.mrb[0].mxu0
    %v4854 = vadd.f32 0.0, %v4853
    %v4855 = vpop.f32.mrb[0].mxu0
    %4856 = vmatprep.mubr.f32.mxu0 0.0
    %4857 = vmatmul.mubr.f32.gmra.mrb[0].mxu0 %v4770
    %v4858 = vpop.f32.mrb[0].mxu0
    %v4859 = vadd.f32 0.0, %v4858
    %v4860 = vpop.f32.mrb[0].mxu0
    %4861 = vdwg.mxu0
    %v4862 = vadd.f32 %v4417, %v4839
    %v4863 = vadd.f32 %v4418, %v4844
    %v4864 = vadd.f32 %v4419, %v4849
    %v4865 = vadd.f32 %v4420, %v4854
    %v4866 = vadd.f32 %v4421, %v4859
    %v4867 = vlaneseq
    %v4868 = vshrl.u32 %v4867, 7
    %v4869 = vsub.s32 6, %v4868
    %v4870 = vrot.slane %v2562, %v4869
    %v4871 = vadd.f32 %v4862, %v4870
    %v4872 = vadd.f32 %v4863, %v4870
    %v4873 = vadd.f32 %v4864, %v4870
    %v4874 = vadd.f32 %v4865, %v4870
    %v4875 = vadd.f32 %v4866, %v4870
    %v4876 = vld [vmem:[%s1 + $0x240] sm:$0x7f]
    %v4877 = vsel %vm130, %v4871, 0.0
    %4878 = vadd.xlane.f32.xlu0 %v4877
    %v4879 = vpop.xlane.xlu0 %4878
    %v4880 = vsel %vm130, %v4872, 0.0
    %4881 = vadd.xlane.f32.xlu0 %v4880
    %v4882 = vpop.xlane.xlu0 %4881
    %v4883 = vsel %vm130, %v4873, 0.0
    %4884 = vadd.xlane.f32.xlu0 %v4883
    %v4885 = vpop.xlane.xlu0 %4884
    %v4886 = vsel %vm130, %v4874, 0.0
    %4887 = vadd.xlane.f32.xlu0 %v4886
    %v4888 = vpop.xlane.xlu0 %4887
    %v4889 = vsel %vm254, %v4875, 0.0
    %4890 = vadd.xlane.f32.xlu0 %v4889
    %v4891 = vpop.xlane.xlu0 %4890
    %v4892 = vmul.f32 %v4879, %v258
    %v4893 = vmul.f32 %v4882, %v258
    %v4894 = vmul.f32 %v4885, %v258
    %v4895 = vmul.f32 %v4888, %v258
    %v4896 = vmul.f32 %v4891, %v258
    %v4897 = vsub.f32 %v4871, %v4892
    %v4898 = vsub.f32 %v4872, %v4893
    %v4899 = vsub.f32 %v4873, %v4894
    %v4900 = vsub.f32 %v4874, %v4895
    %v4901 = vsub.f32 %v4875, %v4896
    %v4902 = vmul.f32 %v4897, %v4897
    %v4903 = vmul.f32 %v4898, %v4898
    %v4904 = vmul.f32 %v4899, %v4899
    %v4905 = vmul.f32 %v4900, %v4900
    %v4906 = vmul.f32 %v4901, %v4901
    %v4907 = vsel %vm130, %v4902, 0.0
    %4908 = vadd.xlane.f32.xlu0 %v4907
    %v4909 = vpop.xlane.xlu0 %4908
    %v4910 = vsel %vm130, %v4903, 0.0
    %4911 = vadd.xlane.f32.xlu0 %v4910
    %v4912 = vpop.xlane.xlu0 %4911
    %v4913 = vsel %vm130, %v4904, 0.0
    %4914 = vadd.xlane.f32.xlu0 %v4913
    %v4915 = vpop.xlane.xlu0 %4914
    %v4916 = vsel %vm130, %v4905, 0.0
    %4917 = vadd.xlane.f32.xlu0 %v4916
    %v4918 = vpop.xlane.xlu0 %4917
    %v4919 = vsel %vm254, %v4906, 0.0
    %4920 = vadd.xlane.f32.xlu0 %v4919
    %v4921 = vpop.xlane.xlu0 %4920
    %v4922 = vmul.f32 %v4909, %v258
    %v4923 = vmul.f32 %v4912, %v258
    %v4924 = vmul.f32 %v4915, %v258
    %v4925 = vmul.f32 %v4918, %v258
    %v4926 = vmul.f32 %v4921, %v258
    %v4927 = vadd.f32 %v4922, 1e-05
    %v4928 = vadd.f32 %v4923, 1e-05
    %v4929 = vadd.f32 %v4924, 1e-05
    %v4930 = vadd.f32 %v4925, 1e-05
    %v4931 = vadd.f32 %v4926, 1e-05
    %v4932 = vrsqrt.pop %v4927
    %v4933 = vrsqrt.pop %v4928
    %v4934 = vrsqrt.pop %v4929
    %v4935 = vrsqrt.pop %v4930
    %v4936 = vrsqrt.pop %v4931
    %v4937 = vmul.f32 %v4897, %v4932
    %v4938 = vmul.f32 %v4898, %v4933
    %v4939 = vmul.f32 %v4899, %v4934
    %v4940 = vmul.f32 %v4900, %v4935
    %v4941 = vmul.f32 %v4901, %v4936
    %v4942 = vlaneseq
    %v4943 = vshrl.u32 %v4942, 7
    %v4944 = vsub.s32 0, %v4943
    %v4945 = vrot.slane %v4876, %v4944
    %v4946 = vmul.f32 %v4937, %v4945
    %v4947 = vmul.f32 %v4938, %v4945
    %v4948 = vmul.f32 %v4939, %v4945
    %v4949 = vmul.f32 %v4940, %v4945
    %v4950 = vmul.f32 %v4941, %v4945
    %v4951 = vlaneseq
    %v4952 = vshrl.u32 %v4951, 7
    %v4953 = vsub.s32 1, %v4952
    %v4954 = vrot.slane %v4876, %v4953
    %v4955 = vadd.f32 %v4946, %v4954
    %v4956 = vadd.f32 %v4947, %v4954
    %v4957 = vadd.f32 %v4948, %v4954
    %v4958 = vadd.f32 %v4949, %v4954
    %v4959 = vadd.f32 %v4950, %v4954
    %v4960 = vld [vmem:[%s1 + $0x1c0] sm:$0xff]
    %v4961 = vld [vmem:[%s1 + $0x1c8] sm:$0xff]
    %v4962 = vld [vmem:[%s1 + $0x1d0] sm:$0xff]
    %v4963 = vld [vmem:[%s1 + $0x1d8] sm:$0xff]
    %v4965 = vsel %vm130, %v4955, 0
    %v4968 = vsel %vm130, %v4956, 0
    %v4971 = vsel %vm130, %v4957, 0
    %v4974 = vsel %vm130, %v4958, 0
    %v4977 = vsel %vm130, %v4959, 0
    %4979 = vmatprep.subr.mxu0 0.0
    %4980 = vmatpush1.msra.mxu0 %v4960
    %4981 = vmatprep.subr.mxu0 0.0
    %4982 = vmatpush1.msra.mxu0 %v4961
    %4983 = vmatprep.subr.mxu0 0.0
    %4984 = vmatpush1.msra.mxu0 %v4962
    %4985 = vmatprep.subr.mxu0 0.0
    %4986 = vmatpush1.msra.mxu0 %v4963
    %4987 = vmatprep.subr.mxu0 0.0
    %4988 = vmatpush1.msra.mxu0 0.0
    %4989 = vmatprep.subr.mxu0 0.0
    %4990 = vmatpush1.msra.mxu0 0.0
    %4991 = vmatprep.subr.mxu0 0.0
    %4992 = vmatpush1.msra.mxu0 0.0
    %4993 = vmatprep.subr.mxu0 0.0
    %4994 = vmatpush1.msra.mxu0 0.0
    %4995 = vmatprep.subr.mxu0 0.0
    %4996 = vmatpush1.msra.mxu0 0.0
    %4997 = vmatprep.subr.mxu0 0.0
    %4998 = vmatpush1.msra.mxu0 0.0
    %4999 = vmatprep.subr.mxu0 0.0
    %5000 = vmatpush1.msra.mxu0 0.0
    %5001 = vmatprep.subr.mxu0 0.0
    %5002 = vmatpush1.msra.mxu0 0.0
    %5003 = vmatprep.subr.mxu0 0.0
    %5004 = vmatpush1.msra.mxu0 0.0
    %5005 = vmatprep.subr.mxu0 0.0
    %5006 = vmatpush1.msra.mxu0 0.0
    %5007 = vmatprep.subr.mxu0 0.0
    %5008 = vmatpush1.msra.mxu0 0.0
    %5009 = vmatprep.subr.mxu0 0.0
    %5010 = vmatpush1.msra.mxu0 0.0
    %5011 = vmatprep.subr.mxu0 0.0
    %5012 = vmatpush1.msra.mxu0 0.0
    %5013 = vmatprep.subr.mxu0 0.0
    %5014 = vmatpush1.msra.mxu0 0.0
    %5015 = vmatprep.subr.mxu0 0.0
    %5016 = vmatpush1.msra.mxu0 0.0
    %5017 = vmatprep.subr.mxu0 0.0
    %5018 = vmatpush1.msra.mxu0 0.0
    %5019 = vmatprep.subr.mxu0 0.0
    %5020 = vmatpush1.msra.mxu0 0.0
    %5021 = vmatprep.subr.mxu0 0.0
    %5022 = vmatpush1.msra.mxu0 0.0
    %5023 = vmatprep.subr.mxu0 0.0
    %5024 = vmatpush1.msra.mxu0 0.0
    %5025 = vmatprep.subr.mxu0 0.0
    %5026 = vmatpush1.msra.mxu0 0.0
    %5027 = vmatprep.subr.mxu0 0.0
    %5028 = vmatpush1.msra.mxu0 0.0
    %5029 = vmatprep.subr.mxu0 0.0
    %5030 = vmatpush1.msra.mxu0 0.0
    %5031 = vmatprep.subr.mxu0 0.0
    %5032 = vmatpush1.msra.mxu0 0.0
    %5033 = vmatprep.subr.mxu0 0.0
    %5034 = vmatpush1.msra.mxu0 0.0
    %5035 = vmatprep.subr.mxu0 0.0
    %5036 = vmatpush1.msra.mxu0 0.0
    %5037 = vmatprep.subr.mxu0 0.0
    %5038 = vmatpush1.msra.mxu0 0.0
    %5039 = vmatprep.subr.mxu0 0.0
    %5040 = vmatpush1.msra.mxu0 0.0
    %5041 = vmatprep.subr.mxu0 0.0
    %5042 = vmatpush1.msra.mxu0 0.0
    %5043 = vmatprep.mubr.f32.mxu0 0.0
    %5044 = vmatmul.mubr.f32.gmra.mrb[0].mxu0 %v4965
    %v5045 = vpop.f32.mrb[0].mxu0
    %v5046 = vadd.f32 0.0, %v5045
    %v5047 = vpop.f32.mrb[0].mxu0
    %5048 = vmatprep.mubr.f32.mxu0 0.0
    %5049 = vmatmul.mubr.f32.gmra.mrb[0].mxu0 %v4968
    %v5050 = vpop.f32.mrb[0].mxu0
    %v5051 = vadd.f32 0.0, %v5050
    %v5052 = vpop.f32.mrb[0].mxu0
    %5053 = vmatprep.mubr.f32.mxu0 0.0
    %5054 = vmatmul.mubr.f32.gmra.mrb[0].mxu0 %v4971
    %v5055 = vpop.f32.mrb[0].mxu0
    %v5056 = vadd.f32 0.0, %v5055
    %v5057 = vpop.f32.mrb[0].mxu0
    %5058 = vmatprep.mubr.f32.mxu0 0.0
    %5059 = vmatmul.mubr.f32.gmra.mrb[0].mxu0 %v4974
    %v5060 = vpop.f32.mrb[0].mxu0
    %v5061 = vadd.f32 0.0, %v5060
    %v5062 = vpop.f32.mrb[0].mxu0
    %5063 = vmatprep.mubr.f32.mxu0 0.0
    %5064 = vmatmul.mubr.f32.gmra.mrb[0].mxu0 %v4977
    %v5065 = vpop.f32.mrb[0].mxu0
    %v5066 = vadd.f32 0.0, %v5065
    %v5067 = vpop.f32.mrb[0].mxu0
    %5068 = vdwg.mxu0
    %v5069 = vld [vmem:[%s1 + $0x1e0] sm:$0xff]
    %v5070 = vld [vmem:[%s1 + $0x1e8] sm:$0xff]
    %v5071 = vld [vmem:[%s1 + $0x1f0] sm:$0xff]
    %v5072 = vld [vmem:[%s1 + $0x1f8] sm:$0xff]
    %5078 = vrot.lane.b32.xlu0 %v5046, 96
    %v5079 = vpop.permute.xlu0 %5078
    %5080 = vrot.lane.b32.xlu0 %v5051, 96
    %v5081 = vpop.permute.xlu0 %5080
    %5082 = vrot.lane.b32.xlu0 %v5056, 96
    %v5083 = vpop.permute.xlu0 %5082
    %5084 = vrot.lane.b32.xlu0 %v5061, 96
    %v5085 = vpop.permute.xlu0 %5084
    %5086 = vrot.lane.b32.xlu0 %v5066, 96
    %v5087 = vpop.permute.xlu0 %5086
    %v5088 = vsel %vm455, %v5046, 0
    %v5090 = vsel %vm455, %v5051, 0
    %v5092 = vsel %vm455, %v5056, 0
    %v5094 = vsel %vm455, %v5061, 0
    %v5096 = vsel %vm455, %v5066, 0
    %v5098 = vsel %vm455, %v5079, 0
    %v5100 = vsel %vm455, %v5081, 0
    %v5102 = vsel %vm455, %v5083, 0
    %v5104 = vsel %vm455, %v5085, 0
    %v5106 = vsel %vm455, %v5087, 0
    %5108 = vmatprep.subr.mxu0 0.0
    %5109 = vmatpush1.xpose.msra.mxu0 %v5098
    %5110 = vmatprep.subr.mxu0 0.0
    %5111 = vmatpush1.xpose.msra.mxu0 %v5100
    %5112 = vmatprep.subr.mxu0 0.0
    %5113 = vmatpush1.xpose.msra.mxu0 %v5102
    %5114 = vmatprep.subr.mxu0 0.0
    %5115 = vmatpush1.xpose.msra.mxu0 %v5104
    %5116 = vmatprep.subr.mxu0 0.0
    %5117 = vmatpush1.xpose.msra.mxu0 %v5106
    %5118 = vmatprep.subr.mxu0 0.0
    %5119 = vmatpush1.xpose.msra.mxu0 0.0
    %5120 = vmatprep.subr.mxu0 0.0
    %5121 = vmatpush1.xpose.msra.mxu0 0.0
    %5122 = vmatprep.subr.mxu0 0.0
    %5123 = vmatpush1.xpose.msra.mxu0 0.0
    %5124 = vmatprep.subr.mxu0 0.0
    %5125 = vmatpush1.xpose.msra.mxu0 0.0
    %5126 = vmatprep.subr.mxu0 0.0
    %5127 = vmatpush1.xpose.msra.mxu0 0.0
    %5128 = vmatprep.subr.mxu0 0.0
    %5129 = vmatpush1.xpose.msra.mxu0 0.0
    %5130 = vmatprep.subr.mxu0 0.0
    %5131 = vmatpush1.xpose.msra.mxu0 0.0
    %5132 = vmatprep.subr.mxu0 0.0
    %5133 = vmatpush1.xpose.msra.mxu0 0.0
    %5134 = vmatprep.subr.mxu0 0.0
    %5135 = vmatpush1.xpose.msra.mxu0 0.0
    %5136 = vmatprep.subr.mxu0 0.0
    %5137 = vmatpush1.xpose.msra.mxu0 0.0
    %5138 = vmatprep.subr.mxu0 0.0
    %5139 = vmatpush1.xpose.msra.mxu0 0.0
    %5140 = vmatprep.subr.mxu0 0.0
    %5141 = vmatpush1.xpose.msra.mxu0 0.0
    %5142 = vmatprep.subr.mxu0 0.0
    %5143 = vmatpush1.xpose.msra.mxu0 0.0
    %5144 = vmatprep.subr.mxu0 0.0
    %5145 = vmatpush1.xpose.msra.mxu0 0.0
    %5146 = vmatprep.subr.mxu0 0.0
    %5147 = vmatpush1.xpose.msra.mxu0 0.0
    %5148 = vmatprep.subr.mxu0 0.0
    %5149 = vmatpush1.xpose.msra.mxu0 0.0
    %5150 = vmatprep.subr.mxu0 0.0
    %5151 = vmatpush1.xpose.msra.mxu0 0.0
    %5152 = vmatprep.subr.mxu0 0.0
    %5153 = vmatpush1.xpose.msra.mxu0 0.0
    %5154 = vmatprep.subr.mxu0 0.0
    %5155 = vmatpush1.xpose.msra.mxu0 0.0
    %5156 = vmatprep.subr.mxu0 0.0
    %5157 = vmatpush1.xpose.msra.mxu0 0.0
    %5158 = vmatprep.subr.mxu0 0.0
    %5159 = vmatpush1.xpose.msra.mxu0 0.0
    %5160 = vmatprep.subr.mxu0 0.0
    %5161 = vmatpush1.xpose.msra.mxu0 0.0
    %5162 = vmatprep.subr.mxu0 0.0
    %5163 = vmatpush1.xpose.msra.mxu0 0.0
    %5164 = vmatprep.subr.mxu0 0.0
    %5165 = vmatpush1.xpose.msra.mxu0 0.0
    %5166 = vmatprep.subr.mxu0 0.0
    %5167 = vmatpush1.xpose.msra.mxu0 0.0
    %5168 = vmatprep.subr.mxu0 0.0
    %5169 = vmatpush1.xpose.msra.mxu0 0.0
    %5170 = vmatprep.subr.mxu0 0.0
    %5171 = vmatpush1.xpose.msra.mxu0 0.0
    %5172 = vmatprep.mubr.f32.mxu0 0.0
    %5173 = vmatmul.mubr.f32.gmra.mrb[0].mxu0 %v5088
    %v5174 = vpop.f32.mrb[0].mxu0
    %v5175 = vadd.f32 %v236, %v5174
    %v5176 = vpop.f32.mrb[0].mxu0
    %5177 = vmatprep.mubr.f32.mxu0 0.0
    %5178 = vmatmul.mubr.f32.gmra.mrb[0].mxu0 %v5090
    %v5179 = vpop.f32.mrb[0].mxu0
    %v5180 = vadd.f32 %v237, %v5179
    %v5181 = vpop.f32.mrb[0].mxu0
    %5182 = vmatprep.mubr.f32.mxu0 0.0
    %5183 = vmatmul.mubr.f32.gmra.mrb[0].mxu0 %v5092
    %v5184 = vpop.f32.mrb[0].mxu0
    %v5185 = vadd.f32 %v238, %v5184
    %v5186 = vpop.f32.mrb[0].mxu0
    %5187 = vmatprep.mubr.f32.mxu0 0.0
    %5188 = vmatmul.mubr.f32.gmra.mrb[0].mxu0 %v5094
    %v5189 = vpop.f32.mrb[0].mxu0
    %v5190 = vadd.f32 %v239, %v5189
    %v5191 = vpop.f32.mrb[0].mxu0
    %5192 = vmatprep.mubr.f32.mxu0 0.0
    %5193 = vmatmul.mubr.f32.gmra.mrb[0].mxu0 %v5096
    %v5194 = vpop.f32.mrb[0].mxu0
    %v5195 = vadd.f32 %v240, %v5194
    %v5196 = vpop.f32.mrb[0].mxu0
    %5197 = vdwg.mxu0
    %v5198 = vsel %vm566, %v5175, -inf
    %5199 = vmax.xlane.f32.xlu0 %v5198
    %v5200 = vpop.xlane.xlu0 %5199
    %v5201 = vsel %vm566, %v5180, -inf
    %5202 = vmax.xlane.f32.xlu0 %v5201
    %v5203 = vpop.xlane.xlu0 %5202
    %v5204 = vsel %vm566, %v5185, -inf
    %5205 = vmax.xlane.f32.xlu0 %v5204
    %v5206 = vpop.xlane.xlu0 %5205
    %v5207 = vsel %vm566, %v5190, -inf
    %5208 = vmax.xlane.f32.xlu0 %v5207
    %v5209 = vpop.xlane.xlu0 %5208
    %v5210 = vsel %vm579, %v5195, -inf
    %5211 = vmax.xlane.f32.xlu0 %v5210
    %v5212 = vpop.xlane.xlu0 %5211
    %v5213 = vsub.f32 %v5175, %v5200
    %v5214 = vsub.f32 %v5180, %v5203
    %v5215 = vsub.f32 %v5185, %v5206
    %v5216 = vsub.f32 %v5190, %v5209
    %v5217 = vsub.f32 %v5195, %v5212
    %v5218 = vmul.f32 %v5213, 1.442695
    %v5219 = vpow.pop %v5218
    %v5220 = vmul.f32 %v5214, 1.442695
    %v5221 = vpow.pop %v5220
    %v5222 = vmul.f32 %v5215, 1.442695
    %v5223 = vpow.pop %v5222
    %v5224 = vmul.f32 %v5216, 1.442695
    %v5225 = vpow.pop %v5224
    %v5226 = vmul.f32 %v5217, 1.442695
    %v5227 = vpow.pop %v5226
    %v5228 = vsel %vm566, %v5219, 0.0
    %5229 = vadd.xlane.f32.xlu0 %v5228
    %v5230 = vpop.xlane.xlu0 %5229
    %v5231 = vsel %vm566, %v5221, 0.0
    %5232 = vadd.xlane.f32.xlu0 %v5231
    %v5233 = vpop.xlane.xlu0 %5232
    %v5234 = vsel %vm566, %v5223, 0.0
    %5235 = vadd.xlane.f32.xlu0 %v5234
    %v5236 = vpop.xlane.xlu0 %5235
    %v5237 = vsel %vm566, %v5225, 0.0
    %5238 = vadd.xlane.f32.xlu0 %v5237
    %v5239 = vpop.xlane.xlu0 %5238
    %v5240 = vsel %vm579, %v5227, 0.0
    %5241 = vadd.xlane.f32.xlu0 %v5240
    %v5242 = vpop.xlane.xlu0 %5241
    %v5243 = vrcp.pop %v5230
    %v5244 = vrcp.pop %v5233
    %v5245 = vrcp.pop %v5236
    %v5246 = vrcp.pop %v5239
    %v5247 = vrcp.pop %v5242
    %v5248 = vmul.f32 %v5219, %v5243
    %v5249 = vmul.f32 %v5221, %v5244
    %v5250 = vmul.f32 %v5223, %v5245
    %v5251 = vmul.f32 %v5225, %v5246
    %v5252 = vmul.f32 %v5227, %v5247
    %5253 = vrot.lane.b32.xlu0 %v5046, 64
    %v5254 = vpop.permute.xlu0 %5253
    %5255 = vrot.lane.b32.xlu0 %v5051, 64
    %v5256 = vpop.permute.xlu0 %5255
    %5257 = vrot.lane.b32.xlu0 %v5056, 64
    %v5258 = vpop.permute.xlu0 %5257
    %5259 = vrot.lane.b32.xlu0 %v5061, 64
    %v5260 = vpop.permute.xlu0 %5259
    %5261 = vrot.lane.b32.xlu0 %v5066, 64
    %v5262 = vpop.permute.xlu0 %5261
    %v5268 = vsel %vm566, %v5248, 0
    %v5271 = vsel %vm566, %v5249, 0
    %v5274 = vsel %vm566, %v5250, 0
    %v5277 = vsel %vm566, %v5251, 0
    %v5280 = vsel %vm566, %v5252, 0
    %v5282 = vsel %vm652, %v5262, 0
    %5284 = vmatprep.subr.mxu0 0.0
    %5285 = vmatpush1.msra.mxu0 %v5254
    %5286 = vmatprep.subr.mxu0 0.0
    %5287 = vmatpush1.msra.mxu0 %v5256
    %5288 = vmatprep.subr.mxu0 0.0
    %5289 = vmatpush1.msra.mxu0 %v5258
    %5290 = vmatprep.subr.mxu0 0.0
    %5291 = vmatpush1.msra.mxu0 %v5260
    %5292 = vmatprep.subr.mxu0 0.0
    %5293 = vmatpush1.msra.mxu0 %v5282
    %5294 = vmatprep.subr.mxu0 0.0
    %5295 = vmatpush1.msra.mxu0 0.0
    %5296 = vmatprep.subr.mxu0 0.0
    %5297 = vmatpush1.msra.mxu0 0.0
    %5298 = vmatprep.subr.mxu0 0.0
    %5299 = vmatpush1.msra.mxu0 0.0
    %5300 = vmatprep.subr.mxu0 0.0
    %5301 = vmatpush1.msra.mxu0 0.0
    %5302 = vmatprep.subr.mxu0 0.0
    %5303 = vmatpush1.msra.mxu0 0.0
    %5304 = vmatprep.subr.mxu0 0.0
    %5305 = vmatpush1.msra.mxu0 0.0
    %5306 = vmatprep.subr.mxu0 0.0
    %5307 = vmatpush1.msra.mxu0 0.0
    %5308 = vmatprep.subr.mxu0 0.0
    %5309 = vmatpush1.msra.mxu0 0.0
    %5310 = vmatprep.subr.mxu0 0.0
    %5311 = vmatpush1.msra.mxu0 0.0
    %5312 = vmatprep.subr.mxu0 0.0
    %5313 = vmatpush1.msra.mxu0 0.0
    %5314 = vmatprep.subr.mxu0 0.0
    %5315 = vmatpush1.msra.mxu0 0.0
    %5316 = vmatprep.subr.mxu0 0.0
    %5317 = vmatpush1.msra.mxu0 0.0
    %5318 = vmatprep.subr.mxu0 0.0
    %5319 = vmatpush1.msra.mxu0 0.0
    %5320 = vmatprep.subr.mxu0 0.0
    %5321 = vmatpush1.msra.mxu0 0.0
    %5322 = vmatprep.subr.mxu0 0.0
    %5323 = vmatpush1.msra.mxu0 0.0
    %5324 = vmatprep.subr.mxu0 0.0
    %5325 = vmatpush1.msra.mxu0 0.0
    %5326 = vmatprep.subr.mxu0 0.0
    %5327 = vmatpush1.msra.mxu0 0.0
    %5328 = vmatprep.subr.mxu0 0.0
    %5329 = vmatpush1.msra.mxu0 0.0
    %5330 = vmatprep.subr.mxu0 0.0
    %5331 = vmatpush1.msra.mxu0 0.0
    %5332 = vmatprep.subr.mxu0 0.0
    %5333 = vmatpush1.msra.mxu0 0.0
    %5334 = vmatprep.subr.mxu0 0.0
    %5335 = vmatpush1.msra.mxu0 0.0
    %5336 = vmatprep.subr.mxu0 0.0
    %5337 = vmatpush1.msra.mxu0 0.0
    %5338 = vmatprep.subr.mxu0 0.0
    %5339 = vmatpush1.msra.mxu0 0.0
    %5340 = vmatprep.subr.mxu0 0.0
    %5341 = vmatpush1.msra.mxu0 0.0
    %5342 = vmatprep.subr.mxu0 0.0
    %5343 = vmatpush1.msra.mxu0 0.0
    %5344 = vmatprep.subr.mxu0 0.0
    %5345 = vmatpush1.msra.mxu0 0.0
    %5346 = vmatprep.subr.mxu0 0.0
    %5347 = vmatpush1.msra.mxu0 0.0
    %5348 = vmatprep.mubr.f32.mxu0 0.0
    %5349 = vmatmul.mubr.f32.gmra.mrb[0].mxu0 %v5268
    %v5350 = vpop.f32.mrb[0].mxu0
    %v5351 = vadd.f32 0.0, %v5350
    %v5352 = vpop.f32.mrb[0].mxu0
    %5353 = vmatprep.mubr.f32.mxu0 0.0
    %5354 = vmatmul.mubr.f32.gmra.mrb[0].mxu0 %v5271
    %v5355 = vpop.f32.mrb[0].mxu0
    %v5356 = vadd.f32 0.0, %v5355
    %v5357 = vpop.f32.mrb[0].mxu0
    %5358 = vmatprep.mubr.f32.mxu0 0.0
    %5359 = vmatmul.mubr.f32.gmra.mrb[0].mxu0 %v5274
    %v5360 = vpop.f32.mrb[0].mxu0
    %v5361 = vadd.f32 0.0, %v5360
    %v5362 = vpop.f32.mrb[0].mxu0
    %5363 = vmatprep.mubr.f32.mxu0 0.0
    %5364 = vmatmul.mubr.f32.gmra.mrb[0].mxu0 %v5277
    %v5365 = vpop.f32.mrb[0].mxu0
    %v5366 = vadd.f32 0.0, %v5365
    %v5367 = vpop.f32.mrb[0].mxu0
    %5368 = vmatprep.mubr.f32.mxu0 0.0
    %5369 = vmatmul.mubr.f32.gmra.mrb[0].mxu0 %v5280
    %v5370 = vpop.f32.mrb[0].mxu0
    %v5371 = vadd.f32 0.0, %v5370
    %v5372 = vpop.f32.mrb[0].mxu0
    %5373 = vdwg.mxu0
    %5374 = vrot.lane.b32.xlu0 %v5046, 120
    %v5375 = vpop.permute.xlu0 %5374
    %5376 = vrot.lane.b32.xlu0 %v5051, 120
    %v5377 = vpop.permute.xlu0 %5376
    %5378 = vrot.lane.b32.xlu0 %v5056, 120
    %v5379 = vpop.permute.xlu0 %5378
    %5380 = vrot.lane.b32.xlu0 %v5061, 120
    %v5381 = vpop.permute.xlu0 %5380
    %5382 = vrot.lane.b32.xlu0 %v5066, 120
    %v5383 = vpop.permute.xlu0 %5382
    %5384 = vrot.lane.b32.xlu0 %v5046, 88
    %v5385 = vpop.permute.xlu0 %5384
    %5386 = vrot.lane.b32.xlu0 %v5051, 88
    %v5387 = vpop.permute.xlu0 %5386
    %5388 = vrot.lane.b32.xlu0 %v5056, 88
    %v5389 = vpop.permute.xlu0 %5388
    %5390 = vrot.lane.b32.xlu0 %v5061, 88
    %v5391 = vpop.permute.xlu0 %5390
    %5392 = vrot.lane.b32.xlu0 %v5066, 88
    %v5393 = vpop.permute.xlu0 %5392
    %v5394 = vsel %vm455, %v5375, 0
    %v5396 = vsel %vm455, %v5377, 0
    %v5398 = vsel %vm455, %v5379, 0
    %v5400 = vsel %vm455, %v5381, 0
    %v5402 = vsel %vm455, %v5383, 0
    %v5404 = vsel %vm455, %v5385, 0
    %v5406 = vsel %vm455, %v5387, 0
    %v5408 = vsel %vm455, %v5389, 0
    %v5410 = vsel %vm455, %v5391, 0
    %v5412 = vsel %vm455, %v5393, 0
    %5414 = vmatprep.subr.mxu0 0.0
    %5415 = vmatpush1.xpose.msra.mxu0 %v5404
    %5416 = vmatprep.subr.mxu0 0.0
    %5417 = vmatpush1.xpose.msra.mxu0 %v5406
    %5418 = vmatprep.subr.mxu0 0.0
    %5419 = vmatpush1.xpose.msra.mxu0 %v5408
    %5420 = vmatprep.subr.mxu0 0.0
    %5421 = vmatpush1.xpose.msra.mxu0 %v5410
    %5422 = vmatprep.subr.mxu0 0.0
    %5423 = vmatpush1.xpose.msra.mxu0 %v5412
    %5424 = vmatprep.subr.mxu0 0.0
    %5425 = vmatpush1.xpose.msra.mxu0 0.0
    %5426 = vmatprep.subr.mxu0 0.0
    %5427 = vmatpush1.xpose.msra.mxu0 0.0
    %5428 = vmatprep.subr.mxu0 0.0
    %5429 = vmatpush1.xpose.msra.mxu0 0.0
    %5430 = vmatprep.subr.mxu0 0.0
    %5431 = vmatpush1.xpose.msra.mxu0 0.0
    %5432 = vmatprep.subr.mxu0 0.0
    %5433 = vmatpush1.xpose.msra.mxu0 0.0
    %5434 = vmatprep.subr.mxu0 0.0
    %5435 = vmatpush1.xpose.msra.mxu0 0.0
    %5436 = vmatprep.subr.mxu0 0.0
    %5437 = vmatpush1.xpose.msra.mxu0 0.0
    %5438 = vmatprep.subr.mxu0 0.0
    %5439 = vmatpush1.xpose.msra.mxu0 0.0
    %5440 = vmatprep.subr.mxu0 0.0
    %5441 = vmatpush1.xpose.msra.mxu0 0.0
    %5442 = vmatprep.subr.mxu0 0.0
    %5443 = vmatpush1.xpose.msra.mxu0 0.0
    %5444 = vmatprep.subr.mxu0 0.0
    %5445 = vmatpush1.xpose.msra.mxu0 0.0
    %5446 = vmatprep.subr.mxu0 0.0
    %5447 = vmatpush1.xpose.msra.mxu0 0.0
    %5448 = vmatprep.subr.mxu0 0.0
    %5449 = vmatpush1.xpose.msra.mxu0 0.0
    %5450 = vmatprep.subr.mxu0 0.0
    %5451 = vmatpush1.xpose.msra.mxu0 0.0
    %5452 = vmatprep.subr.mxu0 0.0
    %5453 = vmatpush1.xpose.msra.mxu0 0.0
    %5454 = vmatprep.subr.mxu0 0.0
    %5455 = vmatpush1.xpose.msra.mxu0 0.0
    %5456 = vmatprep.subr.mxu0 0.0
    %5457 = vmatpush1.xpose.msra.mxu0 0.0
    %5458 = vmatprep.subr.mxu0 0.0
    %5459 = vmatpush1.xpose.msra.mxu0 0.0
    %5460 = vmatprep.subr.mxu0 0.0
    %5461 = vmatpush1.xpose.msra.mxu0 0.0
    %5462 = vmatprep.subr.mxu0 0.0
    %5463 = vmatpush1.xpose.msra.mxu0 0.0
    %5464 = vmatprep.subr.mxu0 0.0
    %5465 = vmatpush1.xpose.msra.mxu0 0.0
    %5466 = vmatprep.subr.mxu0 0.0
    %5467 = vmatpush1.xpose.msra.mxu0 0.0
    %5468 = vmatprep.subr.mxu0 0.0
    %5469 = vmatpush1.xpose.msra.mxu0 0.0
    %5470 = vmatprep.subr.mxu0 0.0
    %5471 = vmatpush1.xpose.msra.mxu0 0.0
    %5472 = vmatprep.subr.mxu0 0.0
    %5473 = vmatpush1.xpose.msra.mxu0 0.0
    %5474 = vmatprep.subr.mxu0 0.0
    %5475 = vmatpush1.xpose.msra.mxu0 0.0
    %5476 = vmatprep.subr.mxu0 0.0
    %5477 = vmatpush1.xpose.msra.mxu0 0.0
    %5478 = vmatprep.mubr.f32.mxu0 0.0
    %5479 = vmatmul.mubr.f32.gmra.mrb[0].mxu0 %v5394
    %v5480 = vpop.f32.mrb[0].mxu0
    %v5481 = vadd.f32 %v236, %v5480
    %v5482 = vpop.f32.mrb[0].mxu0
    %5483 = vmatprep.mubr.f32.mxu0 0.0
    %5484 = vmatmul.mubr.f32.gmra.mrb[0].mxu0 %v5396
    %v5485 = vpop.f32.mrb[0].mxu0
    %v5486 = vadd.f32 %v237, %v5485
    %v5487 = vpop.f32.mrb[0].mxu0
    %5488 = vmatprep.mubr.f32.mxu0 0.0
    %5489 = vmatmul.mubr.f32.gmra.mrb[0].mxu0 %v5398
    %v5490 = vpop.f32.mrb[0].mxu0
    %v5491 = vadd.f32 %v238, %v5490
    %v5492 = vpop.f32.mrb[0].mxu0
    %5493 = vmatprep.mubr.f32.mxu0 0.0
    %5494 = vmatmul.mubr.f32.gmra.mrb[0].mxu0 %v5400
    %v5495 = vpop.f32.mrb[0].mxu0
    %v5496 = vadd.f32 %v239, %v5495
    %v5497 = vpop.f32.mrb[0].mxu0
    %5498 = vmatprep.mubr.f32.mxu0 0.0
    %5499 = vmatmul.mubr.f32.gmra.mrb[0].mxu0 %v5402
    %v5500 = vpop.f32.mrb[0].mxu0
    %v5501 = vadd.f32 %v240, %v5500
    %v5502 = vpop.f32.mrb[0].mxu0
    %5503 = vdwg.mxu0
    %v5504 = vsel %vm566, %v5481, -inf
    %5505 = vmax.xlane.f32.xlu0 %v5504
    %v5506 = vpop.xlane.xlu0 %5505
    %v5507 = vsel %vm566, %v5486, -inf
    %5508 = vmax.xlane.f32.xlu0 %v5507
    %v5509 = vpop.xlane.xlu0 %5508
    %v5510 = vsel %vm566, %v5491, -inf
    %5511 = vmax.xlane.f32.xlu0 %v5510
    %v5512 = vpop.xlane.xlu0 %5511
    %v5513 = vsel %vm566, %v5496, -inf
    %5514 = vmax.xlane.f32.xlu0 %v5513
    %v5515 = vpop.xlane.xlu0 %5514
    %v5516 = vsel %vm579, %v5501, -inf
    %5517 = vmax.xlane.f32.xlu0 %v5516
    %v5518 = vpop.xlane.xlu0 %5517
    %v5519 = vsub.f32 %v5481, %v5506
    %v5520 = vsub.f32 %v5486, %v5509
    %v5521 = vsub.f32 %v5491, %v5512
    %v5522 = vsub.f32 %v5496, %v5515
    %v5523 = vsub.f32 %v5501, %v5518
    %v5524 = vmul.f32 %v5519, 1.442695
    %v5525 = vpow.pop %v5524
    %v5526 = vmul.f32 %v5520, 1.442695
    %v5527 = vpow.pop %v5526
    %v5528 = vmul.f32 %v5521, 1.442695
    %v5529 = vpow.pop %v5528
    %v5530 = vmul.f32 %v5522, 1.442695
    %v5531 = vpow.pop %v5530
    %v5532 = vmul.f32 %v5523, 1.442695
    %v5533 = vpow.pop %v5532
    %v5534 = vsel %vm566, %v5525, 0.0
    %5535 = vadd.xlane.f32.xlu0 %v5534
    %v5536 = vpop.xlane.xlu0 %5535
    %v5537 = vsel %vm566, %v5527, 0.0
    %5538 = vadd.xlane.f32.xlu0 %v5537
    %v5539 = vpop.xlane.xlu0 %5538
    %v5540 = vsel %vm566, %v5529, 0.0
    %5541 = vadd.xlane.f32.xlu0 %v5540
    %v5542 = vpop.xlane.xlu0 %5541
    %v5543 = vsel %vm566, %v5531, 0.0
    %5544 = vadd.xlane.f32.xlu0 %v5543
    %v5545 = vpop.xlane.xlu0 %5544
    %v5546 = vsel %vm579, %v5533, 0.0
    %5547 = vadd.xlane.f32.xlu0 %v5546
    %v5548 = vpop.xlane.xlu0 %5547
    %v5549 = vrcp.pop %v5536
    %v5550 = vrcp.pop %v5539
    %v5551 = vrcp.pop %v5542
    %v5552 = vrcp.pop %v5545
    %v5553 = vrcp.pop %v5548
    %v5554 = vmul.f32 %v5525, %v5549
    %v5555 = vmul.f32 %v5527, %v5550
    %v5556 = vmul.f32 %v5529, %v5551
    %v5557 = vmul.f32 %v5531, %v5552
    %v5558 = vmul.f32 %v5533, %v5553
    %5559 = vrot.lane.b32.xlu0 %v5046, 56
    %v5560 = vpop.permute.xlu0 %5559
    %5561 = vrot.lane.b32.xlu0 %v5051, 56
    %v5562 = vpop.permute.xlu0 %5561
    %5563 = vrot.lane.b32.xlu0 %v5056, 56
    %v5564 = vpop.permute.xlu0 %5563
    %5565 = vrot.lane.b32.xlu0 %v5061, 56
    %v5566 = vpop.permute.xlu0 %5565
    %5567 = vrot.lane.b32.xlu0 %v5066, 56
    %v5568 = vpop.permute.xlu0 %5567
    %v5574 = vsel %vm566, %v5554, 0
    %v5577 = vsel %vm566, %v5555, 0
    %v5580 = vsel %vm566, %v5556, 0
    %v5583 = vsel %vm566, %v5557, 0
    %v5586 = vsel %vm566, %v5558, 0
    %v5588 = vsel %vm652, %v5568, 0
    %5590 = vmatprep.subr.mxu0 0.0
    %5591 = vmatpush1.msra.mxu0 %v5560
    %5592 = vmatprep.subr.mxu0 0.0
    %5593 = vmatpush1.msra.mxu0 %v5562
    %5594 = vmatprep.subr.mxu0 0.0
    %5595 = vmatpush1.msra.mxu0 %v5564
    %5596 = vmatprep.subr.mxu0 0.0
    %5597 = vmatpush1.msra.mxu0 %v5566
    %5598 = vmatprep.subr.mxu0 0.0
    %5599 = vmatpush1.msra.mxu0 %v5588
    %5600 = vmatprep.subr.mxu0 0.0
    %5601 = vmatpush1.msra.mxu0 0.0
    %5602 = vmatprep.subr.mxu0 0.0
    %5603 = vmatpush1.msra.mxu0 0.0
    %5604 = vmatprep.subr.mxu0 0.0
    %5605 = vmatpush1.msra.mxu0 0.0
    %5606 = vmatprep.subr.mxu0 0.0
    %5607 = vmatpush1.msra.mxu0 0.0
    %5608 = vmatprep.subr.mxu0 0.0
    %5609 = vmatpush1.msra.mxu0 0.0
    %5610 = vmatprep.subr.mxu0 0.0
    %5611 = vmatpush1.msra.mxu0 0.0
    %5612 = vmatprep.subr.mxu0 0.0
    %5613 = vmatpush1.msra.mxu0 0.0
    %5614 = vmatprep.subr.mxu0 0.0
    %5615 = vmatpush1.msra.mxu0 0.0
    %5616 = vmatprep.subr.mxu0 0.0
    %5617 = vmatpush1.msra.mxu0 0.0
    %5618 = vmatprep.subr.mxu0 0.0
    %5619 = vmatpush1.msra.mxu0 0.0
    %5620 = vmatprep.subr.mxu0 0.0
    %5621 = vmatpush1.msra.mxu0 0.0
    %5622 = vmatprep.subr.mxu0 0.0
    %5623 = vmatpush1.msra.mxu0 0.0
    %5624 = vmatprep.subr.mxu0 0.0
    %5625 = vmatpush1.msra.mxu0 0.0
    %5626 = vmatprep.subr.mxu0 0.0
    %5627 = vmatpush1.msra.mxu0 0.0
    %5628 = vmatprep.subr.mxu0 0.0
    %5629 = vmatpush1.msra.mxu0 0.0
    %5630 = vmatprep.subr.mxu0 0.0
    %5631 = vmatpush1.msra.mxu0 0.0
    %5632 = vmatprep.subr.mxu0 0.0
    %5633 = vmatpush1.msra.mxu0 0.0
    %5634 = vmatprep.subr.mxu0 0.0
    %5635 = vmatpush1.msra.mxu0 0.0
    %5636 = vmatprep.subr.mxu0 0.0
    %5637 = vmatpush1.msra.mxu0 0.0
    %5638 = vmatprep.subr.mxu0 0.0
    %5639 = vmatpush1.msra.mxu0 0.0
    %5640 = vmatprep.subr.mxu0 0.0
    %5641 = vmatpush1.msra.mxu0 0.0
    %5642 = vmatprep.subr.mxu0 0.0
    %5643 = vmatpush1.msra.mxu0 0.0
    %5644 = vmatprep.subr.mxu0 0.0
    %5645 = vmatpush1.msra.mxu0 0.0
    %5646 = vmatprep.subr.mxu0 0.0
    %5647 = vmatpush1.msra.mxu0 0.0
    %5648 = vmatprep.subr.mxu0 0.0
    %5649 = vmatpush1.msra.mxu0 0.0
    %5650 = vmatprep.subr.mxu0 0.0
    %5651 = vmatpush1.msra.mxu0 0.0
    %5652 = vmatprep.subr.mxu0 0.0
    %5653 = vmatpush1.msra.mxu0 0.0
    %5654 = vmatprep.mubr.f32.mxu0 0.0
    %5655 = vmatmul.mubr.f32.gmra.mrb[0].mxu0 %v5574
    %v5656 = vpop.f32.mrb[0].mxu0
    %v5657 = vadd.f32 0.0, %v5656
    %v5658 = vpop.f32.mrb[0].mxu0
    %5659 = vmatprep.mubr.f32.mxu0 0.0
    %5660 = vmatmul.mubr.f32.gmra.mrb[0].mxu0 %v5577
    %v5661 = vpop.f32.mrb[0].mxu0
    %v5662 = vadd.f32 0.0, %v5661
    %v5663 = vpop.f32.mrb[0].mxu0
    %5664 = vmatprep.mubr.f32.mxu0 0.0
    %5665 = vmatmul.mubr.f32.gmra.mrb[0].mxu0 %v5580
    %v5666 = vpop.f32.mrb[0].mxu0
    %v5667 = vadd.f32 0.0, %v5666
    %v5668 = vpop.f32.mrb[0].mxu0
    %5669 = vmatprep.mubr.f32.mxu0 0.0
    %5670 = vmatmul.mubr.f32.gmra.mrb[0].mxu0 %v5583
    %v5671 = vpop.f32.mrb[0].mxu0
    %v5672 = vadd.f32 0.0, %v5671
    %v5673 = vpop.f32.mrb[0].mxu0
    %5674 = vmatprep.mubr.f32.mxu0 0.0
    %5675 = vmatmul.mubr.f32.gmra.mrb[0].mxu0 %v5586
    %v5676 = vpop.f32.mrb[0].mxu0
    %v5677 = vadd.f32 0.0, %v5676
    %v5678 = vpop.f32.mrb[0].mxu0
    %5679 = vdwg.mxu0
    %v5681 = vsel %vm455, %v5657, 0
    %v5684 = vsel %vm455, %v5662, 0
    %v5687 = vsel %vm455, %v5667, 0
    %v5690 = vsel %vm455, %v5672, 0
    %v5693 = vsel %vm455, %v5677, 0
    %5695 = vmatprep.subr.mxu0 0.0
    %5696 = vmatpush1.msra.mxu0 %v5070
    %5697 = vmatprep.subr.mxu0 0.0
    %5698 = vmatpush1.msra.mxu0 0.0
    %5699 = vmatprep.subr.mxu0 0.0
    %5700 = vmatpush1.msra.mxu0 0.0
    %5701 = vmatprep.subr.mxu0 0.0
    %5702 = vmatpush1.msra.mxu0 0.0
    %5703 = vmatprep.subr.mxu0 0.0
    %5704 = vmatpush1.msra.mxu0 0.0
    %5705 = vmatprep.subr.mxu0 0.0
    %5706 = vmatpush1.msra.mxu0 0.0
    %5707 = vmatprep.subr.mxu0 0.0
    %5708 = vmatpush1.msra.mxu0 0.0
    %5709 = vmatprep.subr.mxu0 0.0
    %5710 = vmatpush1.msra.mxu0 0.0
    %5711 = vmatprep.subr.mxu0 0.0
    %5712 = vmatpush1.msra.mxu0 0.0
    %5713 = vmatprep.subr.mxu0 0.0
    %5714 = vmatpush1.msra.mxu0 0.0
    %5715 = vmatprep.subr.mxu0 0.0
    %5716 = vmatpush1.msra.mxu0 0.0
    %5717 = vmatprep.subr.mxu0 0.0
    %5718 = vmatpush1.msra.mxu0 0.0
    %5719 = vmatprep.subr.mxu0 0.0
    %5720 = vmatpush1.msra.mxu0 0.0
    %5721 = vmatprep.subr.mxu0 0.0
    %5722 = vmatpush1.msra.mxu0 0.0
    %5723 = vmatprep.subr.mxu0 0.0
    %5724 = vmatpush1.msra.mxu0 0.0
    %5725 = vmatprep.subr.mxu0 0.0
    %5726 = vmatpush1.msra.mxu0 0.0
    %5727 = vmatprep.subr.mxu0 0.0
    %5728 = vmatpush1.msra.mxu0 0.0
    %5729 = vmatprep.subr.mxu0 0.0
    %5730 = vmatpush1.msra.mxu0 0.0
    %5731 = vmatprep.subr.mxu0 0.0
    %5732 = vmatpush1.msra.mxu0 0.0
    %5733 = vmatprep.subr.mxu0 0.0
    %5734 = vmatpush1.msra.mxu0 0.0
    %5735 = vmatprep.subr.mxu0 0.0
    %5736 = vmatpush1.msra.mxu0 0.0
    %5737 = vmatprep.subr.mxu0 0.0
    %5738 = vmatpush1.msra.mxu0 0.0
    %5739 = vmatprep.subr.mxu0 0.0
    %5740 = vmatpush1.msra.mxu0 0.0
    %5741 = vmatprep.subr.mxu0 0.0
    %5742 = vmatpush1.msra.mxu0 0.0
    %5743 = vmatprep.subr.mxu0 0.0
    %5744 = vmatpush1.msra.mxu0 0.0
    %5745 = vmatprep.subr.mxu0 0.0
    %5746 = vmatpush1.msra.mxu0 0.0
    %5747 = vmatprep.subr.mxu0 0.0
    %5748 = vmatpush1.msra.mxu0 0.0
    %5749 = vmatprep.subr.mxu0 0.0
    %5750 = vmatpush1.msra.mxu0 0.0
    %5751 = vmatprep.subr.mxu0 0.0
    %5752 = vmatpush1.msra.mxu0 0.0
    %5753 = vmatprep.subr.mxu0 0.0
    %5754 = vmatpush1.msra.mxu0 0.0
    %5755 = vmatprep.subr.mxu0 0.0
    %5756 = vmatpush1.msra.mxu0 0.0
    %5757 = vmatprep.subr.mxu0 0.0
    %5758 = vmatpush1.msra.mxu0 0.0
    %5759 = vmatprep.mubr.f32.mxu0 0.0
    %5760 = vmatmul.mubr.f32.gmra.mrb[0].mxu0 %v5681
    %v5761 = vpop.f32.mrb[0].mxu0
    %v5762 = vadd.f32 0.0, %v5761
    %v5763 = vpop.f32.mrb[0].mxu0
    %5764 = vmatprep.mubr.f32.mxu0 0.0
    %5765 = vmatmul.mubr.f32.gmra.mrb[0].mxu0 %v5684
    %v5766 = vpop.f32.mrb[0].mxu0
    %v5767 = vadd.f32 0.0, %v5766
    %v5768 = vpop.f32.mrb[0].mxu0
    %5769 = vmatprep.mubr.f32.mxu0 0.0
    %5770 = vmatmul.mubr.f32.gmra.mrb[0].mxu0 %v5687
    %v5771 = vpop.f32.mrb[0].mxu0
    %v5772 = vadd.f32 0.0, %v5771
    %v5773 = vpop.f32.mrb[0].mxu0
    %5774 = vmatprep.mubr.f32.mxu0 0.0
    %5775 = vmatmul.mubr.f32.gmra.mrb[0].mxu0 %v5690
    %v5776 = vpop.f32.mrb[0].mxu0
    %v5777 = vadd.f32 0.0, %v5776
    %v5778 = vpop.f32.mrb[0].mxu0
    %5779 = vmatprep.mubr.f32.mxu0 0.0
    %5780 = vmatmul.mubr.f32.gmra.mrb[0].mxu0 %v5693
    %v5781 = vpop.f32.mrb[0].mxu0
    %v5782 = vadd.f32 0.0, %v5781
    %v5783 = vpop.f32.mrb[0].mxu0
    %5784 = vdwg.mxu0
    %v5786 = vsel %vm455, %v5351, 0
    %v5789 = vsel %vm455, %v5356, 0
    %v5792 = vsel %vm455, %v5361, 0
    %v5795 = vsel %vm455, %v5366, 0
    %v5798 = vsel %vm455, %v5371, 0
    %5800 = vmatprep.subr.mxu0 0.0
    %5801 = vmatpush1.msra.mxu0 %v5069
    %5802 = vmatprep.subr.mxu0 0.0
    %5803 = vmatpush1.msra.mxu0 0.0
    %5804 = vmatprep.subr.mxu0 0.0
    %5805 = vmatpush1.msra.mxu0 0.0
    %5806 = vmatprep.subr.mxu0 0.0
    %5807 = vmatpush1.msra.mxu0 0.0
    %5808 = vmatprep.subr.mxu0 0.0
    %5809 = vmatpush1.msra.mxu0 0.0
    %5810 = vmatprep.subr.mxu0 0.0
    %5811 = vmatpush1.msra.mxu0 0.0
    %5812 = vmatprep.subr.mxu0 0.0
    %5813 = vmatpush1.msra.mxu0 0.0
    %5814 = vmatprep.subr.mxu0 0.0
    %5815 = vmatpush1.msra.mxu0 0.0
    %5816 = vmatprep.subr.mxu0 0.0
    %5817 = vmatpush1.msra.mxu0 0.0
    %5818 = vmatprep.subr.mxu0 0.0
    %5819 = vmatpush1.msra.mxu0 0.0
    %5820 = vmatprep.subr.mxu0 0.0
    %5821 = vmatpush1.msra.mxu0 0.0
    %5822 = vmatprep.subr.mxu0 0.0
    %5823 = vmatpush1.msra.mxu0 0.0
    %5824 = vmatprep.subr.mxu0 0.0
    %5825 = vmatpush1.msra.mxu0 0.0
    %5826 = vmatprep.subr.mxu0 0.0
    %5827 = vmatpush1.msra.mxu0 0.0
    %5828 = vmatprep.subr.mxu0 0.0
    %5829 = vmatpush1.msra.mxu0 0.0
    %5830 = vmatprep.subr.mxu0 0.0
    %5831 = vmatpush1.msra.mxu0 0.0
    %5832 = vmatprep.subr.mxu0 0.0
    %5833 = vmatpush1.msra.mxu0 0.0
    %5834 = vmatprep.subr.mxu0 0.0
    %5835 = vmatpush1.msra.mxu0 0.0
    %5836 = vmatprep.subr.mxu0 0.0
    %5837 = vmatpush1.msra.mxu0 0.0
    %5838 = vmatprep.subr.mxu0 0.0
    %5839 = vmatpush1.msra.mxu0 0.0
    %5840 = vmatprep.subr.mxu0 0.0
    %5841 = vmatpush1.msra.mxu0 0.0
    %5842 = vmatprep.subr.mxu0 0.0
    %5843 = vmatpush1.msra.mxu0 0.0
    %5844 = vmatprep.subr.mxu0 0.0
    %5845 = vmatpush1.msra.mxu0 0.0
    %5846 = vmatprep.subr.mxu0 0.0
    %5847 = vmatpush1.msra.mxu0 0.0
    %5848 = vmatprep.subr.mxu0 0.0
    %5849 = vmatpush1.msra.mxu0 0.0
    %5850 = vmatprep.subr.mxu0 0.0
    %5851 = vmatpush1.msra.mxu0 0.0
    %5852 = vmatprep.subr.mxu0 0.0
    %5853 = vmatpush1.msra.mxu0 0.0
    %5854 = vmatprep.subr.mxu0 0.0
    %5855 = vmatpush1.msra.mxu0 0.0
    %5856 = vmatprep.subr.mxu0 0.0
    %5857 = vmatpush1.msra.mxu0 0.0
    %5858 = vmatprep.subr.mxu0 0.0
    %5859 = vmatpush1.msra.mxu0 0.0
    %5860 = vmatprep.subr.mxu0 0.0
    %5861 = vmatpush1.msra.mxu0 0.0
    %5862 = vmatprep.subr.mxu0 0.0
    %5863 = vmatpush1.msra.mxu0 0.0
    %5864 = vmatprep.mubr.f32.mxu0 0.0
    %5865 = vmatmul.mubr.f32.gmra.mrb[0].mxu0 %v5786
    %v5866 = vpop.f32.mrb[0].mxu0
    %v5867 = vadd.f32 %v5762, %v5866
    %v5868 = vpop.f32.mrb[0].mxu0
    %5869 = vmatprep.mubr.f32.mxu0 0.0
    %5870 = vmatmul.mubr.f32.gmra.mrb[0].mxu0 %v5789
    %v5871 = vpop.f32.mrb[0].mxu0
    %v5872 = vadd.f32 %v5767, %v5871
    %v5873 = vpop.f32.mrb[0].mxu0
    %5874 = vmatprep.mubr.f32.mxu0 0.0
    %5875 = vmatmul.mubr.f32.gmra.mrb[0].mxu0 %v5792
    %v5876 = vpop.f32.mrb[0].mxu0
    %v5877 = vadd.f32 %v5772, %v5876
    %v5878 = vpop.f32.mrb[0].mxu0
    %5879 = vmatprep.mubr.f32.mxu0 0.0
    %5880 = vmatmul.mubr.f32.gmra.mrb[0].mxu0 %v5795
    %v5881 = vpop.f32.mrb[0].mxu0
    %v5882 = vadd.f32 %v5777, %v5881
    %v5883 = vpop.f32.mrb[0].mxu0
    %5884 = vmatprep.mubr.f32.mxu0 0.0
    %5885 = vmatmul.mubr.f32.gmra.mrb[0].mxu0 %v5798
    %v5886 = vpop.f32.mrb[0].mxu0
    %v5887 = vadd.f32 %v5782, %v5886
    %v5888 = vpop.f32.mrb[0].mxu0
    %5889 = vdwg.mxu0
    %5890 = vrot.lane.b32.xlu0 %v5046, 112
    %v5891 = vpop.permute.xlu0 %5890
    %5892 = vrot.lane.b32.xlu0 %v5051, 112
    %v5893 = vpop.permute.xlu0 %5892
    %5894 = vrot.lane.b32.xlu0 %v5056, 112
    %v5895 = vpop.permute.xlu0 %5894
    %5896 = vrot.lane.b32.xlu0 %v5061, 112
    %v5897 = vpop.permute.xlu0 %5896
    %5898 = vrot.lane.b32.xlu0 %v5066, 112
    %v5899 = vpop.permute.xlu0 %5898
    %5900 = vrot.lane.b32.xlu0 %v5046, 80
    %v5901 = vpop.permute.xlu0 %5900
    %5902 = vrot.lane.b32.xlu0 %v5051, 80
    %v5903 = vpop.permute.xlu0 %5902
    %5904 = vrot.lane.b32.xlu0 %v5056, 80
    %v5905 = vpop.permute.xlu0 %5904
    %5906 = vrot.lane.b32.xlu0 %v5061, 80
    %v5907 = vpop.permute.xlu0 %5906
    %5908 = vrot.lane.b32.xlu0 %v5066, 80
    %v5909 = vpop.permute.xlu0 %5908
    %v5910 = vsel %vm455, %v5891, 0
    %v5912 = vsel %vm455, %v5893, 0
    %v5914 = vsel %vm455, %v5895, 0
    %v5916 = vsel %vm455, %v5897, 0
    %v5918 = vsel %vm455, %v5899, 0
    %v5920 = vsel %vm455, %v5901, 0
    %v5922 = vsel %vm455, %v5903, 0
    %v5924 = vsel %vm455, %v5905, 0
    %v5926 = vsel %vm455, %v5907, 0
    %v5928 = vsel %vm455, %v5909, 0
    %5930 = vmatprep.subr.mxu0 0.0
    %5931 = vmatpush1.xpose.msra.mxu0 %v5920
    %5932 = vmatprep.subr.mxu0 0.0
    %5933 = vmatpush1.xpose.msra.mxu0 %v5922
    %5934 = vmatprep.subr.mxu0 0.0
    %5935 = vmatpush1.xpose.msra.mxu0 %v5924
    %5936 = vmatprep.subr.mxu0 0.0
    %5937 = vmatpush1.xpose.msra.mxu0 %v5926
    %5938 = vmatprep.subr.mxu0 0.0
    %5939 = vmatpush1.xpose.msra.mxu0 %v5928
    %5940 = vmatprep.subr.mxu0 0.0
    %5941 = vmatpush1.xpose.msra.mxu0 0.0
    %5942 = vmatprep.subr.mxu0 0.0
    %5943 = vmatpush1.xpose.msra.mxu0 0.0
    %5944 = vmatprep.subr.mxu0 0.0
    %5945 = vmatpush1.xpose.msra.mxu0 0.0
    %5946 = vmatprep.subr.mxu0 0.0
    %5947 = vmatpush1.xpose.msra.mxu0 0.0
    %5948 = vmatprep.subr.mxu0 0.0
    %5949 = vmatpush1.xpose.msra.mxu0 0.0
    %5950 = vmatprep.subr.mxu0 0.0
    %5951 = vmatpush1.xpose.msra.mxu0 0.0
    %5952 = vmatprep.subr.mxu0 0.0
    %5953 = vmatpush1.xpose.msra.mxu0 0.0
    %5954 = vmatprep.subr.mxu0 0.0
    %5955 = vmatpush1.xpose.msra.mxu0 0.0
    %5956 = vmatprep.subr.mxu0 0.0
    %5957 = vmatpush1.xpose.msra.mxu0 0.0
    %5958 = vmatprep.subr.mxu0 0.0
    %5959 = vmatpush1.xpose.msra.mxu0 0.0
    %5960 = vmatprep.subr.mxu0 0.0
    %5961 = vmatpush1.xpose.msra.mxu0 0.0
    %5962 = vmatprep.subr.mxu0 0.0
    %5963 = vmatpush1.xpose.msra.mxu0 0.0
    %5964 = vmatprep.subr.mxu0 0.0
    %5965 = vmatpush1.xpose.msra.mxu0 0.0
    %5966 = vmatprep.subr.mxu0 0.0
    %5967 = vmatpush1.xpose.msra.mxu0 0.0
    %5968 = vmatprep.subr.mxu0 0.0
    %5969 = vmatpush1.xpose.msra.mxu0 0.0
    %5970 = vmatprep.subr.mxu0 0.0
    %5971 = vmatpush1.xpose.msra.mxu0 0.0
    %5972 = vmatprep.subr.mxu0 0.0
    %5973 = vmatpush1.xpose.msra.mxu0 0.0
    %5974 = vmatprep.subr.mxu0 0.0
    %5975 = vmatpush1.xpose.msra.mxu0 0.0
    %5976 = vmatprep.subr.mxu0 0.0
    %5977 = vmatpush1.xpose.msra.mxu0 0.0
    %5978 = vmatprep.subr.mxu0 0.0
    %5979 = vmatpush1.xpose.msra.mxu0 0.0
    %5980 = vmatprep.subr.mxu0 0.0
    %5981 = vmatpush1.xpose.msra.mxu0 0.0
    %5982 = vmatprep.subr.mxu0 0.0
    %5983 = vmatpush1.xpose.msra.mxu0 0.0
    %5984 = vmatprep.subr.mxu0 0.0
    %5985 = vmatpush1.xpose.msra.mxu0 0.0
    %5986 = vmatprep.subr.mxu0 0.0
    %5987 = vmatpush1.xpose.msra.mxu0 0.0
    %5988 = vmatprep.subr.mxu0 0.0
    %5989 = vmatpush1.xpose.msra.mxu0 0.0
    %5990 = vmatprep.subr.mxu0 0.0
    %5991 = vmatpush1.xpose.msra.mxu0 0.0
    %5992 = vmatprep.subr.mxu0 0.0
    %5993 = vmatpush1.xpose.msra.mxu0 0.0
    %5994 = vmatprep.mubr.f32.mxu0 0.0
    %5995 = vmatmul.mubr.f32.gmra.mrb[0].mxu0 %v5910
    %v5996 = vpop.f32.mrb[0].mxu0
    %v5997 = vadd.f32 %v236, %v5996
    %v5998 = vpop.f32.mrb[0].mxu0
    %5999 = vmatprep.mubr.f32.mxu0 0.0
    %6000 = vmatmul.mubr.f32.gmra.mrb[0].mxu0 %v5912
    %v6001 = vpop.f32.mrb[0].mxu0
    %v6002 = vadd.f32 %v237, %v6001
    %v6003 = vpop.f32.mrb[0].mxu0
    %6004 = vmatprep.mubr.f32.mxu0 0.0
    %6005 = vmatmul.mubr.f32.gmra.mrb[0].mxu0 %v5914
    %v6006 = vpop.f32.mrb[0].mxu0
    %v6007 = vadd.f32 %v238, %v6006
    %v6008 = vpop.f32.mrb[0].mxu0
    %6009 = vmatprep.mubr.f32.mxu0 0.0
    %6010 = vmatmul.mubr.f32.gmra.mrb[0].mxu0 %v5916
    %v6011 = vpop.f32.mrb[0].mxu0
    %v6012 = vadd.f32 %v239, %v6011
    %v6013 = vpop.f32.mrb[0].mxu0
    %6014 = vmatprep.mubr.f32.mxu0 0.0
    %6015 = vmatmul.mubr.f32.gmra.mrb[0].mxu0 %v5918
    %v6016 = vpop.f32.mrb[0].mxu0
    %v6017 = vadd.f32 %v240, %v6016
    %v6018 = vpop.f32.mrb[0].mxu0
    %6019 = vdwg.mxu0
    %v6020 = vsel %vm566, %v5997, -inf
    %6021 = vmax.xlane.f32.xlu0 %v6020
    %v6022 = vpop.xlane.xlu0 %6021
    %v6023 = vsel %vm566, %v6002, -inf
    %6024 = vmax.xlane.f32.xlu0 %v6023
    %v6025 = vpop.xlane.xlu0 %6024
    %v6026 = vsel %vm566, %v6007, -inf
    %6027 = vmax.xlane.f32.xlu0 %v6026
    %v6028 = vpop.xlane.xlu0 %6027
    %v6029 = vsel %vm566, %v6012, -inf
    %6030 = vmax.xlane.f32.xlu0 %v6029
    %v6031 = vpop.xlane.xlu0 %6030
    %v6032 = vsel %vm579, %v6017, -inf
    %6033 = vmax.xlane.f32.xlu0 %v6032
    %v6034 = vpop.xlane.xlu0 %6033
    %v6035 = vsub.f32 %v5997, %v6022
    %v6036 = vsub.f32 %v6002, %v6025
    %v6037 = vsub.f32 %v6007, %v6028
    %v6038 = vsub.f32 %v6012, %v6031
    %v6039 = vsub.f32 %v6017, %v6034
    %v6040 = vmul.f32 %v6035, 1.442695
    %v6041 = vpow.pop %v6040
    %v6042 = vmul.f32 %v6036, 1.442695
    %v6043 = vpow.pop %v6042
    %v6044 = vmul.f32 %v6037, 1.442695
    %v6045 = vpow.pop %v6044
    %v6046 = vmul.f32 %v6038, 1.442695
    %v6047 = vpow.pop %v6046
    %v6048 = vmul.f32 %v6039, 1.442695
    %v6049 = vpow.pop %v6048
    %v6050 = vsel %vm566, %v6041, 0.0
    %6051 = vadd.xlane.f32.xlu0 %v6050
    %v6052 = vpop.xlane.xlu0 %6051
    %v6053 = vsel %vm566, %v6043, 0.0
    %6054 = vadd.xlane.f32.xlu0 %v6053
    %v6055 = vpop.xlane.xlu0 %6054
    %v6056 = vsel %vm566, %v6045, 0.0
    %6057 = vadd.xlane.f32.xlu0 %v6056
    %v6058 = vpop.xlane.xlu0 %6057
    %v6059 = vsel %vm566, %v6047, 0.0
    %6060 = vadd.xlane.f32.xlu0 %v6059
    %v6061 = vpop.xlane.xlu0 %6060
    %v6062 = vsel %vm579, %v6049, 0.0
    %6063 = vadd.xlane.f32.xlu0 %v6062
    %v6064 = vpop.xlane.xlu0 %6063
    %v6065 = vrcp.pop %v6052
    %v6066 = vrcp.pop %v6055
    %v6067 = vrcp.pop %v6058
    %v6068 = vrcp.pop %v6061
    %v6069 = vrcp.pop %v6064
    %v6070 = vmul.f32 %v6041, %v6065
    %v6071 = vmul.f32 %v6043, %v6066
    %v6072 = vmul.f32 %v6045, %v6067
    %v6073 = vmul.f32 %v6047, %v6068
    %v6074 = vmul.f32 %v6049, %v6069
    %6075 = vrot.lane.b32.xlu0 %v5046, 48
    %v6076 = vpop.permute.xlu0 %6075
    %6077 = vrot.lane.b32.xlu0 %v5051, 48
    %v6078 = vpop.permute.xlu0 %6077
    %6079 = vrot.lane.b32.xlu0 %v5056, 48
    %v6080 = vpop.permute.xlu0 %6079
    %6081 = vrot.lane.b32.xlu0 %v5061, 48
    %v6082 = vpop.permute.xlu0 %6081
    %6083 = vrot.lane.b32.xlu0 %v5066, 48
    %v6084 = vpop.permute.xlu0 %6083
    %v6090 = vsel %vm566, %v6070, 0
    %v6093 = vsel %vm566, %v6071, 0
    %v6096 = vsel %vm566, %v6072, 0
    %v6099 = vsel %vm566, %v6073, 0
    %v6102 = vsel %vm566, %v6074, 0
    %v6104 = vsel %vm652, %v6084, 0
    %6106 = vmatprep.subr.mxu0 0.0
    %6107 = vmatpush1.msra.mxu0 %v6076
    %6108 = vmatprep.subr.mxu0 0.0
    %6109 = vmatpush1.msra.mxu0 %v6078
    %6110 = vmatprep.subr.mxu0 0.0
    %6111 = vmatpush1.msra.mxu0 %v6080
    %6112 = vmatprep.subr.mxu0 0.0
    %6113 = vmatpush1.msra.mxu0 %v6082
    %6114 = vmatprep.subr.mxu0 0.0
    %6115 = vmatpush1.msra.mxu0 %v6104
    %6116 = vmatprep.subr.mxu0 0.0
    %6117 = vmatpush1.msra.mxu0 0.0
    %6118 = vmatprep.subr.mxu0 0.0
    %6119 = vmatpush1.msra.mxu0 0.0
    %6120 = vmatprep.subr.mxu0 0.0
    %6121 = vmatpush1.msra.mxu0 0.0
    %6122 = vmatprep.subr.mxu0 0.0
    %6123 = vmatpush1.msra.mxu0 0.0
    %6124 = vmatprep.subr.mxu0 0.0
    %6125 = vmatpush1.msra.mxu0 0.0
    %6126 = vmatprep.subr.mxu0 0.0
    %6127 = vmatpush1.msra.mxu0 0.0
    %6128 = vmatprep.subr.mxu0 0.0
    %6129 = vmatpush1.msra.mxu0 0.0
    %6130 = vmatprep.subr.mxu0 0.0
    %6131 = vmatpush1.msra.mxu0 0.0
    %6132 = vmatprep.subr.mxu0 0.0
    %6133 = vmatpush1.msra.mxu0 0.0
    %6134 = vmatprep.subr.mxu0 0.0
    %6135 = vmatpush1.msra.mxu0 0.0
    %6136 = vmatprep.subr.mxu0 0.0
    %6137 = vmatpush1.msra.mxu0 0.0
    %6138 = vmatprep.subr.mxu0 0.0
    %6139 = vmatpush1.msra.mxu0 0.0
    %6140 = vmatprep.subr.mxu0 0.0
    %6141 = vmatpush1.msra.mxu0 0.0
    %6142 = vmatprep.subr.mxu0 0.0
    %6143 = vmatpush1.msra.mxu0 0.0
    %6144 = vmatprep.subr.mxu0 0.0
    %6145 = vmatpush1.msra.mxu0 0.0
    %6146 = vmatprep.subr.mxu0 0.0
    %6147 = vmatpush1.msra.mxu0 0.0
    %6148 = vmatprep.subr.mxu0 0.0
    %6149 = vmatpush1.msra.mxu0 0.0
    %6150 = vmatprep.subr.mxu0 0.0
    %6151 = vmatpush1.msra.mxu0 0.0
    %6152 = vmatprep.subr.mxu0 0.0
    %6153 = vmatpush1.msra.mxu0 0.0
    %6154 = vmatprep.subr.mxu0 0.0
    %6155 = vmatpush1.msra.mxu0 0.0
    %6156 = vmatprep.subr.mxu0 0.0
    %6157 = vmatpush1.msra.mxu0 0.0
    %6158 = vmatprep.subr.mxu0 0.0
    %6159 = vmatpush1.msra.mxu0 0.0
    %6160 = vmatprep.subr.mxu0 0.0
    %6161 = vmatpush1.msra.mxu0 0.0
    %6162 = vmatprep.subr.mxu0 0.0
    %6163 = vmatpush1.msra.mxu0 0.0
    %6164 = vmatprep.subr.mxu0 0.0
    %6165 = vmatpush1.msra.mxu0 0.0
    %6166 = vmatprep.subr.mxu0 0.0
    %6167 = vmatpush1.msra.mxu0 0.0
    %6168 = vmatprep.subr.mxu0 0.0
    %6169 = vmatpush1.msra.mxu0 0.0
    %6170 = vmatprep.mubr.f32.mxu0 0.0
    %6171 = vmatmul.mubr.f32.gmra.mrb[0].mxu0 %v6090
    %v6172 = vpop.f32.mrb[0].mxu0
    %v6173 = vadd.f32 0.0, %v6172
    %v6174 = vpop.f32.mrb[0].mxu0
    %6175 = vmatprep.mubr.f32.mxu0 0.0
    %6176 = vmatmul.mubr.f32.gmra.mrb[0].mxu0 %v6093
    %v6177 = vpop.f32.mrb[0].mxu0
    %v6178 = vadd.f32 0.0, %v6177
    %v6179 = vpop.f32.mrb[0].mxu0
    %6180 = vmatprep.mubr.f32.mxu0 0.0
    %6181 = vmatmul.mubr.f32.gmra.mrb[0].mxu0 %v6096
    %v6182 = vpop.f32.mrb[0].mxu0
    %v6183 = vadd.f32 0.0, %v6182
    %v6184 = vpop.f32.mrb[0].mxu0
    %6185 = vmatprep.mubr.f32.mxu0 0.0
    %6186 = vmatmul.mubr.f32.gmra.mrb[0].mxu0 %v6099
    %v6187 = vpop.f32.mrb[0].mxu0
    %v6188 = vadd.f32 0.0, %v6187
    %v6189 = vpop.f32.mrb[0].mxu0
    %6190 = vmatprep.mubr.f32.mxu0 0.0
    %6191 = vmatmul.mubr.f32.gmra.mrb[0].mxu0 %v6102
    %v6192 = vpop.f32.mrb[0].mxu0
    %v6193 = vadd.f32 0.0, %v6192
    %v6194 = vpop.f32.mrb[0].mxu0
    %6195 = vdwg.mxu0
    %v6197 = vsel %vm455, %v6173, 0
    %v6200 = vsel %vm455, %v6178, 0
    %v6203 = vsel %vm455, %v6183, 0
    %v6206 = vsel %vm455, %v6188, 0
    %v6209 = vsel %vm455, %v6193, 0
    %6211 = vmatprep.subr.mxu0 0.0
    %6212 = vmatpush1.msra.mxu0 %v5071
    %6213 = vmatprep.subr.mxu0 0.0
    %6214 = vmatpush1.msra.mxu0 0.0
    %6215 = vmatprep.subr.mxu0 0.0
    %6216 = vmatpush1.msra.mxu0 0.0
    %6217 = vmatprep.subr.mxu0 0.0
    %6218 = vmatpush1.msra.mxu0 0.0
    %6219 = vmatprep.subr.mxu0 0.0
    %6220 = vmatpush1.msra.mxu0 0.0
    %6221 = vmatprep.subr.mxu0 0.0
    %6222 = vmatpush1.msra.mxu0 0.0
    %6223 = vmatprep.subr.mxu0 0.0
    %6224 = vmatpush1.msra.mxu0 0.0
    %6225 = vmatprep.subr.mxu0 0.0
    %6226 = vmatpush1.msra.mxu0 0.0
    %6227 = vmatprep.subr.mxu0 0.0
    %6228 = vmatpush1.msra.mxu0 0.0
    %6229 = vmatprep.subr.mxu0 0.0
    %6230 = vmatpush1.msra.mxu0 0.0
    %6231 = vmatprep.subr.mxu0 0.0
    %6232 = vmatpush1.msra.mxu0 0.0
    %6233 = vmatprep.subr.mxu0 0.0
    %6234 = vmatpush1.msra.mxu0 0.0
    %6235 = vmatprep.subr.mxu0 0.0
    %6236 = vmatpush1.msra.mxu0 0.0
    %6237 = vmatprep.subr.mxu0 0.0
    %6238 = vmatpush1.msra.mxu0 0.0
    %6239 = vmatprep.subr.mxu0 0.0
    %6240 = vmatpush1.msra.mxu0 0.0
    %6241 = vmatprep.subr.mxu0 0.0
    %6242 = vmatpush1.msra.mxu0 0.0
    %6243 = vmatprep.subr.mxu0 0.0
    %6244 = vmatpush1.msra.mxu0 0.0
    %6245 = vmatprep.subr.mxu0 0.0
    %6246 = vmatpush1.msra.mxu0 0.0
    %6247 = vmatprep.subr.mxu0 0.0
    %6248 = vmatpush1.msra.mxu0 0.0
    %6249 = vmatprep.subr.mxu0 0.0
    %6250 = vmatpush1.msra.mxu0 0.0
    %6251 = vmatprep.subr.mxu0 0.0
    %6252 = vmatpush1.msra.mxu0 0.0
    %6253 = vmatprep.subr.mxu0 0.0
    %6254 = vmatpush1.msra.mxu0 0.0
    %6255 = vmatprep.subr.mxu0 0.0
    %6256 = vmatpush1.msra.mxu0 0.0
    %6257 = vmatprep.subr.mxu0 0.0
    %6258 = vmatpush1.msra.mxu0 0.0
    %6259 = vmatprep.subr.mxu0 0.0
    %6260 = vmatpush1.msra.mxu0 0.0
    %6261 = vmatprep.subr.mxu0 0.0
    %6262 = vmatpush1.msra.mxu0 0.0
    %6263 = vmatprep.subr.mxu0 0.0
    %6264 = vmatpush1.msra.mxu0 0.0
    %6265 = vmatprep.subr.mxu0 0.0
    %6266 = vmatpush1.msra.mxu0 0.0
    %6267 = vmatprep.subr.mxu0 0.0
    %6268 = vmatpush1.msra.mxu0 0.0
    %6269 = vmatprep.subr.mxu0 0.0
    %6270 = vmatpush1.msra.mxu0 0.0
    %6271 = vmatprep.subr.mxu0 0.0
    %6272 = vmatpush1.msra.mxu0 0.0
    %6273 = vmatprep.subr.mxu0 0.0
    %6274 = vmatpush1.msra.mxu0 0.0
    %6275 = vmatprep.mubr.f32.mxu0 0.0
    %6276 = vmatmul.mubr.f32.gmra.mrb[0].mxu0 %v6197
    %v6277 = vpop.f32.mrb[0].mxu0
    %v6278 = vadd.f32 0.0, %v6277
    %v6279 = vpop.f32.mrb[0].mxu0
    %6280 = vmatprep.mubr.f32.mxu0 0.0
    %6281 = vmatmul.mubr.f32.gmra.mrb[0].mxu0 %v6200
    %v6282 = vpop.f32.mrb[0].mxu0
    %v6283 = vadd.f32 0.0, %v6282
    %v6284 = vpop.f32.mrb[0].mxu0
    %6285 = vmatprep.mubr.f32.mxu0 0.0
    %6286 = vmatmul.mubr.f32.gmra.mrb[0].mxu0 %v6203
    %v6287 = vpop.f32.mrb[0].mxu0
    %v6288 = vadd.f32 0.0, %v6287
    %v6289 = vpop.f32.mrb[0].mxu0
    %6290 = vmatprep.mubr.f32.mxu0 0.0
    %6291 = vmatmul.mubr.f32.gmra.mrb[0].mxu0 %v6206
    %v6292 = vpop.f32.mrb[0].mxu0
    %v6293 = vadd.f32 0.0, %v6292
    %v6294 = vpop.f32.mrb[0].mxu0
    %6295 = vmatprep.mubr.f32.mxu0 0.0
    %6296 = vmatmul.mubr.f32.gmra.mrb[0].mxu0 %v6209
    %v6297 = vpop.f32.mrb[0].mxu0
    %v6298 = vadd.f32 0.0, %v6297
    %v6299 = vpop.f32.mrb[0].mxu0
    %6300 = vdwg.mxu0
    %v6301 = vadd.f32 %v5867, %v6278
    %v6302 = vadd.f32 %v5872, %v6283
    %v6303 = vadd.f32 %v5877, %v6288
    %v6304 = vadd.f32 %v5882, %v6293
    %v6305 = vadd.f32 %v5887, %v6298
    %6306 = vrot.lane.b32.xlu0 %v5046, 104
    %v6307 = vpop.permute.xlu0 %6306
    %6308 = vrot.lane.b32.xlu0 %v5051, 104
    %v6309 = vpop.permute.xlu0 %6308
    %6310 = vrot.lane.b32.xlu0 %v5056, 104
    %v6311 = vpop.permute.xlu0 %6310
    %6312 = vrot.lane.b32.xlu0 %v5061, 104
    %v6313 = vpop.permute.xlu0 %6312
    %6314 = vrot.lane.b32.xlu0 %v5066, 104
    %v6315 = vpop.permute.xlu0 %6314
    %6316 = vrot.lane.b32.xlu0 %v5046, 72
    %v6317 = vpop.permute.xlu0 %6316
    %6318 = vrot.lane.b32.xlu0 %v5051, 72
    %v6319 = vpop.permute.xlu0 %6318
    %6320 = vrot.lane.b32.xlu0 %v5056, 72
    %v6321 = vpop.permute.xlu0 %6320
    %6322 = vrot.lane.b32.xlu0 %v5061, 72
    %v6323 = vpop.permute.xlu0 %6322
    %6324 = vrot.lane.b32.xlu0 %v5066, 72
    %v6325 = vpop.permute.xlu0 %6324
    %v6326 = vsel %vm455, %v6307, 0
    %v6328 = vsel %vm455, %v6309, 0
    %v6330 = vsel %vm455, %v6311, 0
    %v6332 = vsel %vm455, %v6313, 0
    %v6334 = vsel %vm455, %v6315, 0
    %v6336 = vsel %vm455, %v6317, 0
    %v6338 = vsel %vm455, %v6319, 0
    %v6340 = vsel %vm455, %v6321, 0
    %v6342 = vsel %vm455, %v6323, 0
    %v6344 = vsel %vm455, %v6325, 0
    %6346 = vmatprep.subr.mxu0 0.0
    %6347 = vmatpush1.xpose.msra.mxu0 %v6336
    %6348 = vmatprep.subr.mxu0 0.0
    %6349 = vmatpush1.xpose.msra.mxu0 %v6338
    %6350 = vmatprep.subr.mxu0 0.0
    %6351 = vmatpush1.xpose.msra.mxu0 %v6340
    %6352 = vmatprep.subr.mxu0 0.0
    %6353 = vmatpush1.xpose.msra.mxu0 %v6342
    %6354 = vmatprep.subr.mxu0 0.0
    %6355 = vmatpush1.xpose.msra.mxu0 %v6344
    %6356 = vmatprep.subr.mxu0 0.0
    %6357 = vmatpush1.xpose.msra.mxu0 0.0
    %6358 = vmatprep.subr.mxu0 0.0
    %6359 = vmatpush1.xpose.msra.mxu0 0.0
    %6360 = vmatprep.subr.mxu0 0.0
    %6361 = vmatpush1.xpose.msra.mxu0 0.0
    %6362 = vmatprep.subr.mxu0 0.0
    %6363 = vmatpush1.xpose.msra.mxu0 0.0
    %6364 = vmatprep.subr.mxu0 0.0
    %6365 = vmatpush1.xpose.msra.mxu0 0.0
    %6366 = vmatprep.subr.mxu0 0.0
    %6367 = vmatpush1.xpose.msra.mxu0 0.0
    %6368 = vmatprep.subr.mxu0 0.0
    %6369 = vmatpush1.xpose.msra.mxu0 0.0
    %6370 = vmatprep.subr.mxu0 0.0
    %6371 = vmatpush1.xpose.msra.mxu0 0.0
    %6372 = vmatprep.subr.mxu0 0.0
    %6373 = vmatpush1.xpose.msra.mxu0 0.0
    %6374 = vmatprep.subr.mxu0 0.0
    %6375 = vmatpush1.xpose.msra.mxu0 0.0
    %6376 = vmatprep.subr.mxu0 0.0
    %6377 = vmatpush1.xpose.msra.mxu0 0.0
    %6378 = vmatprep.subr.mxu0 0.0
    %6379 = vmatpush1.xpose.msra.mxu0 0.0
    %6380 = vmatprep.subr.mxu0 0.0
    %6381 = vmatpush1.xpose.msra.mxu0 0.0
    %6382 = vmatprep.subr.mxu0 0.0
    %6383 = vmatpush1.xpose.msra.mxu0 0.0
    %6384 = vmatprep.subr.mxu0 0.0
    %6385 = vmatpush1.xpose.msra.mxu0 0.0
    %6386 = vmatprep.subr.mxu0 0.0
    %6387 = vmatpush1.xpose.msra.mxu0 0.0
    %6388 = vmatprep.subr.mxu0 0.0
    %6389 = vmatpush1.xpose.msra.mxu0 0.0
    %6390 = vmatprep.subr.mxu0 0.0
    %6391 = vmatpush1.xpose.msra.mxu0 0.0
    %6392 = vmatprep.subr.mxu0 0.0
    %6393 = vmatpush1.xpose.msra.mxu0 0.0
    %6394 = vmatprep.subr.mxu0 0.0
    %6395 = vmatpush1.xpose.msra.mxu0 0.0
    %6396 = vmatprep.subr.mxu0 0.0
    %6397 = vmatpush1.xpose.msra.mxu0 0.0
    %6398 = vmatprep.subr.mxu0 0.0
    %6399 = vmatpush1.xpose.msra.mxu0 0.0
    %6400 = vmatprep.subr.mxu0 0.0
    %6401 = vmatpush1.xpose.msra.mxu0 0.0
    %6402 = vmatprep.subr.mxu0 0.0
    %6403 = vmatpush1.xpose.msra.mxu0 0.0
    %6404 = vmatprep.subr.mxu0 0.0
    %6405 = vmatpush1.xpose.msra.mxu0 0.0
    %6406 = vmatprep.subr.mxu0 0.0
    %6407 = vmatpush1.xpose.msra.mxu0 0.0
    %6408 = vmatprep.subr.mxu0 0.0
    %6409 = vmatpush1.xpose.msra.mxu0 0.0
    %6410 = vmatprep.mubr.f32.mxu0 0.0
    %6411 = vmatmul.mubr.f32.gmra.mrb[0].mxu0 %v6326
    %v6412 = vpop.f32.mrb[0].mxu0
    %v6413 = vadd.f32 %v236, %v6412
    %v6414 = vpop.f32.mrb[0].mxu0
    %6415 = vmatprep.mubr.f32.mxu0 0.0
    %6416 = vmatmul.mubr.f32.gmra.mrb[0].mxu0 %v6328
    %v6417 = vpop.f32.mrb[0].mxu0
    %v6418 = vadd.f32 %v237, %v6417
    %v6419 = vpop.f32.mrb[0].mxu0
    %6420 = vmatprep.mubr.f32.mxu0 0.0
    %6421 = vmatmul.mubr.f32.gmra.mrb[0].mxu0 %v6330
    %v6422 = vpop.f32.mrb[0].mxu0
    %v6423 = vadd.f32 %v238, %v6422
    %v6424 = vpop.f32.mrb[0].mxu0
    %6425 = vmatprep.mubr.f32.mxu0 0.0
    %6426 = vmatmul.mubr.f32.gmra.mrb[0].mxu0 %v6332
    %v6427 = vpop.f32.mrb[0].mxu0
    %v6428 = vadd.f32 %v239, %v6427
    %v6429 = vpop.f32.mrb[0].mxu0
    %6430 = vmatprep.mubr.f32.mxu0 0.0
    %6431 = vmatmul.mubr.f32.gmra.mrb[0].mxu0 %v6334
    %v6432 = vpop.f32.mrb[0].mxu0
    %v6433 = vadd.f32 %v240, %v6432
    %v6434 = vpop.f32.mrb[0].mxu0
    %6435 = vdwg.mxu0
    %v6436 = vsel %vm566, %v6413, -inf
    %6437 = vmax.xlane.f32.xlu0 %v6436
    %v6438 = vpop.xlane.xlu0 %6437
    %v6439 = vsel %vm566, %v6418, -inf
    %6440 = vmax.xlane.f32.xlu0 %v6439
    %v6441 = vpop.xlane.xlu0 %6440
    %v6442 = vsel %vm566, %v6423, -inf
    %6443 = vmax.xlane.f32.xlu0 %v6442
    %v6444 = vpop.xlane.xlu0 %6443
    %v6445 = vsel %vm566, %v6428, -inf
    %6446 = vmax.xlane.f32.xlu0 %v6445
    %v6447 = vpop.xlane.xlu0 %6446
    %v6448 = vsel %vm579, %v6433, -inf
    %6449 = vmax.xlane.f32.xlu0 %v6448
    %v6450 = vpop.xlane.xlu0 %6449
    %v6451 = vsub.f32 %v6413, %v6438
    %v6452 = vsub.f32 %v6418, %v6441
    %v6453 = vsub.f32 %v6423, %v6444
    %v6454 = vsub.f32 %v6428, %v6447
    %v6455 = vsub.f32 %v6433, %v6450
    %v6456 = vmul.f32 %v6451, 1.442695
    %v6457 = vpow.pop %v6456
    %v6458 = vmul.f32 %v6452, 1.442695
    %v6459 = vpow.pop %v6458
    %v6460 = vmul.f32 %v6453, 1.442695
    %v6461 = vpow.pop %v6460
    %v6462 = vmul.f32 %v6454, 1.442695
    %v6463 = vpow.pop %v6462
    %v6464 = vmul.f32 %v6455, 1.442695
    %v6465 = vpow.pop %v6464
    %v6466 = vsel %vm566, %v6457, 0.0
    %6467 = vadd.xlane.f32.xlu0 %v6466
    %v6468 = vpop.xlane.xlu0 %6467
    %v6469 = vsel %vm566, %v6459, 0.0
    %6470 = vadd.xlane.f32.xlu0 %v6469
    %v6471 = vpop.xlane.xlu0 %6470
    %v6472 = vsel %vm566, %v6461, 0.0
    %6473 = vadd.xlane.f32.xlu0 %v6472
    %v6474 = vpop.xlane.xlu0 %6473
    %v6475 = vsel %vm566, %v6463, 0.0
    %6476 = vadd.xlane.f32.xlu0 %v6475
    %v6477 = vpop.xlane.xlu0 %6476
    %v6478 = vsel %vm579, %v6465, 0.0
    %6479 = vadd.xlane.f32.xlu0 %v6478
    %v6480 = vpop.xlane.xlu0 %6479
    %v6481 = vrcp.pop %v6468
    %v6482 = vrcp.pop %v6471
    %v6483 = vrcp.pop %v6474
    %v6484 = vrcp.pop %v6477
    %v6485 = vrcp.pop %v6480
    %v6486 = vmul.f32 %v6457, %v6481
    %v6487 = vmul.f32 %v6459, %v6482
    %v6488 = vmul.f32 %v6461, %v6483
    %v6489 = vmul.f32 %v6463, %v6484
    %v6490 = vmul.f32 %v6465, %v6485
    %6491 = vrot.lane.b32.xlu0 %v5046, 40
    %v6492 = vpop.permute.xlu0 %6491
    %6493 = vrot.lane.b32.xlu0 %v5051, 40
    %v6494 = vpop.permute.xlu0 %6493
    %6495 = vrot.lane.b32.xlu0 %v5056, 40
    %v6496 = vpop.permute.xlu0 %6495
    %6497 = vrot.lane.b32.xlu0 %v5061, 40
    %v6498 = vpop.permute.xlu0 %6497
    %6499 = vrot.lane.b32.xlu0 %v5066, 40
    %v6500 = vpop.permute.xlu0 %6499
    %v6506 = vsel %vm566, %v6486, 0
    %v6509 = vsel %vm566, %v6487, 0
    %v6512 = vsel %vm566, %v6488, 0
    %v6515 = vsel %vm566, %v6489, 0
    %v6518 = vsel %vm566, %v6490, 0
    %v6520 = vsel %vm652, %v6500, 0
    %6522 = vmatprep.subr.mxu0 0.0
    %6523 = vmatpush1.msra.mxu0 %v6492
    %6524 = vmatprep.subr.mxu0 0.0
    %6525 = vmatpush1.msra.mxu0 %v6494
    %6526 = vmatprep.subr.mxu0 0.0
    %6527 = vmatpush1.msra.mxu0 %v6496
    %6528 = vmatprep.subr.mxu0 0.0
    %6529 = vmatpush1.msra.mxu0 %v6498
    %6530 = vmatprep.subr.mxu0 0.0
    %6531 = vmatpush1.msra.mxu0 %v6520
    %6532 = vmatprep.subr.mxu0 0.0
    %6533 = vmatpush1.msra.mxu0 0.0
    %6534 = vmatprep.subr.mxu0 0.0
    %6535 = vmatpush1.msra.mxu0 0.0
    %6536 = vmatprep.subr.mxu0 0.0
    %6537 = vmatpush1.msra.mxu0 0.0
    %6538 = vmatprep.subr.mxu0 0.0
    %6539 = vmatpush1.msra.mxu0 0.0
    %6540 = vmatprep.subr.mxu0 0.0
    %6541 = vmatpush1.msra.mxu0 0.0
    %6542 = vmatprep.subr.mxu0 0.0
    %6543 = vmatpush1.msra.mxu0 0.0
    %6544 = vmatprep.subr.mxu0 0.0
    %6545 = vmatpush1.msra.mxu0 0.0
    %6546 = vmatprep.subr.mxu0 0.0
    %6547 = vmatpush1.msra.mxu0 0.0
    %6548 = vmatprep.subr.mxu0 0.0
    %6549 = vmatpush1.msra.mxu0 0.0
    %6550 = vmatprep.subr.mxu0 0.0
    %6551 = vmatpush1.msra.mxu0 0.0
    %6552 = vmatprep.subr.mxu0 0.0
    %6553 = vmatpush1.msra.mxu0 0.0
    %6554 = vmatprep.subr.mxu0 0.0
    %6555 = vmatpush1.msra.mxu0 0.0
    %6556 = vmatprep.subr.mxu0 0.0
    %6557 = vmatpush1.msra.mxu0 0.0
    %6558 = vmatprep.subr.mxu0 0.0
    %6559 = vmatpush1.msra.mxu0 0.0
    %6560 = vmatprep.subr.mxu0 0.0
    %6561 = vmatpush1.msra.mxu0 0.0
    %6562 = vmatprep.subr.mxu0 0.0
    %6563 = vmatpush1.msra.mxu0 0.0
    %6564 = vmatprep.subr.mxu0 0.0
    %6565 = vmatpush1.msra.mxu0 0.0
    %6566 = vmatprep.subr.mxu0 0.0
    %6567 = vmatpush1.msra.mxu0 0.0
    %6568 = vmatprep.subr.mxu0 0.0
    %6569 = vmatpush1.msra.mxu0 0.0
    %6570 = vmatprep.subr.mxu0 0.0
    %6571 = vmatpush1.msra.mxu0 0.0
    %6572 = vmatprep.subr.mxu0 0.0
    %6573 = vmatpush1.msra.mxu0 0.0
    %6574 = vmatprep.subr.mxu0 0.0
    %6575 = vmatpush1.msra.mxu0 0.0
    %6576 = vmatprep.subr.mxu0 0.0
    %6577 = vmatpush1.msra.mxu0 0.0
    %6578 = vmatprep.subr.mxu0 0.0
    %6579 = vmatpush1.msra.mxu0 0.0
    %6580 = vmatprep.subr.mxu0 0.0
    %6581 = vmatpush1.msra.mxu0 0.0
    %6582 = vmatprep.subr.mxu0 0.0
    %6583 = vmatpush1.msra.mxu0 0.0
    %6584 = vmatprep.subr.mxu0 0.0
    %6585 = vmatpush1.msra.mxu0 0.0
    %6586 = vmatprep.mubr.f32.mxu0 0.0
    %6587 = vmatmul.mubr.f32.gmra.mrb[0].mxu0 %v6506
    %v6588 = vpop.f32.mrb[0].mxu0
    %v6589 = vadd.f32 0.0, %v6588
    %v6590 = vpop.f32.mrb[0].mxu0
    %6591 = vmatprep.mubr.f32.mxu0 0.0
    %6592 = vmatmul.mubr.f32.gmra.mrb[0].mxu0 %v6509
    %v6593 = vpop.f32.mrb[0].mxu0
    %v6594 = vadd.f32 0.0, %v6593
    %v6595 = vpop.f32.mrb[0].mxu0
    %6596 = vmatprep.mubr.f32.mxu0 0.0
    %6597 = vmatmul.mubr.f32.gmra.mrb[0].mxu0 %v6512
    %v6598 = vpop.f32.mrb[0].mxu0
    %v6599 = vadd.f32 0.0, %v6598
    %v6600 = vpop.f32.mrb[0].mxu0
    %6601 = vmatprep.mubr.f32.mxu0 0.0
    %6602 = vmatmul.mubr.f32.gmra.mrb[0].mxu0 %v6515
    %v6603 = vpop.f32.mrb[0].mxu0
    %v6604 = vadd.f32 0.0, %v6603
    %v6605 = vpop.f32.mrb[0].mxu0
    %6606 = vmatprep.mubr.f32.mxu0 0.0
    %6607 = vmatmul.mubr.f32.gmra.mrb[0].mxu0 %v6518
    %v6608 = vpop.f32.mrb[0].mxu0
    %v6609 = vadd.f32 0.0, %v6608
    %v6610 = vpop.f32.mrb[0].mxu0
    %6611 = vdwg.mxu0
    %v6613 = vsel %vm455, %v6589, 0
    %v6616 = vsel %vm455, %v6594, 0
    %v6619 = vsel %vm455, %v6599, 0
    %v6622 = vsel %vm455, %v6604, 0
    %v6625 = vsel %vm455, %v6609, 0
    %6627 = vmatprep.subr.mxu0 0.0
    %6628 = vmatpush1.msra.mxu0 %v5072
    %6629 = vmatprep.subr.mxu0 0.0
    %6630 = vmatpush1.msra.mxu0 0.0
    %6631 = vmatprep.subr.mxu0 0.0
    %6632 = vmatpush1.msra.mxu0 0.0
    %6633 = vmatprep.subr.mxu0 0.0
    %6634 = vmatpush1.msra.mxu0 0.0
    %6635 = vmatprep.subr.mxu0 0.0
    %6636 = vmatpush1.msra.mxu0 0.0
    %6637 = vmatprep.subr.mxu0 0.0
    %6638 = vmatpush1.msra.mxu0 0.0
    %6639 = vmatprep.subr.mxu0 0.0
    %6640 = vmatpush1.msra.mxu0 0.0
    %6641 = vmatprep.subr.mxu0 0.0
    %6642 = vmatpush1.msra.mxu0 0.0
    %6643 = vmatprep.subr.mxu0 0.0
    %6644 = vmatpush1.msra.mxu0 0.0
    %6645 = vmatprep.subr.mxu0 0.0
    %6646 = vmatpush1.msra.mxu0 0.0
    %6647 = vmatprep.subr.mxu0 0.0
    %6648 = vmatpush1.msra.mxu0 0.0
    %6649 = vmatprep.subr.mxu0 0.0
    %6650 = vmatpush1.msra.mxu0 0.0
    %6651 = vmatprep.subr.mxu0 0.0
    %6652 = vmatpush1.msra.mxu0 0.0
    %6653 = vmatprep.subr.mxu0 0.0
    %6654 = vmatpush1.msra.mxu0 0.0
    %6655 = vmatprep.subr.mxu0 0.0
    %6656 = vmatpush1.msra.mxu0 0.0
    %6657 = vmatprep.subr.mxu0 0.0
    %6658 = vmatpush1.msra.mxu0 0.0
    %6659 = vmatprep.subr.mxu0 0.0
    %6660 = vmatpush1.msra.mxu0 0.0
    %6661 = vmatprep.subr.mxu0 0.0
    %6662 = vmatpush1.msra.mxu0 0.0
    %6663 = vmatprep.subr.mxu0 0.0
    %6664 = vmatpush1.msra.mxu0 0.0
    %6665 = vmatprep.subr.mxu0 0.0
    %6666 = vmatpush1.msra.mxu0 0.0
    %6667 = vmatprep.subr.mxu0 0.0
    %6668 = vmatpush1.msra.mxu0 0.0
    %6669 = vmatprep.subr.mxu0 0.0
    %6670 = vmatpush1.msra.mxu0 0.0
    %6671 = vmatprep.subr.mxu0 0.0
    %6672 = vmatpush1.msra.mxu0 0.0
    %6673 = vmatprep.subr.mxu0 0.0
    %6674 = vmatpush1.msra.mxu0 0.0
    %6675 = vmatprep.subr.mxu0 0.0
    %6676 = vmatpush1.msra.mxu0 0.0
    %6677 = vmatprep.subr.mxu0 0.0
    %6678 = vmatpush1.msra.mxu0 0.0
    %6679 = vmatprep.subr.mxu0 0.0
    %6680 = vmatpush1.msra.mxu0 0.0
    %6681 = vmatprep.subr.mxu0 0.0
    %6682 = vmatpush1.msra.mxu0 0.0
    %6683 = vmatprep.subr.mxu0 0.0
    %6684 = vmatpush1.msra.mxu0 0.0
    %6685 = vmatprep.subr.mxu0 0.0
    %6686 = vmatpush1.msra.mxu0 0.0
    %6687 = vmatprep.subr.mxu0 0.0
    %6688 = vmatpush1.msra.mxu0 0.0
    %6689 = vmatprep.subr.mxu0 0.0
    %6690 = vmatpush1.msra.mxu0 0.0
    %6691 = vmatprep.mubr.f32.mxu0 0.0
    %6692 = vmatmul.mubr.f32.gmra.mrb[0].mxu0 %v6613
    %v6693 = vpop.f32.mrb[0].mxu0
    %v6694 = vadd.f32 0.0, %v6693
    %v6695 = vpop.f32.mrb[0].mxu0
    %6696 = vmatprep.mubr.f32.mxu0 0.0
    %6697 = vmatmul.mubr.f32.gmra.mrb[0].mxu0 %v6616
    %v6698 = vpop.f32.mrb[0].mxu0
    %v6699 = vadd.f32 0.0, %v6698
    %v6700 = vpop.f32.mrb[0].mxu0
    %6701 = vmatprep.mubr.f32.mxu0 0.0
    %6702 = vmatmul.mubr.f32.gmra.mrb[0].mxu0 %v6619
    %v6703 = vpop.f32.mrb[0].mxu0
    %v6704 = vadd.f32 0.0, %v6703
    %v6705 = vpop.f32.mrb[0].mxu0
    %6706 = vmatprep.mubr.f32.mxu0 0.0
    %6707 = vmatmul.mubr.f32.gmra.mrb[0].mxu0 %v6622
    %v6708 = vpop.f32.mrb[0].mxu0
    %v6709 = vadd.f32 0.0, %v6708
    %v6710 = vpop.f32.mrb[0].mxu0
    %6711 = vmatprep.mubr.f32.mxu0 0.0
    %6712 = vmatmul.mubr.f32.gmra.mrb[0].mxu0 %v6625
    %v6713 = vpop.f32.mrb[0].mxu0
    %v6714 = vadd.f32 0.0, %v6713
    %v6715 = vpop.f32.mrb[0].mxu0
    %6716 = vdwg.mxu0
    %v6717 = vadd.f32 %v6301, %v6694
    %v6718 = vadd.f32 %v6302, %v6699
    %v6719 = vadd.f32 %v6303, %v6704
    %v6720 = vadd.f32 %v6304, %v6709
    %v6721 = vadd.f32 %v6305, %v6714
    %v6722 = vadd.f32 %v4871, %v6717
    %v6723 = vadd.f32 %v4872, %v6718
    %v6724 = vadd.f32 %v4873, %v6719
    %v6725 = vadd.f32 %v4874, %v6720
    %v6726 = vadd.f32 %v4875, %v6721
    %v6727 = vlaneseq
    %v6728 = vshrl.u32 %v6727, 7
    %v6729 = vsub.s32 2, %v6728
    %v6730 = vrot.slane %v4876, %v6729
    %v6731 = vadd.f32 %v6722, %v6730
    %v6732 = vadd.f32 %v6723, %v6730
    %v6733 = vadd.f32 %v6724, %v6730
    %v6734 = vadd.f32 %v6725, %v6730
    %v6735 = vadd.f32 %v6726, %v6730
    %v6736 = vsel %vm130, %v6731, 0.0
    %6737 = vadd.xlane.f32.xlu0 %v6736
    %v6738 = vpop.xlane.xlu0 %6737
    %v6739 = vsel %vm130, %v6732, 0.0
    %6740 = vadd.xlane.f32.xlu0 %v6739
    %v6741 = vpop.xlane.xlu0 %6740
    %v6742 = vsel %vm130, %v6733, 0.0
    %6743 = vadd.xlane.f32.xlu0 %v6742
    %v6744 = vpop.xlane.xlu0 %6743
    %v6745 = vsel %vm130, %v6734, 0.0
    %6746 = vadd.xlane.f32.xlu0 %v6745
    %v6747 = vpop.xlane.xlu0 %6746
    %v6748 = vsel %vm254, %v6735, 0.0
    %6749 = vadd.xlane.f32.xlu0 %v6748
    %v6750 = vpop.xlane.xlu0 %6749
    %v6751 = vmul.f32 %v6738, %v258
    %v6752 = vmul.f32 %v6741, %v258
    %v6753 = vmul.f32 %v6744, %v258
    %v6754 = vmul.f32 %v6747, %v258
    %v6755 = vmul.f32 %v6750, %v258
    %v6756 = vsub.f32 %v6731, %v6751
    %v6757 = vsub.f32 %v6732, %v6752
    %v6758 = vsub.f32 %v6733, %v6753
    %v6759 = vsub.f32 %v6734, %v6754
    %v6760 = vsub.f32 %v6735, %v6755
    %v6761 = vmul.f32 %v6756, %v6756
    %v6762 = vmul.f32 %v6757, %v6757
    %v6763 = vmul.f32 %v6758, %v6758
    %v6764 = vmul.f32 %v6759, %v6759
    %v6765 = vmul.f32 %v6760, %v6760
    %v6766 = vsel %vm130, %v6761, 0.0
    %6767 = vadd.xlane.f32.xlu0 %v6766
    %v6768 = vpop.xlane.xlu0 %6767
    %v6769 = vsel %vm130, %v6762, 0.0
    %6770 = vadd.xlane.f32.xlu0 %v6769
    %v6771 = vpop.xlane.xlu0 %6770
    %v6772 = vsel %vm130, %v6763, 0.0
    %6773 = vadd.xlane.f32.xlu0 %v6772
    %v6774 = vpop.xlane.xlu0 %6773
    %v6775 = vsel %vm130, %v6764, 0.0
    %6776 = vadd.xlane.f32.xlu0 %v6775
    %v6777 = vpop.xlane.xlu0 %6776
    %v6778 = vsel %vm254, %v6765, 0.0
    %6779 = vadd.xlane.f32.xlu0 %v6778
    %v6780 = vpop.xlane.xlu0 %6779
    %v6781 = vmul.f32 %v6768, %v258
    %v6782 = vmul.f32 %v6771, %v258
    %v6783 = vmul.f32 %v6774, %v258
    %v6784 = vmul.f32 %v6777, %v258
    %v6785 = vmul.f32 %v6780, %v258
    %v6786 = vadd.f32 %v6781, 1e-05
    %v6787 = vadd.f32 %v6782, 1e-05
    %v6788 = vadd.f32 %v6783, 1e-05
    %v6789 = vadd.f32 %v6784, 1e-05
    %v6790 = vadd.f32 %v6785, 1e-05
    %v6791 = vrsqrt.pop %v6786
    %v6792 = vrsqrt.pop %v6787
    %v6793 = vrsqrt.pop %v6788
    %v6794 = vrsqrt.pop %v6789
    %v6795 = vrsqrt.pop %v6790
    %v6796 = vmul.f32 %v6756, %v6791
    %v6797 = vmul.f32 %v6757, %v6792
    %v6798 = vmul.f32 %v6758, %v6793
    %v6799 = vmul.f32 %v6759, %v6794
    %v6800 = vmul.f32 %v6760, %v6795
    %v6801 = vlaneseq
    %v6802 = vshrl.u32 %v6801, 7
    %v6803 = vsub.s32 3, %v6802
    %v6804 = vrot.slane %v4876, %v6803
    %v6805 = vmul.f32 %v6796, %v6804
    %v6806 = vmul.f32 %v6797, %v6804
    %v6807 = vmul.f32 %v6798, %v6804
    %v6808 = vmul.f32 %v6799, %v6804
    %v6809 = vmul.f32 %v6800, %v6804
    %v6810 = vlaneseq
    %v6811 = vshrl.u32 %v6810, 7
    %v6812 = vsub.s32 4, %v6811
    %v6813 = vrot.slane %v4876, %v6812
    %v6814 = vadd.f32 %v6805, %v6813
    %v6815 = vadd.f32 %v6806, %v6813
    %v6816 = vadd.f32 %v6807, %v6813
    %v6817 = vadd.f32 %v6808, %v6813
    %v6818 = vadd.f32 %v6809, %v6813
    %v6819 = vld [vmem:[%s1 + $0x200] sm:$0xff]
    %v6820 = vld [vmem:[%s1 + $0x208] sm:$0xff]
    %v6821 = vld [vmem:[%s1 + $0x210] sm:$0xff]
    %v6822 = vld [vmem:[%s1 + $0x218] sm:$0xff]
    %v6823 = vlaneseq
    %v6824 = vshrl.u32 %v6823, 7
    %v6825 = vsub.s32 5, %v6824
    %v6826 = vrot.slane %v4876, %v6825
    %v6828 = vsel %vm130, %v6814, 0
    %v6831 = vsel %vm130, %v6815, 0
    %v6834 = vsel %vm130, %v6816, 0
    %v6837 = vsel %vm130, %v6817, 0
    %v6840 = vsel %vm130, %v6818, 0
    %6842 = vmatprep.subr.mxu0 0.0
    %6843 = vmatpush1.msra.mxu0 %v6819
    %6844 = vmatprep.subr.mxu0 0.0
    %6845 = vmatpush1.msra.mxu0 %v6820
    %6846 = vmatprep.subr.mxu0 0.0
    %6847 = vmatpush1.msra.mxu0 %v6821
    %6848 = vmatprep.subr.mxu0 0.0
    %6849 = vmatpush1.msra.mxu0 %v6822
    %6850 = vmatprep.subr.mxu0 0.0
    %6851 = vmatpush1.msra.mxu0 0.0
    %6852 = vmatprep.subr.mxu0 0.0
    %6853 = vmatpush1.msra.mxu0 0.0
    %6854 = vmatprep.subr.mxu0 0.0
    %6855 = vmatpush1.msra.mxu0 0.0
    %6856 = vmatprep.subr.mxu0 0.0
    %6857 = vmatpush1.msra.mxu0 0.0
    %6858 = vmatprep.subr.mxu0 0.0
    %6859 = vmatpush1.msra.mxu0 0.0
    %6860 = vmatprep.subr.mxu0 0.0
    %6861 = vmatpush1.msra.mxu0 0.0
    %6862 = vmatprep.subr.mxu0 0.0
    %6863 = vmatpush1.msra.mxu0 0.0
    %6864 = vmatprep.subr.mxu0 0.0
    %6865 = vmatpush1.msra.mxu0 0.0
    %6866 = vmatprep.subr.mxu0 0.0
    %6867 = vmatpush1.msra.mxu0 0.0
    %6868 = vmatprep.subr.mxu0 0.0
    %6869 = vmatpush1.msra.mxu0 0.0
    %6870 = vmatprep.subr.mxu0 0.0
    %6871 = vmatpush1.msra.mxu0 0.0
    %6872 = vmatprep.subr.mxu0 0.0
    %6873 = vmatpush1.msra.mxu0 0.0
    %6874 = vmatprep.subr.mxu0 0.0
    %6875 = vmatpush1.msra.mxu0 0.0
    %6876 = vmatprep.subr.mxu0 0.0
    %6877 = vmatpush1.msra.mxu0 0.0
    %6878 = vmatprep.subr.mxu0 0.0
    %6879 = vmatpush1.msra.mxu0 0.0
    %6880 = vmatprep.subr.mxu0 0.0
    %6881 = vmatpush1.msra.mxu0 0.0
    %6882 = vmatprep.subr.mxu0 0.0
    %6883 = vmatpush1.msra.mxu0 0.0
    %6884 = vmatprep.subr.mxu0 0.0
    %6885 = vmatpush1.msra.mxu0 0.0
    %6886 = vmatprep.subr.mxu0 0.0
    %6887 = vmatpush1.msra.mxu0 0.0
    %6888 = vmatprep.subr.mxu0 0.0
    %6889 = vmatpush1.msra.mxu0 0.0
    %6890 = vmatprep.subr.mxu0 0.0
    %6891 = vmatpush1.msra.mxu0 0.0
    %6892 = vmatprep.subr.mxu0 0.0
    %6893 = vmatpush1.msra.mxu0 0.0
    %6894 = vmatprep.subr.mxu0 0.0
    %6895 = vmatpush1.msra.mxu0 0.0
    %6896 = vmatprep.subr.mxu0 0.0
    %6897 = vmatpush1.msra.mxu0 0.0
    %6898 = vmatprep.subr.mxu0 0.0
    %6899 = vmatpush1.msra.mxu0 0.0
    %6900 = vmatprep.subr.mxu0 0.0
    %6901 = vmatpush1.msra.mxu0 0.0
    %6902 = vmatprep.subr.mxu0 0.0
    %6903 = vmatpush1.msra.mxu0 0.0
    %6904 = vmatprep.subr.mxu0 0.0
    %6905 = vmatpush1.msra.mxu0 0.0
    %6906 = vmatprep.mubr.f32.mxu0 0.0
    %6907 = vmatmul.mubr.f32.gmra.mrb[0].mxu0 %v6828
    %v6908 = vpop.f32.mrb[0].mxu0
    %v6909 = vadd.f32 %v6826, %v6908
    %v6910 = vpop.f32.mrb[0].mxu0
    %6911 = vmatprep.mubr.f32.mxu0 0.0
    %6912 = vmatmul.mubr.f32.gmra.mrb[0].mxu0 %v6831
    %v6913 = vpop.f32.mrb[0].mxu0
    %v6914 = vadd.f32 %v6826, %v6913
    %v6915 = vpop.f32.mrb[0].mxu0
    %6916 = vmatprep.mubr.f32.mxu0 0.0
    %6917 = vmatmul.mubr.f32.gmra.mrb[0].mxu0 %v6834
    %v6918 = vpop.f32.mrb[0].mxu0
    %v6919 = vadd.f32 %v6826, %v6918
    %v6920 = vpop.f32.mrb[0].mxu0
    %6921 = vmatprep.mubr.f32.mxu0 0.0
    %6922 = vmatmul.mubr.f32.gmra.mrb[0].mxu0 %v6837
    %v6923 = vpop.f32.mrb[0].mxu0
    %v6924 = vadd.f32 %v6826, %v6923
    %v6925 = vpop.f32.mrb[0].mxu0
    %6926 = vmatprep.mubr.f32.mxu0 0.0
    %6927 = vmatmul.mubr.f32.gmra.mrb[0].mxu0 %v6840
    %v6928 = vpop.f32.mrb[0].mxu0
    %v6929 = vadd.f32 %v6826, %v6928
    %v6930 = vpop.f32.mrb[0].mxu0
    %6931 = vdwg.mxu0
    %v6932 = vmul.f32 %v6909, 0.5
    %v6933 = vmul.f32 %v6914, 0.5
    %v6934 = vmul.f32 %v6919, 0.5
    %v6935 = vmul.f32 %v6924, 0.5
    %v6936 = vmul.f32 %v6929, 0.5
    %v6937 = vmul.f32 %v6909, %v2308
    %v6938 = vmul.f32 %v6914, %v2308
    %v6939 = vmul.f32 %v6919, %v2308
    %v6940 = vmul.f32 %v6924, %v2308
    %v6941 = vmul.f32 %v6929, %v2308
    %vm6942 = vcmp.ge.f32.partialorder %v6937, 0.0
    %vm6943 = vcmp.ge.f32.partialorder %v6938, 0.0
    %vm6944 = vcmp.ge.f32.partialorder %v6939, 0.0
    %vm6945 = vcmp.ge.f32.partialorder %v6940, 0.0
    %vm6946 = vcmp.ge.f32.partialorder %v6941, 0.0
    %v6947 = vsel %vm6942, 1.0, -1.0
    %v6948 = vsel %vm6943, 1.0, -1.0
    %v6949 = vsel %vm6944, 1.0, -1.0
    %v6950 = vsel %vm6945, 1.0, -1.0
    %v6951 = vsel %vm6946, 1.0, -1.0
    %v6952 = vand.u32 2147483647, %v6937
    %v6953 = vand.u32 2147483647, %v6938
    %v6954 = vand.u32 2147483647, %v6939
    %v6955 = vand.u32 2147483647, %v6940
    %v6956 = vand.u32 2147483647, %v6941
    %v6957 = vmul.f32 %v6952, 0.3275911
    %v6958 = vmul.f32 %v6953, 0.3275911
    %v6959 = vmul.f32 %v6954, 0.3275911
    %v6960 = vmul.f32 %v6955, 0.3275911
    %v6961 = vmul.f32 %v6956, 0.3275911
    %v6962 = vadd.f32 %v6957, 1.0
    %v6963 = vadd.f32 %v6958, 1.0
    %v6964 = vadd.f32 %v6959, 1.0
    %v6965 = vadd.f32 %v6960, 1.0
    %v6966 = vadd.f32 %v6961, 1.0
    %v6967 = vrcp.pop %v6962
    %v6968 = vmul.f32 1.0, %v6967
    %v6969 = vrcp.pop %v6963
    %v6970 = vmul.f32 1.0, %v6969
    %v6971 = vrcp.pop %v6964
    %v6972 = vmul.f32 1.0, %v6971
    %v6973 = vrcp.pop %v6965
    %v6974 = vmul.f32 1.0, %v6973
    %v6975 = vrcp.pop %v6966
    %v6976 = vmul.f32 1.0, %v6975
    %v6977 = vmul.f32 %v6968, 1.0614054
    %v6978 = vmul.f32 %v6970, 1.0614054
    %v6979 = vmul.f32 %v6972, 1.0614054
    %v6980 = vmul.f32 %v6974, 1.0614054
    %v6981 = vmul.f32 %v6976, 1.0614054
    %v6982 = vadd.f32 %v6977, -1.4531521
    %v6983 = vadd.f32 %v6978, -1.4531521
    %v6984 = vadd.f32 %v6979, -1.4531521
    %v6985 = vadd.f32 %v6980, -1.4531521
    %v6986 = vadd.f32 %v6981, -1.4531521
    %v6987 = vmul.f32 %v6982, %v6968
    %v6988 = vmul.f32 %v6983, %v6970
    %v6989 = vmul.f32 %v6984, %v6972
    %v6990 = vmul.f32 %v6985, %v6974
    %v6991 = vmul.f32 %v6986, %v6976
    %v6992 = vadd.f32 %v6987, 1.4214138
    %v6993 = vadd.f32 %v6988, 1.4214138
    %v6994 = vadd.f32 %v6989, 1.4214138
    %v6995 = vadd.f32 %v6990, 1.4214138
    %v6996 = vadd.f32 %v6991, 1.4214138
    %v6997 = vmul.f32 %v6992, %v6968
    %v6998 = vmul.f32 %v6993, %v6970
    %v6999 = vmul.f32 %v6994, %v6972
    %v7000 = vmul.f32 %v6995, %v6974
    %v7001 = vmul.f32 %v6996, %v6976
    %v7002 = vadd.f32 %v6997, -0.28449672
    %v7003 = vadd.f32 %v6998, -0.28449672
    %v7004 = vadd.f32 %v6999, -0.28449672
    %v7005 = vadd.f32 %v7000, -0.28449672
    %v7006 = vadd.f32 %v7001, -0.28449672
    %v7007 = vmul.f32 %v7002, %v6968
    %v7008 = vmul.f32 %v7003, %v6970
    %v7009 = vmul.f32 %v7004, %v6972
    %v7010 = vmul.f32 %v7005, %v6974
    %v7011 = vmul.f32 %v7006, %v6976
    %v7012 = vadd.f32 %v7007, 0.2548296
    %v7013 = vadd.f32 %v7008, 0.2548296
    %v7014 = vadd.f32 %v7009, 0.2548296
    %v7015 = vadd.f32 %v7010, 0.2548296
    %v7016 = vadd.f32 %v7011, 0.2548296
    %v7017 = vmul.f32 %v7012, %v6968
    %v7018 = vmul.f32 %v7013, %v6970
    %v7019 = vmul.f32 %v7014, %v6972
    %v7020 = vmul.f32 %v7015, %v6974
    %v7021 = vmul.f32 %v7016, %v6976
    %v7022 = vsub.f32 0.0, %v6952
    %v7023 = vsub.f32 0.0, %v6953
    %v7024 = vsub.f32 0.0, %v6954
    %v7025 = vsub.f32 0.0, %v6955
    %v7026 = vsub.f32 0.0, %v6956
    %v7027 = vmul.f32 %v7022, %v6952
    %v7028 = vmul.f32 %v7023, %v6953
    %v7029 = vmul.f32 %v7024, %v6954
    %v7030 = vmul.f32 %v7025, %v6955
    %v7031 = vmul.f32 %v7026, %v6956
    %v7032 = vmul.f32 %v7027, 1.442695
    %v7033 = vpow.pop %v7032
    %v7034 = vmul.f32 %v7028, 1.442695
    %v7035 = vpow.pop %v7034
    %v7036 = vmul.f32 %v7029, 1.442695
    %v7037 = vpow.pop %v7036
    %v7038 = vmul.f32 %v7030, 1.442695
    %v7039 = vpow.pop %v7038
    %v7040 = vmul.f32 %v7031, 1.442695
    %v7041 = vpow.pop %v7040
    %v7042 = vmul.f32 %v7017, %v7033
    %v7043 = vmul.f32 %v7018, %v7035
    %v7044 = vmul.f32 %v7019, %v7037
    %v7045 = vmul.f32 %v7020, %v7039
    %v7046 = vmul.f32 %v7021, %v7041
    %v7047 = vsub.f32 1.0, %v7042
    %v7048 = vsub.f32 1.0, %v7043
    %v7049 = vsub.f32 1.0, %v7044
    %v7050 = vsub.f32 1.0, %v7045
    %v7051 = vsub.f32 1.0, %v7046
    %v7052 = vmul.f32 %v6947, %v7047
    %v7053 = vmul.f32 %v6948, %v7048
    %v7054 = vmul.f32 %v6949, %v7049
    %v7055 = vmul.f32 %v6950, %v7050
    %v7056 = vmul.f32 %v6951, %v7051
    %v7057 = vadd.f32 %v7052, 1.0
    %v7058 = vadd.f32 %v7053, 1.0
    %v7059 = vadd.f32 %v7054, 1.0
    %v7060 = vadd.f32 %v7055, 1.0
    %v7061 = vadd.f32 %v7056, 1.0
    %v7062 = vmul.f32 %v6932, %v7057
    %v7063 = vmul.f32 %v6933, %v7058
    %v7064 = vmul.f32 %v6934, %v7059
    %v7065 = vmul.f32 %v6935, %v7060
    %v7066 = vmul.f32 %v6936, %v7061
    %v7067 = vld [vmem:[%s1 + $0x220] sm:$0xff]
    %v7068 = vld [vmem:[%s1 + $0x228] sm:$0xff]
    %v7069 = vld [vmem:[%s1 + $0x230] sm:$0xff]
    %v7070 = vld [vmem:[%s1 + $0x238] sm:$0xff]
    %v7072 = vsel %vm130, %v7062, 0
    %v7075 = vsel %vm130, %v7063, 0
    %v7078 = vsel %vm130, %v7064, 0
    %v7081 = vsel %vm130, %v7065, 0
    %v7084 = vsel %vm130, %v7066, 0
    %7086 = vmatprep.subr.mxu0 0.0
    %7087 = vmatpush1.msra.mxu0 %v7067
    %7088 = vmatprep.subr.mxu0 0.0
    %7089 = vmatpush1.msra.mxu0 %v7068
    %7090 = vmatprep.subr.mxu0 0.0
    %7091 = vmatpush1.msra.mxu0 %v7069
    %7092 = vmatprep.subr.mxu0 0.0
    %7093 = vmatpush1.msra.mxu0 %v7070
    %7094 = vmatprep.subr.mxu0 0.0
    %7095 = vmatpush1.msra.mxu0 0.0
    %7096 = vmatprep.subr.mxu0 0.0
    %7097 = vmatpush1.msra.mxu0 0.0
    %7098 = vmatprep.subr.mxu0 0.0
    %7099 = vmatpush1.msra.mxu0 0.0
    %7100 = vmatprep.subr.mxu0 0.0
    %7101 = vmatpush1.msra.mxu0 0.0
    %7102 = vmatprep.subr.mxu0 0.0
    %7103 = vmatpush1.msra.mxu0 0.0
    %7104 = vmatprep.subr.mxu0 0.0
    %7105 = vmatpush1.msra.mxu0 0.0
    %7106 = vmatprep.subr.mxu0 0.0
    %7107 = vmatpush1.msra.mxu0 0.0
    %7108 = vmatprep.subr.mxu0 0.0
    %7109 = vmatpush1.msra.mxu0 0.0
    %7110 = vmatprep.subr.mxu0 0.0
    %7111 = vmatpush1.msra.mxu0 0.0
    %7112 = vmatprep.subr.mxu0 0.0
    %7113 = vmatpush1.msra.mxu0 0.0
    %7114 = vmatprep.subr.mxu0 0.0
    %7115 = vmatpush1.msra.mxu0 0.0
    %7116 = vmatprep.subr.mxu0 0.0
    %7117 = vmatpush1.msra.mxu0 0.0
    %7118 = vmatprep.subr.mxu0 0.0
    %7119 = vmatpush1.msra.mxu0 0.0
    %7120 = vmatprep.subr.mxu0 0.0
    %7121 = vmatpush1.msra.mxu0 0.0
    %7122 = vmatprep.subr.mxu0 0.0
    %7123 = vmatpush1.msra.mxu0 0.0
    %7124 = vmatprep.subr.mxu0 0.0
    %7125 = vmatpush1.msra.mxu0 0.0
    %7126 = vmatprep.subr.mxu0 0.0
    %7127 = vmatpush1.msra.mxu0 0.0
    %7128 = vmatprep.subr.mxu0 0.0
    %7129 = vmatpush1.msra.mxu0 0.0
    %7130 = vmatprep.subr.mxu0 0.0
    %7131 = vmatpush1.msra.mxu0 0.0
    %7132 = vmatprep.subr.mxu0 0.0
    %7133 = vmatpush1.msra.mxu0 0.0
    %7134 = vmatprep.subr.mxu0 0.0
    %7135 = vmatpush1.msra.mxu0 0.0
    %7136 = vmatprep.subr.mxu0 0.0
    %7137 = vmatpush1.msra.mxu0 0.0
    %7138 = vmatprep.subr.mxu0 0.0
    %7139 = vmatpush1.msra.mxu0 0.0
    %7140 = vmatprep.subr.mxu0 0.0
    %7141 = vmatpush1.msra.mxu0 0.0
    %7142 = vmatprep.subr.mxu0 0.0
    %7143 = vmatpush1.msra.mxu0 0.0
    %7144 = vmatprep.subr.mxu0 0.0
    %7145 = vmatpush1.msra.mxu0 0.0
    %7146 = vmatprep.subr.mxu0 0.0
    %7147 = vmatpush1.msra.mxu0 0.0
    %7148 = vmatprep.subr.mxu0 0.0
    %7149 = vmatpush1.msra.mxu0 0.0
    %7150 = vmatprep.mubr.f32.mxu0 0.0
    %7151 = vmatmul.mubr.f32.gmra.mrb[0].mxu0 %v7072
    %v7152 = vpop.f32.mrb[0].mxu0
    %v7153 = vadd.f32 0.0, %v7152
    %v7154 = vpop.f32.mrb[0].mxu0
    %7155 = vmatprep.mubr.f32.mxu0 0.0
    %7156 = vmatmul.mubr.f32.gmra.mrb[0].mxu0 %v7075
    %v7157 = vpop.f32.mrb[0].mxu0
    %v7158 = vadd.f32 0.0, %v7157
    %v7159 = vpop.f32.mrb[0].mxu0
    %7160 = vmatprep.mubr.f32.mxu0 0.0
    %7161 = vmatmul.mubr.f32.gmra.mrb[0].mxu0 %v7078
    %v7162 = vpop.f32.mrb[0].mxu0
    %v7163 = vadd.f32 0.0, %v7162
    %v7164 = vpop.f32.mrb[0].mxu0
    %7165 = vmatprep.mubr.f32.mxu0 0.0
    %7166 = vmatmul.mubr.f32.gmra.mrb[0].mxu0 %v7081
    %v7167 = vpop.f32.mrb[0].mxu0
    %v7168 = vadd.f32 0.0, %v7167
    %v7169 = vpop.f32.mrb[0].mxu0
    %7170 = vmatprep.mubr.f32.mxu0 0.0
    %7171 = vmatmul.mubr.f32.gmra.mrb[0].mxu0 %v7084
    %v7172 = vpop.f32.mrb[0].mxu0
    %v7173 = vadd.f32 0.0, %v7172
    %v7174 = vpop.f32.mrb[0].mxu0
    %7175 = vdwg.mxu0
    %v7176 = vadd.f32 %v6731, %v7153
    %v7177 = vadd.f32 %v6732, %v7158
    %v7178 = vadd.f32 %v6733, %v7163
    %v7179 = vadd.f32 %v6734, %v7168
    %v7180 = vadd.f32 %v6735, %v7173
    %v7181 = vlaneseq
    %v7182 = vshrl.u32 %v7181, 7
    %v7183 = vsub.s32 6, %v7182
    %v7184 = vrot.slane %v4876, %v7183
    %v7185 = vadd.f32 %v7176, %v7184
    %v7186 = vadd.f32 %v7177, %v7184
    %v7187 = vadd.f32 %v7178, %v7184
    %v7188 = vadd.f32 %v7179, %v7184
    %v7189 = vadd.f32 %v7180, %v7184
    %v7190 = vld [vmem:[%s1 + $0x2c8] sm:$0x7f]
    %v7191 = vsel %vm130, %v7185, 0.0
    %7192 = vadd.xlane.f32.xlu0 %v7191
    %v7193 = vpop.xlane.xlu0 %7192
    %v7194 = vsel %vm130, %v7186, 0.0
    %7195 = vadd.xlane.f32.xlu0 %v7194
    %v7196 = vpop.xlane.xlu0 %7195
    %v7197 = vsel %vm130, %v7187, 0.0
    %7198 = vadd.xlane.f32.xlu0 %v7197
    %v7199 = vpop.xlane.xlu0 %7198
    %v7200 = vsel %vm130, %v7188, 0.0
    %7201 = vadd.xlane.f32.xlu0 %v7200
    %v7202 = vpop.xlane.xlu0 %7201
    %v7203 = vsel %vm254, %v7189, 0.0
    %7204 = vadd.xlane.f32.xlu0 %v7203
    %v7205 = vpop.xlane.xlu0 %7204
    %v7206 = vmul.f32 %v7193, %v258
    %v7207 = vmul.f32 %v7196, %v258
    %v7208 = vmul.f32 %v7199, %v258
    %v7209 = vmul.f32 %v7202, %v258
    %v7210 = vmul.f32 %v7205, %v258
    %v7211 = vsub.f32 %v7185, %v7206
    %v7212 = vsub.f32 %v7186, %v7207
    %v7213 = vsub.f32 %v7187, %v7208
    %v7214 = vsub.f32 %v7188, %v7209
    %v7215 = vsub.f32 %v7189, %v7210
    %v7216 = vmul.f32 %v7211, %v7211
    %v7217 = vmul.f32 %v7212, %v7212
    %v7218 = vmul.f32 %v7213, %v7213
    %v7219 = vmul.f32 %v7214, %v7214
    %v7220 = vmul.f32 %v7215, %v7215
    %v7221 = vsel %vm130, %v7216, 0.0
    %7222 = vadd.xlane.f32.xlu0 %v7221
    %v7223 = vpop.xlane.xlu0 %7222
    %v7224 = vsel %vm130, %v7217, 0.0
    %7225 = vadd.xlane.f32.xlu0 %v7224
    %v7226 = vpop.xlane.xlu0 %7225
    %v7227 = vsel %vm130, %v7218, 0.0
    %7228 = vadd.xlane.f32.xlu0 %v7227
    %v7229 = vpop.xlane.xlu0 %7228
    %v7230 = vsel %vm130, %v7219, 0.0
    %7231 = vadd.xlane.f32.xlu0 %v7230
    %v7232 = vpop.xlane.xlu0 %7231
    %v7233 = vsel %vm254, %v7220, 0.0
    %7234 = vadd.xlane.f32.xlu0 %v7233
    %v7235 = vpop.xlane.xlu0 %7234
    %v7236 = vmul.f32 %v7223, %v258
    %v7237 = vmul.f32 %v7226, %v258
    %v7238 = vmul.f32 %v7229, %v258
    %v7239 = vmul.f32 %v7232, %v258
    %v7240 = vmul.f32 %v7235, %v258
    %v7241 = vadd.f32 %v7236, 1e-05
    %v7242 = vadd.f32 %v7237, 1e-05
    %v7243 = vadd.f32 %v7238, 1e-05
    %v7244 = vadd.f32 %v7239, 1e-05
    %v7245 = vadd.f32 %v7240, 1e-05
    %v7246 = vrsqrt.pop %v7241
    %v7247 = vrsqrt.pop %v7242
    %v7248 = vrsqrt.pop %v7243
    %v7249 = vrsqrt.pop %v7244
    %v7250 = vrsqrt.pop %v7245
    %v7251 = vmul.f32 %v7211, %v7246
    %v7252 = vmul.f32 %v7212, %v7247
    %v7253 = vmul.f32 %v7213, %v7248
    %v7254 = vmul.f32 %v7214, %v7249
    %v7255 = vmul.f32 %v7215, %v7250
    %v7256 = vlaneseq
    %v7257 = vshrl.u32 %v7256, 7
    %v7258 = vsub.s32 0, %v7257
    %v7259 = vrot.slane %v7190, %v7258
    %v7260 = vmul.f32 %v7251, %v7259
    %v7261 = vmul.f32 %v7252, %v7259
    %v7262 = vmul.f32 %v7253, %v7259
    %v7263 = vmul.f32 %v7254, %v7259
    %v7264 = vmul.f32 %v7255, %v7259
    %v7265 = vlaneseq
    %v7266 = vshrl.u32 %v7265, 7
    %v7267 = vsub.s32 1, %v7266
    %v7268 = vrot.slane %v7190, %v7267
    %v7269 = vadd.f32 %v7260, %v7268
    %v7270 = vadd.f32 %v7261, %v7268
    %v7271 = vadd.f32 %v7262, %v7268
    %v7272 = vadd.f32 %v7263, %v7268
    %v7273 = vadd.f32 %v7264, %v7268
    %v7274 = vld [vmem:[%s1 + $0x248] sm:$0xff]
    %v7275 = vld [vmem:[%s1 + $0x250] sm:$0xff]
    %v7276 = vld [vmem:[%s1 + $0x258] sm:$0xff]
    %v7277 = vld [vmem:[%s1 + $0x260] sm:$0xff]
    %v7279 = vsel %vm130, %v7269, 0
    %v7282 = vsel %vm130, %v7270, 0
    %v7285 = vsel %vm130, %v7271, 0
    %v7288 = vsel %vm130, %v7272, 0
    %v7291 = vsel %vm130, %v7273, 0
    %7293 = vmatprep.subr.mxu0 0.0
    %7294 = vmatpush1.msra.mxu0 %v7274
    %7295 = vmatprep.subr.mxu0 0.0
    %7296 = vmatpush1.msra.mxu0 %v7275
    %7297 = vmatprep.subr.mxu0 0.0
    %7298 = vmatpush1.msra.mxu0 %v7276
    %7299 = vmatprep.subr.mxu0 0.0
    %7300 = vmatpush1.msra.mxu0 %v7277
    %7301 = vmatprep.subr.mxu0 0.0
    %7302 = vmatpush1.msra.mxu0 0.0
    %7303 = vmatprep.subr.mxu0 0.0
    %7304 = vmatpush1.msra.mxu0 0.0
    %7305 = vmatprep.subr.mxu0 0.0
    %7306 = vmatpush1.msra.mxu0 0.0
    %7307 = vmatprep.subr.mxu0 0.0
    %7308 = vmatpush1.msra.mxu0 0.0
    %7309 = vmatprep.subr.mxu0 0.0
    %7310 = vmatpush1.msra.mxu0 0.0
    %7311 = vmatprep.subr.mxu0 0.0
    %7312 = vmatpush1.msra.mxu0 0.0
    %7313 = vmatprep.subr.mxu0 0.0
    %7314 = vmatpush1.msra.mxu0 0.0
    %7315 = vmatprep.subr.mxu0 0.0
    %7316 = vmatpush1.msra.mxu0 0.0
    %7317 = vmatprep.subr.mxu0 0.0
    %7318 = vmatpush1.msra.mxu0 0.0
    %7319 = vmatprep.subr.mxu0 0.0
    %7320 = vmatpush1.msra.mxu0 0.0
    %7321 = vmatprep.subr.mxu0 0.0
    %7322 = vmatpush1.msra.mxu0 0.0
    %7323 = vmatprep.subr.mxu0 0.0
    %7324 = vmatpush1.msra.mxu0 0.0
    %7325 = vmatprep.subr.mxu0 0.0
    %7326 = vmatpush1.msra.mxu0 0.0
    %7327 = vmatprep.subr.mxu0 0.0
    %7328 = vmatpush1.msra.mxu0 0.0
    %7329 = vmatprep.subr.mxu0 0.0
    %7330 = vmatpush1.msra.mxu0 0.0
    %7331 = vmatprep.subr.mxu0 0.0
    %7332 = vmatpush1.msra.mxu0 0.0
    %7333 = vmatprep.subr.mxu0 0.0
    %7334 = vmatpush1.msra.mxu0 0.0
    %7335 = vmatprep.subr.mxu0 0.0
    %7336 = vmatpush1.msra.mxu0 0.0
    %7337 = vmatprep.subr.mxu0 0.0
    %7338 = vmatpush1.msra.mxu0 0.0
    %7339 = vmatprep.subr.mxu0 0.0
    %7340 = vmatpush1.msra.mxu0 0.0
    %7341 = vmatprep.subr.mxu0 0.0
    %7342 = vmatpush1.msra.mxu0 0.0
    %7343 = vmatprep.subr.mxu0 0.0
    %7344 = vmatpush1.msra.mxu0 0.0
    %7345 = vmatprep.subr.mxu0 0.0
    %7346 = vmatpush1.msra.mxu0 0.0
    %7347 = vmatprep.subr.mxu0 0.0
    %7348 = vmatpush1.msra.mxu0 0.0
    %7349 = vmatprep.subr.mxu0 0.0
    %7350 = vmatpush1.msra.mxu0 0.0
    %7351 = vmatprep.subr.mxu0 0.0
    %7352 = vmatpush1.msra.mxu0 0.0
    %7353 = vmatprep.subr.mxu0 0.0
    %7354 = vmatpush1.msra.mxu0 0.0
    %7355 = vmatprep.subr.mxu0 0.0
    %7356 = vmatpush1.msra.mxu0 0.0
    %7357 = vmatprep.mubr.f32.mxu0 0.0
    %7358 = vmatmul.mubr.f32.gmra.mrb[0].mxu0 %v7279
    %v7359 = vpop.f32.mrb[0].mxu0
    %v7360 = vadd.f32 0.0, %v7359
    %v7361 = vpop.f32.mrb[0].mxu0
    %7362 = vmatprep.mubr.f32.mxu0 0.0
    %7363 = vmatmul.mubr.f32.gmra.mrb[0].mxu0 %v7282
    %v7364 = vpop.f32.mrb[0].mxu0
    %v7365 = vadd.f32 0.0, %v7364
    %v7366 = vpop.f32.mrb[0].mxu0
    %7367 = vmatprep.mubr.f32.mxu0 0.0
    %7368 = vmatmul.mubr.f32.gmra.mrb[0].mxu0 %v7285
    %v7369 = vpop.f32.mrb[0].mxu0
    %v7370 = vadd.f32 0.0, %v7369
    %v7371 = vpop.f32.mrb[0].mxu0
    %7372 = vmatprep.mubr.f32.mxu0 0.0
    %7373 = vmatmul.mubr.f32.gmra.mrb[0].mxu0 %v7288
    %v7374 = vpop.f32.mrb[0].mxu0
    %v7375 = vadd.f32 0.0, %v7374
    %v7376 = vpop.f32.mrb[0].mxu0
    %7377 = vmatprep.mubr.f32.mxu0 0.0
    %7378 = vmatmul.mubr.f32.gmra.mrb[0].mxu0 %v7291
    %v7379 = vpop.f32.mrb[0].mxu0
    %v7380 = vadd.f32 0.0, %v7379
    %v7381 = vpop.f32.mrb[0].mxu0
    %7382 = vdwg.mxu0
    %v7383 = vld [vmem:[%s1 + $0x268] sm:$0xff]
    %v7384 = vld [vmem:[%s1 + $0x270] sm:$0xff]
    %v7385 = vld [vmem:[%s1 + $0x278] sm:$0xff]
    %v7386 = vld [vmem:[%s1 + $0x280] sm:$0xff]
    %7392 = vrot.lane.b32.xlu0 %v7360, 96
    %v7393 = vpop.permute.xlu0 %7392
    %7394 = vrot.lane.b32.xlu0 %v7365, 96
    %v7395 = vpop.permute.xlu0 %7394
    %7396 = vrot.lane.b32.xlu0 %v7370, 96
    %v7397 = vpop.permute.xlu0 %7396
    %7398 = vrot.lane.b32.xlu0 %v7375, 96
    %v7399 = vpop.permute.xlu0 %7398
    %7400 = vrot.lane.b32.xlu0 %v7380, 96
    %v7401 = vpop.permute.xlu0 %7400
    %v7402 = vsel %vm455, %v7360, 0
    %v7404 = vsel %vm455, %v7365, 0
    %v7406 = vsel %vm455, %v7370, 0
    %v7408 = vsel %vm455, %v7375, 0
    %v7410 = vsel %vm455, %v7380, 0
    %v7412 = vsel %vm455, %v7393, 0
    %v7414 = vsel %vm455, %v7395, 0
    %v7416 = vsel %vm455, %v7397, 0
    %v7418 = vsel %vm455, %v7399, 0
    %v7420 = vsel %vm455, %v7401, 0
    %7422 = vmatprep.subr.mxu0 0.0
    %7423 = vmatpush1.xpose.msra.mxu0 %v7412
    %7424 = vmatprep.subr.mxu0 0.0
    %7425 = vmatpush1.xpose.msra.mxu0 %v7414
    %7426 = vmatprep.subr.mxu0 0.0
    %7427 = vmatpush1.xpose.msra.mxu0 %v7416
    %7428 = vmatprep.subr.mxu0 0.0
    %7429 = vmatpush1.xpose.msra.mxu0 %v7418
    %7430 = vmatprep.subr.mxu0 0.0
    %7431 = vmatpush1.xpose.msra.mxu0 %v7420
    %7432 = vmatprep.subr.mxu0 0.0
    %7433 = vmatpush1.xpose.msra.mxu0 0.0
    %7434 = vmatprep.subr.mxu0 0.0
    %7435 = vmatpush1.xpose.msra.mxu0 0.0
    %7436 = vmatprep.subr.mxu0 0.0
    %7437 = vmatpush1.xpose.msra.mxu0 0.0
    %7438 = vmatprep.subr.mxu0 0.0
    %7439 = vmatpush1.xpose.msra.mxu0 0.0
    %7440 = vmatprep.subr.mxu0 0.0
    %7441 = vmatpush1.xpose.msra.mxu0 0.0
    %7442 = vmatprep.subr.mxu0 0.0
    %7443 = vmatpush1.xpose.msra.mxu0 0.0
    %7444 = vmatprep.subr.mxu0 0.0
    %7445 = vmatpush1.xpose.msra.mxu0 0.0
    %7446 = vmatprep.subr.mxu0 0.0
    %7447 = vmatpush1.xpose.msra.mxu0 0.0
    %7448 = vmatprep.subr.mxu0 0.0
    %7449 = vmatpush1.xpose.msra.mxu0 0.0
    %7450 = vmatprep.subr.mxu0 0.0
    %7451 = vmatpush1.xpose.msra.mxu0 0.0
    %7452 = vmatprep.subr.mxu0 0.0
    %7453 = vmatpush1.xpose.msra.mxu0 0.0
    %7454 = vmatprep.subr.mxu0 0.0
    %7455 = vmatpush1.xpose.msra.mxu0 0.0
    %7456 = vmatprep.subr.mxu0 0.0
    %7457 = vmatpush1.xpose.msra.mxu0 0.0
    %7458 = vmatprep.subr.mxu0 0.0
    %7459 = vmatpush1.xpose.msra.mxu0 0.0
    %7460 = vmatprep.subr.mxu0 0.0
    %7461 = vmatpush1.xpose.msra.mxu0 0.0
    %7462 = vmatprep.subr.mxu0 0.0
    %7463 = vmatpush1.xpose.msra.mxu0 0.0
    %7464 = vmatprep.subr.mxu0 0.0
    %7465 = vmatpush1.xpose.msra.mxu0 0.0
    %7466 = vmatprep.subr.mxu0 0.0
    %7467 = vmatpush1.xpose.msra.mxu0 0.0
    %7468 = vmatprep.subr.mxu0 0.0
    %7469 = vmatpush1.xpose.msra.mxu0 0.0
    %7470 = vmatprep.subr.mxu0 0.0
    %7471 = vmatpush1.xpose.msra.mxu0 0.0
    %7472 = vmatprep.subr.mxu0 0.0
    %7473 = vmatpush1.xpose.msra.mxu0 0.0
    %7474 = vmatprep.subr.mxu0 0.0
    %7475 = vmatpush1.xpose.msra.mxu0 0.0
    %7476 = vmatprep.subr.mxu0 0.0
    %7477 = vmatpush1.xpose.msra.mxu0 0.0
    %7478 = vmatprep.subr.mxu0 0.0
    %7479 = vmatpush1.xpose.msra.mxu0 0.0
    %7480 = vmatprep.subr.mxu0 0.0
    %7481 = vmatpush1.xpose.msra.mxu0 0.0
    %7482 = vmatprep.subr.mxu0 0.0
    %7483 = vmatpush1.xpose.msra.mxu0 0.0
    %7484 = vmatprep.subr.mxu0 0.0
    %7485 = vmatpush1.xpose.msra.mxu0 0.0
    %7486 = vmatprep.mubr.f32.mxu0 0.0
    %7487 = vmatmul.mubr.f32.gmra.mrb[0].mxu0 %v7402
    %v7488 = vpop.f32.mrb[0].mxu0
    %v7489 = vadd.f32 %v236, %v7488
    %v7490 = vpop.f32.mrb[0].mxu0
    %7491 = vmatprep.mubr.f32.mxu0 0.0
    %7492 = vmatmul.mubr.f32.gmra.mrb[0].mxu0 %v7404
    %v7493 = vpop.f32.mrb[0].mxu0
    %v7494 = vadd.f32 %v237, %v7493
    %v7495 = vpop.f32.mrb[0].mxu0
    %7496 = vmatprep.mubr.f32.mxu0 0.0
    %7497 = vmatmul.mubr.f32.gmra.mrb[0].mxu0 %v7406
    %v7498 = vpop.f32.mrb[0].mxu0
    %v7499 = vadd.f32 %v238, %v7498
    %v7500 = vpop.f32.mrb[0].mxu0
    %7501 = vmatprep.mubr.f32.mxu0 0.0
    %7502 = vmatmul.mubr.f32.gmra.mrb[0].mxu0 %v7408
    %v7503 = vpop.f32.mrb[0].mxu0
    %v7504 = vadd.f32 %v239, %v7503
    %v7505 = vpop.f32.mrb[0].mxu0
    %7506 = vmatprep.mubr.f32.mxu0 0.0
    %7507 = vmatmul.mubr.f32.gmra.mrb[0].mxu0 %v7410
    %v7508 = vpop.f32.mrb[0].mxu0
    %v7509 = vadd.f32 %v240, %v7508
    %v7510 = vpop.f32.mrb[0].mxu0
    %7511 = vdwg.mxu0
    %v7512 = vsel %vm566, %v7489, -inf
    %7513 = vmax.xlane.f32.xlu0 %v7512
    %v7514 = vpop.xlane.xlu0 %7513
    %v7515 = vsel %vm566, %v7494, -inf
    %7516 = vmax.xlane.f32.xlu0 %v7515
    %v7517 = vpop.xlane.xlu0 %7516
    %v7518 = vsel %vm566, %v7499, -inf
    %7519 = vmax.xlane.f32.xlu0 %v7518
    %v7520 = vpop.xlane.xlu0 %7519
    %v7521 = vsel %vm566, %v7504, -inf
    %7522 = vmax.xlane.f32.xlu0 %v7521
    %v7523 = vpop.xlane.xlu0 %7522
    %v7524 = vsel %vm579, %v7509, -inf
    %7525 = vmax.xlane.f32.xlu0 %v7524
    %v7526 = vpop.xlane.xlu0 %7525
    %v7527 = vsub.f32 %v7489, %v7514
    %v7528 = vsub.f32 %v7494, %v7517
    %v7529 = vsub.f32 %v7499, %v7520
    %v7530 = vsub.f32 %v7504, %v7523
    %v7531 = vsub.f32 %v7509, %v7526
    %v7532 = vmul.f32 %v7527, 1.442695
    %v7533 = vpow.pop %v7532
    %v7534 = vmul.f32 %v7528, 1.442695
    %v7535 = vpow.pop %v7534
    %v7536 = vmul.f32 %v7529, 1.442695
    %v7537 = vpow.pop %v7536
    %v7538 = vmul.f32 %v7530, 1.442695
    %v7539 = vpow.pop %v7538
    %v7540 = vmul.f32 %v7531, 1.442695
    %v7541 = vpow.pop %v7540
    %v7542 = vsel %vm566, %v7533, 0.0
    %7543 = vadd.xlane.f32.xlu0 %v7542
    %v7544 = vpop.xlane.xlu0 %7543
    %v7545 = vsel %vm566, %v7535, 0.0
    %7546 = vadd.xlane.f32.xlu0 %v7545
    %v7547 = vpop.xlane.xlu0 %7546
    %v7548 = vsel %vm566, %v7537, 0.0
    %7549 = vadd.xlane.f32.xlu0 %v7548
    %v7550 = vpop.xlane.xlu0 %7549
    %v7551 = vsel %vm566, %v7539, 0.0
    %7552 = vadd.xlane.f32.xlu0 %v7551
    %v7553 = vpop.xlane.xlu0 %7552
    %v7554 = vsel %vm579, %v7541, 0.0
    %7555 = vadd.xlane.f32.xlu0 %v7554
    %v7556 = vpop.xlane.xlu0 %7555
    %v7557 = vrcp.pop %v7544
    %v7558 = vrcp.pop %v7547
    %v7559 = vrcp.pop %v7550
    %v7560 = vrcp.pop %v7553
    %v7561 = vrcp.pop %v7556
    %v7562 = vmul.f32 %v7533, %v7557
    %v7563 = vmul.f32 %v7535, %v7558
    %v7564 = vmul.f32 %v7537, %v7559
    %v7565 = vmul.f32 %v7539, %v7560
    %v7566 = vmul.f32 %v7541, %v7561
    %7567 = vrot.lane.b32.xlu0 %v7360, 64
    %v7568 = vpop.permute.xlu0 %7567
    %7569 = vrot.lane.b32.xlu0 %v7365, 64
    %v7570 = vpop.permute.xlu0 %7569
    %7571 = vrot.lane.b32.xlu0 %v7370, 64
    %v7572 = vpop.permute.xlu0 %7571
    %7573 = vrot.lane.b32.xlu0 %v7375, 64
    %v7574 = vpop.permute.xlu0 %7573
    %7575 = vrot.lane.b32.xlu0 %v7380, 64
    %v7576 = vpop.permute.xlu0 %7575
    %v7582 = vsel %vm566, %v7562, 0
    %v7585 = vsel %vm566, %v7563, 0
    %v7588 = vsel %vm566, %v7564, 0
    %v7591 = vsel %vm566, %v7565, 0
    %v7594 = vsel %vm566, %v7566, 0
    %v7596 = vsel %vm652, %v7576, 0
    %7598 = vmatprep.subr.mxu0 0.0
    %7599 = vmatpush1.msra.mxu0 %v7568
    %7600 = vmatprep.subr.mxu0 0.0
    %7601 = vmatpush1.msra.mxu0 %v7570
    %7602 = vmatprep.subr.mxu0 0.0
    %7603 = vmatpush1.msra.mxu0 %v7572
    %7604 = vmatprep.subr.mxu0 0.0
    %7605 = vmatpush1.msra.mxu0 %v7574
    %7606 = vmatprep.subr.mxu0 0.0
    %7607 = vmatpush1.msra.mxu0 %v7596
    %7608 = vmatprep.subr.mxu0 0.0
    %7609 = vmatpush1.msra.mxu0 0.0
    %7610 = vmatprep.subr.mxu0 0.0
    %7611 = vmatpush1.msra.mxu0 0.0
    %7612 = vmatprep.subr.mxu0 0.0
    %7613 = vmatpush1.msra.mxu0 0.0
    %7614 = vmatprep.subr.mxu0 0.0
    %7615 = vmatpush1.msra.mxu0 0.0
    %7616 = vmatprep.subr.mxu0 0.0
    %7617 = vmatpush1.msra.mxu0 0.0
    %7618 = vmatprep.subr.mxu0 0.0
    %7619 = vmatpush1.msra.mxu0 0.0
    %7620 = vmatprep.subr.mxu0 0.0
    %7621 = vmatpush1.msra.mxu0 0.0
    %7622 = vmatprep.subr.mxu0 0.0
    %7623 = vmatpush1.msra.mxu0 0.0
    %7624 = vmatprep.subr.mxu0 0.0
    %7625 = vmatpush1.msra.mxu0 0.0
    %7626 = vmatprep.subr.mxu0 0.0
    %7627 = vmatpush1.msra.mxu0 0.0
    %7628 = vmatprep.subr.mxu0 0.0
    %7629 = vmatpush1.msra.mxu0 0.0
    %7630 = vmatprep.subr.mxu0 0.0
    %7631 = vmatpush1.msra.mxu0 0.0
    %7632 = vmatprep.subr.mxu0 0.0
    %7633 = vmatpush1.msra.mxu0 0.0
    %7634 = vmatprep.subr.mxu0 0.0
    %7635 = vmatpush1.msra.mxu0 0.0
    %7636 = vmatprep.subr.mxu0 0.0
    %7637 = vmatpush1.msra.mxu0 0.0
    %7638 = vmatprep.subr.mxu0 0.0
    %7639 = vmatpush1.msra.mxu0 0.0
    %7640 = vmatprep.subr.mxu0 0.0
    %7641 = vmatpush1.msra.mxu0 0.0
    %7642 = vmatprep.subr.mxu0 0.0
    %7643 = vmatpush1.msra.mxu0 0.0
    %7644 = vmatprep.subr.mxu0 0.0
    %7645 = vmatpush1.msra.mxu0 0.0
    %7646 = vmatprep.subr.mxu0 0.0
    %7647 = vmatpush1.msra.mxu0 0.0
    %7648 = vmatprep.subr.mxu0 0.0
    %7649 = vmatpush1.msra.mxu0 0.0
    %7650 = vmatprep.subr.mxu0 0.0
    %7651 = vmatpush1.msra.mxu0 0.0
    %7652 = vmatprep.subr.mxu0 0.0
    %7653 = vmatpush1.msra.mxu0 0.0
    %7654 = vmatprep.subr.mxu0 0.0
    %7655 = vmatpush1.msra.mxu0 0.0
    %7656 = vmatprep.subr.mxu0 0.0
    %7657 = vmatpush1.msra.mxu0 0.0
    %7658 = vmatprep.subr.mxu0 0.0
    %7659 = vmatpush1.msra.mxu0 0.0
    %7660 = vmatprep.subr.mxu0 0.0
    %7661 = vmatpush1.msra.mxu0 0.0
    %7662 = vmatprep.mubr.f32.mxu0 0.0
    %7663 = vmatmul.mubr.f32.gmra.mrb[0].mxu0 %v7582
    %v7664 = vpop.f32.mrb[0].mxu0
    %v7665 = vadd.f32 0.0, %v7664
    %v7666 = vpop.f32.mrb[0].mxu0
    %7667 = vmatprep.mubr.f32.mxu0 0.0
    %7668 = vmatmul.mubr.f32.gmra.mrb[0].mxu0 %v7585
    %v7669 = vpop.f32.mrb[0].mxu0
    %v7670 = vadd.f32 0.0, %v7669
    %v7671 = vpop.f32.mrb[0].mxu0
    %7672 = vmatprep.mubr.f32.mxu0 0.0
    %7673 = vmatmul.mubr.f32.gmra.mrb[0].mxu0 %v7588
    %v7674 = vpop.f32.mrb[0].mxu0
    %v7675 = vadd.f32 0.0, %v7674
    %v7676 = vpop.f32.mrb[0].mxu0
    %7677 = vmatprep.mubr.f32.mxu0 0.0
    %7678 = vmatmul.mubr.f32.gmra.mrb[0].mxu0 %v7591
    %v7679 = vpop.f32.mrb[0].mxu0
    %v7680 = vadd.f32 0.0, %v7679
    %v7681 = vpop.f32.mrb[0].mxu0
    %7682 = vmatprep.mubr.f32.mxu0 0.0
    %7683 = vmatmul.mubr.f32.gmra.mrb[0].mxu0 %v7594
    %v7684 = vpop.f32.mrb[0].mxu0
    %v7685 = vadd.f32 0.0, %v7684
    %v7686 = vpop.f32.mrb[0].mxu0
    %7687 = vdwg.mxu0
    %7688 = vrot.lane.b32.xlu0 %v7360, 120
    %v7689 = vpop.permute.xlu0 %7688
    %7690 = vrot.lane.b32.xlu0 %v7365, 120
    %v7691 = vpop.permute.xlu0 %7690
    %7692 = vrot.lane.b32.xlu0 %v7370, 120
    %v7693 = vpop.permute.xlu0 %7692
    %7694 = vrot.lane.b32.xlu0 %v7375, 120
    %v7695 = vpop.permute.xlu0 %7694
    %7696 = vrot.lane.b32.xlu0 %v7380, 120
    %v7697 = vpop.permute.xlu0 %7696
    %7698 = vrot.lane.b32.xlu0 %v7360, 88
    %v7699 = vpop.permute.xlu0 %7698
    %7700 = vrot.lane.b32.xlu0 %v7365, 88
    %v7701 = vpop.permute.xlu0 %7700
    %7702 = vrot.lane.b32.xlu0 %v7370, 88
    %v7703 = vpop.permute.xlu0 %7702
    %7704 = vrot.lane.b32.xlu0 %v7375, 88
    %v7705 = vpop.permute.xlu0 %7704
    %7706 = vrot.lane.b32.xlu0 %v7380, 88
    %v7707 = vpop.permute.xlu0 %7706
    %v7708 = vsel %vm455, %v7689, 0
    %v7710 = vsel %vm455, %v7691, 0
    %v7712 = vsel %vm455, %v7693, 0
    %v7714 = vsel %vm455, %v7695, 0
    %v7716 = vsel %vm455, %v7697, 0
    %v7718 = vsel %vm455, %v7699, 0
    %v7720 = vsel %vm455, %v7701, 0
    %v7722 = vsel %vm455, %v7703, 0
    %v7724 = vsel %vm455, %v7705, 0
    %v7726 = vsel %vm455, %v7707, 0
    %7728 = vmatprep.subr.mxu0 0.0
    %7729 = vmatpush1.xpose.msra.mxu0 %v7718
    %7730 = vmatprep.subr.mxu0 0.0
    %7731 = vmatpush1.xpose.msra.mxu0 %v7720
    %7732 = vmatprep.subr.mxu0 0.0
    %7733 = vmatpush1.xpose.msra.mxu0 %v7722
    %7734 = vmatprep.subr.mxu0 0.0
    %7735 = vmatpush1.xpose.msra.mxu0 %v7724
    %7736 = vmatprep.subr.mxu0 0.0
    %7737 = vmatpush1.xpose.msra.mxu0 %v7726
    %7738 = vmatprep.subr.mxu0 0.0
    %7739 = vmatpush1.xpose.msra.mxu0 0.0
    %7740 = vmatprep.subr.mxu0 0.0
    %7741 = vmatpush1.xpose.msra.mxu0 0.0
    %7742 = vmatprep.subr.mxu0 0.0
    %7743 = vmatpush1.xpose.msra.mxu0 0.0
    %7744 = vmatprep.subr.mxu0 0.0
    %7745 = vmatpush1.xpose.msra.mxu0 0.0
    %7746 = vmatprep.subr.mxu0 0.0
    %7747 = vmatpush1.xpose.msra.mxu0 0.0
    %7748 = vmatprep.subr.mxu0 0.0
    %7749 = vmatpush1.xpose.msra.mxu0 0.0
    %7750 = vmatprep.subr.mxu0 0.0
    %7751 = vmatpush1.xpose.msra.mxu0 0.0
    %7752 = vmatprep.subr.mxu0 0.0
    %7753 = vmatpush1.xpose.msra.mxu0 0.0
    %7754 = vmatprep.subr.mxu0 0.0
    %7755 = vmatpush1.xpose.msra.mxu0 0.0
    %7756 = vmatprep.subr.mxu0 0.0
    %7757 = vmatpush1.xpose.msra.mxu0 0.0
    %7758 = vmatprep.subr.mxu0 0.0
    %7759 = vmatpush1.xpose.msra.mxu0 0.0
    %7760 = vmatprep.subr.mxu0 0.0
    %7761 = vmatpush1.xpose.msra.mxu0 0.0
    %7762 = vmatprep.subr.mxu0 0.0
    %7763 = vmatpush1.xpose.msra.mxu0 0.0
    %7764 = vmatprep.subr.mxu0 0.0
    %7765 = vmatpush1.xpose.msra.mxu0 0.0
    %7766 = vmatprep.subr.mxu0 0.0
    %7767 = vmatpush1.xpose.msra.mxu0 0.0
    %7768 = vmatprep.subr.mxu0 0.0
    %7769 = vmatpush1.xpose.msra.mxu0 0.0
    %7770 = vmatprep.subr.mxu0 0.0
    %7771 = vmatpush1.xpose.msra.mxu0 0.0
    %7772 = vmatprep.subr.mxu0 0.0
    %7773 = vmatpush1.xpose.msra.mxu0 0.0
    %7774 = vmatprep.subr.mxu0 0.0
    %7775 = vmatpush1.xpose.msra.mxu0 0.0
    %7776 = vmatprep.subr.mxu0 0.0
    %7777 = vmatpush1.xpose.msra.mxu0 0.0
    %7778 = vmatprep.subr.mxu0 0.0
    %7779 = vmatpush1.xpose.msra.mxu0 0.0
    %7780 = vmatprep.subr.mxu0 0.0
    %7781 = vmatpush1.xpose.msra.mxu0 0.0
    %7782 = vmatprep.subr.mxu0 0.0
    %7783 = vmatpush1.xpose.msra.mxu0 0.0
    %7784 = vmatprep.subr.mxu0 0.0
    %7785 = vmatpush1.xpose.msra.mxu0 0.0
    %7786 = vmatprep.subr.mxu0 0.0
    %7787 = vmatpush1.xpose.msra.mxu0 0.0
    %7788 = vmatprep.subr.mxu0 0.0
    %7789 = vmatpush1.xpose.msra.mxu0 0.0
    %7790 = vmatprep.subr.mxu0 0.0
    %7791 = vmatpush1.xpose.msra.mxu0 0.0
    %7792 = vmatprep.mubr.f32.mxu0 0.0
    %7793 = vmatmul.mubr.f32.gmra.mrb[0].mxu0 %v7708
    %v7794 = vpop.f32.mrb[0].mxu0
    %v7795 = vadd.f32 %v236, %v7794
    %v7796 = vpop.f32.mrb[0].mxu0
    %7797 = vmatprep.mubr.f32.mxu0 0.0
    %7798 = vmatmul.mubr.f32.gmra.mrb[0].mxu0 %v7710
    %v7799 = vpop.f32.mrb[0].mxu0
    %v7800 = vadd.f32 %v237, %v7799
    %v7801 = vpop.f32.mrb[0].mxu0
    %7802 = vmatprep.mubr.f32.mxu0 0.0
    %7803 = vmatmul.mubr.f32.gmra.mrb[0].mxu0 %v7712
    %v7804 = vpop.f32.mrb[0].mxu0
    %v7805 = vadd.f32 %v238, %v7804
    %v7806 = vpop.f32.mrb[0].mxu0
    %7807 = vmatprep.mubr.f32.mxu0 0.0
    %7808 = vmatmul.mubr.f32.gmra.mrb[0].mxu0 %v7714
    %v7809 = vpop.f32.mrb[0].mxu0
    %v7810 = vadd.f32 %v239, %v7809
    %v7811 = vpop.f32.mrb[0].mxu0
    %7812 = vmatprep.mubr.f32.mxu0 0.0
    %7813 = vmatmul.mubr.f32.gmra.mrb[0].mxu0 %v7716
    %v7814 = vpop.f32.mrb[0].mxu0
    %v7815 = vadd.f32 %v240, %v7814
    %v7816 = vpop.f32.mrb[0].mxu0
    %7817 = vdwg.mxu0
    %v7818 = vsel %vm566, %v7795, -inf
    %7819 = vmax.xlane.f32.xlu0 %v7818
    %v7820 = vpop.xlane.xlu0 %7819
    %v7821 = vsel %vm566, %v7800, -inf
    %7822 = vmax.xlane.f32.xlu0 %v7821
    %v7823 = vpop.xlane.xlu0 %7822
    %v7824 = vsel %vm566, %v7805, -inf
    %7825 = vmax.xlane.f32.xlu0 %v7824
    %v7826 = vpop.xlane.xlu0 %7825
    %v7827 = vsel %vm566, %v7810, -inf
    %7828 = vmax.xlane.f32.xlu0 %v7827
    %v7829 = vpop.xlane.xlu0 %7828
    %v7830 = vsel %vm579, %v7815, -inf
    %7831 = vmax.xlane.f32.xlu0 %v7830
    %v7832 = vpop.xlane.xlu0 %7831
    %v7833 = vsub.f32 %v7795, %v7820
    %v7834 = vsub.f32 %v7800, %v7823
    %v7835 = vsub.f32 %v7805, %v7826
    %v7836 = vsub.f32 %v7810, %v7829
    %v7837 = vsub.f32 %v7815, %v7832
    %v7838 = vmul.f32 %v7833, 1.442695
    %v7839 = vpow.pop %v7838
    %v7840 = vmul.f32 %v7834, 1.442695
    %v7841 = vpow.pop %v7840
    %v7842 = vmul.f32 %v7835, 1.442695
    %v7843 = vpow.pop %v7842
    %v7844 = vmul.f32 %v7836, 1.442695
    %v7845 = vpow.pop %v7844
    %v7846 = vmul.f32 %v7837, 1.442695
    %v7847 = vpow.pop %v7846
    %v7848 = vsel %vm566, %v7839, 0.0
    %7849 = vadd.xlane.f32.xlu0 %v7848
    %v7850 = vpop.xlane.xlu0 %7849
    %v7851 = vsel %vm566, %v7841, 0.0
    %7852 = vadd.xlane.f32.xlu0 %v7851
    %v7853 = vpop.xlane.xlu0 %7852
    %v7854 = vsel %vm566, %v7843, 0.0
    %7855 = vadd.xlane.f32.xlu0 %v7854
    %v7856 = vpop.xlane.xlu0 %7855
    %v7857 = vsel %vm566, %v7845, 0.0
    %7858 = vadd.xlane.f32.xlu0 %v7857
    %v7859 = vpop.xlane.xlu0 %7858
    %v7860 = vsel %vm579, %v7847, 0.0
    %7861 = vadd.xlane.f32.xlu0 %v7860
    %v7862 = vpop.xlane.xlu0 %7861
    %v7863 = vrcp.pop %v7850
    %v7864 = vrcp.pop %v7853
    %v7865 = vrcp.pop %v7856
    %v7866 = vrcp.pop %v7859
    %v7867 = vrcp.pop %v7862
    %v7868 = vmul.f32 %v7839, %v7863
    %v7869 = vmul.f32 %v7841, %v7864
    %v7870 = vmul.f32 %v7843, %v7865
    %v7871 = vmul.f32 %v7845, %v7866
    %v7872 = vmul.f32 %v7847, %v7867
    %7873 = vrot.lane.b32.xlu0 %v7360, 56
    %v7874 = vpop.permute.xlu0 %7873
    %7875 = vrot.lane.b32.xlu0 %v7365, 56
    %v7876 = vpop.permute.xlu0 %7875
    %7877 = vrot.lane.b32.xlu0 %v7370, 56
    %v7878 = vpop.permute.xlu0 %7877
    %7879 = vrot.lane.b32.xlu0 %v7375, 56
    %v7880 = vpop.permute.xlu0 %7879
    %7881 = vrot.lane.b32.xlu0 %v7380, 56
    %v7882 = vpop.permute.xlu0 %7881
    %v7888 = vsel %vm566, %v7868, 0
    %v7891 = vsel %vm566, %v7869, 0
    %v7894 = vsel %vm566, %v7870, 0
    %v7897 = vsel %vm566, %v7871, 0
    %v7900 = vsel %vm566, %v7872, 0
    %v7902 = vsel %vm652, %v7882, 0
    %7904 = vmatprep.subr.mxu0 0.0
    %7905 = vmatpush1.msra.mxu0 %v7874
    %7906 = vmatprep.subr.mxu0 0.0
    %7907 = vmatpush1.msra.mxu0 %v7876
    %7908 = vmatprep.subr.mxu0 0.0
    %7909 = vmatpush1.msra.mxu0 %v7878
    %7910 = vmatprep.subr.mxu0 0.0
    %7911 = vmatpush1.msra.mxu0 %v7880
    %7912 = vmatprep.subr.mxu0 0.0
    %7913 = vmatpush1.msra.mxu0 %v7902
    %7914 = vmatprep.subr.mxu0 0.0
    %7915 = vmatpush1.msra.mxu0 0.0
    %7916 = vmatprep.subr.mxu0 0.0
    %7917 = vmatpush1.msra.mxu0 0.0
    %7918 = vmatprep.subr.mxu0 0.0
    %7919 = vmatpush1.msra.mxu0 0.0
    %7920 = vmatprep.subr.mxu0 0.0
    %7921 = vmatpush1.msra.mxu0 0.0
    %7922 = vmatprep.subr.mxu0 0.0
    %7923 = vmatpush1.msra.mxu0 0.0
    %7924 = vmatprep.subr.mxu0 0.0
    %7925 = vmatpush1.msra.mxu0 0.0
    %7926 = vmatprep.subr.mxu0 0.0
    %7927 = vmatpush1.msra.mxu0 0.0
    %7928 = vmatprep.subr.mxu0 0.0
    %7929 = vmatpush1.msra.mxu0 0.0
    %7930 = vmatprep.subr.mxu0 0.0
    %7931 = vmatpush1.msra.mxu0 0.0
    %7932 = vmatprep.subr.mxu0 0.0
    %7933 = vmatpush1.msra.mxu0 0.0
    %7934 = vmatprep.subr.mxu0 0.0
    %7935 = vmatpush1.msra.mxu0 0.0
    %7936 = vmatprep.subr.mxu0 0.0
    %7937 = vmatpush1.msra.mxu0 0.0
    %7938 = vmatprep.subr.mxu0 0.0
    %7939 = vmatpush1.msra.mxu0 0.0
    %7940 = vmatprep.subr.mxu0 0.0
    %7941 = vmatpush1.msra.mxu0 0.0
    %7942 = vmatprep.subr.mxu0 0.0
    %7943 = vmatpush1.msra.mxu0 0.0
    %7944 = vmatprep.subr.mxu0 0.0
    %7945 = vmatpush1.msra.mxu0 0.0
    %7946 = vmatprep.subr.mxu0 0.0
    %7947 = vmatpush1.msra.mxu0 0.0
    %7948 = vmatprep.subr.mxu0 0.0
    %7949 = vmatpush1.msra.mxu0 0.0
    %7950 = vmatprep.subr.mxu0 0.0
    %7951 = vmatpush1.msra.mxu0 0.0
    %7952 = vmatprep.subr.mxu0 0.0
    %7953 = vmatpush1.msra.mxu0 0.0
    %7954 = vmatprep.subr.mxu0 0.0
    %7955 = vmatpush1.msra.mxu0 0.0
    %7956 = vmatprep.subr.mxu0 0.0
    %7957 = vmatpush1.msra.mxu0 0.0
    %7958 = vmatprep.subr.mxu0 0.0
    %7959 = vmatpush1.msra.mxu0 0.0
    %7960 = vmatprep.subr.mxu0 0.0
    %7961 = vmatpush1.msra.mxu0 0.0
    %7962 = vmatprep.subr.mxu0 0.0
    %7963 = vmatpush1.msra.mxu0 0.0
    %7964 = vmatprep.subr.mxu0 0.0
    %7965 = vmatpush1.msra.mxu0 0.0
    %7966 = vmatprep.subr.mxu0 0.0
    %7967 = vmatpush1.msra.mxu0 0.0
    %7968 = vmatprep.mubr.f32.mxu0 0.0
    %7969 = vmatmul.mubr.f32.gmra.mrb[0].mxu0 %v7888
    %v7970 = vpop.f32.mrb[0].mxu0
    %v7971 = vadd.f32 0.0, %v7970
    %v7972 = vpop.f32.mrb[0].mxu0
    %7973 = vmatprep.mubr.f32.mxu0 0.0
    %7974 = vmatmul.mubr.f32.gmra.mrb[0].mxu0 %v7891
    %v7975 = vpop.f32.mrb[0].mxu0
    %v7976 = vadd.f32 0.0, %v7975
    %v7977 = vpop.f32.mrb[0].mxu0
    %7978 = vmatprep.mubr.f32.mxu0 0.0
    %7979 = vmatmul.mubr.f32.gmra.mrb[0].mxu0 %v7894
    %v7980 = vpop.f32.mrb[0].mxu0
    %v7981 = vadd.f32 0.0, %v7980
    %v7982 = vpop.f32.mrb[0].mxu0
    %7983 = vmatprep.mubr.f32.mxu0 0.0
    %7984 = vmatmul.mubr.f32.gmra.mrb[0].mxu0 %v7897
    %v7985 = vpop.f32.mrb[0].mxu0
    %v7986 = vadd.f32 0.0, %v7985
    %v7987 = vpop.f32.mrb[0].mxu0
    %7988 = vmatprep.mubr.f32.mxu0 0.0
    %7989 = vmatmul.mubr.f32.gmra.mrb[0].mxu0 %v7900
    %v7990 = vpop.f32.mrb[0].mxu0
    %v7991 = vadd.f32 0.0, %v7990
    %v7992 = vpop.f32.mrb[0].mxu0
    %7993 = vdwg.mxu0
    %v7995 = vsel %vm455, %v7971, 0
    %v7998 = vsel %vm455, %v7976, 0
    %v8001 = vsel %vm455, %v7981, 0
    %v8004 = vsel %vm455, %v7986, 0
    %v8007 = vsel %vm455, %v7991, 0
    %8009 = vmatprep.subr.mxu0 0.0
    %8010 = vmatpush1.msra.mxu0 %v7384
    %8011 = vmatprep.subr.mxu0 0.0
    %8012 = vmatpush1.msra.mxu0 0.0
    %8013 = vmatprep.subr.mxu0 0.0
    %8014 = vmatpush1.msra.mxu0 0.0
    %8015 = vmatprep.subr.mxu0 0.0
    %8016 = vmatpush1.msra.mxu0 0.0
    %8017 = vmatprep.subr.mxu0 0.0
    %8018 = vmatpush1.msra.mxu0 0.0
    %8019 = vmatprep.subr.mxu0 0.0
    %8020 = vmatpush1.msra.mxu0 0.0
    %8021 = vmatprep.subr.mxu0 0.0
    %8022 = vmatpush1.msra.mxu0 0.0
    %8023 = vmatprep.subr.mxu0 0.0
    %8024 = vmatpush1.msra.mxu0 0.0
    %8025 = vmatprep.subr.mxu0 0.0
    %8026 = vmatpush1.msra.mxu0 0.0
    %8027 = vmatprep.subr.mxu0 0.0
    %8028 = vmatpush1.msra.mxu0 0.0
    %8029 = vmatprep.subr.mxu0 0.0
    %8030 = vmatpush1.msra.mxu0 0.0
    %8031 = vmatprep.subr.mxu0 0.0
    %8032 = vmatpush1.msra.mxu0 0.0
    %8033 = vmatprep.subr.mxu0 0.0
    %8034 = vmatpush1.msra.mxu0 0.0
    %8035 = vmatprep.subr.mxu0 0.0
    %8036 = vmatpush1.msra.mxu0 0.0
    %8037 = vmatprep.subr.mxu0 0.0
    %8038 = vmatpush1.msra.mxu0 0.0
    %8039 = vmatprep.subr.mxu0 0.0
    %8040 = vmatpush1.msra.mxu0 0.0
    %8041 = vmatprep.subr.mxu0 0.0
    %8042 = vmatpush1.msra.mxu0 0.0
    %8043 = vmatprep.subr.mxu0 0.0
    %8044 = vmatpush1.msra.mxu0 0.0
    %8045 = vmatprep.subr.mxu0 0.0
    %8046 = vmatpush1.msra.mxu0 0.0
    %8047 = vmatprep.subr.mxu0 0.0
    %8048 = vmatpush1.msra.mxu0 0.0
    %8049 = vmatprep.subr.mxu0 0.0
    %8050 = vmatpush1.msra.mxu0 0.0
    %8051 = vmatprep.subr.mxu0 0.0
    %8052 = vmatpush1.msra.mxu0 0.0
    %8053 = vmatprep.subr.mxu0 0.0
    %8054 = vmatpush1.msra.mxu0 0.0
    %8055 = vmatprep.subr.mxu0 0.0
    %8056 = vmatpush1.msra.mxu0 0.0
    %8057 = vmatprep.subr.mxu0 0.0
    %8058 = vmatpush1.msra.mxu0 0.0
    %8059 = vmatprep.subr.mxu0 0.0
    %8060 = vmatpush1.msra.mxu0 0.0
    %8061 = vmatprep.subr.mxu0 0.0
    %8062 = vmatpush1.msra.mxu0 0.0
    %8063 = vmatprep.subr.mxu0 0.0
    %8064 = vmatpush1.msra.mxu0 0.0
    %8065 = vmatprep.subr.mxu0 0.0
    %8066 = vmatpush1.msra.mxu0 0.0
    %8067 = vmatprep.subr.mxu0 0.0
    %8068 = vmatpush1.msra.mxu0 0.0
    %8069 = vmatprep.subr.mxu0 0.0
    %8070 = vmatpush1.msra.mxu0 0.0
    %8071 = vmatprep.subr.mxu0 0.0
    %8072 = vmatpush1.msra.mxu0 0.0
    %8073 = vmatprep.mubr.f32.mxu0 0.0
    %8074 = vmatmul.mubr.f32.gmra.mrb[0].mxu0 %v7995
    %v8075 = vpop.f32.mrb[0].mxu0
    %v8076 = vadd.f32 0.0, %v8075
    %v8077 = vpop.f32.mrb[0].mxu0
    %8078 = vmatprep.mubr.f32.mxu0 0.0
    %8079 = vmatmul.mubr.f32.gmra.mrb[0].mxu0 %v7998
    %v8080 = vpop.f32.mrb[0].mxu0
    %v8081 = vadd.f32 0.0, %v8080
    %v8082 = vpop.f32.mrb[0].mxu0
    %8083 = vmatprep.mubr.f32.mxu0 0.0
    %8084 = vmatmul.mubr.f32.gmra.mrb[0].mxu0 %v8001
    %v8085 = vpop.f32.mrb[0].mxu0
    %v8086 = vadd.f32 0.0, %v8085
    %v8087 = vpop.f32.mrb[0].mxu0
    %8088 = vmatprep.mubr.f32.mxu0 0.0
    %8089 = vmatmul.mubr.f32.gmra.mrb[0].mxu0 %v8004
    %v8090 = vpop.f32.mrb[0].mxu0
    %v8091 = vadd.f32 0.0, %v8090
    %v8092 = vpop.f32.mrb[0].mxu0
    %8093 = vmatprep.mubr.f32.mxu0 0.0
    %8094 = vmatmul.mubr.f32.gmra.mrb[0].mxu0 %v8007
    %v8095 = vpop.f32.mrb[0].mxu0
    %v8096 = vadd.f32 0.0, %v8095
    %v8097 = vpop.f32.mrb[0].mxu0
    %8098 = vdwg.mxu0
    %v8100 = vsel %vm455, %v7665, 0
    %v8103 = vsel %vm455, %v7670, 0
    %v8106 = vsel %vm455, %v7675, 0
    %v8109 = vsel %vm455, %v7680, 0
    %v8112 = vsel %vm455, %v7685, 0
    %8114 = vmatprep.subr.mxu0 0.0
    %8115 = vmatpush1.msra.mxu0 %v7383
    %8116 = vmatprep.subr.mxu0 0.0
    %8117 = vmatpush1.msra.mxu0 0.0
    %8118 = vmatprep.subr.mxu0 0.0
    %8119 = vmatpush1.msra.mxu0 0.0
    %8120 = vmatprep.subr.mxu0 0.0
    %8121 = vmatpush1.msra.mxu0 0.0
    %8122 = vmatprep.subr.mxu0 0.0
    %8123 = vmatpush1.msra.mxu0 0.0
    %8124 = vmatprep.subr.mxu0 0.0
    %8125 = vmatpush1.msra.mxu0 0.0
    %8126 = vmatprep.subr.mxu0 0.0
    %8127 = vmatpush1.msra.mxu0 0.0
    %8128 = vmatprep.subr.mxu0 0.0
    %8129 = vmatpush1.msra.mxu0 0.0
    %8130 = vmatprep.subr.mxu0 0.0
    %8131 = vmatpush1.msra.mxu0 0.0
    %8132 = vmatprep.subr.mxu0 0.0
    %8133 = vmatpush1.msra.mxu0 0.0
    %8134 = vmatprep.subr.mxu0 0.0
    %8135 = vmatpush1.msra.mxu0 0.0
    %8136 = vmatprep.subr.mxu0 0.0
    %8137 = vmatpush1.msra.mxu0 0.0
    %8138 = vmatprep.subr.mxu0 0.0
    %8139 = vmatpush1.msra.mxu0 0.0
    %8140 = vmatprep.subr.mxu0 0.0
    %8141 = vmatpush1.msra.mxu0 0.0
    %8142 = vmatprep.subr.mxu0 0.0
    %8143 = vmatpush1.msra.mxu0 0.0
    %8144 = vmatprep.subr.mxu0 0.0
    %8145 = vmatpush1.msra.mxu0 0.0
    %8146 = vmatprep.subr.mxu0 0.0
    %8147 = vmatpush1.msra.mxu0 0.0
    %8148 = vmatprep.subr.mxu0 0.0
    %8149 = vmatpush1.msra.mxu0 0.0
    %8150 = vmatprep.subr.mxu0 0.0
    %8151 = vmatpush1.msra.mxu0 0.0
    %8152 = vmatprep.subr.mxu0 0.0
    %8153 = vmatpush1.msra.mxu0 0.0
    %8154 = vmatprep.subr.mxu0 0.0
    %8155 = vmatpush1.msra.mxu0 0.0
    %8156 = vmatprep.subr.mxu0 0.0
    %8157 = vmatpush1.msra.mxu0 0.0
    %8158 = vmatprep.subr.mxu0 0.0
    %8159 = vmatpush1.msra.mxu0 0.0
    %8160 = vmatprep.subr.mxu0 0.0
    %8161 = vmatpush1.msra.mxu0 0.0
    %8162 = vmatprep.subr.mxu0 0.0
    %8163 = vmatpush1.msra.mxu0 0.0
    %8164 = vmatprep.subr.mxu0 0.0
    %8165 = vmatpush1.msra.mxu0 0.0
    %8166 = vmatprep.subr.mxu0 0.0
    %8167 = vmatpush1.msra.mxu0 0.0
    %8168 = vmatprep.subr.mxu0 0.0
    %8169 = vmatpush1.msra.mxu0 0.0
    %8170 = vmatprep.subr.mxu0 0.0
    %8171 = vmatpush1.msra.mxu0 0.0
    %8172 = vmatprep.subr.mxu0 0.0
    %8173 = vmatpush1.msra.mxu0 0.0
    %8174 = vmatprep.subr.mxu0 0.0
    %8175 = vmatpush1.msra.mxu0 0.0
    %8176 = vmatprep.subr.mxu0 0.0
    %8177 = vmatpush1.msra.mxu0 0.0
    %8178 = vmatprep.mubr.f32.mxu0 0.0
    %8179 = vmatmul.mubr.f32.gmra.mrb[0].mxu0 %v8100
    %v8180 = vpop.f32.mrb[0].mxu0
    %v8181 = vadd.f32 %v8076, %v8180
    %v8182 = vpop.f32.mrb[0].mxu0
    %8183 = vmatprep.mubr.f32.mxu0 0.0
    %8184 = vmatmul.mubr.f32.gmra.mrb[0].mxu0 %v8103
    %v8185 = vpop.f32.mrb[0].mxu0
    %v8186 = vadd.f32 %v8081, %v8185
    %v8187 = vpop.f32.mrb[0].mxu0
    %8188 = vmatprep.mubr.f32.mxu0 0.0
    %8189 = vmatmul.mubr.f32.gmra.mrb[0].mxu0 %v8106
    %v8190 = vpop.f32.mrb[0].mxu0
    %v8191 = vadd.f32 %v8086, %v8190
    %v8192 = vpop.f32.mrb[0].mxu0
    %8193 = vmatprep.mubr.f32.mxu0 0.0
    %8194 = vmatmul.mubr.f32.gmra.mrb[0].mxu0 %v8109
    %v8195 = vpop.f32.mrb[0].mxu0
    %v8196 = vadd.f32 %v8091, %v8195
    %v8197 = vpop.f32.mrb[0].mxu0
    %8198 = vmatprep.mubr.f32.mxu0 0.0
    %8199 = vmatmul.mubr.f32.gmra.mrb[0].mxu0 %v8112
    %v8200 = vpop.f32.mrb[0].mxu0
    %v8201 = vadd.f32 %v8096, %v8200
    %v8202 = vpop.f32.mrb[0].mxu0
    %8203 = vdwg.mxu0
    %8204 = vrot.lane.b32.xlu0 %v7360, 112
    %v8205 = vpop.permute.xlu0 %8204
    %8206 = vrot.lane.b32.xlu0 %v7365, 112
    %v8207 = vpop.permute.xlu0 %8206
    %8208 = vrot.lane.b32.xlu0 %v7370, 112
    %v8209 = vpop.permute.xlu0 %8208
    %8210 = vrot.lane.b32.xlu0 %v7375, 112
    %v8211 = vpop.permute.xlu0 %8210
    %8212 = vrot.lane.b32.xlu0 %v7380, 112
    %v8213 = vpop.permute.xlu0 %8212
    %8214 = vrot.lane.b32.xlu0 %v7360, 80
    %v8215 = vpop.permute.xlu0 %8214
    %8216 = vrot.lane.b32.xlu0 %v7365, 80
    %v8217 = vpop.permute.xlu0 %8216
    %8218 = vrot.lane.b32.xlu0 %v7370, 80
    %v8219 = vpop.permute.xlu0 %8218
    %8220 = vrot.lane.b32.xlu0 %v7375, 80
    %v8221 = vpop.permute.xlu0 %8220
    %8222 = vrot.lane.b32.xlu0 %v7380, 80
    %v8223 = vpop.permute.xlu0 %8222
    %v8224 = vsel %vm455, %v8205, 0
    %v8226 = vsel %vm455, %v8207, 0
    %v8228 = vsel %vm455, %v8209, 0
    %v8230 = vsel %vm455, %v8211, 0
    %v8232 = vsel %vm455, %v8213, 0
    %v8234 = vsel %vm455, %v8215, 0
    %v8236 = vsel %vm455, %v8217, 0
    %v8238 = vsel %vm455, %v8219, 0
    %v8240 = vsel %vm455, %v8221, 0
    %v8242 = vsel %vm455, %v8223, 0
    %8244 = vmatprep.subr.mxu0 0.0
    %8245 = vmatpush1.xpose.msra.mxu0 %v8234
    %8246 = vmatprep.subr.mxu0 0.0
    %8247 = vmatpush1.xpose.msra.mxu0 %v8236
    %8248 = vmatprep.subr.mxu0 0.0
    %8249 = vmatpush1.xpose.msra.mxu0 %v8238
    %8250 = vmatprep.subr.mxu0 0.0
    %8251 = vmatpush1.xpose.msra.mxu0 %v8240
    %8252 = vmatprep.subr.mxu0 0.0
    %8253 = vmatpush1.xpose.msra.mxu0 %v8242
    %8254 = vmatprep.subr.mxu0 0.0
    %8255 = vmatpush1.xpose.msra.mxu0 0.0
    %8256 = vmatprep.subr.mxu0 0.0
    %8257 = vmatpush1.xpose.msra.mxu0 0.0
    %8258 = vmatprep.subr.mxu0 0.0
    %8259 = vmatpush1.xpose.msra.mxu0 0.0
    %8260 = vmatprep.subr.mxu0 0.0
    %8261 = vmatpush1.xpose.msra.mxu0 0.0
    %8262 = vmatprep.subr.mxu0 0.0
    %8263 = vmatpush1.xpose.msra.mxu0 0.0
    %8264 = vmatprep.subr.mxu0 0.0
    %8265 = vmatpush1.xpose.msra.mxu0 0.0
    %8266 = vmatprep.subr.mxu0 0.0
    %8267 = vmatpush1.xpose.msra.mxu0 0.0
    %8268 = vmatprep.subr.mxu0 0.0
    %8269 = vmatpush1.xpose.msra.mxu0 0.0
    %8270 = vmatprep.subr.mxu0 0.0
    %8271 = vmatpush1.xpose.msra.mxu0 0.0
    %8272 = vmatprep.subr.mxu0 0.0
    %8273 = vmatpush1.xpose.msra.mxu0 0.0
    %8274 = vmatprep.subr.mxu0 0.0
    %8275 = vmatpush1.xpose.msra.mxu0 0.0
    %8276 = vmatprep.subr.mxu0 0.0
    %8277 = vmatpush1.xpose.msra.mxu0 0.0
    %8278 = vmatprep.subr.mxu0 0.0
    %8279 = vmatpush1.xpose.msra.mxu0 0.0
    %8280 = vmatprep.subr.mxu0 0.0
    %8281 = vmatpush1.xpose.msra.mxu0 0.0
    %8282 = vmatprep.subr.mxu0 0.0
    %8283 = vmatpush1.xpose.msra.mxu0 0.0
    %8284 = vmatprep.subr.mxu0 0.0
    %8285 = vmatpush1.xpose.msra.mxu0 0.0
    %8286 = vmatprep.subr.mxu0 0.0
    %8287 = vmatpush1.xpose.msra.mxu0 0.0
    %8288 = vmatprep.subr.mxu0 0.0
    %8289 = vmatpush1.xpose.msra.mxu0 0.0
    %8290 = vmatprep.subr.mxu0 0.0
    %8291 = vmatpush1.xpose.msra.mxu0 0.0
    %8292 = vmatprep.subr.mxu0 0.0
    %8293 = vmatpush1.xpose.msra.mxu0 0.0
    %8294 = vmatprep.subr.mxu0 0.0
    %8295 = vmatpush1.xpose.msra.mxu0 0.0
    %8296 = vmatprep.subr.mxu0 0.0
    %8297 = vmatpush1.xpose.msra.mxu0 0.0
    %8298 = vmatprep.subr.mxu0 0.0
    %8299 = vmatpush1.xpose.msra.mxu0 0.0
    %8300 = vmatprep.subr.mxu0 0.0
    %8301 = vmatpush1.xpose.msra.mxu0 0.0
    %8302 = vmatprep.subr.mxu0 0.0
    %8303 = vmatpush1.xpose.msra.mxu0 0.0
    %8304 = vmatprep.subr.mxu0 0.0
    %8305 = vmatpush1.xpose.msra.mxu0 0.0
    %8306 = vmatprep.subr.mxu0 0.0
    %8307 = vmatpush1.xpose.msra.mxu0 0.0
    %8308 = vmatprep.mubr.f32.mxu0 0.0
    %8309 = vmatmul.mubr.f32.gmra.mrb[0].mxu0 %v8224
    %v8310 = vpop.f32.mrb[0].mxu0
    %v8311 = vadd.f32 %v236, %v8310
    %v8312 = vpop.f32.mrb[0].mxu0
    %8313 = vmatprep.mubr.f32.mxu0 0.0
    %8314 = vmatmul.mubr.f32.gmra.mrb[0].mxu0 %v8226
    %v8315 = vpop.f32.mrb[0].mxu0
    %v8316 = vadd.f32 %v237, %v8315
    %v8317 = vpop.f32.mrb[0].mxu0
    %8318 = vmatprep.mubr.f32.mxu0 0.0
    %8319 = vmatmul.mubr.f32.gmra.mrb[0].mxu0 %v8228
    %v8320 = vpop.f32.mrb[0].mxu0
    %v8321 = vadd.f32 %v238, %v8320
    %v8322 = vpop.f32.mrb[0].mxu0
    %8323 = vmatprep.mubr.f32.mxu0 0.0
    %8324 = vmatmul.mubr.f32.gmra.mrb[0].mxu0 %v8230
    %v8325 = vpop.f32.mrb[0].mxu0
    %v8326 = vadd.f32 %v239, %v8325
    %v8327 = vpop.f32.mrb[0].mxu0
    %8328 = vmatprep.mubr.f32.mxu0 0.0
    %8329 = vmatmul.mubr.f32.gmra.mrb[0].mxu0 %v8232
    %v8330 = vpop.f32.mrb[0].mxu0
    %v8331 = vadd.f32 %v240, %v8330
    %v8332 = vpop.f32.mrb[0].mxu0
    %8333 = vdwg.mxu0
    %v8334 = vsel %vm566, %v8311, -inf
    %8335 = vmax.xlane.f32.xlu0 %v8334
    %v8336 = vpop.xlane.xlu0 %8335
    %v8337 = vsel %vm566, %v8316, -inf
    %8338 = vmax.xlane.f32.xlu0 %v8337
    %v8339 = vpop.xlane.xlu0 %8338
    %v8340 = vsel %vm566, %v8321, -inf
    %8341 = vmax.xlane.f32.xlu0 %v8340
    %v8342 = vpop.xlane.xlu0 %8341
    %v8343 = vsel %vm566, %v8326, -inf
    %8344 = vmax.xlane.f32.xlu0 %v8343
    %v8345 = vpop.xlane.xlu0 %8344
    %v8346 = vsel %vm579, %v8331, -inf
    %8347 = vmax.xlane.f32.xlu0 %v8346
    %v8348 = vpop.xlane.xlu0 %8347
    %v8349 = vsub.f32 %v8311, %v8336
    %v8350 = vsub.f32 %v8316, %v8339
    %v8351 = vsub.f32 %v8321, %v8342
    %v8352 = vsub.f32 %v8326, %v8345
    %v8353 = vsub.f32 %v8331, %v8348
    %v8354 = vmul.f32 %v8349, 1.442695
    %v8355 = vpow.pop %v8354
    %v8356 = vmul.f32 %v8350, 1.442695
    %v8357 = vpow.pop %v8356
    %v8358 = vmul.f32 %v8351, 1.442695
    %v8359 = vpow.pop %v8358
    %v8360 = vmul.f32 %v8352, 1.442695
    %v8361 = vpow.pop %v8360
    %v8362 = vmul.f32 %v8353, 1.442695
    %v8363 = vpow.pop %v8362
    %v8364 = vsel %vm566, %v8355, 0.0
    %8365 = vadd.xlane.f32.xlu0 %v8364
    %v8366 = vpop.xlane.xlu0 %8365
    %v8367 = vsel %vm566, %v8357, 0.0
    %8368 = vadd.xlane.f32.xlu0 %v8367
    %v8369 = vpop.xlane.xlu0 %8368
    %v8370 = vsel %vm566, %v8359, 0.0
    %8371 = vadd.xlane.f32.xlu0 %v8370
    %v8372 = vpop.xlane.xlu0 %8371
    %v8373 = vsel %vm566, %v8361, 0.0
    %8374 = vadd.xlane.f32.xlu0 %v8373
    %v8375 = vpop.xlane.xlu0 %8374
    %v8376 = vsel %vm579, %v8363, 0.0
    %8377 = vadd.xlane.f32.xlu0 %v8376
    %v8378 = vpop.xlane.xlu0 %8377
    %v8379 = vrcp.pop %v8366
    %v8380 = vrcp.pop %v8369
    %v8381 = vrcp.pop %v8372
    %v8382 = vrcp.pop %v8375
    %v8383 = vrcp.pop %v8378
    %v8384 = vmul.f32 %v8355, %v8379
    %v8385 = vmul.f32 %v8357, %v8380
    %v8386 = vmul.f32 %v8359, %v8381
    %v8387 = vmul.f32 %v8361, %v8382
    %v8388 = vmul.f32 %v8363, %v8383
    %8389 = vrot.lane.b32.xlu0 %v7360, 48
    %v8390 = vpop.permute.xlu0 %8389
    %8391 = vrot.lane.b32.xlu0 %v7365, 48
    %v8392 = vpop.permute.xlu0 %8391
    %8393 = vrot.lane.b32.xlu0 %v7370, 48
    %v8394 = vpop.permute.xlu0 %8393
    %8395 = vrot.lane.b32.xlu0 %v7375, 48
    %v8396 = vpop.permute.xlu0 %8395
    %8397 = vrot.lane.b32.xlu0 %v7380, 48
    %v8398 = vpop.permute.xlu0 %8397
    %v8404 = vsel %vm566, %v8384, 0
    %v8407 = vsel %vm566, %v8385, 0
    %v8410 = vsel %vm566, %v8386, 0
    %v8413 = vsel %vm566, %v8387, 0
    %v8416 = vsel %vm566, %v8388, 0
    %v8418 = vsel %vm652, %v8398, 0
    %8420 = vmatprep.subr.mxu0 0.0
    %8421 = vmatpush1.msra.mxu0 %v8390
    %8422 = vmatprep.subr.mxu0 0.0
    %8423 = vmatpush1.msra.mxu0 %v8392
    %8424 = vmatprep.subr.mxu0 0.0
    %8425 = vmatpush1.msra.mxu0 %v8394
    %8426 = vmatprep.subr.mxu0 0.0
    %8427 = vmatpush1.msra.mxu0 %v8396
    %8428 = vmatprep.subr.mxu0 0.0
    %8429 = vmatpush1.msra.mxu0 %v8418
    %8430 = vmatprep.subr.mxu0 0.0
    %8431 = vmatpush1.msra.mxu0 0.0
    %8432 = vmatprep.subr.mxu0 0.0
    %8433 = vmatpush1.msra.mxu0 0.0
    %8434 = vmatprep.subr.mxu0 0.0
    %8435 = vmatpush1.msra.mxu0 0.0
    %8436 = vmatprep.subr.mxu0 0.0
    %8437 = vmatpush1.msra.mxu0 0.0
    %8438 = vmatprep.subr.mxu0 0.0
    %8439 = vmatpush1.msra.mxu0 0.0
    %8440 = vmatprep.subr.mxu0 0.0
    %8441 = vmatpush1.msra.mxu0 0.0
    %8442 = vmatprep.subr.mxu0 0.0
    %8443 = vmatpush1.msra.mxu0 0.0
    %8444 = vmatprep.subr.mxu0 0.0
    %8445 = vmatpush1.msra.mxu0 0.0
    %8446 = vmatprep.subr.mxu0 0.0
    %8447 = vmatpush1.msra.mxu0 0.0
    %8448 = vmatprep.subr.mxu0 0.0
    %8449 = vmatpush1.msra.mxu0 0.0
    %8450 = vmatprep.subr.mxu0 0.0
    %8451 = vmatpush1.msra.mxu0 0.0
    %8452 = vmatprep.subr.mxu0 0.0
    %8453 = vmatpush1.msra.mxu0 0.0
    %8454 = vmatprep.subr.mxu0 0.0
    %8455 = vmatpush1.msra.mxu0 0.0
    %8456 = vmatprep.subr.mxu0 0.0
    %8457 = vmatpush1.msra.mxu0 0.0
    %8458 = vmatprep.subr.mxu0 0.0
    %8459 = vmatpush1.msra.mxu0 0.0
    %8460 = vmatprep.subr.mxu0 0.0
    %8461 = vmatpush1.msra.mxu0 0.0
    %8462 = vmatprep.subr.mxu0 0.0
    %8463 = vmatpush1.msra.mxu0 0.0
    %8464 = vmatprep.subr.mxu0 0.0
    %8465 = vmatpush1.msra.mxu0 0.0
    %8466 = vmatprep.subr.mxu0 0.0
    %8467 = vmatpush1.msra.mxu0 0.0
    %8468 = vmatprep.subr.mxu0 0.0
    %8469 = vmatpush1.msra.mxu0 0.0
    %8470 = vmatprep.subr.mxu0 0.0
    %8471 = vmatpush1.msra.mxu0 0.0
    %8472 = vmatprep.subr.mxu0 0.0
    %8473 = vmatpush1.msra.mxu0 0.0
    %8474 = vmatprep.subr.mxu0 0.0
    %8475 = vmatpush1.msra.mxu0 0.0
    %8476 = vmatprep.subr.mxu0 0.0
    %8477 = vmatpush1.msra.mxu0 0.0
    %8478 = vmatprep.subr.mxu0 0.0
    %8479 = vmatpush1.msra.mxu0 0.0
    %8480 = vmatprep.subr.mxu0 0.0
    %8481 = vmatpush1.msra.mxu0 0.0
    %8482 = vmatprep.subr.mxu0 0.0
    %8483 = vmatpush1.msra.mxu0 0.0
    %8484 = vmatprep.mubr.f32.mxu0 0.0
    %8485 = vmatmul.mubr.f32.gmra.mrb[0].mxu0 %v8404
    %v8486 = vpop.f32.mrb[0].mxu0
    %v8487 = vadd.f32 0.0, %v8486
    %v8488 = vpop.f32.mrb[0].mxu0
    %8489 = vmatprep.mubr.f32.mxu0 0.0
    %8490 = vmatmul.mubr.f32.gmra.mrb[0].mxu0 %v8407
    %v8491 = vpop.f32.mrb[0].mxu0
    %v8492 = vadd.f32 0.0, %v8491
    %v8493 = vpop.f32.mrb[0].mxu0
    %8494 = vmatprep.mubr.f32.mxu0 0.0
    %8495 = vmatmul.mubr.f32.gmra.mrb[0].mxu0 %v8410
    %v8496 = vpop.f32.mrb[0].mxu0
    %v8497 = vadd.f32 0.0, %v8496
    %v8498 = vpop.f32.mrb[0].mxu0
    %8499 = vmatprep.mubr.f32.mxu0 0.0
    %8500 = vmatmul.mubr.f32.gmra.mrb[0].mxu0 %v8413
    %v8501 = vpop.f32.mrb[0].mxu0
    %v8502 = vadd.f32 0.0, %v8501
    %v8503 = vpop.f32.mrb[0].mxu0
    %8504 = vmatprep.mubr.f32.mxu0 0.0
    %8505 = vmatmul.mubr.f32.gmra.mrb[0].mxu0 %v8416
    %v8506 = vpop.f32.mrb[0].mxu0
    %v8507 = vadd.f32 0.0, %v8506
    %v8508 = vpop.f32.mrb[0].mxu0
    %8509 = vdwg.mxu0
    %v8511 = vsel %vm455, %v8487, 0
    %v8514 = vsel %vm455, %v8492, 0
    %v8517 = vsel %vm455, %v8497, 0
    %v8520 = vsel %vm455, %v8502, 0
    %v8523 = vsel %vm455, %v8507, 0
    %8525 = vmatprep.subr.mxu0 0.0
    %8526 = vmatpush1.msra.mxu0 %v7385
    %8527 = vmatprep.subr.mxu0 0.0
    %8528 = vmatpush1.msra.mxu0 0.0
    %8529 = vmatprep.subr.mxu0 0.0
    %8530 = vmatpush1.msra.mxu0 0.0
    %8531 = vmatprep.subr.mxu0 0.0
    %8532 = vmatpush1.msra.mxu0 0.0
    %8533 = vmatprep.subr.mxu0 0.0
    %8534 = vmatpush1.msra.mxu0 0.0
    %8535 = vmatprep.subr.mxu0 0.0
    %8536 = vmatpush1.msra.mxu0 0.0
    %8537 = vmatprep.subr.mxu0 0.0
    %8538 = vmatpush1.msra.mxu0 0.0
    %8539 = vmatprep.subr.mxu0 0.0
    %8540 = vmatpush1.msra.mxu0 0.0
    %8541 = vmatprep.subr.mxu0 0.0
    %8542 = vmatpush1.msra.mxu0 0.0
    %8543 = vmatprep.subr.mxu0 0.0
    %8544 = vmatpush1.msra.mxu0 0.0
    %8545 = vmatprep.subr.mxu0 0.0
    %8546 = vmatpush1.msra.mxu0 0.0
    %8547 = vmatprep.subr.mxu0 0.0
    %8548 = vmatpush1.msra.mxu0 0.0
    %8549 = vmatprep.subr.mxu0 0.0
    %8550 = vmatpush1.msra.mxu0 0.0
    %8551 = vmatprep.subr.mxu0 0.0
    %8552 = vmatpush1.msra.mxu0 0.0
    %8553 = vmatprep.subr.mxu0 0.0
    %8554 = vmatpush1.msra.mxu0 0.0
    %8555 = vmatprep.subr.mxu0 0.0
    %8556 = vmatpush1.msra.mxu0 0.0
    %8557 = vmatprep.subr.mxu0 0.0
    %8558 = vmatpush1.msra.mxu0 0.0
    %8559 = vmatprep.subr.mxu0 0.0
    %8560 = vmatpush1.msra.mxu0 0.0
    %8561 = vmatprep.subr.mxu0 0.0
    %8562 = vmatpush1.msra.mxu0 0.0
    %8563 = vmatprep.subr.mxu0 0.0
    %8564 = vmatpush1.msra.mxu0 0.0
    %8565 = vmatprep.subr.mxu0 0.0
    %8566 = vmatpush1.msra.mxu0 0.0
    %8567 = vmatprep.subr.mxu0 0.0
    %8568 = vmatpush1.msra.mxu0 0.0
    %8569 = vmatprep.subr.mxu0 0.0
    %8570 = vmatpush1.msra.mxu0 0.0
    %8571 = vmatprep.subr.mxu0 0.0
    %8572 = vmatpush1.msra.mxu0 0.0
    %8573 = vmatprep.subr.mxu0 0.0
    %8574 = vmatpush1.msra.mxu0 0.0
    %8575 = vmatprep.subr.mxu0 0.0
    %8576 = vmatpush1.msra.mxu0 0.0
    %8577 = vmatprep.subr.mxu0 0.0
    %8578 = vmatpush1.msra.mxu0 0.0
    %8579 = vmatprep.subr.mxu0 0.0
    %8580 = vmatpush1.msra.mxu0 0.0
    %8581 = vmatprep.subr.mxu0 0.0
    %8582 = vmatpush1.msra.mxu0 0.0
    %8583 = vmatprep.subr.mxu0 0.0
    %8584 = vmatpush1.msra.mxu0 0.0
    %8585 = vmatprep.subr.mxu0 0.0
    %8586 = vmatpush1.msra.mxu0 0.0
    %8587 = vmatprep.subr.mxu0 0.0
    %8588 = vmatpush1.msra.mxu0 0.0
    %8589 = vmatprep.mubr.f32.mxu0 0.0
    %8590 = vmatmul.mubr.f32.gmra.mrb[0].mxu0 %v8511
    %v8591 = vpop.f32.mrb[0].mxu0
    %v8592 = vadd.f32 0.0, %v8591
    %v8593 = vpop.f32.mrb[0].mxu0
    %8594 = vmatprep.mubr.f32.mxu0 0.0
    %8595 = vmatmul.mubr.f32.gmra.mrb[0].mxu0 %v8514
    %v8596 = vpop.f32.mrb[0].mxu0
    %v8597 = vadd.f32 0.0, %v8596
    %v8598 = vpop.f32.mrb[0].mxu0
    %8599 = vmatprep.mubr.f32.mxu0 0.0
    %8600 = vmatmul.mubr.f32.gmra.mrb[0].mxu0 %v8517
    %v8601 = vpop.f32.mrb[0].mxu0
    %v8602 = vadd.f32 0.0, %v8601
    %v8603 = vpop.f32.mrb[0].mxu0
    %8604 = vmatprep.mubr.f32.mxu0 0.0
    %8605 = vmatmul.mubr.f32.gmra.mrb[0].mxu0 %v8520
    %v8606 = vpop.f32.mrb[0].mxu0
    %v8607 = vadd.f32 0.0, %v8606
    %v8608 = vpop.f32.mrb[0].mxu0
    %8609 = vmatprep.mubr.f32.mxu0 0.0
    %8610 = vmatmul.mubr.f32.gmra.mrb[0].mxu0 %v8523
    %v8611 = vpop.f32.mrb[0].mxu0
    %v8612 = vadd.f32 0.0, %v8611
    %v8613 = vpop.f32.mrb[0].mxu0
    %8614 = vdwg.mxu0
    %v8615 = vadd.f32 %v8181, %v8592
    %v8616 = vadd.f32 %v8186, %v8597
    %v8617 = vadd.f32 %v8191, %v8602
    %v8618 = vadd.f32 %v8196, %v8607
    %v8619 = vadd.f32 %v8201, %v8612
    %8620 = vrot.lane.b32.xlu0 %v7360, 104
    %v8621 = vpop.permute.xlu0 %8620
    %8622 = vrot.lane.b32.xlu0 %v7365, 104
    %v8623 = vpop.permute.xlu0 %8622
    %8624 = vrot.lane.b32.xlu0 %v7370, 104
    %v8625 = vpop.permute.xlu0 %8624
    %8626 = vrot.lane.b32.xlu0 %v7375, 104
    %v8627 = vpop.permute.xlu0 %8626
    %8628 = vrot.lane.b32.xlu0 %v7380, 104
    %v8629 = vpop.permute.xlu0 %8628
    %8630 = vrot.lane.b32.xlu0 %v7360, 72
    %v8631 = vpop.permute.xlu0 %8630
    %8632 = vrot.lane.b32.xlu0 %v7365, 72
    %v8633 = vpop.permute.xlu0 %8632
    %8634 = vrot.lane.b32.xlu0 %v7370, 72
    %v8635 = vpop.permute.xlu0 %8634
    %8636 = vrot.lane.b32.xlu0 %v7375, 72
    %v8637 = vpop.permute.xlu0 %8636
    %8638 = vrot.lane.b32.xlu0 %v7380, 72
    %v8639 = vpop.permute.xlu0 %8638
    %v8640 = vsel %vm455, %v8621, 0
    %v8642 = vsel %vm455, %v8623, 0
    %v8644 = vsel %vm455, %v8625, 0
    %v8646 = vsel %vm455, %v8627, 0
    %v8648 = vsel %vm455, %v8629, 0
    %v8650 = vsel %vm455, %v8631, 0
    %v8652 = vsel %vm455, %v8633, 0
    %v8654 = vsel %vm455, %v8635, 0
    %v8656 = vsel %vm455, %v8637, 0
    %v8658 = vsel %vm455, %v8639, 0
    %8660 = vmatprep.subr.mxu0 0.0
    %8661 = vmatpush1.xpose.msra.mxu0 %v8650
    %8662 = vmatprep.subr.mxu0 0.0
    %8663 = vmatpush1.xpose.msra.mxu0 %v8652
    %8664 = vmatprep.subr.mxu0 0.0
    %8665 = vmatpush1.xpose.msra.mxu0 %v8654
    %8666 = vmatprep.subr.mxu0 0.0
    %8667 = vmatpush1.xpose.msra.mxu0 %v8656
    %8668 = vmatprep.subr.mxu0 0.0
    %8669 = vmatpush1.xpose.msra.mxu0 %v8658
    %8670 = vmatprep.subr.mxu0 0.0
    %8671 = vmatpush1.xpose.msra.mxu0 0.0
    %8672 = vmatprep.subr.mxu0 0.0
    %8673 = vmatpush1.xpose.msra.mxu0 0.0
    %8674 = vmatprep.subr.mxu0 0.0
    %8675 = vmatpush1.xpose.msra.mxu0 0.0
    %8676 = vmatprep.subr.mxu0 0.0
    %8677 = vmatpush1.xpose.msra.mxu0 0.0
    %8678 = vmatprep.subr.mxu0 0.0
    %8679 = vmatpush1.xpose.msra.mxu0 0.0
    %8680 = vmatprep.subr.mxu0 0.0
    %8681 = vmatpush1.xpose.msra.mxu0 0.0
    %8682 = vmatprep.subr.mxu0 0.0
    %8683 = vmatpush1.xpose.msra.mxu0 0.0
    %8684 = vmatprep.subr.mxu0 0.0
    %8685 = vmatpush1.xpose.msra.mxu0 0.0
    %8686 = vmatprep.subr.mxu0 0.0
    %8687 = vmatpush1.xpose.msra.mxu0 0.0
    %8688 = vmatprep.subr.mxu0 0.0
    %8689 = vmatpush1.xpose.msra.mxu0 0.0
    %8690 = vmatprep.subr.mxu0 0.0
    %8691 = vmatpush1.xpose.msra.mxu0 0.0
    %8692 = vmatprep.subr.mxu0 0.0
    %8693 = vmatpush1.xpose.msra.mxu0 0.0
    %8694 = vmatprep.subr.mxu0 0.0
    %8695 = vmatpush1.xpose.msra.mxu0 0.0
    %8696 = vmatprep.subr.mxu0 0.0
    %8697 = vmatpush1.xpose.msra.mxu0 0.0
    %8698 = vmatprep.subr.mxu0 0.0
    %8699 = vmatpush1.xpose.msra.mxu0 0.0
    %8700 = vmatprep.subr.mxu0 0.0
    %8701 = vmatpush1.xpose.msra.mxu0 0.0
    %8702 = vmatprep.subr.mxu0 0.0
    %8703 = vmatpush1.xpose.msra.mxu0 0.0
    %8704 = vmatprep.subr.mxu0 0.0
    %8705 = vmatpush1.xpose.msra.mxu0 0.0
    %8706 = vmatprep.subr.mxu0 0.0
    %8707 = vmatpush1.xpose.msra.mxu0 0.0
    %8708 = vmatprep.subr.mxu0 0.0
    %8709 = vmatpush1.xpose.msra.mxu0 0.0
    %8710 = vmatprep.subr.mxu0 0.0
    %8711 = vmatpush1.xpose.msra.mxu0 0.0
    %8712 = vmatprep.subr.mxu0 0.0
    %8713 = vmatpush1.xpose.msra.mxu0 0.0
    %8714 = vmatprep.subr.mxu0 0.0
    %8715 = vmatpush1.xpose.msra.mxu0 0.0
    %8716 = vmatprep.subr.mxu0 0.0
    %8717 = vmatpush1.xpose.msra.mxu0 0.0
    %8718 = vmatprep.subr.mxu0 0.0
    %8719 = vmatpush1.xpose.msra.mxu0 0.0
    %8720 = vmatprep.subr.mxu0 0.0
    %8721 = vmatpush1.xpose.msra.mxu0 0.0
    %8722 = vmatprep.subr.mxu0 0.0
    %8723 = vmatpush1.xpose.msra.mxu0 0.0
    %8724 = vmatprep.mubr.f32.mxu0 0.0
    %8725 = vmatmul.mubr.f32.gmra.mrb[0].mxu0 %v8640
    %v8726 = vpop.f32.mrb[0].mxu0
    %v8727 = vadd.f32 %v236, %v8726
    %v8728 = vpop.f32.mrb[0].mxu0
    %8729 = vmatprep.mubr.f32.mxu0 0.0
    %8730 = vmatmul.mubr.f32.gmra.mrb[0].mxu0 %v8642
    %v8731 = vpop.f32.mrb[0].mxu0
    %v8732 = vadd.f32 %v237, %v8731
    %v8733 = vpop.f32.mrb[0].mxu0
    %8734 = vmatprep.mubr.f32.mxu0 0.0
    %8735 = vmatmul.mubr.f32.gmra.mrb[0].mxu0 %v8644
    %v8736 = vpop.f32.mrb[0].mxu0
    %v8737 = vadd.f32 %v238, %v8736
    %v8738 = vpop.f32.mrb[0].mxu0
    %8739 = vmatprep.mubr.f32.mxu0 0.0
    %8740 = vmatmul.mubr.f32.gmra.mrb[0].mxu0 %v8646
    %v8741 = vpop.f32.mrb[0].mxu0
    %v8742 = vadd.f32 %v239, %v8741
    %v8743 = vpop.f32.mrb[0].mxu0
    %8744 = vmatprep.mubr.f32.mxu0 0.0
    %8745 = vmatmul.mubr.f32.gmra.mrb[0].mxu0 %v8648
    %v8746 = vpop.f32.mrb[0].mxu0
    %v8747 = vadd.f32 %v240, %v8746
    %v8748 = vpop.f32.mrb[0].mxu0
    %8749 = vdwg.mxu0
    %v8750 = vsel %vm566, %v8727, -inf
    %8751 = vmax.xlane.f32.xlu0 %v8750
    %v8752 = vpop.xlane.xlu0 %8751
    %v8753 = vsel %vm566, %v8732, -inf
    %8754 = vmax.xlane.f32.xlu0 %v8753
    %v8755 = vpop.xlane.xlu0 %8754
    %v8756 = vsel %vm566, %v8737, -inf
    %8757 = vmax.xlane.f32.xlu0 %v8756
    %v8758 = vpop.xlane.xlu0 %8757
    %v8759 = vsel %vm566, %v8742, -inf
    %8760 = vmax.xlane.f32.xlu0 %v8759
    %v8761 = vpop.xlane.xlu0 %8760
    %v8762 = vsel %vm579, %v8747, -inf
    %8763 = vmax.xlane.f32.xlu0 %v8762
    %v8764 = vpop.xlane.xlu0 %8763
    %v8765 = vsub.f32 %v8727, %v8752
    %v8766 = vsub.f32 %v8732, %v8755
    %v8767 = vsub.f32 %v8737, %v8758
    %v8768 = vsub.f32 %v8742, %v8761
    %v8769 = vsub.f32 %v8747, %v8764
    %v8770 = vmul.f32 %v8765, 1.442695
    %v8771 = vpow.pop %v8770
    %v8772 = vmul.f32 %v8766, 1.442695
    %v8773 = vpow.pop %v8772
    %v8774 = vmul.f32 %v8767, 1.442695
    %v8775 = vpow.pop %v8774
    %v8776 = vmul.f32 %v8768, 1.442695
    %v8777 = vpow.pop %v8776
    %v8778 = vmul.f32 %v8769, 1.442695
    %v8779 = vpow.pop %v8778
    %v8780 = vsel %vm566, %v8771, 0.0
    %8781 = vadd.xlane.f32.xlu0 %v8780
    %v8782 = vpop.xlane.xlu0 %8781
    %v8783 = vsel %vm566, %v8773, 0.0
    %8784 = vadd.xlane.f32.xlu0 %v8783
    %v8785 = vpop.xlane.xlu0 %8784
    %v8786 = vsel %vm566, %v8775, 0.0
    %8787 = vadd.xlane.f32.xlu0 %v8786
    %v8788 = vpop.xlane.xlu0 %8787
    %v8789 = vsel %vm566, %v8777, 0.0
    %8790 = vadd.xlane.f32.xlu0 %v8789
    %v8791 = vpop.xlane.xlu0 %8790
    %v8792 = vsel %vm579, %v8779, 0.0
    %8793 = vadd.xlane.f32.xlu0 %v8792
    %v8794 = vpop.xlane.xlu0 %8793
    %v8795 = vrcp.pop %v8782
    %v8796 = vrcp.pop %v8785
    %v8797 = vrcp.pop %v8788
    %v8798 = vrcp.pop %v8791
    %v8799 = vrcp.pop %v8794
    %v8800 = vmul.f32 %v8771, %v8795
    %v8801 = vmul.f32 %v8773, %v8796
    %v8802 = vmul.f32 %v8775, %v8797
    %v8803 = vmul.f32 %v8777, %v8798
    %v8804 = vmul.f32 %v8779, %v8799
    %8805 = vrot.lane.b32.xlu0 %v7360, 40
    %v8806 = vpop.permute.xlu0 %8805
    %8807 = vrot.lane.b32.xlu0 %v7365, 40
    %v8808 = vpop.permute.xlu0 %8807
    %8809 = vrot.lane.b32.xlu0 %v7370, 40
    %v8810 = vpop.permute.xlu0 %8809
    %8811 = vrot.lane.b32.xlu0 %v7375, 40
    %v8812 = vpop.permute.xlu0 %8811
    %8813 = vrot.lane.b32.xlu0 %v7380, 40
    %v8814 = vpop.permute.xlu0 %8813
    %v8820 = vsel %vm566, %v8800, 0
    %v8823 = vsel %vm566, %v8801, 0
    %v8826 = vsel %vm566, %v8802, 0
    %v8829 = vsel %vm566, %v8803, 0
    %v8832 = vsel %vm566, %v8804, 0
    %v8834 = vsel %vm652, %v8814, 0
    %8836 = vmatprep.subr.mxu0 0.0
    %8837 = vmatpush1.msra.mxu0 %v8806
    %8838 = vmatprep.subr.mxu0 0.0
    %8839 = vmatpush1.msra.mxu0 %v8808
    %8840 = vmatprep.subr.mxu0 0.0
    %8841 = vmatpush1.msra.mxu0 %v8810
    %8842 = vmatprep.subr.mxu0 0.0
    %8843 = vmatpush1.msra.mxu0 %v8812
    %8844 = vmatprep.subr.mxu0 0.0
    %8845 = vmatpush1.msra.mxu0 %v8834
    %8846 = vmatprep.subr.mxu0 0.0
    %8847 = vmatpush1.msra.mxu0 0.0
    %8848 = vmatprep.subr.mxu0 0.0
    %8849 = vmatpush1.msra.mxu0 0.0
    %8850 = vmatprep.subr.mxu0 0.0
    %8851 = vmatpush1.msra.mxu0 0.0
    %8852 = vmatprep.subr.mxu0 0.0
    %8853 = vmatpush1.msra.mxu0 0.0
    %8854 = vmatprep.subr.mxu0 0.0
    %8855 = vmatpush1.msra.mxu0 0.0
    %8856 = vmatprep.subr.mxu0 0.0
    %8857 = vmatpush1.msra.mxu0 0.0
    %8858 = vmatprep.subr.mxu0 0.0
    %8859 = vmatpush1.msra.mxu0 0.0
    %8860 = vmatprep.subr.mxu0 0.0
    %8861 = vmatpush1.msra.mxu0 0.0
    %8862 = vmatprep.subr.mxu0 0.0
    %8863 = vmatpush1.msra.mxu0 0.0
    %8864 = vmatprep.subr.mxu0 0.0
    %8865 = vmatpush1.msra.mxu0 0.0
    %8866 = vmatprep.subr.mxu0 0.0
    %8867 = vmatpush1.msra.mxu0 0.0
    %8868 = vmatprep.subr.mxu0 0.0
    %8869 = vmatpush1.msra.mxu0 0.0
    %8870 = vmatprep.subr.mxu0 0.0
    %8871 = vmatpush1.msra.mxu0 0.0
    %8872 = vmatprep.subr.mxu0 0.0
    %8873 = vmatpush1.msra.mxu0 0.0
    %8874 = vmatprep.subr.mxu0 0.0
    %8875 = vmatpush1.msra.mxu0 0.0
    %8876 = vmatprep.subr.mxu0 0.0
    %8877 = vmatpush1.msra.mxu0 0.0
    %8878 = vmatprep.subr.mxu0 0.0
    %8879 = vmatpush1.msra.mxu0 0.0
    %8880 = vmatprep.subr.mxu0 0.0
    %8881 = vmatpush1.msra.mxu0 0.0
    %8882 = vmatprep.subr.mxu0 0.0
    %8883 = vmatpush1.msra.mxu0 0.0
    %8884 = vmatprep.subr.mxu0 0.0
    %8885 = vmatpush1.msra.mxu0 0.0
    %8886 = vmatprep.subr.mxu0 0.0
    %8887 = vmatpush1.msra.mxu0 0.0
    %8888 = vmatprep.subr.mxu0 0.0
    %8889 = vmatpush1.msra.mxu0 0.0
    %8890 = vmatprep.subr.mxu0 0.0
    %8891 = vmatpush1.msra.mxu0 0.0
    %8892 = vmatprep.subr.mxu0 0.0
    %8893 = vmatpush1.msra.mxu0 0.0
    %8894 = vmatprep.subr.mxu0 0.0
    %8895 = vmatpush1.msra.mxu0 0.0
    %8896 = vmatprep.subr.mxu0 0.0
    %8897 = vmatpush1.msra.mxu0 0.0
    %8898 = vmatprep.subr.mxu0 0.0
    %8899 = vmatpush1.msra.mxu0 0.0
    %8900 = vmatprep.mubr.f32.mxu0 0.0
    %8901 = vmatmul.mubr.f32.gmra.mrb[0].mxu0 %v8820
    %v8902 = vpop.f32.mrb[0].mxu0
    %v8903 = vadd.f32 0.0, %v8902
    %v8904 = vpop.f32.mrb[0].mxu0
    %8905 = vmatprep.mubr.f32.mxu0 0.0
    %8906 = vmatmul.mubr.f32.gmra.mrb[0].mxu0 %v8823
    %v8907 = vpop.f32.mrb[0].mxu0
    %v8908 = vadd.f32 0.0, %v8907
    %v8909 = vpop.f32.mrb[0].mxu0
    %8910 = vmatprep.mubr.f32.mxu0 0.0
    %8911 = vmatmul.mubr.f32.gmra.mrb[0].mxu0 %v8826
    %v8912 = vpop.f32.mrb[0].mxu0
    %v8913 = vadd.f32 0.0, %v8912
    %v8914 = vpop.f32.mrb[0].mxu0
    %8915 = vmatprep.mubr.f32.mxu0 0.0
    %8916 = vmatmul.mubr.f32.gmra.mrb[0].mxu0 %v8829
    %v8917 = vpop.f32.mrb[0].mxu0
    %v8918 = vadd.f32 0.0, %v8917
    %v8919 = vpop.f32.mrb[0].mxu0
    %8920 = vmatprep.mubr.f32.mxu0 0.0
    %8921 = vmatmul.mubr.f32.gmra.mrb[0].mxu0 %v8832
    %v8922 = vpop.f32.mrb[0].mxu0
    %v8923 = vadd.f32 0.0, %v8922
    %v8924 = vpop.f32.mrb[0].mxu0
    %8925 = vdwg.mxu0
    %v8927 = vsel %vm455, %v8903, 0
    %v8930 = vsel %vm455, %v8908, 0
    %v8933 = vsel %vm455, %v8913, 0
    %v8936 = vsel %vm455, %v8918, 0
    %v8939 = vsel %vm455, %v8923, 0
    %8941 = vmatprep.subr.mxu0 0.0
    %8942 = vmatpush1.msra.mxu0 %v7386
    %8943 = vmatprep.subr.mxu0 0.0
    %8944 = vmatpush1.msra.mxu0 0.0
    %8945 = vmatprep.subr.mxu0 0.0
    %8946 = vmatpush1.msra.mxu0 0.0
    %8947 = vmatprep.subr.mxu0 0.0
    %8948 = vmatpush1.msra.mxu0 0.0
    %8949 = vmatprep.subr.mxu0 0.0
    %8950 = vmatpush1.msra.mxu0 0.0
    %8951 = vmatprep.subr.mxu0 0.0
    %8952 = vmatpush1.msra.mxu0 0.0
    %8953 = vmatprep.subr.mxu0 0.0
    %8954 = vmatpush1.msra.mxu0 0.0
    %8955 = vmatprep.subr.mxu0 0.0
    %8956 = vmatpush1.msra.mxu0 0.0
    %8957 = vmatprep.subr.mxu0 0.0
    %8958 = vmatpush1.msra.mxu0 0.0
    %8959 = vmatprep.subr.mxu0 0.0
    %8960 = vmatpush1.msra.mxu0 0.0
    %8961 = vmatprep.subr.mxu0 0.0
    %8962 = vmatpush1.msra.mxu0 0.0
    %8963 = vmatprep.subr.mxu0 0.0
    %8964 = vmatpush1.msra.mxu0 0.0
    %8965 = vmatprep.subr.mxu0 0.0
    %8966 = vmatpush1.msra.mxu0 0.0
    %8967 = vmatprep.subr.mxu0 0.0
    %8968 = vmatpush1.msra.mxu0 0.0
    %8969 = vmatprep.subr.mxu0 0.0
    %8970 = vmatpush1.msra.mxu0 0.0
    %8971 = vmatprep.subr.mxu0 0.0
    %8972 = vmatpush1.msra.mxu0 0.0
    %8973 = vmatprep.subr.mxu0 0.0
    %8974 = vmatpush1.msra.mxu0 0.0
    %8975 = vmatprep.subr.mxu0 0.0
    %8976 = vmatpush1.msra.mxu0 0.0
    %8977 = vmatprep.subr.mxu0 0.0
    %8978 = vmatpush1.msra.mxu0 0.0
    %8979 = vmatprep.subr.mxu0 0.0
    %8980 = vmatpush1.msra.mxu0 0.0
    %8981 = vmatprep.subr.mxu0 0.0
    %8982 = vmatpush1.msra.mxu0 0.0
    %8983 = vmatprep.subr.mxu0 0.0
    %8984 = vmatpush1.msra.mxu0 0.0
    %8985 = vmatprep.subr.mxu0 0.0
    %8986 = vmatpush1.msra.mxu0 0.0
    %8987 = vmatprep.subr.mxu0 0.0
    %8988 = vmatpush1.msra.mxu0 0.0
    %8989 = vmatprep.subr.mxu0 0.0
    %8990 = vmatpush1.msra.mxu0 0.0
    %8991 = vmatprep.subr.mxu0 0.0
    %8992 = vmatpush1.msra.mxu0 0.0
    %8993 = vmatprep.subr.mxu0 0.0
    %8994 = vmatpush1.msra.mxu0 0.0
    %8995 = vmatprep.subr.mxu0 0.0
    %8996 = vmatpush1.msra.mxu0 0.0
    %8997 = vmatprep.subr.mxu0 0.0
    %8998 = vmatpush1.msra.mxu0 0.0
    %8999 = vmatprep.subr.mxu0 0.0
    %9000 = vmatpush1.msra.mxu0 0.0
    %9001 = vmatprep.subr.mxu0 0.0
    %9002 = vmatpush1.msra.mxu0 0.0
    %9003 = vmatprep.subr.mxu0 0.0
    %9004 = vmatpush1.msra.mxu0 0.0
    %9005 = vmatprep.mubr.f32.mxu0 0.0
    %9006 = vmatmul.mubr.f32.gmra.mrb[0].mxu0 %v8927
    %v9007 = vpop.f32.mrb[0].mxu0
    %v9008 = vadd.f32 0.0, %v9007
    %v9009 = vpop.f32.mrb[0].mxu0
    %9010 = vmatprep.mubr.f32.mxu0 0.0
    %9011 = vmatmul.mubr.f32.gmra.mrb[0].mxu0 %v8930
    %v9012 = vpop.f32.mrb[0].mxu0
    %v9013 = vadd.f32 0.0, %v9012
    %v9014 = vpop.f32.mrb[0].mxu0
    %9015 = vmatprep.mubr.f32.mxu0 0.0
    %9016 = vmatmul.mubr.f32.gmra.mrb[0].mxu0 %v8933
    %v9017 = vpop.f32.mrb[0].mxu0
    %v9018 = vadd.f32 0.0, %v9017
    %v9019 = vpop.f32.mrb[0].mxu0
    %9020 = vmatprep.mubr.f32.mxu0 0.0
    %9021 = vmatmul.mubr.f32.gmra.mrb[0].mxu0 %v8936
    %v9022 = vpop.f32.mrb[0].mxu0
    %v9023 = vadd.f32 0.0, %v9022
    %v9024 = vpop.f32.mrb[0].mxu0
    %9025 = vmatprep.mubr.f32.mxu0 0.0
    %9026 = vmatmul.mubr.f32.gmra.mrb[0].mxu0 %v8939
    %v9027 = vpop.f32.mrb[0].mxu0
    %v9028 = vadd.f32 0.0, %v9027
    %v9029 = vpop.f32.mrb[0].mxu0
    %9030 = vdwg.mxu0
    %v9031 = vadd.f32 %v8615, %v9008
    %v9032 = vadd.f32 %v8616, %v9013
    %v9033 = vadd.f32 %v8617, %v9018
    %v9034 = vadd.f32 %v8618, %v9023
    %v9035 = vadd.f32 %v8619, %v9028
    %v9036 = vadd.f32 %v7185, %v9031
    %v9037 = vadd.f32 %v7186, %v9032
    %v9038 = vadd.f32 %v7187, %v9033
    %v9039 = vadd.f32 %v7188, %v9034
    %v9040 = vadd.f32 %v7189, %v9035
    %v9041 = vlaneseq
    %v9042 = vshrl.u32 %v9041, 7
    %v9043 = vsub.s32 2, %v9042
    %v9044 = vrot.slane %v7190, %v9043
    %v9045 = vadd.f32 %v9036, %v9044
    %v9046 = vadd.f32 %v9037, %v9044
    %v9047 = vadd.f32 %v9038, %v9044
    %v9048 = vadd.f32 %v9039, %v9044
    %v9049 = vadd.f32 %v9040, %v9044
    %v9050 = vsel %vm130, %v9045, 0.0
    %9051 = vadd.xlane.f32.xlu0 %v9050
    %v9052 = vpop.xlane.xlu0 %9051
    %v9053 = vsel %vm130, %v9046, 0.0
    %9054 = vadd.xlane.f32.xlu0 %v9053
    %v9055 = vpop.xlane.xlu0 %9054
    %v9056 = vsel %vm130, %v9047, 0.0
    %9057 = vadd.xlane.f32.xlu0 %v9056
    %v9058 = vpop.xlane.xlu0 %9057
    %v9059 = vsel %vm130, %v9048, 0.0
    %9060 = vadd.xlane.f32.xlu0 %v9059
    %v9061 = vpop.xlane.xlu0 %9060
    %v9062 = vsel %vm254, %v9049, 0.0
    %9063 = vadd.xlane.f32.xlu0 %v9062
    %v9064 = vpop.xlane.xlu0 %9063
    %v9065 = vmul.f32 %v9052, %v258
    %v9066 = vmul.f32 %v9055, %v258
    %v9067 = vmul.f32 %v9058, %v258
    %v9068 = vmul.f32 %v9061, %v258
    %v9069 = vmul.f32 %v9064, %v258
    %v9070 = vsub.f32 %v9045, %v9065
    %v9071 = vsub.f32 %v9046, %v9066
    %v9072 = vsub.f32 %v9047, %v9067
    %v9073 = vsub.f32 %v9048, %v9068
    %v9074 = vsub.f32 %v9049, %v9069
    %v9075 = vmul.f32 %v9070, %v9070
    %v9076 = vmul.f32 %v9071, %v9071
    %v9077 = vmul.f32 %v9072, %v9072
    %v9078 = vmul.f32 %v9073, %v9073
    %v9079 = vmul.f32 %v9074, %v9074
    %v9080 = vsel %vm130, %v9075, 0.0
    %9081 = vadd.xlane.f32.xlu0 %v9080
    %v9082 = vpop.xlane.xlu0 %9081
    %v9083 = vsel %vm130, %v9076, 0.0
    %9084 = vadd.xlane.f32.xlu0 %v9083
    %v9085 = vpop.xlane.xlu0 %9084
    %v9086 = vsel %vm130, %v9077, 0.0
    %9087 = vadd.xlane.f32.xlu0 %v9086
    %v9088 = vpop.xlane.xlu0 %9087
    %v9089 = vsel %vm130, %v9078, 0.0
    %9090 = vadd.xlane.f32.xlu0 %v9089
    %v9091 = vpop.xlane.xlu0 %9090
    %v9092 = vsel %vm254, %v9079, 0.0
    %9093 = vadd.xlane.f32.xlu0 %v9092
    %v9094 = vpop.xlane.xlu0 %9093
    %v9095 = vmul.f32 %v9082, %v258
    %v9096 = vmul.f32 %v9085, %v258
    %v9097 = vmul.f32 %v9088, %v258
    %v9098 = vmul.f32 %v9091, %v258
    %v9099 = vmul.f32 %v9094, %v258
    %v9100 = vadd.f32 %v9095, 1e-05
    %v9101 = vadd.f32 %v9096, 1e-05
    %v9102 = vadd.f32 %v9097, 1e-05
    %v9103 = vadd.f32 %v9098, 1e-05
    %v9104 = vadd.f32 %v9099, 1e-05
    %v9105 = vrsqrt.pop %v9100
    %v9106 = vrsqrt.pop %v9101
    %v9107 = vrsqrt.pop %v9102
    %v9108 = vrsqrt.pop %v9103
    %v9109 = vrsqrt.pop %v9104
    %v9110 = vmul.f32 %v9070, %v9105
    %v9111 = vmul.f32 %v9071, %v9106
    %v9112 = vmul.f32 %v9072, %v9107
    %v9113 = vmul.f32 %v9073, %v9108
    %v9114 = vmul.f32 %v9074, %v9109
    %v9115 = vlaneseq
    %v9116 = vshrl.u32 %v9115, 7
    %v9117 = vsub.s32 3, %v9116
    %v9118 = vrot.slane %v7190, %v9117
    %v9119 = vmul.f32 %v9110, %v9118
    %v9120 = vmul.f32 %v9111, %v9118
    %v9121 = vmul.f32 %v9112, %v9118
    %v9122 = vmul.f32 %v9113, %v9118
    %v9123 = vmul.f32 %v9114, %v9118
    %v9124 = vlaneseq
    %v9125 = vshrl.u32 %v9124, 7
    %v9126 = vsub.s32 4, %v9125
    %v9127 = vrot.slane %v7190, %v9126
    %v9128 = vadd.f32 %v9119, %v9127
    %v9129 = vadd.f32 %v9120, %v9127
    %v9130 = vadd.f32 %v9121, %v9127
    %v9131 = vadd.f32 %v9122, %v9127
    %v9132 = vadd.f32 %v9123, %v9127
    %v9133 = vld [vmem:[%s1 + $0x288] sm:$0xff]
    %v9134 = vld [vmem:[%s1 + $0x290] sm:$0xff]
    %v9135 = vld [vmem:[%s1 + $0x298] sm:$0xff]
    %v9136 = vld [vmem:[%s1 + $0x2a0] sm:$0xff]
    %v9137 = vlaneseq
    %v9138 = vshrl.u32 %v9137, 7
    %v9139 = vsub.s32 5, %v9138
    %v9140 = vrot.slane %v7190, %v9139
    %v9142 = vsel %vm130, %v9128, 0
    %v9145 = vsel %vm130, %v9129, 0
    %v9148 = vsel %vm130, %v9130, 0
    %v9151 = vsel %vm130, %v9131, 0
    %v9154 = vsel %vm130, %v9132, 0
    %9156 = vmatprep.subr.mxu0 0.0
    %9157 = vmatpush1.msra.mxu0 %v9133
    %9158 = vmatprep.subr.mxu0 0.0
    %9159 = vmatpush1.msra.mxu0 %v9134
    %9160 = vmatprep.subr.mxu0 0.0
    %9161 = vmatpush1.msra.mxu0 %v9135
    %9162 = vmatprep.subr.mxu0 0.0
    %9163 = vmatpush1.msra.mxu0 %v9136
    %9164 = vmatprep.subr.mxu0 0.0
    %9165 = vmatpush1.msra.mxu0 0.0
    %9166 = vmatprep.subr.mxu0 0.0
    %9167 = vmatpush1.msra.mxu0 0.0
    %9168 = vmatprep.subr.mxu0 0.0
    %9169 = vmatpush1.msra.mxu0 0.0
    %9170 = vmatprep.subr.mxu0 0.0
    %9171 = vmatpush1.msra.mxu0 0.0
    %9172 = vmatprep.subr.mxu0 0.0
    %9173 = vmatpush1.msra.mxu0 0.0
    %9174 = vmatprep.subr.mxu0 0.0
    %9175 = vmatpush1.msra.mxu0 0.0
    %9176 = vmatprep.subr.mxu0 0.0
    %9177 = vmatpush1.msra.mxu0 0.0
    %9178 = vmatprep.subr.mxu0 0.0
    %9179 = vmatpush1.msra.mxu0 0.0
    %9180 = vmatprep.subr.mxu0 0.0
    %9181 = vmatpush1.msra.mxu0 0.0
    %9182 = vmatprep.subr.mxu0 0.0
    %9183 = vmatpush1.msra.mxu0 0.0
    %9184 = vmatprep.subr.mxu0 0.0
    %9185 = vmatpush1.msra.mxu0 0.0
    %9186 = vmatprep.subr.mxu0 0.0
    %9187 = vmatpush1.msra.mxu0 0.0
    %9188 = vmatprep.subr.mxu0 0.0
    %9189 = vmatpush1.msra.mxu0 0.0
    %9190 = vmatprep.subr.mxu0 0.0
    %9191 = vmatpush1.msra.mxu0 0.0
    %9192 = vmatprep.subr.mxu0 0.0
    %9193 = vmatpush1.msra.mxu0 0.0
    %9194 = vmatprep.subr.mxu0 0.0
    %9195 = vmatpush1.msra.mxu0 0.0
    %9196 = vmatprep.subr.mxu0 0.0
    %9197 = vmatpush1.msra.mxu0 0.0
    %9198 = vmatprep.subr.mxu0 0.0
    %9199 = vmatpush1.msra.mxu0 0.0
    %9200 = vmatprep.subr.mxu0 0.0
    %9201 = vmatpush1.msra.mxu0 0.0
    %9202 = vmatprep.subr.mxu0 0.0
    %9203 = vmatpush1.msra.mxu0 0.0
    %9204 = vmatprep.subr.mxu0 0.0
    %9205 = vmatpush1.msra.mxu0 0.0
    %9206 = vmatprep.subr.mxu0 0.0
    %9207 = vmatpush1.msra.mxu0 0.0
    %9208 = vmatprep.subr.mxu0 0.0
    %9209 = vmatpush1.msra.mxu0 0.0
    %9210 = vmatprep.subr.mxu0 0.0
    %9211 = vmatpush1.msra.mxu0 0.0
    %9212 = vmatprep.subr.mxu0 0.0
    %9213 = vmatpush1.msra.mxu0 0.0
    %9214 = vmatprep.subr.mxu0 0.0
    %9215 = vmatpush1.msra.mxu0 0.0
    %9216 = vmatprep.subr.mxu0 0.0
    %9217 = vmatpush1.msra.mxu0 0.0
    %9218 = vmatprep.subr.mxu0 0.0
    %9219 = vmatpush1.msra.mxu0 0.0
    %9220 = vmatprep.mubr.f32.mxu0 0.0
    %9221 = vmatmul.mubr.f32.gmra.mrb[0].mxu0 %v9142
    %v9222 = vpop.f32.mrb[0].mxu0
    %v9223 = vadd.f32 %v9140, %v9222
    %v9224 = vpop.f32.mrb[0].mxu0
    %9225 = vmatprep.mubr.f32.mxu0 0.0
    %9226 = vmatmul.mubr.f32.gmra.mrb[0].mxu0 %v9145
    %v9227 = vpop.f32.mrb[0].mxu0
    %v9228 = vadd.f32 %v9140, %v9227
    %v9229 = vpop.f32.mrb[0].mxu0
    %9230 = vmatprep.mubr.f32.mxu0 0.0
    %9231 = vmatmul.mubr.f32.gmra.mrb[0].mxu0 %v9148
    %v9232 = vpop.f32.mrb[0].mxu0
    %v9233 = vadd.f32 %v9140, %v9232
    %v9234 = vpop.f32.mrb[0].mxu0
    %9235 = vmatprep.mubr.f32.mxu0 0.0
    %9236 = vmatmul.mubr.f32.gmra.mrb[0].mxu0 %v9151
    %v9237 = vpop.f32.mrb[0].mxu0
    %v9238 = vadd.f32 %v9140, %v9237
    %v9239 = vpop.f32.mrb[0].mxu0
    %9240 = vmatprep.mubr.f32.mxu0 0.0
    %9241 = vmatmul.mubr.f32.gmra.mrb[0].mxu0 %v9154
    %v9242 = vpop.f32.mrb[0].mxu0
    %v9243 = vadd.f32 %v9140, %v9242
    %v9244 = vpop.f32.mrb[0].mxu0
    %9245 = vdwg.mxu0
    %v9246 = vmul.f32 %v9223, 0.5
    %v9247 = vmul.f32 %v9228, 0.5
    %v9248 = vmul.f32 %v9233, 0.5
    %v9249 = vmul.f32 %v9238, 0.5
    %v9250 = vmul.f32 %v9243, 0.5
    %v9251 = vmul.f32 %v9223, %v2308
    %v9252 = vmul.f32 %v9228, %v2308
    %v9253 = vmul.f32 %v9233, %v2308
    %v9254 = vmul.f32 %v9238, %v2308
    %v9255 = vmul.f32 %v9243, %v2308
    %vm9256 = vcmp.ge.f32.partialorder %v9251, 0.0
    %vm9257 = vcmp.ge.f32.partialorder %v9252, 0.0
    %vm9258 = vcmp.ge.f32.partialorder %v9253, 0.0
    %vm9259 = vcmp.ge.f32.partialorder %v9254, 0.0
    %vm9260 = vcmp.ge.f32.partialorder %v9255, 0.0
    %v9261 = vsel %vm9256, 1.0, -1.0
    %v9262 = vsel %vm9257, 1.0, -1.0
    %v9263 = vsel %vm9258, 1.0, -1.0
    %v9264 = vsel %vm9259, 1.0, -1.0
    %v9265 = vsel %vm9260, 1.0, -1.0
    %v9266 = vand.u32 2147483647, %v9251
    %v9267 = vand.u32 2147483647, %v9252
    %v9268 = vand.u32 2147483647, %v9253
    %v9269 = vand.u32 2147483647, %v9254
    %v9270 = vand.u32 2147483647, %v9255
    %v9271 = vmul.f32 %v9266, 0.3275911
    %v9272 = vmul.f32 %v9267, 0.3275911
    %v9273 = vmul.f32 %v9268, 0.3275911
    %v9274 = vmul.f32 %v9269, 0.3275911
    %v9275 = vmul.f32 %v9270, 0.3275911
    %v9276 = vadd.f32 %v9271, 1.0
    %v9277 = vadd.f32 %v9272, 1.0
    %v9278 = vadd.f32 %v9273, 1.0
    %v9279 = vadd.f32 %v9274, 1.0
    %v9280 = vadd.f32 %v9275, 1.0
    %v9281 = vrcp.pop %v9276
    %v9282 = vmul.f32 1.0, %v9281
    %v9283 = vrcp.pop %v9277
    %v9284 = vmul.f32 1.0, %v9283
    %v9285 = vrcp.pop %v9278
    %v9286 = vmul.f32 1.0, %v9285
    %v9287 = vrcp.pop %v9279
    %v9288 = vmul.f32 1.0, %v9287
    %v9289 = vrcp.pop %v9280
    %v9290 = vmul.f32 1.0, %v9289
    %v9291 = vmul.f32 %v9282, 1.0614054
    %v9292 = vmul.f32 %v9284, 1.0614054
    %v9293 = vmul.f32 %v9286, 1.0614054
    %v9294 = vmul.f32 %v9288, 1.0614054
    %v9295 = vmul.f32 %v9290, 1.0614054
    %v9296 = vadd.f32 %v9291, -1.4531521
    %v9297 = vadd.f32 %v9292, -1.4531521
    %v9298 = vadd.f32 %v9293, -1.4531521
    %v9299 = vadd.f32 %v9294, -1.4531521
    %v9300 = vadd.f32 %v9295, -1.4531521
    %v9301 = vmul.f32 %v9296, %v9282
    %v9302 = vmul.f32 %v9297, %v9284
    %v9303 = vmul.f32 %v9298, %v9286
    %v9304 = vmul.f32 %v9299, %v9288
    %v9305 = vmul.f32 %v9300, %v9290
    %v9306 = vadd.f32 %v9301, 1.4214138
    %v9307 = vadd.f32 %v9302, 1.4214138
    %v9308 = vadd.f32 %v9303, 1.4214138
    %v9309 = vadd.f32 %v9304, 1.4214138
    %v9310 = vadd.f32 %v9305, 1.4214138
    %v9311 = vmul.f32 %v9306, %v9282
    %v9312 = vmul.f32 %v9307, %v9284
    %v9313 = vmul.f32 %v9308, %v9286
    %v9314 = vmul.f32 %v9309, %v9288
    %v9315 = vmul.f32 %v9310, %v9290
    %v9316 = vadd.f32 %v9311, -0.28449672
    %v9317 = vadd.f32 %v9312, -0.28449672
    %v9318 = vadd.f32 %v9313, -0.28449672
    %v9319 = vadd.f32 %v9314, -0.28449672
    %v9320 = vadd.f32 %v9315, -0.28449672
    %v9321 = vmul.f32 %v9316, %v9282
    %v9322 = vmul.f32 %v9317, %v9284
    %v9323 = vmul.f32 %v9318, %v9286
    %v9324 = vmul.f32 %v9319, %v9288
    %v9325 = vmul.f32 %v9320, %v9290
    %v9326 = vadd.f32 %v9321, 0.2548296
    %v9327 = vadd.f32 %v9322, 0.2548296
    %v9328 = vadd.f32 %v9323, 0.2548296
    %v9329 = vadd.f32 %v9324, 0.2548296
    %v9330 = vadd.f32 %v9325, 0.2548296
    %v9331 = vmul.f32 %v9326, %v9282
    %v9332 = vmul.f32 %v9327, %v9284
    %v9333 = vmul.f32 %v9328, %v9286
    %v9334 = vmul.f32 %v9329, %v9288
    %v9335 = vmul.f32 %v9330, %v9290
    %v9336 = vsub.f32 0.0, %v9266
    %v9337 = vsub.f32 0.0, %v9267
    %v9338 = vsub.f32 0.0, %v9268
    %v9339 = vsub.f32 0.0, %v9269
    %v9340 = vsub.f32 0.0, %v9270
    %v9341 = vmul.f32 %v9336, %v9266
    %v9342 = vmul.f32 %v9337, %v9267
    %v9343 = vmul.f32 %v9338, %v9268
    %v9344 = vmul.f32 %v9339, %v9269
    %v9345 = vmul.f32 %v9340, %v9270
    %v9346 = vmul.f32 %v9341, 1.442695
    %v9347 = vpow.pop %v9346
    %v9348 = vmul.f32 %v9342, 1.442695
    %v9349 = vpow.pop %v9348
    %v9350 = vmul.f32 %v9343, 1.442695
    %v9351 = vpow.pop %v9350
    %v9352 = vmul.f32 %v9344, 1.442695
    %v9353 = vpow.pop %v9352
    %v9354 = vmul.f32 %v9345, 1.442695
    %v9355 = vpow.pop %v9354
    %v9356 = vmul.f32 %v9331, %v9347
    %v9357 = vmul.f32 %v9332, %v9349
    %v9358 = vmul.f32 %v9333, %v9351
    %v9359 = vmul.f32 %v9334, %v9353
    %v9360 = vmul.f32 %v9335, %v9355
    %v9361 = vsub.f32 1.0, %v9356
    %v9362 = vsub.f32 1.0, %v9357
    %v9363 = vsub.f32 1.0, %v9358
    %v9364 = vsub.f32 1.0, %v9359
    %v9365 = vsub.f32 1.0, %v9360
    %v9366 = vmul.f32 %v9261, %v9361
    %v9367 = vmul.f32 %v9262, %v9362
    %v9368 = vmul.f32 %v9263, %v9363
    %v9369 = vmul.f32 %v9264, %v9364
    %v9370 = vmul.f32 %v9265, %v9365
    %v9371 = vadd.f32 %v9366, 1.0
    %v9372 = vadd.f32 %v9367, 1.0
    %v9373 = vadd.f32 %v9368, 1.0
    %v9374 = vadd.f32 %v9369, 1.0
    %v9375 = vadd.f32 %v9370, 1.0
    %v9376 = vmul.f32 %v9246, %v9371
    %v9377 = vmul.f32 %v9247, %v9372
    %v9378 = vmul.f32 %v9248, %v9373
    %v9379 = vmul.f32 %v9249, %v9374
    %v9380 = vmul.f32 %v9250, %v9375
    %v9381 = vld [vmem:[%s1 + $0x2a8] sm:$0xff]
    %v9382 = vld [vmem:[%s1 + $0x2b0] sm:$0xff]
    %v9383 = vld [vmem:[%s1 + $0x2b8] sm:$0xff]
    %v9384 = vld [vmem:[%s1 + $0x2c0] sm:$0xff]
    %v9386 = vsel %vm130, %v9376, 0
    %v9389 = vsel %vm130, %v9377, 0
    %v9392 = vsel %vm130, %v9378, 0
    %v9395 = vsel %vm130, %v9379, 0
    %v9398 = vsel %vm130, %v9380, 0
    %9400 = vmatprep.subr.mxu0 0.0
    %9401 = vmatpush1.msra.mxu0 %v9381
    %9402 = vmatprep.subr.mxu0 0.0
    %9403 = vmatpush1.msra.mxu0 %v9382
    %9404 = vmatprep.subr.mxu0 0.0
    %9405 = vmatpush1.msra.mxu0 %v9383
    %9406 = vmatprep.subr.mxu0 0.0
    %9407 = vmatpush1.msra.mxu0 %v9384
    %9408 = vmatprep.subr.mxu0 0.0
    %9409 = vmatpush1.msra.mxu0 0.0
    %9410 = vmatprep.subr.mxu0 0.0
    %9411 = vmatpush1.msra.mxu0 0.0
    %9412 = vmatprep.subr.mxu0 0.0
    %9413 = vmatpush1.msra.mxu0 0.0
    %9414 = vmatprep.subr.mxu0 0.0
    %9415 = vmatpush1.msra.mxu0 0.0
    %9416 = vmatprep.subr.mxu0 0.0
    %9417 = vmatpush1.msra.mxu0 0.0
    %9418 = vmatprep.subr.mxu0 0.0
    %9419 = vmatpush1.msra.mxu0 0.0
    %9420 = vmatprep.subr.mxu0 0.0
    %9421 = vmatpush1.msra.mxu0 0.0
    %9422 = vmatprep.subr.mxu0 0.0
    %9423 = vmatpush1.msra.mxu0 0.0
    %9424 = vmatprep.subr.mxu0 0.0
    %9425 = vmatpush1.msra.mxu0 0.0
    %9426 = vmatprep.subr.mxu0 0.0
    %9427 = vmatpush1.msra.mxu0 0.0
    %9428 = vmatprep.subr.mxu0 0.0
    %9429 = vmatpush1.msra.mxu0 0.0
    %9430 = vmatprep.subr.mxu0 0.0
    %9431 = vmatpush1.msra.mxu0 0.0
    %9432 = vmatprep.subr.mxu0 0.0
    %9433 = vmatpush1.msra.mxu0 0.0
    %9434 = vmatprep.subr.mxu0 0.0
    %9435 = vmatpush1.msra.mxu0 0.0
    %9436 = vmatprep.subr.mxu0 0.0
    %9437 = vmatpush1.msra.mxu0 0.0
    %9438 = vmatprep.subr.mxu0 0.0
    %9439 = vmatpush1.msra.mxu0 0.0
    %9440 = vmatprep.subr.mxu0 0.0
    %9441 = vmatpush1.msra.mxu0 0.0
    %9442 = vmatprep.subr.mxu0 0.0
    %9443 = vmatpush1.msra.mxu0 0.0
    %9444 = vmatprep.subr.mxu0 0.0
    %9445 = vmatpush1.msra.mxu0 0.0
    %9446 = vmatprep.subr.mxu0 0.0
    %9447 = vmatpush1.msra.mxu0 0.0
    %9448 = vmatprep.subr.mxu0 0.0
    %9449 = vmatpush1.msra.mxu0 0.0
    %9450 = vmatprep.subr.mxu0 0.0
    %9451 = vmatpush1.msra.mxu0 0.0
    %9452 = vmatprep.subr.mxu0 0.0
    %9453 = vmatpush1.msra.mxu0 0.0
    %9454 = vmatprep.subr.mxu0 0.0
    %9455 = vmatpush1.msra.mxu0 0.0
    %9456 = vmatprep.subr.mxu0 0.0
    %9457 = vmatpush1.msra.mxu0 0.0
    %9458 = vmatprep.subr.mxu0 0.0
    %9459 = vmatpush1.msra.mxu0 0.0
    %9460 = vmatprep.subr.mxu0 0.0
    %9461 = vmatpush1.msra.mxu0 0.0
    %9462 = vmatprep.subr.mxu0 0.0
    %9463 = vmatpush1.msra.mxu0 0.0
    %9464 = vmatprep.mubr.f32.mxu0 0.0
    %9465 = vmatmul.mubr.f32.gmra.mrb[0].mxu0 %v9386
    %v9466 = vpop.f32.mrb[0].mxu0
    %v9467 = vadd.f32 0.0, %v9466
    %v9468 = vpop.f32.mrb[0].mxu0
    %9469 = vmatprep.mubr.f32.mxu0 0.0
    %9470 = vmatmul.mubr.f32.gmra.mrb[0].mxu0 %v9389
    %v9471 = vpop.f32.mrb[0].mxu0
    %v9472 = vadd.f32 0.0, %v9471
    %v9473 = vpop.f32.mrb[0].mxu0
    %9474 = vmatprep.mubr.f32.mxu0 0.0
    %9475 = vmatmul.mubr.f32.gmra.mrb[0].mxu0 %v9392
    %v9476 = vpop.f32.mrb[0].mxu0
    %v9477 = vadd.f32 0.0, %v9476
    %v9478 = vpop.f32.mrb[0].mxu0
    %9479 = vmatprep.mubr.f32.mxu0 0.0
    %9480 = vmatmul.mubr.f32.gmra.mrb[0].mxu0 %v9395
    %v9481 = vpop.f32.mrb[0].mxu0
    %v9482 = vadd.f32 0.0, %v9481
    %v9483 = vpop.f32.mrb[0].mxu0
    %9484 = vmatprep.mubr.f32.mxu0 0.0
    %9485 = vmatmul.mubr.f32.gmra.mrb[0].mxu0 %v9398
    %v9486 = vpop.f32.mrb[0].mxu0
    %v9487 = vadd.f32 0.0, %v9486
    %v9488 = vpop.f32.mrb[0].mxu0
    %9489 = vdwg.mxu0
    %v9490 = vadd.f32 %v9045, %v9467
    %v9491 = vadd.f32 %v9046, %v9472
    %v9492 = vadd.f32 %v9047, %v9477
    %v9493 = vadd.f32 %v9048, %v9482
    %v9494 = vadd.f32 %v9049, %v9487
    %v9495 = vlaneseq
    %v9496 = vshrl.u32 %v9495, 7
    %v9497 = vsub.s32 6, %v9496
    %v9498 = vrot.slane %v7190, %v9497
    %v9499 = vadd.f32 %v9490, %v9498
    %v9500 = vadd.f32 %v9491, %v9498
    %v9501 = vadd.f32 %v9492, %v9498
    %v9502 = vadd.f32 %v9493, %v9498
    %v9503 = vadd.f32 %v9494, %v9498
    %v9504 = vld [vmem:[%s1 + $0xa8] sm:$0x3]
    %v9506 = vsel %vm566, %v9504, 0
    %v9509 = vsel %vm652, %v9503, 0
    %9511 = vmatprep.subr.mxu0 0.0
    %9512 = vmatpush1.msra.mxu0 %v9499
    %9513 = vmatprep.subr.mxu0 0.0
    %9514 = vmatpush1.msra.mxu0 %v9500
    %9515 = vmatprep.subr.mxu0 0.0
    %9516 = vmatpush1.msra.mxu0 %v9501
    %9517 = vmatprep.subr.mxu0 0.0
    %9518 = vmatpush1.msra.mxu0 %v9502
    %9519 = vmatprep.subr.mxu0 0.0
    %9520 = vmatpush1.msra.mxu0 %v9509
    %9521 = vmatprep.subr.mxu0 0.0
    %9522 = vmatpush1.msra.mxu0 0.0
    %9523 = vmatprep.subr.mxu0 0.0
    %9524 = vmatpush1.msra.mxu0 0.0
    %9525 = vmatprep.subr.mxu0 0.0
    %9526 = vmatpush1.msra.mxu0 0.0
    %9527 = vmatprep.subr.mxu0 0.0
    %9528 = vmatpush1.msra.mxu0 0.0
    %9529 = vmatprep.subr.mxu0 0.0
    %9530 = vmatpush1.msra.mxu0 0.0
    %9531 = vmatprep.subr.mxu0 0.0
    %9532 = vmatpush1.msra.mxu0 0.0
    %9533 = vmatprep.subr.mxu0 0.0
    %9534 = vmatpush1.msra.mxu0 0.0
    %9535 = vmatprep.subr.mxu0 0.0
    %9536 = vmatpush1.msra.mxu0 0.0
    %9537 = vmatprep.subr.mxu0 0.0
    %9538 = vmatpush1.msra.mxu0 0.0
    %9539 = vmatprep.subr.mxu0 0.0
    %9540 = vmatpush1.msra.mxu0 0.0
    %9541 = vmatprep.subr.mxu0 0.0
    %9542 = vmatpush1.msra.mxu0 0.0
    %9543 = vmatprep.subr.mxu0 0.0
    %9544 = vmatpush1.msra.mxu0 0.0
    %9545 = vmatprep.subr.mxu0 0.0
    %9546 = vmatpush1.msra.mxu0 0.0
    %9547 = vmatprep.subr.mxu0 0.0
    %9548 = vmatpush1.msra.mxu0 0.0
    %9549 = vmatprep.subr.mxu0 0.0
    %9550 = vmatpush1.msra.mxu0 0.0
    %9551 = vmatprep.subr.mxu0 0.0
    %9552 = vmatpush1.msra.mxu0 0.0
    %9553 = vmatprep.subr.mxu0 0.0
    %9554 = vmatpush1.msra.mxu0 0.0
    %9555 = vmatprep.subr.mxu0 0.0
    %9556 = vmatpush1.msra.mxu0 0.0
    %9557 = vmatprep.subr.mxu0 0.0
    %9558 = vmatpush1.msra.mxu0 0.0
    %9559 = vmatprep.subr.mxu0 0.0
    %9560 = vmatpush1.msra.mxu0 0.0
    %9561 = vmatprep.subr.mxu0 0.0
    %9562 = vmatpush1.msra.mxu0 0.0
    %9563 = vmatprep.subr.mxu0 0.0
    %9564 = vmatpush1.msra.mxu0 0.0
    %9565 = vmatprep.subr.mxu0 0.0
    %9566 = vmatpush1.msra.mxu0 0.0
    %9567 = vmatprep.subr.mxu0 0.0
    %9568 = vmatpush1.msra.mxu0 0.0
    %9569 = vmatprep.subr.mxu0 0.0
    %9570 = vmatpush1.msra.mxu0 0.0
    %9571 = vmatprep.subr.mxu0 0.0
    %9572 = vmatpush1.msra.mxu0 0.0
    %9573 = vmatprep.subr.mxu0 0.0
    %9574 = vmatpush1.msra.mxu0 0.0
    %9575 = vmatprep.mubr.f32.mxu0 0.0
    %9576 = vmatmul.mubr.f32.gmra.mrb[0].mxu0 %v9506
    %v9577 = vpop.f32.mrb[0].mxu0
    %v9578 = vadd.f32 0.0, %v9577
    %v9579 = vpop.f32.mrb[0].mxu0
    %9580 = vdwg.mxu0
    %v9581 = vld [vmem:[%s1 + $0x310] sm:$0x3]
    %v9582 = vld [vmem:[%s1 + $0x2d0] sm:$0xff]
    %v9583 = vld [vmem:[%s1 + $0x2d8] sm:$0xff]
    %v9584 = vld [vmem:[%s1 + $0x2e0] sm:$0xff]
    %v9585 = vld [vmem:[%s1 + $0x2e8] sm:$0xff]
    %v9586 = vlaneseq
    %v9587 = vshrl.u32 %v9586, 7
    %v9588 = vsub.s32 0, %v9587
    %v9589 = vrot.slane %v9581, %v9588
    %v9591 = vsel %vm130, %v9578, 0
    %9593 = vmatprep.subr.mxu0 0.0
    %9594 = vmatpush1.msra.mxu0 %v9582
    %9595 = vmatprep.subr.mxu0 0.0
    %9596 = vmatpush1.msra.mxu0 %v9583
    %9597 = vmatprep.subr.mxu0 0.0
    %9598 = vmatpush1.msra.mxu0 %v9584
    %9599 = vmatprep.subr.mxu0 0.0
    %9600 = vmatpush1.msra.mxu0 %v9585
    %9601 = vmatprep.subr.mxu0 0.0
    %9602 = vmatpush1.msra.mxu0 0.0
    %9603 = vmatprep.subr.mxu0 0.0
    %9604 = vmatpush1.msra.mxu0 0.0
    %9605 = vmatprep.subr.mxu0 0.0
    %9606 = vmatpush1.msra.mxu0 0.0
    %9607 = vmatprep.subr.mxu0 0.0
    %9608 = vmatpush1.msra.mxu0 0.0
    %9609 = vmatprep.subr.mxu0 0.0
    %9610 = vmatpush1.msra.mxu0 0.0
    %9611 = vmatprep.subr.mxu0 0.0
    %9612 = vmatpush1.msra.mxu0 0.0
    %9613 = vmatprep.subr.mxu0 0.0
    %9614 = vmatpush1.msra.mxu0 0.0
    %9615 = vmatprep.subr.mxu0 0.0
    %9616 = vmatpush1.msra.mxu0 0.0
    %9617 = vmatprep.subr.mxu0 0.0
    %9618 = vmatpush1.msra.mxu0 0.0
    %9619 = vmatprep.subr.mxu0 0.0
    %9620 = vmatpush1.msra.mxu0 0.0
    %9621 = vmatprep.subr.mxu0 0.0
    %9622 = vmatpush1.msra.mxu0 0.0
    %9623 = vmatprep.subr.mxu0 0.0
    %9624 = vmatpush1.msra.mxu0 0.0
    %9625 = vmatprep.subr.mxu0 0.0
    %9626 = vmatpush1.msra.mxu0 0.0
    %9627 = vmatprep.subr.mxu0 0.0
    %9628 = vmatpush1.msra.mxu0 0.0
    %9629 = vmatprep.subr.mxu0 0.0
    %9630 = vmatpush1.msra.mxu0 0.0
    %9631 = vmatprep.subr.mxu0 0.0
    %9632 = vmatpush1.msra.mxu0 0.0
    %9633 = vmatprep.subr.mxu0 0.0
    %9634 = vmatpush1.msra.mxu0 0.0
    %9635 = vmatprep.subr.mxu0 0.0
    %9636 = vmatpush1.msra.mxu0 0.0
    %9637 = vmatprep.subr.mxu0 0.0
    %9638 = vmatpush1.msra.mxu0 0.0
    %9639 = vmatprep.subr.mxu0 0.0
    %9640 = vmatpush1.msra.mxu0 0.0
    %9641 = vmatprep.subr.mxu0 0.0
    %9642 = vmatpush1.msra.mxu0 0.0
    %9643 = vmatprep.subr.mxu0 0.0
    %9644 = vmatpush1.msra.mxu0 0.0
    %9645 = vmatprep.subr.mxu0 0.0
    %9646 = vmatpush1.msra.mxu0 0.0
    %9647 = vmatprep.subr.mxu0 0.0
    %9648 = vmatpush1.msra.mxu0 0.0
    %9649 = vmatprep.subr.mxu0 0.0
    %9650 = vmatpush1.msra.mxu0 0.0
    %9651 = vmatprep.subr.mxu0 0.0
    %9652 = vmatpush1.msra.mxu0 0.0
    %9653 = vmatprep.subr.mxu0 0.0
    %9654 = vmatpush1.msra.mxu0 0.0
    %9655 = vmatprep.subr.mxu0 0.0
    %9656 = vmatpush1.msra.mxu0 0.0
    %9657 = vmatprep.mubr.f32.mxu0 0.0
    %9658 = vmatmul.mubr.f32.gmra.mrb[0].mxu0 %v9591
    %v9659 = vpop.f32.mrb[0].mxu0
    %v9660 = vadd.f32 %v9589, %v9659
    %v9661 = vpop.f32.mrb[0].mxu0
    %9662 = vdwg.mxu0
    %v9663 = vmax.f32 %v9660, 0.0
    %v9664 = vld [vmem:[%s1 + $0x2f0] sm:$0xff]
    %v9665 = vld [vmem:[%s1 + $0x2f8] sm:$0xff]
    %v9666 = vld [vmem:[%s1 + $0x300] sm:$0xff]
    %v9667 = vld [vmem:[%s1 + $0x308] sm:$0xff]
    %v9668 = vlaneseq
    %v9669 = vshrl.u32 %v9668, 7
    %v9670 = vsub.s32 1, %v9669
    %v9671 = vrot.slane %v9581, %v9670
    %v9673 = vsel %vm130, %v9663, 0
    %9675 = vmatprep.subr.mxu0 0.0
    %9676 = vmatpush1.msra.mxu0 %v9664
    %9677 = vmatprep.subr.mxu0 0.0
    %9678 = vmatpush1.msra.mxu0 %v9665
    %9679 = vmatprep.subr.mxu0 0.0
    %9680 = vmatpush1.msra.mxu0 %v9666
    %9681 = vmatprep.subr.mxu0 0.0
    %9682 = vmatpush1.msra.mxu0 %v9667
    %9683 = vmatprep.subr.mxu0 0.0
    %9684 = vmatpush1.msra.mxu0 0.0
    %9685 = vmatprep.subr.mxu0 0.0
    %9686 = vmatpush1.msra.mxu0 0.0
    %9687 = vmatprep.subr.mxu0 0.0
    %9688 = vmatpush1.msra.mxu0 0.0
    %9689 = vmatprep.subr.mxu0 0.0
    %9690 = vmatpush1.msra.mxu0 0.0
    %9691 = vmatprep.subr.mxu0 0.0
    %9692 = vmatpush1.msra.mxu0 0.0
    %9693 = vmatprep.subr.mxu0 0.0
    %9694 = vmatpush1.msra.mxu0 0.0
    %9695 = vmatprep.subr.mxu0 0.0
    %9696 = vmatpush1.msra.mxu0 0.0
    %9697 = vmatprep.subr.mxu0 0.0
    %9698 = vmatpush1.msra.mxu0 0.0
    %9699 = vmatprep.subr.mxu0 0.0
    %9700 = vmatpush1.msra.mxu0 0.0
    %9701 = vmatprep.subr.mxu0 0.0
    %9702 = vmatpush1.msra.mxu0 0.0
    %9703 = vmatprep.subr.mxu0 0.0
    %9704 = vmatpush1.msra.mxu0 0.0
    %9705 = vmatprep.subr.mxu0 0.0
    %9706 = vmatpush1.msra.mxu0 0.0
    %9707 = vmatprep.subr.mxu0 0.0
    %9708 = vmatpush1.msra.mxu0 0.0
    %9709 = vmatprep.subr.mxu0 0.0
    %9710 = vmatpush1.msra.mxu0 0.0
    %9711 = vmatprep.subr.mxu0 0.0
    %9712 = vmatpush1.msra.mxu0 0.0
    %9713 = vmatprep.subr.mxu0 0.0
    %9714 = vmatpush1.msra.mxu0 0.0
    %9715 = vmatprep.subr.mxu0 0.0
    %9716 = vmatpush1.msra.mxu0 0.0
    %9717 = vmatprep.subr.mxu0 0.0
    %9718 = vmatpush1.msra.mxu0 0.0
    %9719 = vmatprep.subr.mxu0 0.0
    %9720 = vmatpush1.msra.mxu0 0.0
    %9721 = vmatprep.subr.mxu0 0.0
    %9722 = vmatpush1.msra.mxu0 0.0
    %9723 = vmatprep.subr.mxu0 0.0
    %9724 = vmatpush1.msra.mxu0 0.0
    %9725 = vmatprep.subr.mxu0 0.0
    %9726 = vmatpush1.msra.mxu0 0.0
    %9727 = vmatprep.subr.mxu0 0.0
    %9728 = vmatpush1.msra.mxu0 0.0
    %9729 = vmatprep.subr.mxu0 0.0
    %9730 = vmatpush1.msra.mxu0 0.0
    %9731 = vmatprep.subr.mxu0 0.0
    %9732 = vmatpush1.msra.mxu0 0.0
    %9733 = vmatprep.subr.mxu0 0.0
    %9734 = vmatpush1.msra.mxu0 0.0
    %9735 = vmatprep.subr.mxu0 0.0
    %9736 = vmatpush1.msra.mxu0 0.0
    %9737 = vmatprep.subr.mxu0 0.0
    %9738 = vmatpush1.msra.mxu0 0.0
    %9739 = vmatprep.mubr.f32.mxu0 0.0
    %9740 = vmatmul.mubr.f32.gmra.mrb[0].mxu0 %v9673
    %v9741 = vpop.f32.mrb[0].mxu0
    %v9742 = vadd.f32 %v9671, %v9741
    %v9743 = vpop.f32.mrb[0].mxu0
    %9744 = vdwg.mxu0
    %v9745 = vld [vmem:[%s1 + $0x358] sm:$0x3]
    %v9746 = vld [vmem:[%s1 + $0x318] sm:$0xff]
    %v9747 = vld [vmem:[%s1 + $0x320] sm:$0xff]
    %v9748 = vld [vmem:[%s1 + $0x328] sm:$0xff]
    %v9749 = vld [vmem:[%s1 + $0x330] sm:$0xff]
    %v9750 = vlaneseq
    %v9751 = vshrl.u32 %v9750, 7
    %v9752 = vsub.s32 0, %v9751
    %v9753 = vrot.slane %v9745, %v9752
    %v9755 = vsel %vm130, %v9742, 0
    %9757 = vmatprep.subr.mxu0 0.0
    %9758 = vmatpush1.msra.mxu0 %v9746
    %9759 = vmatprep.subr.mxu0 0.0
    %9760 = vmatpush1.msra.mxu0 %v9747
    %9761 = vmatprep.subr.mxu0 0.0
    %9762 = vmatpush1.msra.mxu0 %v9748
    %9763 = vmatprep.subr.mxu0 0.0
    %9764 = vmatpush1.msra.mxu0 %v9749
    %9765 = vmatprep.subr.mxu0 0.0
    %9766 = vmatpush1.msra.mxu0 0.0
    %9767 = vmatprep.subr.mxu0 0.0
    %9768 = vmatpush1.msra.mxu0 0.0
    %9769 = vmatprep.subr.mxu0 0.0
    %9770 = vmatpush1.msra.mxu0 0.0
    %9771 = vmatprep.subr.mxu0 0.0
    %9772 = vmatpush1.msra.mxu0 0.0
    %9773 = vmatprep.subr.mxu0 0.0
    %9774 = vmatpush1.msra.mxu0 0.0
    %9775 = vmatprep.subr.mxu0 0.0
    %9776 = vmatpush1.msra.mxu0 0.0
    %9777 = vmatprep.subr.mxu0 0.0
    %9778 = vmatpush1.msra.mxu0 0.0
    %9779 = vmatprep.subr.mxu0 0.0
    %9780 = vmatpush1.msra.mxu0 0.0
    %9781 = vmatprep.subr.mxu0 0.0
    %9782 = vmatpush1.msra.mxu0 0.0
    %9783 = vmatprep.subr.mxu0 0.0
    %9784 = vmatpush1.msra.mxu0 0.0
    %9785 = vmatprep.subr.mxu0 0.0
    %9786 = vmatpush1.msra.mxu0 0.0
    %9787 = vmatprep.subr.mxu0 0.0
    %9788 = vmatpush1.msra.mxu0 0.0
    %9789 = vmatprep.subr.mxu0 0.0
    %9790 = vmatpush1.msra.mxu0 0.0
    %9791 = vmatprep.subr.mxu0 0.0
    %9792 = vmatpush1.msra.mxu0 0.0
    %9793 = vmatprep.subr.mxu0 0.0
    %9794 = vmatpush1.msra.mxu0 0.0
    %9795 = vmatprep.subr.mxu0 0.0
    %9796 = vmatpush1.msra.mxu0 0.0
    %9797 = vmatprep.subr.mxu0 0.0
    %9798 = vmatpush1.msra.mxu0 0.0
    %9799 = vmatprep.subr.mxu0 0.0
    %9800 = vmatpush1.msra.mxu0 0.0
    %9801 = vmatprep.subr.mxu0 0.0
    %9802 = vmatpush1.msra.mxu0 0.0
    %9803 = vmatprep.subr.mxu0 0.0
    %9804 = vmatpush1.msra.mxu0 0.0
    %9805 = vmatprep.subr.mxu0 0.0
    %9806 = vmatpush1.msra.mxu0 0.0
    %9807 = vmatprep.subr.mxu0 0.0
    %9808 = vmatpush1.msra.mxu0 0.0
    %9809 = vmatprep.subr.mxu0 0.0
    %9810 = vmatpush1.msra.mxu0 0.0
    %9811 = vmatprep.subr.mxu0 0.0
    %9812 = vmatpush1.msra.mxu0 0.0
    %9813 = vmatprep.subr.mxu0 0.0
    %9814 = vmatpush1.msra.mxu0 0.0
    %9815 = vmatprep.subr.mxu0 0.0
    %9816 = vmatpush1.msra.mxu0 0.0
    %9817 = vmatprep.subr.mxu0 0.0
    %9818 = vmatpush1.msra.mxu0 0.0
    %9819 = vmatprep.subr.mxu0 0.0
    %9820 = vmatpush1.msra.mxu0 0.0
    %9821 = vmatprep.mubr.f32.mxu0 0.0
    %9822 = vmatmul.mubr.f32.gmra.mrb[0].mxu0 %v9755
    %v9823 = vpop.f32.mrb[0].mxu0
    %v9824 = vadd.f32 %v9753, %v9823
    %v9825 = vpop.f32.mrb[0].mxu0
    %9826 = vdwg.mxu0
    %v9827 = vmax.f32 %v9824, 0.0
    %v9828 = vld [vmem:[%s1 + $0x338] sm:$0xff]
    %v9829 = vld [vmem:[%s1 + $0x340] sm:$0xff]
    %v9830 = vld [vmem:[%s1 + $0x348] sm:$0xff]
    %v9831 = vld [vmem:[%s1 + $0x350] sm:$0xff]
    %v9832 = vlaneseq
    %v9833 = vshrl.u32 %v9832, 7
    %v9834 = vsub.s32 1, %v9833
    %v9835 = vrot.slane %v9745, %v9834
    %v9837 = vsel %vm130, %v9827, 0
    %9839 = vmatprep.subr.mxu0 0.0
    %9840 = vmatpush1.msra.mxu0 %v9828
    %9841 = vmatprep.subr.mxu0 0.0
    %9842 = vmatpush1.msra.mxu0 %v9829
    %9843 = vmatprep.subr.mxu0 0.0
    %9844 = vmatpush1.msra.mxu0 %v9830
    %9845 = vmatprep.subr.mxu0 0.0
    %9846 = vmatpush1.msra.mxu0 %v9831
    %9847 = vmatprep.subr.mxu0 0.0
    %9848 = vmatpush1.msra.mxu0 0.0
    %9849 = vmatprep.subr.mxu0 0.0
    %9850 = vmatpush1.msra.mxu0 0.0
    %9851 = vmatprep.subr.mxu0 0.0
    %9852 = vmatpush1.msra.mxu0 0.0
    %9853 = vmatprep.subr.mxu0 0.0
    %9854 = vmatpush1.msra.mxu0 0.0
    %9855 = vmatprep.subr.mxu0 0.0
    %9856 = vmatpush1.msra.mxu0 0.0
    %9857 = vmatprep.subr.mxu0 0.0
    %9858 = vmatpush1.msra.mxu0 0.0
    %9859 = vmatprep.subr.mxu0 0.0
    %9860 = vmatpush1.msra.mxu0 0.0
    %9861 = vmatprep.subr.mxu0 0.0
    %9862 = vmatpush1.msra.mxu0 0.0
    %9863 = vmatprep.subr.mxu0 0.0
    %9864 = vmatpush1.msra.mxu0 0.0
    %9865 = vmatprep.subr.mxu0 0.0
    %9866 = vmatpush1.msra.mxu0 0.0
    %9867 = vmatprep.subr.mxu0 0.0
    %9868 = vmatpush1.msra.mxu0 0.0
    %9869 = vmatprep.subr.mxu0 0.0
    %9870 = vmatpush1.msra.mxu0 0.0
    %9871 = vmatprep.subr.mxu0 0.0
    %9872 = vmatpush1.msra.mxu0 0.0
    %9873 = vmatprep.subr.mxu0 0.0
    %9874 = vmatpush1.msra.mxu0 0.0
    %9875 = vmatprep.subr.mxu0 0.0
    %9876 = vmatpush1.msra.mxu0 0.0
    %9877 = vmatprep.subr.mxu0 0.0
    %9878 = vmatpush1.msra.mxu0 0.0
    %9879 = vmatprep.subr.mxu0 0.0
    %9880 = vmatpush1.msra.mxu0 0.0
    %9881 = vmatprep.subr.mxu0 0.0
    %9882 = vmatpush1.msra.mxu0 0.0
    %9883 = vmatprep.subr.mxu0 0.0
    %9884 = vmatpush1.msra.mxu0 0.0
    %9885 = vmatprep.subr.mxu0 0.0
    %9886 = vmatpush1.msra.mxu0 0.0
    %9887 = vmatprep.subr.mxu0 0.0
    %9888 = vmatpush1.msra.mxu0 0.0
    %9889 = vmatprep.subr.mxu0 0.0
    %9890 = vmatpush1.msra.mxu0 0.0
    %9891 = vmatprep.subr.mxu0 0.0
    %9892 = vmatpush1.msra.mxu0 0.0
    %9893 = vmatprep.subr.mxu0 0.0
    %9894 = vmatpush1.msra.mxu0 0.0
    %9895 = vmatprep.subr.mxu0 0.0
    %9896 = vmatpush1.msra.mxu0 0.0
    %9897 = vmatprep.subr.mxu0 0.0
    %9898 = vmatpush1.msra.mxu0 0.0
    %9899 = vmatprep.subr.mxu0 0.0
    %9900 = vmatpush1.msra.mxu0 0.0
    %9901 = vmatprep.subr.mxu0 0.0
    %9902 = vmatpush1.msra.mxu0 0.0
    %9903 = vmatprep.mubr.f32.mxu0 0.0
    %9904 = vmatmul.mubr.f32.gmra.mrb[0].mxu0 %v9837
    %v9905 = vpop.f32.mrb[0].mxu0
    %v9906 = vadd.f32 %v9835, %v9905
    %v9907 = vpop.f32.mrb[0].mxu0
    %9908 = vdwg.mxu0
    %v9909 = vld [vmem:[%s1 + $0x360] sm:$0xff]
    %v9910 = vld [vmem:[%s1 + $0x368] sm:$0xff]
    %v9911 = vld [vmem:[%s1 + $0x370] sm:$0xff]
    %v9912 = vld [vmem:[%s1 + $0x378] sm:$0xff]
    %v9913 = vld [vmem:[%s1 + $0x380] sm:$0x1]
    %v9914 = vlaneseq
    %v9915 = vshrl.u32 %v9914, 7
    %v9916 = vsub.s32 0, %v9915
    %v9917 = vrot.slane %v9913, %v9916
    %v9919 = vsel %vm130, %v9906, 0
    %9921 = vmatprep.subr.mxu0 0.0
    %9922 = vmatpush1.msra.mxu0 %v9909
    %9923 = vmatprep.subr.mxu0 0.0
    %9924 = vmatpush1.msra.mxu0 %v9910
    %9925 = vmatprep.subr.mxu0 0.0
    %9926 = vmatpush1.msra.mxu0 %v9911
    %9927 = vmatprep.subr.mxu0 0.0
    %9928 = vmatpush1.msra.mxu0 %v9912
    %9929 = vmatprep.subr.mxu0 0.0
    %9930 = vmatpush1.msra.mxu0 0.0
    %9931 = vmatprep.subr.mxu0 0.0
    %9932 = vmatpush1.msra.mxu0 0.0
    %9933 = vmatprep.subr.mxu0 0.0
    %9934 = vmatpush1.msra.mxu0 0.0
    %9935 = vmatprep.subr.mxu0 0.0
    %9936 = vmatpush1.msra.mxu0 0.0
    %9937 = vmatprep.subr.mxu0 0.0
    %9938 = vmatpush1.msra.mxu0 0.0
    %9939 = vmatprep.subr.mxu0 0.0
    %9940 = vmatpush1.msra.mxu0 0.0
    %9941 = vmatprep.subr.mxu0 0.0
    %9942 = vmatpush1.msra.mxu0 0.0
    %9943 = vmatprep.subr.mxu0 0.0
    %9944 = vmatpush1.msra.mxu0 0.0
    %9945 = vmatprep.subr.mxu0 0.0
    %9946 = vmatpush1.msra.mxu0 0.0
    %9947 = vmatprep.subr.mxu0 0.0
    %9948 = vmatpush1.msra.mxu0 0.0
    %9949 = vmatprep.subr.mxu0 0.0
    %9950 = vmatpush1.msra.mxu0 0.0
    %9951 = vmatprep.subr.mxu0 0.0
    %9952 = vmatpush1.msra.mxu0 0.0
    %9953 = vmatprep.subr.mxu0 0.0
    %9954 = vmatpush1.msra.mxu0 0.0
    %9955 = vmatprep.subr.mxu0 0.0
    %9956 = vmatpush1.msra.mxu0 0.0
    %9957 = vmatprep.subr.mxu0 0.0
    %9958 = vmatpush1.msra.mxu0 0.0
    %9959 = vmatprep.subr.mxu0 0.0
    %9960 = vmatpush1.msra.mxu0 0.0
    %9961 = vmatprep.subr.mxu0 0.0
    %9962 = vmatpush1.msra.mxu0 0.0
    %9963 = vmatprep.subr.mxu0 0.0
    %9964 = vmatpush1.msra.mxu0 0.0
    %9965 = vmatprep.subr.mxu0 0.0
    %9966 = vmatpush1.msra.mxu0 0.0
    %9967 = vmatprep.subr.mxu0 0.0
    %9968 = vmatpush1.msra.mxu0 0.0
    %9969 = vmatprep.subr.mxu0 0.0
    %9970 = vmatpush1.msra.mxu0 0.0
    %9971 = vmatprep.subr.mxu0 0.0
    %9972 = vmatpush1.msra.mxu0 0.0
    %9973 = vmatprep.subr.mxu0 0.0
    %9974 = vmatpush1.msra.mxu0 0.0
    %9975 = vmatprep.subr.mxu0 0.0
    %9976 = vmatpush1.msra.mxu0 0.0
    %9977 = vmatprep.subr.mxu0 0.0
    %9978 = vmatpush1.msra.mxu0 0.0
    %9979 = vmatprep.subr.mxu0 0.0
    %9980 = vmatpush1.msra.mxu0 0.0
    %9981 = vmatprep.subr.mxu0 0.0
    %9982 = vmatpush1.msra.mxu0 0.0
    %9983 = vmatprep.subr.mxu0 0.0
    %9984 = vmatpush1.msra.mxu0 0.0
    %9985 = vmatprep.mubr.f32.mxu0 0.0
    %9986 = vmatmul.mubr.f32.gmra.mrb[0].mxu0 %v9919
    %v9987 = vpop.f32.mrb[0].mxu0
    %v9988 = vadd.f32 %v9917, %v9987
    %v9989 = vpop.f32.mrb[0].mxu0
    %9990 = vdwg.mxu0
    %vm9991 = vcmask 123904
    %9992 = vst.msk [vmem:[#allocation2] sm:$0x3] %vm9991, %v9988
    // Predicated region
    $region10: #{fwd.1} parent=1 // pred_check
      _
    $region11: #{fwd.1} parent=1 // pred_check_branch
      %9994 = sbr.rel (0) target = $region13
    $region12: #{fwd.1} parent=1 // pred_region
      %s9996 = ssub.s32 32, 32
      %9997 = vsyncadd [#allocation3], %s9996
      %s9999 = sshll.u32 [#allocation2], 4
      %s10000 = int_to_ptr.vmem [resolvable:$true] %s9999
      %10002 = dma.vmem_to_hbm [thread:$0]  %s10000, 32, %s2, [#allocation3]
    $region13: #{fwd.1} parent=1 // pred_fallthru
      _
    // Predicated region
    $region14: #{fwd.1} parent=1 // pred_check
      _
    $region15: #{fwd.1} parent=1 // pred_check_branch
      %10004 = sbr.rel (0) target = $region17
    $region16: #{fwd.1} parent=1 // pred_region
      %10005 = dma.done [#allocation3], 32
    $region17: #{fwd.1} parent=1 // pred_fallthru
      _
    %10006 = vsyncpa [#allocation3], 1

</llo_original>
